<compile_context>
chip_gen: v6e
topology: v6e:2x2x1
jax: 0.10.0
libtpu: 0.0.40
codegen_flags: <defaults>
</compile_context>

<pallas_src>
import functools

import jax
import jax.numpy as jnp
from jax import lax
from jax.experimental import pallas as pl
from jax.experimental.pallas import tpu as pltpu

NEG_SLOPE = 0.2          # LeakyReLU negative slope, matches nn.LeakyReLU(0.2)
NUM_DENSE_BLOCKS = 3     # RRDB = Sequential(DenseResidualBlock x 3)
PATCH_DTYPE = jnp.bfloat16


def _round_up(x, m):
    return (x + m - 1) // m * m


# ------------------------------- Pallas kernel ------------------------------ #

def _rrdb_kernel(x_ref, mask_ref, w_ref, b_ref, o_ref, patch_ref, *,
                 C, G, H, W, res_scale, num_blocks, pad_to, w_off, b_off):
    """Full RRDB forward for one batch element, everything resident in VMEM.

    x_ref:     (1, C, H*W) f32      input (channels on sublanes, pixels on lanes)
    mask_ref:  (6, H*W)   f32       rows 0..2: vertical (dy) edge masks,
                                    rows 3..5: horizontal (dx) edge masks
    w_ref:     (W_ROWS, K_MAX) bf16 all conv weights; rows at w_off[blk][layer][dx],
                                    columns ordered (source, dy, channel) to match
                                    the patch-row layout (zero padded groups)
    b_ref:     (B_ROWS, 1) f32      all conv biases; rows at b_off[blk][layer]
    o_ref:     (1, C, H*W) f32
    patch_ref: (3*(Cp+4*Gp), H*W) bf16 scratch with the dy-shifted copies of
               [x, x1..x4]; each conv reads a growing contiguous K prefix.
    """
    HW = H * W
    Cp = _round_up(C, pad_to)
    Gp = _round_up(G, pad_to)

    masks = mask_ref[...]                         # (6, HW) f32, hoisted once

    # Trace-time cache: each (mask row, #rows) broadcast is materialised once
    # (JAX does not CSE broadcast_in_dim).
    _bcast = {}

    def mask_b(row, rows):
        key = (row, rows)
        if key not in _bcast:
            _bcast[key] = jnp.broadcast_to(masks[row:row + 1, :], (rows, HW))
        return _bcast[key]

    def src_layout(s):
        cs = C if s == 0 else G
        cs_p = Cp if s == 0 else Gp
        base = 0 if s == 0 else 3 * Cp + (s - 1) * 3 * Gp
        return cs, cs_p, base

    # Zero the padding rows of the patch scratch (emitted only when the channel
    # groups are actually padded, e.g. toy C=G=4).  Stale VMEM could hold
    # Inf/NaN which would poison the f32 accumulator even against zero weights.
    for s in range(5):
        cs, cs_p, base = src_layout(s)
        if cs_p > cs:
            for dy in range(3):
                r0 = base + dy * cs_p + cs
                patch_ref[r0:base + (dy + 1) * cs_p, :] = jnp.zeros(
                    (cs_p - cs, HW), patch_ref.dtype)

    def write_source(val, s):
        # val: (cs, HW) f32.  Store its 3 dy-shifted, vertically masked copies
        # (cast to bf16) into the rows of source s.  dy == 1 (center) needs no
        # roll and no mask.
        cs, cs_p, base = src_layout(s)
        for dy in range(3):
            if dy == 1:
                shifted = val
            else:
                shift = (-(dy - 1) * W) % HW      # shifted[p] == val[p + (dy-1)*W]
                shifted = pltpu.roll(val, shift=shift, axis=1) * mask_b(dy, cs)
            patch_ref[base + dy * cs_p: base + dy * cs_p + cs, :] = (
                shifted.astype(patch_ref.dtype))

    x_rrdb = x_ref[0]                              # (C, HW) f32
    x_blk = x_rrdb
    for blk in range(num_blocks):                  # 3 DenseResidualBlocks, unrolled
        write_source(x_blk, 0)                     # source 0 = block input
        for layer in range(5):
            cout = G if layer < 4 else C
            k_rows = 3 * Cp + layer * 3 * Gp       # growing K prefix of the patch
            b_r0 = b_off[blk][layer]
            bias = b_ref[b_r0:b_r0 + cout, :]      # (cout, 1) f32
            # Center tap (dx == 1): plain matmul, no output roll / mask.
            w_r0 = w_off[blk][layer][1]
            acc = jnp.dot(w_ref[w_r0:w_r0 + cout, 0:k_rows],
                          patch_ref[0:k_rows, :],
                          preferred_element_type=jnp.float32) + bias
            # dx == 0 / dx == 2: matmul, then shift the SMALL (cout, HW) output
            # by +/-1 lane and mask the horizontal border.
            for dx in (0, 2):
                w_r0 = w_off[blk][layer][dx]
                z = jnp.dot(w_ref[w_r0:w_r0 + cout, 0:k_rows],
                            patch_ref[0:k_rows, :],
                            preferred_element_type=jnp.float32)
                z = pltpu.roll(z, shift=(-(dx - 1)) % HW, axis=1)
                acc = acc + z * mask_b(3 + dx, cout)
            if layer < 4:
                y = jnp.where(acc > 0.0, acc, NEG_SLOPE * acc)   # LeakyReLU(0.2)
                write_source(y, layer + 1)                       # next dense source
            else:
                x_blk = acc * res_scale + x_blk                  # dense-block residual
    # Outer RRDB residual.
    o_ref[0] = (x_blk * res_scale + x_rrdb).astype(o_ref.dtype)


# ------------------------------ Host-side glue ------------------------------ #

def _edge_masks(h, w):
    """(6, H*W) f32: rows 0..2 vertical masks per dy, rows 3..5 horizontal per dx."""
    hw = h * w
    rows = jnp.arange(hw, dtype=jnp.int32) // w
    cols = jnp.arange(hw, dtype=jnp.int32) % w
    ms = []
    for dy in range(3):
        ms.append(((rows + (dy - 1) >= 0) & (rows + (dy - 1) < h)).astype(jnp.float32))
    for dx in range(3):
        ms.append(((cols + (dx - 1) >= 0) & (cols + (dx - 1) < w)).astype(jnp.float32))
    return jnp.stack(ms, axis=0)


def _param_layout(c, g, num_blocks, pad_to):
    """Row offsets for the packed weight / bias slabs (static Python ints)."""
    cp, gp = _round_up(c, pad_to), _round_up(g, pad_to)
    k_max = 3 * cp + 4 * 3 * gp
    w_off, b_off = [], []
    w_rows = b_rows = 0
    for _ in range(num_blocks):
        w_blk, b_blk = [], []
        for layer in range(5):
            cout = g if layer < 4 else c
            w_layer = []
            for _dx in range(3):
                w_layer.append(w_rows)
                w_rows += _round_up(cout, 8)       # sublane-aligned row chunks
            w_blk.append(tuple(w_layer))
            b_blk.append(b_rows)
            b_rows += _round_up(cout, 8)
        w_off.append(tuple(w_blk))
        b_off.append(tuple(b_blk))
    return tuple(w_off), tuple(b_off), w_rows, b_rows, k_max


def _pack_params(rrdb_params, c, g, pad_to, w_off, b_off, w_rows, b_rows, k_max):
    """PyTorch OIHW weights -> one bf16 slab (per-dx rows, (source,dy,ch) columns
    matching the patch layout, zero-padded) + one f32 bias column."""
    w_slab = jnp.zeros((w_rows, k_max), jnp.float32)
    b_slab = jnp.zeros((b_rows, 1), jnp.float32)
    for bi, blk in enumerate(rrdb_params):
        for li, (wgt, bias) in enumerate(blk):
            cout = wgt.shape[0]
            src_sizes = [c] + [g] * li
            for dx in range(3):
                cols, off_ch = [], 0
                for cs in src_sizes:
                    cs_p = _round_up(cs, pad_to)
                    chunk = jnp.transpose(wgt[:, off_ch:off_ch + cs, :, dx],
                                          (0, 2, 1))           # (cout, dy, cs)
                    chunk = jnp.pad(chunk, ((0, 0), (0, 0), (0, cs_p - cs)))
                    cols.append(chunk.reshape(cout, 3 * cs_p))
                    off_ch += cs
                wdx = jnp.concatenate(cols, axis=1)
                r0 = w_off[bi][li][dx]
                w_slab = w_slab.at[r0:r0 + cout, 0:wdx.shape[1]].set(wdx)
            r0 = b_off[bi][li]
            b_slab = b_slab.at[r0:r0 + cout, 0].set(bias)
    return w_slab.astype(jnp.bfloat16), b_slab


def rrdb_pallas(x_nchw, rrdb_params, res_scale=0.2):
    """ResidualInResidualDenseBlock forward. x_nchw: (N, C, H, W) float32."""
    n, c, h, w = x_nchw.shape
    hw = h * w
    g = rrdb_params[0][0][0].shape[0]              # growths = Cout of conv1
    num_blocks = len(rrdb_params)
    pad_to = 32 // jnp.dtype(PATCH_DTYPE).itemsize  # 16 for bf16, 8 for f32
    cp, gp = _round_up(c, pad_to), _round_up(g, pad_to)

    # TODO(synk): for real ESRGAN resolutions (e.g. C=64, G=32, 128x128) add a
    # spatial grid axis over H*W tiles with a 1-row/col halo (manual
    # make_async_copy from a pl.ANY input, or recompute border taps) so the
    # 3*(Cp+4*Gp)*tile_HW bf16 patch stays under ~24 MiB on v7x's 64 MiB VMEM
    # and both v7x TensorCores get work even at batch 1.

    x_flat = x_nchw.reshape(n, c, hw)              # NCHW -> (N, C, H*W), no transpose
    masks = _edge_masks(h, w)
    w_off, b_off, w_rows, b_rows, k_max = _param_layout(c, g, num_blocks, pad_to)
    w_slab, b_slab = _pack_params(rrdb_params, c, g, pad_to, w_off, b_off,
                                  w_rows, b_rows, k_max)

    flops = 0
    for layer in range(5):
        cin = c + layer * g
        cout = g if layer < 4 else c
        flops += 2 * cout * 9 * cin * hw
    flops *= num_blocks * n
    bytes_accessed = (2 * n * c * hw * 4 + int(masks.size) * 4 +
                      int(w_slab.size) * 2 + int(b_slab.size) * 4)

    kernel = functools.partial(
        _rrdb_kernel, C=c, G=g, H=h, W=w, res_scale=res_scale,
        num_blocks=num_blocks, pad_to=pad_to, w_off=w_off, b_off=b_off)

    out = pl.pallas_call(
        kernel,
        out_shape=jax.ShapeDtypeStruct((n, c, hw), x_nchw.dtype),
        grid=(n,),
        in_specs=[pl.BlockSpec((1, c, hw), lambda i: (i, 0, 0)),
                  pl.BlockSpec((6, hw), lambda i: (0, 0)),
                  pl.BlockSpec((w_rows, k_max), lambda i: (0, 0)),
                  pl.BlockSpec((b_rows, 1), lambda i: (0, 0))],
        out_specs=pl.BlockSpec((1, c, hw), lambda i: (i, 0, 0)),
        scratch_shapes=[pltpu.VMEM((3 * (cp + 4 * gp), hw), PATCH_DTYPE)],
        compiler_params=pltpu.CompilerParams(
            dimension_semantics=("parallel",),
            vmem_limit_bytes=64 * 1024 * 1024),
        cost_estimate=pl.CostEstimate(flops=flops, transcendentals=0,
                                      bytes_accessed=bytes_accessed),
    )(x_flat, masks, w_slab, b_slab)
    return out.reshape(n, c, h, w)


# ------------------------- Deterministic parameters ------------------------- #

def init_params(key, channels, growths, num_blocks=NUM_DENSE_BLOCKS):
    """Per dense block: 5 conv layers, PyTorch OIHW weights (Cout, Cin, 3, 3) + bias."""
    layer_specs = [
        (channels + 0 * growths, growths),
        (channels + 1 * growths, growths),
        (channels + 2 * growths, growths),
        (channels + 3 * growths, growths),
        (channels + 4 * growths, channels),
    ]
    params = []
    for _ in range(num_blocks):
        block = []
        for cin, cout in layer_specs:
            key, kw, kb = jax.random.split(key, 3)
            fan_in = 9 * cin
            wgt = jax.random.normal(kw, (cout, cin, 3, 3), jnp.float32) / jnp.sqrt(
                jnp.float32(fan_in))
            b = 0.01 * jax.random.normal(kb, (cout,), jnp.float32)
            block.append((wgt, b))
        params.append(block)
    return params


# ----------------------------- Pure-JAX reference ---------------------------- #

def _conv3x3_ref(x, wgt, b):
    y = lax.conv_general_dilated(
        x, wgt, window_strides=(1, 1), padding="SAME",
        dimension_numbers=("NCHW", "OIHW", "NCHW"),
        precision=lax.Precision.HIGHEST)
    return y + b.reshape(1, -1, 1, 1)


def _dense_block_ref(x, block_params, res_scale):
    def lrelu(v):
        return jnp.where(v > 0, v, NEG_SLOPE * v)

    (w1, b1), (w2, b2), (w3, b3), (w4, b4), (w5, b5) = block_params
    x1 = lrelu(_conv3x3_ref(x, w1, b1))
    x2 = lrelu(_conv3x3_ref(jnp.concatenate([x, x1], 1), w2, b2))
    x3 = lrelu(_conv3x3_ref(jnp.concatenate([x, x1, x2], 1), w3, b3))
    x4 = lrelu(_conv3x3_ref(jnp.concatenate([x, x1, x2, x3], 1), w4, b4))
    x5 = _conv3x3_ref(jnp.concatenate([x, x1, x2, x3, x4], 1), w5, b5)
    return x5 * res_scale + x


def rrdb_ref(x, rrdb_params, res_scale=0.2):
    y = x
    for blk in rrdb_params:
        y = _dense_block_ref(y, blk, res_scale)
    return y * res_scale + x


# ----------------------------------- Main ------------------------------------ #

if __name__ == "__main__":
    N, C, H, W = 2, 4, 16, 16    # channels=4
    G = 4                        # growths=4

    key = jax.random.PRNGKey(0)
    kx, kp = jax.random.split(key)

    x = jax.random.normal(kx, (N, C, H, W), jnp.float32)   # PyTorch NCHW layout
    params = init_params(kp, C, G)

    out = rrdb_pallas(x, params, res_scale=0.2)
    out = jax.block_until_ready(out)
    assert out.shape == (N, C, H, W)

    ref = rrdb_ref(x, params, res_scale=0.2)
    max_err = float(jnp.max(jnp.abs(out - ref)))
    # Patch activations and weights are bf16-quantized (f32 accumulation), and the
    # reference is full f32; with O(1) activations and res_scale=0.2 damping the
    # expected max error is ~1e-3..1e-2, so 5e-2 gives comfortable margin.
    assert max_err < 5e-2, f"mismatch vs reference: {max_err}"

    print("KERNEL_OK")
</pallas_src>

<mosaic_0001>
module attributes {stable_mosaic.version = 11 : i64} {
  func.func @_rrdb_kernel(%arg0: i32, %arg1: memref<1x4x256xf32, #tpu.memory_space<vmem>>, %arg2: memref<6x256xf32, #tpu.memory_space<vmem>>, %arg3: memref<360x240xbf16, #tpu.memory_space<vmem>>, %arg4: memref<120x1xf32, #tpu.memory_space<vmem>>, %arg5: memref<1x4x256xf32, #tpu.memory_space<vmem>>, %arg6: memref<240x256xbf16, #tpu.memory_space<vmem>>) attributes {dimension_semantics = [#tpu.dimension_semantics<parallel>], iteration_bounds = array<i64: 2>, scalar_prefetch = 0 : i64, scratch_operands = 1 : i64, tpu.core_type = #tpu.core_type<tc>, window_params = [{transform_indices = @transform_0, window_bounds = array<i64: 1, 4, 256>}, {pipeline_mode = #tpu.pipeline_mode<synchronous>, transform_indices = @transform_1, window_bounds = array<i64: 6, 256>}, {pipeline_mode = #tpu.pipeline_mode<synchronous>, transform_indices = @transform_2, window_bounds = array<i64: 360, 240>}, {pipeline_mode = #tpu.pipeline_mode<synchronous>, transform_indices = @transform_3, window_bounds = array<i64: 120, 1>}, {transform_indices = @transform_4, window_bounds = array<i64: 1, 4, 256>}]} {
    %c0 = arith.constant 0 : index
    %c0_0 = arith.constant 0 : index
    %0 = vector.load %arg2[%c0, %c0_0] : memref<6x256xf32, #tpu.memory_space<vmem>>, vector<6x256xf32>
    %cst = arith.constant 0.000000e+00 : bf16
    %1 = vector.broadcast %cst : bf16 to vector<12x256xbf16>
    %c4 = arith.constant 4 : index
    %c0_1 = arith.constant 0 : index
    %2 = vector.load %arg6[%c4, %c0_1] : memref<240x256xbf16, #tpu.memory_space<vmem>>, vector<12x256xbf16>
    tpu.vector_store %arg6[%c4, %c0_1], %1 {strides = array<i32>} : memref<240x256xbf16, #tpu.memory_space<vmem>>, vector<12x256xbf16>,
    %cst_2 = arith.constant 0.000000e+00 : bf16
    %3 = vector.broadcast %cst_2 : bf16 to vector<12x256xbf16>
    %c20 = arith.constant 20 : index
    %c0_3 = arith.constant 0 : index
    %4 = vector.load %arg6[%c20, %c0_3] : memref<240x256xbf16, #tpu.memory_space<vmem>>, vector<12x256xbf16>
    tpu.vector_store %arg6[%c20, %c0_3], %3 {strides = array<i32>} : memref<240x256xbf16, #tpu.memory_space<vmem>>, vector<12x256xbf16>,
    %cst_4 = arith.constant 0.000000e+00 : bf16
    %5 = vector.broadcast %cst_4 : bf16 to vector<12x256xbf16>
    %c36 = arith.constant 36 : index
    %c0_5 = arith.constant 0 : index
    %6 = vector.load %arg6[%c36, %c0_5] : memref<240x256xbf16, #tpu.memory_space<vmem>>, vector<12x256xbf16>
    tpu.vector_store %arg6[%c36, %c0_5], %5 {strides = array<i32>} : memref<240x256xbf16, #tpu.memory_space<vmem>>, vector<12x256xbf16>,
    %cst_6 = arith.constant 0.000000e+00 : bf16
    %7 = vector.broadcast %cst_6 : bf16 to vector<12x256xbf16>
    %c52 = arith.constant 52 : index
    %c0_7 = arith.constant 0 : index
    %8 = vector.load %arg6[%c52, %c0_7] : memref<240x256xbf16, #tpu.memory_space<vmem>>, vector<12x256xbf16>
    tpu.vector_store %arg6[%c52, %c0_7], %7 {strides = array<i32>} : memref<240x256xbf16, #tpu.memory_space<vmem>>, vector<12x256xbf16>,
    %cst_8 = arith.constant 0.000000e+00 : bf16
    %9 = vector.broadcast %cst_8 : bf16 to vector<12x256xbf16>
    %c68 = arith.constant 68 : index
    %c0_9 = arith.constant 0 : index
    %10 = vector.load %arg6[%c68, %c0_9] : memref<240x256xbf16, #tpu.memory_space<vmem>>, vector<12x256xbf16>
    tpu.vector_store %arg6[%c68, %c0_9], %9 {strides = array<i32>} : memref<240x256xbf16, #tpu.memory_space<vmem>>, vector<12x256xbf16>,
    %cst_10 = arith.constant 0.000000e+00 : bf16
    %11 = vector.broadcast %cst_10 : bf16 to vector<12x256xbf16>
    %c84 = arith.constant 84 : index
    %c0_11 = arith.constant 0 : index
    %12 = vector.load %arg6[%c84, %c0_11] : memref<240x256xbf16, #tpu.memory_space<vmem>>, vector<12x256xbf16>
    tpu.vector_store %arg6[%c84, %c0_11], %11 {strides = array<i32>} : memref<240x256xbf16, #tpu.memory_space<vmem>>, vector<12x256xbf16>,
    %cst_12 = arith.constant 0.000000e+00 : bf16
    %13 = vector.broadcast %cst_12 : bf16 to vector<12x256xbf16>
    %c100 = arith.constant 100 : index
    %c0_13 = arith.constant 0 : index
    %14 = vector.load %arg6[%c100, %c0_13] : memref<240x256xbf16, #tpu.memory_space<vmem>>, vector<12x256xbf16>
    tpu.vector_store %arg6[%c100, %c0_13], %13 {strides = array<i32>} : memref<240x256xbf16, #tpu.memory_space<vmem>>, vector<12x256xbf16>,
    %cst_14 = arith.constant 0.000000e+00 : bf16
    %15 = vector.broadcast %cst_14 : bf16 to vector<12x256xbf16>
    %c116 = arith.constant 116 : index
    %c0_15 = arith.constant 0 : index
    %16 = vector.load %arg6[%c116, %c0_15] : memref<240x256xbf16, #tpu.memory_space<vmem>>, vector<12x256xbf16>
    tpu.vector_store %arg6[%c116, %c0_15], %15 {strides = array<i32>} : memref<240x256xbf16, #tpu.memory_space<vmem>>, vector<12x256xbf16>,
    %cst_16 = arith.constant 0.000000e+00 : bf16
    %17 = vector.broadcast %cst_16 : bf16 to vector<12x256xbf16>
    %c132 = arith.constant 132 : index
    %c0_17 = arith.constant 0 : index
    %18 = vector.load %arg6[%c132, %c0_17] : memref<240x256xbf16, #tpu.memory_space<vmem>>, vector<12x256xbf16>
    tpu.vector_store %arg6[%c132, %c0_17], %17 {strides = array<i32>} : memref<240x256xbf16, #tpu.memory_space<vmem>>, vector<12x256xbf16>,
    %cst_18 = arith.constant 0.000000e+00 : bf16
    %19 = vector.broadcast %cst_18 : bf16 to vector<12x256xbf16>
    %c148 = arith.constant 148 : index
    %c0_19 = arith.constant 0 : index
    %20 = vector.load %arg6[%c148, %c0_19] : memref<240x256xbf16, #tpu.memory_space<vmem>>, vector<12x256xbf16>
    tpu.vector_store %arg6[%c148, %c0_19], %19 {strides = array<i32>} : memref<240x256xbf16, #tpu.memory_space<vmem>>, vector<12x256xbf16>,
    %cst_20 = arith.constant 0.000000e+00 : bf16
    %21 = vector.broadcast %cst_20 : bf16 to vector<12x256xbf16>
    %c164 = arith.constant 164 : index
    %c0_21 = arith.constant 0 : index
    %22 = vector.load %arg6[%c164, %c0_21] : memref<240x256xbf16, #tpu.memory_space<vmem>>, vector<12x256xbf16>
    tpu.vector_store %arg6[%c164, %c0_21], %21 {strides = array<i32>} : memref<240x256xbf16, #tpu.memory_space<vmem>>, vector<12x256xbf16>,
    %cst_22 = arith.constant 0.000000e+00 : bf16
    %23 = vector.broadcast %cst_22 : bf16 to vector<12x256xbf16>
    %c180 = arith.constant 180 : index
    %c0_23 = arith.constant 0 : index
    %24 = vector.load %arg6[%c180, %c0_23] : memref<240x256xbf16, #tpu.memory_space<vmem>>, vector<12x256xbf16>
    tpu.vector_store %arg6[%c180, %c0_23], %23 {strides = array<i32>} : memref<240x256xbf16, #tpu.memory_space<vmem>>, vector<12x256xbf16>,
    %cst_24 = arith.constant 0.000000e+00 : bf16
    %25 = vector.broadcast %cst_24 : bf16 to vector<12x256xbf16>
    %c196 = arith.constant 196 : index
    %c0_25 = arith.constant 0 : index
    %26 = vector.load %arg6[%c196, %c0_25] : memref<240x256xbf16, #tpu.memory_space<vmem>>, vector<12x256xbf16>
    tpu.vector_store %arg6[%c196, %c0_25], %25 {strides = array<i32>} : memref<240x256xbf16, #tpu.memory_space<vmem>>, vector<12x256xbf16>,
    %cst_26 = arith.constant 0.000000e+00 : bf16
    %27 = vector.broadcast %cst_26 : bf16 to vector<12x256xbf16>
    %c212 = arith.constant 212 : index
    %c0_27 = arith.constant 0 : index
    %28 = vector.load %arg6[%c212, %c0_27] : memref<240x256xbf16, #tpu.memory_space<vmem>>, vector<12x256xbf16>
    tpu.vector_store %arg6[%c212, %c0_27], %27 {strides = array<i32>} : memref<240x256xbf16, #tpu.memory_space<vmem>>, vector<12x256xbf16>,
    %cst_28 = arith.constant 0.000000e+00 : bf16
    %29 = vector.broadcast %cst_28 : bf16 to vector<12x256xbf16>
    %c228 = arith.constant 228 : index
    %c0_29 = arith.constant 0 : index
    %30 = vector.load %arg6[%c228, %c0_29] : memref<240x256xbf16, #tpu.memory_space<vmem>>, vector<12x256xbf16>
    tpu.vector_store %arg6[%c228, %c0_29], %29 {strides = array<i32>} : memref<240x256xbf16, #tpu.memory_space<vmem>>, vector<12x256xbf16>,
    %c0_30 = arith.constant 0 : index
    %c0_31 = arith.constant 0 : index
    %c0_32 = arith.constant 0 : index
    %31 = vector.load %arg1[%c0_30, %c0_31, %c0_32] : memref<1x4x256xf32, #tpu.memory_space<vmem>>, vector<1x4x256xf32>
    %32 = vector.shape_cast %31 : vector<1x4x256xf32> to vector<4x256xf32>
    %c16_i32 = arith.constant 16 : i32
    %33 = tpu.dynamic_rotate %32 by %c16_i32 dim 1 : vector<4x256xf32>, i32 -> vector<4x256xf32>
    %34 = vector.extract_strided_slice %0 {offsets = [0, 0], sizes = [1, 256], strides = [1, 1]} : vector<6x256xf32> to vector<1x256xf32>
    %35 = vector.shape_cast %34 : vector<1x256xf32> to vector<1x256xf32>
    %36 = vector.broadcast %35 : vector<1x256xf32> to vector<4x256xf32>
    %37 = arith.mulf %33, %36 : vector<4x256xf32>
    %38 = arith.truncf %37 : vector<4x256xf32> to vector<4x256xbf16>
    %c0_33 = arith.constant 0 : index
    %c0_34 = arith.constant 0 : index
    %39 = vector.load %arg6[%c0_33, %c0_34] : memref<240x256xbf16, #tpu.memory_space<vmem>>, vector<4x256xbf16>
    tpu.vector_store %arg6[%c0_33, %c0_34], %38 {strides = array<i32>} : memref<240x256xbf16, #tpu.memory_space<vmem>>, vector<4x256xbf16>,
    %40 = arith.truncf %32 : vector<4x256xf32> to vector<4x256xbf16>
    %c16 = arith.constant 16 : index
    %c0_35 = arith.constant 0 : index
    %41 = vector.load %arg6[%c16, %c0_35] : memref<240x256xbf16, #tpu.memory_space<vmem>>, vector<4x256xbf16>
    tpu.vector_store %arg6[%c16, %c0_35], %40 {strides = array<i32>} : memref<240x256xbf16, #tpu.memory_space<vmem>>, vector<4x256xbf16>,
    %c240_i32 = arith.constant 240 : i32
    %42 = tpu.dynamic_rotate %32 by %c240_i32 dim 1 : vector<4x256xf32>, i32 -> vector<4x256xf32>
    %43 = vector.extract_strided_slice %0 {offsets = [2, 0], sizes = [1, 256], strides = [1, 1]} : vector<6x256xf32> to vector<1x256xf32>
    %44 = vector.shape_cast %43 : vector<1x256xf32> to vector<1x256xf32>
    %45 = vector.broadcast %44 : vector<1x256xf32> to vector<4x256xf32>
    %46 = arith.mulf %42, %45 : vector<4x256xf32>
    %47 = arith.truncf %46 : vector<4x256xf32> to vector<4x256xbf16>
    %c32 = arith.constant 32 : index
    %c0_36 = arith.constant 0 : index
    %48 = vector.load %arg6[%c32, %c0_36] : memref<240x256xbf16, #tpu.memory_space<vmem>>, vector<4x256xbf16>
    tpu.vector_store %arg6[%c32, %c0_36], %47 {strides = array<i32>} : memref<240x256xbf16, #tpu.memory_space<vmem>>, vector<4x256xbf16>,
    %c0_37 = arith.constant 0 : index
    %c0_38 = arith.constant 0 : index
    %49 = vector.load %arg4[%c0_37, %c0_38] : memref<120x1xf32, #tpu.memory_space<vmem>>, vector<4x1xf32>
    %c8 = arith.constant 8 : index
    %c0_39 = arith.constant 0 : index
    %50 = vector.load %arg3[%c8, %c0_39] : memref<360x240xbf16, #tpu.memory_space<vmem>>, vector<4x48xbf16>
    %c0_40 = arith.constant 0 : index
    %c0_41 = arith.constant 0 : index
    %51 = vector.load %arg6[%c0_40, %c0_41] : memref<240x256xbf16, #tpu.memory_space<vmem>>, vector<48x256xbf16>
    %cst_42 = arith.constant dense<0.000000e+00> : vector<4x256xf32>
    %52 = tpu.matmul %50, %51, %cst_42 {dimension_numbers = #tpu.dot_dimension_numbers<[1], [0], [0], [1], [0, 0, 1, 1], [], []>} : vector<4x48xbf16>, vector<48x256xbf16>, vector<4x256xf32> -> vector<4x256xf32>
    %53 = vector.broadcast %49 : vector<4x1xf32> to vector<4x256xf32>
    %54 = arith.addf %52, %53 : vector<4x256xf32>
    %c0_43 = arith.constant 0 : index
    %c0_44 = arith.constant 0 : index
    %55 = vector.load %arg3[%c0_43, %c0_44] : memref<360x240xbf16, #tpu.memory_space<vmem>>, vector<4x48xbf16>
    %c0_45 = arith.constant 0 : index
    %c0_46 = arith.constant 0 : index
    %56 = vector.load %arg6[%c0_45, %c0_46] : memref<240x256xbf16, #tpu.memory_space<vmem>>, vector<48x256xbf16>
    %cst_47 = arith.constant dense<0.000000e+00> : vector<4x256xf32>
    %57 = tpu.matmul %55, %56, %cst_47 {dimension_numbers = #tpu.dot_dimension_numbers<[1], [0], [0], [1], [0, 0, 1, 1], [], []>} : vector<4x48xbf16>, vector<48x256xbf16>, vector<4x256xf32> -> vector<4x256xf32>
    %c1_i32 = arith.constant 1 : i32
    %58 = tpu.dynamic_rotate %57 by %c1_i32 dim 1 : vector<4x256xf32>, i32 -> vector<4x256xf32>
    %59 = vector.extract_strided_slice %0 {offsets = [3, 0], sizes = [1, 256], strides = [1, 1]} : vector<6x256xf32> to vector<1x256xf32>
    %60 = vector.shape_cast %59 : vector<1x256xf32> to vector<1x256xf32>
    %61 = vector.broadcast %60 : vector<1x256xf32> to vector<4x256xf32>
    %62 = arith.mulf %58, %61 : vector<4x256xf32>
    %63 = arith.addf %54, %62 : vector<4x256xf32>
    %c16_48 = arith.constant 16 : index
    %c0_49 = arith.constant 0 : index
    %64 = vector.load %arg3[%c16_48, %c0_49] : memref<360x240xbf16, #tpu.memory_space<vmem>>, vector<4x48xbf16>
    %c0_50 = arith.constant 0 : index
    %c0_51 = arith.constant 0 : index
    %65 = vector.load %arg6[%c0_50, %c0_51] : memref<240x256xbf16, #tpu.memory_space<vmem>>, vector<48x256xbf16>
    %cst_52 = arith.constant dense<0.000000e+00> : vector<4x256xf32>
    %66 = tpu.matmul %64, %65, %cst_52 {dimension_numbers = #tpu.dot_dimension_numbers<[1], [0], [0], [1], [0, 0, 1, 1], [], []>} : vector<4x48xbf16>, vector<48x256xbf16>, vector<4x256xf32> -> vector<4x256xf32>
    %c255_i32 = arith.constant 255 : i32
    %67 = tpu.dynamic_rotate %66 by %c255_i32 dim 1 : vector<4x256xf32>, i32 -> vector<4x256xf32>
    %68 = vector.extract_strided_slice %0 {offsets = [5, 0], sizes = [1, 256], strides = [1, 1]} : vector<6x256xf32> to vector<1x256xf32>
    %69 = vector.shape_cast %68 : vector<1x256xf32> to vector<1x256xf32>
    %70 = vector.broadcast %69 : vector<1x256xf32> to vector<4x256xf32>
    %71 = arith.mulf %67, %70 : vector<4x256xf32>
    %72 = arith.addf %63, %71 : vector<4x256xf32>
    %cst_53 = arith.constant 0.000000e+00 : f32
    %73 = vector.broadcast %cst_53 : f32 to vector<4x256xf32>
    %74 = arith.cmpf ogt, %72, %73 : vector<4x256xf32>
    %cst_54 = arith.constant 2.000000e-01 : f32
    %75 = vector.broadcast %cst_54 : f32 to vector<4x256xf32>
    %76 = arith.mulf %75, %72 : vector<4x256xf32>
    %77 = arith.select %74, %72, %76 : vector<4x256xi1>, vector<4x256xf32>
    %c16_i32_55 = arith.constant 16 : i32
    %78 = tpu.dynamic_rotate %77 by %c16_i32_55 dim 1 : vector<4x256xf32>, i32 -> vector<4x256xf32>
    %79 = arith.mulf %78, %36 : vector<4x256xf32>
    %80 = arith.truncf %79 : vector<4x256xf32> to vector<4x256xbf16>
    %c48 = arith.constant 48 : index
    %c0_56 = arith.constant 0 : index
    %81 = vector.load %arg6[%c48, %c0_56] : memref<240x256xbf16, #tpu.memory_space<vmem>>, vector<4x256xbf16>
    tpu.vector_store %arg6[%c48, %c0_56], %80 {strides = array<i32>} : memref<240x256xbf16, #tpu.memory_space<vmem>>, vector<4x256xbf16>,
    %82 = arith.truncf %77 : vector<4x256xf32> to vector<4x256xbf16>
    %c64 = arith.constant 64 : index
    %c0_57 = arith.constant 0 : index
    %83 = vector.load %arg6[%c64, %c0_57] : memref<240x256xbf16, #tpu.memory_space<vmem>>, vector<4x256xbf16>
    tpu.vector_store %arg6[%c64, %c0_57], %82 {strides = array<i32>} : memref<240x256xbf16, #tpu.memory_space<vmem>>, vector<4x256xbf16>,
    %c240_i32_58 = arith.constant 240 : i32
    %84 = tpu.dynamic_rotate %77 by %c240_i32_58 dim 1 : vector<4x256xf32>, i32 -> vector<4x256xf32>
    %85 = arith.mulf %84, %45 : vector<4x256xf32>
    %86 = arith.truncf %85 : vector<4x256xf32> to vector<4x256xbf16>
    %c80 = arith.constant 80 : index
    %c0_59 = arith.constant 0 : index
    %87 = vector.load %arg6[%c80, %c0_59] : memref<240x256xbf16, #tpu.memory_space<vmem>>, vector<4x256xbf16>
    tpu.vector_store %arg6[%c80, %c0_59], %86 {strides = array<i32>} : memref<240x256xbf16, #tpu.memory_space<vmem>>, vector<4x256xbf16>,
    %c8_60 = arith.constant 8 : index
    %c0_61 = arith.constant 0 : index
    %88 = vector.load %arg4[%c8_60, %c0_61] : memref<120x1xf32, #tpu.memory_space<vmem>>, vector<4x1xf32>
    %c32_62 = arith.constant 32 : index
    %c0_63 = arith.constant 0 : index
    %89 = vector.load %arg3[%c32_62, %c0_63] : memref<360x240xbf16, #tpu.memory_space<vmem>>, vector<4x96xbf16>
    %c0_64 = arith.constant 0 : index
    %c0_65 = arith.constant 0 : index
    %90 = vector.load %arg6[%c0_64, %c0_65] : memref<240x256xbf16, #tpu.memory_space<vmem>>, vector<96x256xbf16>
    %cst_66 = arith.constant dense<0.000000e+00> : vector<4x256xf32>
    %91 = tpu.matmul %89, %90, %cst_66 {dimension_numbers = #tpu.dot_dimension_numbers<[1], [0], [0], [1], [0, 0, 1, 1], [], []>} : vector<4x96xbf16>, vector<96x256xbf16>, vector<4x256xf32> -> vector<4x256xf32>
    %92 = vector.broadcast %88 : vector<4x1xf32> to vector<4x256xf32>
    %93 = arith.addf %91, %92 : vector<4x256xf32>
    %c24 = arith.constant 24 : index
    %c0_67 = arith.constant 0 : index
    %94 = vector.load %arg3[%c24, %c0_67] : memref<360x240xbf16, #tpu.memory_space<vmem>>, vector<4x96xbf16>
    %c0_68 = arith.constant 0 : index
    %c0_69 = arith.constant 0 : index
    %95 = vector.load %arg6[%c0_68, %c0_69] : memref<240x256xbf16, #tpu.memory_space<vmem>>, vector<96x256xbf16>
    %cst_70 = arith.constant dense<0.000000e+00> : vector<4x256xf32>
    %96 = tpu.matmul %94, %95, %cst_70 {dimension_numbers = #tpu.dot_dimension_numbers<[1], [0], [0], [1], [0, 0, 1, 1], [], []>} : vector<4x96xbf16>, vector<96x256xbf16>, vector<4x256xf32> -> vector<4x256xf32>
    %c1_i32_71 = arith.constant 1 : i32
    %97 = tpu.dynamic_rotate %96 by %c1_i32_71 dim 1 : vector<4x256xf32>, i32 -> vector<4x256xf32>
    %98 = arith.mulf %97, %61 : vector<4x256xf32>
    %99 = arith.addf %93, %98 : vector<4x256xf32>
    %c40 = arith.constant 40 : index
    %c0_72 = arith.constant 0 : index
    %100 = vector.load %arg3[%c40, %c0_72] : memref<360x240xbf16, #tpu.memory_space<vmem>>, vector<4x96xbf16>
    %c0_73 = arith.constant 0 : index
    %c0_74 = arith.constant 0 : index
    %101 = vector.load %arg6[%c0_73, %c0_74] : memref<240x256xbf16, #tpu.memory_space<vmem>>, vector<96x256xbf16>
    %cst_75 = arith.constant dense<0.000000e+00> : vector<4x256xf32>
    %102 = tpu.matmul %100, %101, %cst_75 {dimension_numbers = #tpu.dot_dimension_numbers<[1], [0], [0], [1], [0, 0, 1, 1], [], []>} : vector<4x96xbf16>, vector<96x256xbf16>, vector<4x256xf32> -> vector<4x256xf32>
    %c255_i32_76 = arith.constant 255 : i32
    %103 = tpu.dynamic_rotate %102 by %c255_i32_76 dim 1 : vector<4x256xf32>, i32 -> vector<4x256xf32>
    %104 = arith.mulf %103, %70 : vector<4x256xf32>
    %105 = arith.addf %99, %104 : vector<4x256xf32>
    %cst_77 = arith.constant 0.000000e+00 : f32
    %106 = vector.broadcast %cst_77 : f32 to vector<4x256xf32>
    %107 = arith.cmpf ogt, %105, %106 : vector<4x256xf32>
    %cst_78 = arith.constant 2.000000e-01 : f32
    %108 = vector.broadcast %cst_78 : f32 to vector<4x256xf32>
    %109 = arith.mulf %108, %105 : vector<4x256xf32>
    %110 = arith.select %107, %105, %109 : vector<4x256xi1>, vector<4x256xf32>
    %c16_i32_79 = arith.constant 16 : i32
    %111 = tpu.dynamic_rotate %110 by %c16_i32_79 dim 1 : vector<4x256xf32>, i32 -> vector<4x256xf32>
    %112 = arith.mulf %111, %36 : vector<4x256xf32>
    %113 = arith.truncf %112 : vector<4x256xf32> to vector<4x256xbf16>
    %c96 = arith.constant 96 : index
    %c0_80 = arith.constant 0 : index
    %114 = vector.load %arg6[%c96, %c0_80] : memref<240x256xbf16, #tpu.memory_space<vmem>>, vector<4x256xbf16>
    tpu.vector_store %arg6[%c96, %c0_80], %113 {strides = array<i32>} : memref<240x256xbf16, #tpu.memory_space<vmem>>, vector<4x256xbf16>,
    %115 = arith.truncf %110 : vector<4x256xf32> to vector<4x256xbf16>
    %c112 = arith.constant 112 : index
    %c0_81 = arith.constant 0 : index
    %116 = vector.load %arg6[%c112, %c0_81] : memref<240x256xbf16, #tpu.memory_space<vmem>>, vector<4x256xbf16>
    tpu.vector_store %arg6[%c112, %c0_81], %115 {strides = array<i32>} : memref<240x256xbf16, #tpu.memory_space<vmem>>, vector<4x256xbf16>,
    %c240_i32_82 = arith.constant 240 : i32
    %117 = tpu.dynamic_rotate %110 by %c240_i32_82 dim 1 : vector<4x256xf32>, i32 -> vector<4x256xf32>
    %118 = arith.mulf %117, %45 : vector<4x256xf32>
    %119 = arith.truncf %118 : vector<4x256xf32> to vector<4x256xbf16>
    %c128 = arith.constant 128 : index
    %c0_83 = arith.constant 0 : index
    %120 = vector.load %arg6[%c128, %c0_83] : memref<240x256xbf16, #tpu.memory_space<vmem>>, vector<4x256xbf16>
    tpu.vector_store %arg6[%c128, %c0_83], %119 {strides = array<i32>} : memref<240x256xbf16, #tpu.memory_space<vmem>>, vector<4x256xbf16>,
    %c16_84 = arith.constant 16 : index
    %c0_85 = arith.constant 0 : index
    %121 = vector.load %arg4[%c16_84, %c0_85] : memref<120x1xf32, #tpu.memory_space<vmem>>, vector<4x1xf32>
    %c56 = arith.constant 56 : index
    %c0_86 = arith.constant 0 : index
    %122 = vector.load %arg3[%c56, %c0_86] : memref<360x240xbf16, #tpu.memory_space<vmem>>, vector<4x144xbf16>
    %c0_87 = arith.constant 0 : index
    %c0_88 = arith.constant 0 : index
    %123 = vector.load %arg6[%c0_87, %c0_88] : memref<240x256xbf16, #tpu.memory_space<vmem>>, vector<144x256xbf16>
    %cst_89 = arith.constant dense<0.000000e+00> : vector<4x256xf32>
    %124 = tpu.matmul %122, %123, %cst_89 {dimension_numbers = #tpu.dot_dimension_numbers<[1], [0], [0], [1], [0, 0, 1, 1], [], []>} : vector<4x144xbf16>, vector<144x256xbf16>, vector<4x256xf32> -> vector<4x256xf32>
    %125 = vector.broadcast %121 : vector<4x1xf32> to vector<4x256xf32>
    %126 = arith.addf %124, %125 : vector<4x256xf32>
    %c48_90 = arith.constant 48 : index
    %c0_91 = arith.constant 0 : index
    %127 = vector.load %arg3[%c48_90, %c0_91] : memref<360x240xbf16, #tpu.memory_space<vmem>>, vector<4x144xbf16>
    %c0_92 = arith.constant 0 : index
    %c0_93 = arith.constant 0 : index
    %128 = vector.load %arg6[%c0_92, %c0_93] : memref<240x256xbf16, #tpu.memory_space<vmem>>, vector<144x256xbf16>
    %cst_94 = arith.constant dense<0.000000e+00> : vector<4x256xf32>
    %129 = tpu.matmul %127, %128, %cst_94 {dimension_numbers = #tpu.dot_dimension_numbers<[1], [0], [0], [1], [0, 0, 1, 1], [], []>} : vector<4x144xbf16>, vector<144x256xbf16>, vector<4x256xf32> -> vector<4x256xf32>
    %c1_i32_95 = arith.constant 1 : i32
    %130 = tpu.dynamic_rotate %129 by %c1_i32_95 dim 1 : vector<4x256xf32>, i32 -> vector<4x256xf32>
    %131 = arith.mulf %130, %61 : vector<4x256xf32>
    %132 = arith.addf %126, %131 : vector<4x256xf32>
    %c64_96 = arith.constant 64 : index
    %c0_97 = arith.constant 0 : index
    %133 = vector.load %arg3[%c64_96, %c0_97] : memref<360x240xbf16, #tpu.memory_space<vmem>>, vector<4x144xbf16>
    %c0_98 = arith.constant 0 : index
    %c0_99 = arith.constant 0 : index
    %134 = vector.load %arg6[%c0_98, %c0_99] : memref<240x256xbf16, #tpu.memory_space<vmem>>, vector<144x256xbf16>
    %cst_100 = arith.constant dense<0.000000e+00> : vector<4x256xf32>
    %135 = tpu.matmul %133, %134, %cst_100 {dimension_numbers = #tpu.dot_dimension_numbers<[1], [0], [0], [1], [0, 0, 1, 1], [], []>} : vector<4x144xbf16>, vector<144x256xbf16>, vector<4x256xf32> -> vector<4x256xf32>
    %c255_i32_101 = arith.constant 255 : i32
    %136 = tpu.dynamic_rotate %135 by %c255_i32_101 dim 1 : vector<4x256xf32>, i32 -> vector<4x256xf32>
    %137 = arith.mulf %136, %70 : vector<4x256xf32>
    %138 = arith.addf %132, %137 : vector<4x256xf32>
    %cst_102 = arith.constant 0.000000e+00 : f32
    %139 = vector.broadcast %cst_102 : f32 to vector<4x256xf32>
    %140 = arith.cmpf ogt, %138, %139 : vector<4x256xf32>
    %cst_103 = arith.constant 2.000000e-01 : f32
    %141 = vector.broadcast %cst_103 : f32 to vector<4x256xf32>
    %142 = arith.mulf %141, %138 : vector<4x256xf32>
    %143 = arith.select %140, %138, %142 : vector<4x256xi1>, vector<4x256xf32>
    %c16_i32_104 = arith.constant 16 : i32
    %144 = tpu.dynamic_rotate %143 by %c16_i32_104 dim 1 : vector<4x256xf32>, i32 -> vector<4x256xf32>
    %145 = arith.mulf %144, %36 : vector<4x256xf32>
    %146 = arith.truncf %145 : vector<4x256xf32> to vector<4x256xbf16>
    %c144 = arith.constant 144 : index
    %c0_105 = arith.constant 0 : index
    %147 = vector.load %arg6[%c144, %c0_105] : memref<240x256xbf16, #tpu.memory_space<vmem>>, vector<4x256xbf16>
    tpu.vector_store %arg6[%c144, %c0_105], %146 {strides = array<i32>} : memref<240x256xbf16, #tpu.memory_space<vmem>>, vector<4x256xbf16>,
    %148 = arith.truncf %143 : vector<4x256xf32> to vector<4x256xbf16>
    %c160 = arith.constant 160 : index
    %c0_106 = arith.constant 0 : index
    %149 = vector.load %arg6[%c160, %c0_106] : memref<240x256xbf16, #tpu.memory_space<vmem>>, vector<4x256xbf16>
    tpu.vector_store %arg6[%c160, %c0_106], %148 {strides = array<i32>} : memref<240x256xbf16, #tpu.memory_space<vmem>>, vector<4x256xbf16>,
    %c240_i32_107 = arith.constant 240 : i32
    %150 = tpu.dynamic_rotate %143 by %c240_i32_107 dim 1 : vector<4x256xf32>, i32 -> vector<4x256xf32>
    %151 = arith.mulf %150, %45 : vector<4x256xf32>
    %152 = arith.truncf %151 : vector<4x256xf32> to vector<4x256xbf16>
    %c176 = arith.constant 176 : index
    %c0_108 = arith.constant 0 : index
    %153 = vector.load %arg6[%c176, %c0_108] : memref<240x256xbf16, #tpu.memory_space<vmem>>, vector<4x256xbf16>
    tpu.vector_store %arg6[%c176, %c0_108], %152 {strides = array<i32>} : memref<240x256xbf16, #tpu.memory_space<vmem>>, vector<4x256xbf16>,
    %c24_109 = arith.constant 24 : index
    %c0_110 = arith.constant 0 : index
    %154 = vector.load %arg4[%c24_109, %c0_110] : memref<120x1xf32, #tpu.memory_space<vmem>>, vector<4x1xf32>
    %c80_111 = arith.constant 80 : index
    %c0_112 = arith.constant 0 : index
    %155 = vector.load %arg3[%c80_111, %c0_112] : memref<360x240xbf16, #tpu.memory_space<vmem>>, vector<4x192xbf16>
    %c0_113 = arith.constant 0 : index
    %c0_114 = arith.constant 0 : index
    %156 = vector.load %arg6[%c0_113, %c0_114] : memref<240x256xbf16, #tpu.memory_space<vmem>>, vector<192x256xbf16>
    %cst_115 = arith.constant dense<0.000000e+00> : vector<4x256xf32>
    %157 = tpu.matmul %155, %156, %cst_115 {dimension_numbers = #tpu.dot_dimension_numbers<[1], [0], [0], [1], [0, 0, 1, 1], [], []>} : vector<4x192xbf16>, vector<192x256xbf16>, vector<4x256xf32> -> vector<4x256xf32>
    %158 = vector.broadcast %154 : vector<4x1xf32> to vector<4x256xf32>
    %159 = arith.addf %157, %158 : vector<4x256xf32>
    %c72 = arith.constant 72 : index
    %c0_116 = arith.constant 0 : index
    %160 = vector.load %arg3[%c72, %c0_116] : memref<360x240xbf16, #tpu.memory_space<vmem>>, vector<4x192xbf16>
    %c0_117 = arith.constant 0 : index
    %c0_118 = arith.constant 0 : index
    %161 = vector.load %arg6[%c0_117, %c0_118] : memref<240x256xbf16, #tpu.memory_space<vmem>>, vector<192x256xbf16>
    %cst_119 = arith.constant dense<0.000000e+00> : vector<4x256xf32>
    %162 = tpu.matmul %160, %161, %cst_119 {dimension_numbers = #tpu.dot_dimension_numbers<[1], [0], [0], [1], [0, 0, 1, 1], [], []>} : vector<4x192xbf16>, vector<192x256xbf16>, vector<4x256xf32> -> vector<4x256xf32>
    %c1_i32_120 = arith.constant 1 : i32
    %163 = tpu.dynamic_rotate %162 by %c1_i32_120 dim 1 : vector<4x256xf32>, i32 -> vector<4x256xf32>
    %164 = arith.mulf %163, %61 : vector<4x256xf32>
    %165 = arith.addf %159, %164 : vector<4x256xf32>
    %c88 = arith.constant 88 : index
    %c0_121 = arith.constant 0 : index
    %166 = vector.load %arg3[%c88, %c0_121] : memref<360x240xbf16, #tpu.memory_space<vmem>>, vector<4x192xbf16>
    %c0_122 = arith.constant 0 : index
    %c0_123 = arith.constant 0 : index
    %167 = vector.load %arg6[%c0_122, %c0_123] : memref<240x256xbf16, #tpu.memory_space<vmem>>, vector<192x256xbf16>
    %cst_124 = arith.constant dense<0.000000e+00> : vector<4x256xf32>
    %168 = tpu.matmul %166, %167, %cst_124 {dimension_numbers = #tpu.dot_dimension_numbers<[1], [0], [0], [1], [0, 0, 1, 1], [], []>} : vector<4x192xbf16>, vector<192x256xbf16>, vector<4x256xf32> -> vector<4x256xf32>
    %c255_i32_125 = arith.constant 255 : i32
    %169 = tpu.dynamic_rotate %168 by %c255_i32_125 dim 1 : vector<4x256xf32>, i32 -> vector<4x256xf32>
    %170 = arith.mulf %169, %70 : vector<4x256xf32>
    %171 = arith.addf %165, %170 : vector<4x256xf32>
    %cst_126 = arith.constant 0.000000e+00 : f32
    %172 = vector.broadcast %cst_126 : f32 to vector<4x256xf32>
    %173 = arith.cmpf ogt, %171, %172 : vector<4x256xf32>
    %cst_127 = arith.constant 2.000000e-01 : f32
    %174 = vector.broadcast %cst_127 : f32 to vector<4x256xf32>
    %175 = arith.mulf %174, %171 : vector<4x256xf32>
    %176 = arith.select %173, %171, %175 : vector<4x256xi1>, vector<4x256xf32>
    %c16_i32_128 = arith.constant 16 : i32
    %177 = tpu.dynamic_rotate %176 by %c16_i32_128 dim 1 : vector<4x256xf32>, i32 -> vector<4x256xf32>
    %178 = arith.mulf %177, %36 : vector<4x256xf32>
    %179 = arith.truncf %178 : vector<4x256xf32> to vector<4x256xbf16>
    %c192 = arith.constant 192 : index
    %c0_129 = arith.constant 0 : index
    %180 = vector.load %arg6[%c192, %c0_129] : memref<240x256xbf16, #tpu.memory_space<vmem>>, vector<4x256xbf16>
    tpu.vector_store %arg6[%c192, %c0_129], %179 {strides = array<i32>} : memref<240x256xbf16, #tpu.memory_space<vmem>>, vector<4x256xbf16>,
    %181 = arith.truncf %176 : vector<4x256xf32> to vector<4x256xbf16>
    %c208 = arith.constant 208 : index
    %c0_130 = arith.constant 0 : index
    %182 = vector.load %arg6[%c208, %c0_130] : memref<240x256xbf16, #tpu.memory_space<vmem>>, vector<4x256xbf16>
    tpu.vector_store %arg6[%c208, %c0_130], %181 {strides = array<i32>} : memref<240x256xbf16, #tpu.memory_space<vmem>>, vector<4x256xbf16>,
    %c240_i32_131 = arith.constant 240 : i32
    %183 = tpu.dynamic_rotate %176 by %c240_i32_131 dim 1 : vector<4x256xf32>, i32 -> vector<4x256xf32>
    %184 = arith.mulf %183, %45 : vector<4x256xf32>
    %185 = arith.truncf %184 : vector<4x256xf32> to vector<4x256xbf16>
    %c224 = arith.constant 224 : index
    %c0_132 = arith.constant 0 : index
    %186 = vector.load %arg6[%c224, %c0_132] : memref<240x256xbf16, #tpu.memory_space<vmem>>, vector<4x256xbf16>
    tpu.vector_store %arg6[%c224, %c0_132], %185 {strides = array<i32>} : memref<240x256xbf16, #tpu.memory_space<vmem>>, vector<4x256xbf16>,
    %c32_133 = arith.constant 32 : index
    %c0_134 = arith.constant 0 : index
    %187 = vector.load %arg4[%c32_133, %c0_134] : memref<120x1xf32, #tpu.memory_space<vmem>>, vector<4x1xf32>
    %c104 = arith.constant 104 : index
    %c0_135 = arith.constant 0 : index
    %188 = vector.load %arg3[%c104, %c0_135] : memref<360x240xbf16, #tpu.memory_space<vmem>>, vector<4x240xbf16>
    %c0_136 = arith.constant 0 : index
    %c0_137 = arith.constant 0 : index
    %189 = vector.load %arg6[%c0_136, %c0_137] : memref<240x256xbf16, #tpu.memory_space<vmem>>, vector<240x256xbf16>
    %cst_138 = arith.constant dense<0.000000e+00> : vector<4x256xf32>
    %190 = tpu.matmul %188, %189, %cst_138 {dimension_numbers = #tpu.dot_dimension_numbers<[1], [0], [0], [1], [0, 0, 1, 1], [], []>} : vector<4x240xbf16>, vector<240x256xbf16>, vector<4x256xf32> -> vector<4x256xf32>
    %191 = vector.broadcast %187 : vector<4x1xf32> to vector<4x256xf32>
    %192 = arith.addf %190, %191 : vector<4x256xf32>
    %c96_139 = arith.constant 96 : index
    %c0_140 = arith.constant 0 : index
    %193 = vector.load %arg3[%c96_139, %c0_140] : memref<360x240xbf16, #tpu.memory_space<vmem>>, vector<4x240xbf16>
    %c0_141 = arith.constant 0 : index
    %c0_142 = arith.constant 0 : index
    %194 = vector.load %arg6[%c0_141, %c0_142] : memref<240x256xbf16, #tpu.memory_space<vmem>>, vector<240x256xbf16>
    %cst_143 = arith.constant dense<0.000000e+00> : vector<4x256xf32>
    %195 = tpu.matmul %193, %194, %cst_143 {dimension_numbers = #tpu.dot_dimension_numbers<[1], [0], [0], [1], [0, 0, 1, 1], [], []>} : vector<4x240xbf16>, vector<240x256xbf16>, vector<4x256xf32> -> vector<4x256xf32>
    %c1_i32_144 = arith.constant 1 : i32
    %196 = tpu.dynamic_rotate %195 by %c1_i32_144 dim 1 : vector<4x256xf32>, i32 -> vector<4x256xf32>
    %197 = arith.mulf %196, %61 : vector<4x256xf32>
    %198 = arith.addf %192, %197 : vector<4x256xf32>
    %c112_145 = arith.constant 112 : index
    %c0_146 = arith.constant 0 : index
    %199 = vector.load %arg3[%c112_145, %c0_146] : memref<360x240xbf16, #tpu.memory_space<vmem>>, vector<4x240xbf16>
    %c0_147 = arith.constant 0 : index
    %c0_148 = arith.constant 0 : index
    %200 = vector.load %arg6[%c0_147, %c0_148] : memref<240x256xbf16, #tpu.memory_space<vmem>>, vector<240x256xbf16>
    %cst_149 = arith.constant dense<0.000000e+00> : vector<4x256xf32>
    %201 = tpu.matmul %199, %200, %cst_149 {dimension_numbers = #tpu.dot_dimension_numbers<[1], [0], [0], [1], [0, 0, 1, 1], [], []>} : vector<4x240xbf16>, vector<240x256xbf16>, vector<4x256xf32> -> vector<4x256xf32>
    %c255_i32_150 = arith.constant 255 : i32
    %202 = tpu.dynamic_rotate %201 by %c255_i32_150 dim 1 : vector<4x256xf32>, i32 -> vector<4x256xf32>
    %203 = arith.mulf %202, %70 : vector<4x256xf32>
    %204 = arith.addf %198, %203 : vector<4x256xf32>
    %cst_151 = arith.constant 2.000000e-01 : f32
    %205 = vector.broadcast %cst_151 : f32 to vector<4x256xf32>
    %206 = arith.mulf %204, %205 : vector<4x256xf32>
    %207 = arith.addf %206, %32 : vector<4x256xf32>
    %c16_i32_152 = arith.constant 16 : i32
    %208 = tpu.dynamic_rotate %207 by %c16_i32_152 dim 1 : vector<4x256xf32>, i32 -> vector<4x256xf32>
    %209 = arith.mulf %208, %36 : vector<4x256xf32>
    %210 = arith.truncf %209 : vector<4x256xf32> to vector<4x256xbf16>
    %c0_153 = arith.constant 0 : index
    %c0_154 = arith.constant 0 : index
    %211 = vector.load %arg6[%c0_153, %c0_154] : memref<240x256xbf16, #tpu.memory_space<vmem>>, vector<4x256xbf16>
    tpu.vector_store %arg6[%c0_153, %c0_154], %210 {strides = array<i32>} : memref<240x256xbf16, #tpu.memory_space<vmem>>, vector<4x256xbf16>,
    %212 = arith.truncf %207 : vector<4x256xf32> to vector<4x256xbf16>
    %c16_155 = arith.constant 16 : index
    %c0_156 = arith.constant 0 : index
    %213 = vector.load %arg6[%c16_155, %c0_156] : memref<240x256xbf16, #tpu.memory_space<vmem>>, vector<4x256xbf16>
    tpu.vector_store %arg6[%c16_155, %c0_156], %212 {strides = array<i32>} : memref<240x256xbf16, #tpu.memory_space<vmem>>, vector<4x256xbf16>,
    %c240_i32_157 = arith.constant 240 : i32
    %214 = tpu.dynamic_rotate %207 by %c240_i32_157 dim 1 : vector<4x256xf32>, i32 -> vector<4x256xf32>
    %215 = arith.mulf %214, %45 : vector<4x256xf32>
    %216 = arith.truncf %215 : vector<4x256xf32> to vector<4x256xbf16>
    %c32_158 = arith.constant 32 : index
    %c0_159 = arith.constant 0 : index
    %217 = vector.load %arg6[%c32_158, %c0_159] : memref<240x256xbf16, #tpu.memory_space<vmem>>, vector<4x256xbf16>
    tpu.vector_store %arg6[%c32_158, %c0_159], %216 {strides = array<i32>} : memref<240x256xbf16, #tpu.memory_space<vmem>>, vector<4x256xbf16>,
    %c40_160 = arith.constant 40 : index
    %c0_161 = arith.constant 0 : index
    %218 = vector.load %arg4[%c40_160, %c0_161] : memref<120x1xf32, #tpu.memory_space<vmem>>, vector<4x1xf32>
    %c128_162 = arith.constant 128 : index
    %c0_163 = arith.constant 0 : index
    %219 = vector.load %arg3[%c128_162, %c0_163] : memref<360x240xbf16, #tpu.memory_space<vmem>>, vector<4x48xbf16>
    %c0_164 = arith.constant 0 : index
    %c0_165 = arith.constant 0 : index
    %220 = vector.load %arg6[%c0_164, %c0_165] : memref<240x256xbf16, #tpu.memory_space<vmem>>, vector<48x256xbf16>
    %cst_166 = arith.constant dense<0.000000e+00> : vector<4x256xf32>
    %221 = tpu.matmul %219, %220, %cst_166 {dimension_numbers = #tpu.dot_dimension_numbers<[1], [0], [0], [1], [0, 0, 1, 1], [], []>} : vector<4x48xbf16>, vector<48x256xbf16>, vector<4x256xf32> -> vector<4x256xf32>
    %222 = vector.broadcast %218 : vector<4x1xf32> to vector<4x256xf32>
    %223 = arith.addf %221, %222 : vector<4x256xf32>
    %c120 = arith.constant 120 : index
    %c0_167 = arith.constant 0 : index
    %224 = vector.load %arg3[%c120, %c0_167] : memref<360x240xbf16, #tpu.memory_space<vmem>>, vector<4x48xbf16>
    %c0_168 = arith.constant 0 : index
    %c0_169 = arith.constant 0 : index
    %225 = vector.load %arg6[%c0_168, %c0_169] : memref<240x256xbf16, #tpu.memory_space<vmem>>, vector<48x256xbf16>
    %cst_170 = arith.constant dense<0.000000e+00> : vector<4x256xf32>
    %226 = tpu.matmul %224, %225, %cst_170 {dimension_numbers = #tpu.dot_dimension_numbers<[1], [0], [0], [1], [0, 0, 1, 1], [], []>} : vector<4x48xbf16>, vector<48x256xbf16>, vector<4x256xf32> -> vector<4x256xf32>
    %c1_i32_171 = arith.constant 1 : i32
    %227 = tpu.dynamic_rotate %226 by %c1_i32_171 dim 1 : vector<4x256xf32>, i32 -> vector<4x256xf32>
    %228 = arith.mulf %227, %61 : vector<4x256xf32>
    %229 = arith.addf %223, %228 : vector<4x256xf32>
    %c136 = arith.constant 136 : index
    %c0_172 = arith.constant 0 : index
    %230 = vector.load %arg3[%c136, %c0_172] : memref<360x240xbf16, #tpu.memory_space<vmem>>, vector<4x48xbf16>
    %c0_173 = arith.constant 0 : index
    %c0_174 = arith.constant 0 : index
    %231 = vector.load %arg6[%c0_173, %c0_174] : memref<240x256xbf16, #tpu.memory_space<vmem>>, vector<48x256xbf16>
    %cst_175 = arith.constant dense<0.000000e+00> : vector<4x256xf32>
    %232 = tpu.matmul %230, %231, %cst_175 {dimension_numbers = #tpu.dot_dimension_numbers<[1], [0], [0], [1], [0, 0, 1, 1], [], []>} : vector<4x48xbf16>, vector<48x256xbf16>, vector<4x256xf32> -> vector<4x256xf32>
    %c255_i32_176 = arith.constant 255 : i32
    %233 = tpu.dynamic_rotate %232 by %c255_i32_176 dim 1 : vector<4x256xf32>, i32 -> vector<4x256xf32>
    %234 = arith.mulf %233, %70 : vector<4x256xf32>
    %235 = arith.addf %229, %234 : vector<4x256xf32>
    %cst_177 = arith.constant 0.000000e+00 : f32
    %236 = vector.broadcast %cst_177 : f32 to vector<4x256xf32>
    %237 = arith.cmpf ogt, %235, %236 : vector<4x256xf32>
    %cst_178 = arith.constant 2.000000e-01 : f32
    %238 = vector.broadcast %cst_178 : f32 to vector<4x256xf32>
    %239 = arith.mulf %238, %235 : vector<4x256xf32>
    %240 = arith.select %237, %235, %239 : vector<4x256xi1>, vector<4x256xf32>
    %c16_i32_179 = arith.constant 16 : i32
    %241 = tpu.dynamic_rotate %240 by %c16_i32_179 dim 1 : vector<4x256xf32>, i32 -> vector<4x256xf32>
    %242 = arith.mulf %241, %36 : vector<4x256xf32>
    %243 = arith.truncf %242 : vector<4x256xf32> to vector<4x256xbf16>
    %c48_180 = arith.constant 48 : index
    %c0_181 = arith.constant 0 : index
    %244 = vector.load %arg6[%c48_180, %c0_181] : memref<240x256xbf16, #tpu.memory_space<vmem>>, vector<4x256xbf16>
    tpu.vector_store %arg6[%c48_180, %c0_181], %243 {strides = array<i32>} : memref<240x256xbf16, #tpu.memory_space<vmem>>, vector<4x256xbf16>,
    %245 = arith.truncf %240 : vector<4x256xf32> to vector<4x256xbf16>
    %c64_182 = arith.constant 64 : index
    %c0_183 = arith.constant 0 : index
    %246 = vector.load %arg6[%c64_182, %c0_183] : memref<240x256xbf16, #tpu.memory_space<vmem>>, vector<4x256xbf16>
    tpu.vector_store %arg6[%c64_182, %c0_183], %245 {strides = array<i32>} : memref<240x256xbf16, #tpu.memory_space<vmem>>, vector<4x256xbf16>,
    %c240_i32_184 = arith.constant 240 : i32
    %247 = tpu.dynamic_rotate %240 by %c240_i32_184 dim 1 : vector<4x256xf32>, i32 -> vector<4x256xf32>
    %248 = arith.mulf %247, %45 : vector<4x256xf32>
    %249 = arith.truncf %248 : vector<4x256xf32> to vector<4x256xbf16>
    %c80_185 = arith.constant 80 : index
    %c0_186 = arith.constant 0 : index
    %250 = vector.load %arg6[%c80_185, %c0_186] : memref<240x256xbf16, #tpu.memory_space<vmem>>, vector<4x256xbf16>
    tpu.vector_store %arg6[%c80_185, %c0_186], %249 {strides = array<i32>} : memref<240x256xbf16, #tpu.memory_space<vmem>>, vector<4x256xbf16>,
    %c48_187 = arith.constant 48 : index
    %c0_188 = arith.constant 0 : index
    %251 = vector.load %arg4[%c48_187, %c0_188] : memref<120x1xf32, #tpu.memory_space<vmem>>, vector<4x1xf32>
    %c152 = arith.constant 152 : index
    %c0_189 = arith.constant 0 : index
    %252 = vector.load %arg3[%c152, %c0_189] : memref<360x240xbf16, #tpu.memory_space<vmem>>, vector<4x96xbf16>
    %c0_190 = arith.constant 0 : index
    %c0_191 = arith.constant 0 : index
    %253 = vector.load %arg6[%c0_190, %c0_191] : memref<240x256xbf16, #tpu.memory_space<vmem>>, vector<96x256xbf16>
    %cst_192 = arith.constant dense<0.000000e+00> : vector<4x256xf32>
    %254 = tpu.matmul %252, %253, %cst_192 {dimension_numbers = #tpu.dot_dimension_numbers<[1], [0], [0], [1], [0, 0, 1, 1], [], []>} : vector<4x96xbf16>, vector<96x256xbf16>, vector<4x256xf32> -> vector<4x256xf32>
    %255 = vector.broadcast %251 : vector<4x1xf32> to vector<4x256xf32>
    %256 = arith.addf %254, %255 : vector<4x256xf32>
    %c144_193 = arith.constant 144 : index
    %c0_194 = arith.constant 0 : index
    %257 = vector.load %arg3[%c144_193, %c0_194] : memref<360x240xbf16, #tpu.memory_space<vmem>>, vector<4x96xbf16>
    %c0_195 = arith.constant 0 : index
    %c0_196 = arith.constant 0 : index
    %258 = vector.load %arg6[%c0_195, %c0_196] : memref<240x256xbf16, #tpu.memory_space<vmem>>, vector<96x256xbf16>
    %cst_197 = arith.constant dense<0.000000e+00> : vector<4x256xf32>
    %259 = tpu.matmul %257, %258, %cst_197 {dimension_numbers = #tpu.dot_dimension_numbers<[1], [0], [0], [1], [0, 0, 1, 1], [], []>} : vector<4x96xbf16>, vector<96x256xbf16>, vector<4x256xf32> -> vector<4x256xf32>
    %c1_i32_198 = arith.constant 1 : i32
    %260 = tpu.dynamic_rotate %259 by %c1_i32_198 dim 1 : vector<4x256xf32>, i32 -> vector<4x256xf32>
    %261 = arith.mulf %260, %61 : vector<4x256xf32>
    %262 = arith.addf %256, %261 : vector<4x256xf32>
    %c160_199 = arith.constant 160 : index
    %c0_200 = arith.constant 0 : index
    %263 = vector.load %arg3[%c160_199, %c0_200] : memref<360x240xbf16, #tpu.memory_space<vmem>>, vector<4x96xbf16>
    %c0_201 = arith.constant 0 : index
    %c0_202 = arith.constant 0 : index
    %264 = vector.load %arg6[%c0_201, %c0_202] : memref<240x256xbf16, #tpu.memory_space<vmem>>, vector<96x256xbf16>
    %cst_203 = arith.constant dense<0.000000e+00> : vector<4x256xf32>
    %265 = tpu.matmul %263, %264, %cst_203 {dimension_numbers = #tpu.dot_dimension_numbers<[1], [0], [0], [1], [0, 0, 1, 1], [], []>} : vector<4x96xbf16>, vector<96x256xbf16>, vector<4x256xf32> -> vector<4x256xf32>
    %c255_i32_204 = arith.constant 255 : i32
    %266 = tpu.dynamic_rotate %265 by %c255_i32_204 dim 1 : vector<4x256xf32>, i32 -> vector<4x256xf32>
    %267 = arith.mulf %266, %70 : vector<4x256xf32>
    %268 = arith.addf %262, %267 : vector<4x256xf32>
    %cst_205 = arith.constant 0.000000e+00 : f32
    %269 = vector.broadcast %cst_205 : f32 to vector<4x256xf32>
    %270 = arith.cmpf ogt, %268, %269 : vector<4x256xf32>
    %cst_206 = arith.constant 2.000000e-01 : f32
    %271 = vector.broadcast %cst_206 : f32 to vector<4x256xf32>
    %272 = arith.mulf %271, %268 : vector<4x256xf32>
    %273 = arith.select %270, %268, %272 : vector<4x256xi1>, vector<4x256xf32>
    %c16_i32_207 = arith.constant 16 : i32
    %274 = tpu.dynamic_rotate %273 by %c16_i32_207 dim 1 : vector<4x256xf32>, i32 -> vector<4x256xf32>
    %275 = arith.mulf %274, %36 : vector<4x256xf32>
    %276 = arith.truncf %275 : vector<4x256xf32> to vector<4x256xbf16>
    %c96_208 = arith.constant 96 : index
    %c0_209 = arith.constant 0 : index
    %277 = vector.load %arg6[%c96_208, %c0_209] : memref<240x256xbf16, #tpu.memory_space<vmem>>, vector<4x256xbf16>
    tpu.vector_store %arg6[%c96_208, %c0_209], %276 {strides = array<i32>} : memref<240x256xbf16, #tpu.memory_space<vmem>>, vector<4x256xbf16>,
    %278 = arith.truncf %273 : vector<4x256xf32> to vector<4x256xbf16>
    %c112_210 = arith.constant 112 : index
    %c0_211 = arith.constant 0 : index
    %279 = vector.load %arg6[%c112_210, %c0_211] : memref<240x256xbf16, #tpu.memory_space<vmem>>, vector<4x256xbf16>
    tpu.vector_store %arg6[%c112_210, %c0_211], %278 {strides = array<i32>} : memref<240x256xbf16, #tpu.memory_space<vmem>>, vector<4x256xbf16>,
    %c240_i32_212 = arith.constant 240 : i32
    %280 = tpu.dynamic_rotate %273 by %c240_i32_212 dim 1 : vector<4x256xf32>, i32 -> vector<4x256xf32>
    %281 = arith.mulf %280, %45 : vector<4x256xf32>
    %282 = arith.truncf %281 : vector<4x256xf32> to vector<4x256xbf16>
    %c128_213 = arith.constant 128 : index
    %c0_214 = arith.constant 0 : index
    %283 = vector.load %arg6[%c128_213, %c0_214] : memref<240x256xbf16, #tpu.memory_space<vmem>>, vector<4x256xbf16>
    tpu.vector_store %arg6[%c128_213, %c0_214], %282 {strides = array<i32>} : memref<240x256xbf16, #tpu.memory_space<vmem>>, vector<4x256xbf16>,
    %c56_215 = arith.constant 56 : index
    %c0_216 = arith.constant 0 : index
    %284 = vector.load %arg4[%c56_215, %c0_216] : memref<120x1xf32, #tpu.memory_space<vmem>>, vector<4x1xf32>
    %c176_217 = arith.constant 176 : index
    %c0_218 = arith.constant 0 : index
    %285 = vector.load %arg3[%c176_217, %c0_218] : memref<360x240xbf16, #tpu.memory_space<vmem>>, vector<4x144xbf16>
    %c0_219 = arith.constant 0 : index
    %c0_220 = arith.constant 0 : index
    %286 = vector.load %arg6[%c0_219, %c0_220] : memref<240x256xbf16, #tpu.memory_space<vmem>>, vector<144x256xbf16>
    %cst_221 = arith.constant dense<0.000000e+00> : vector<4x256xf32>
    %287 = tpu.matmul %285, %286, %cst_221 {dimension_numbers = #tpu.dot_dimension_numbers<[1], [0], [0], [1], [0, 0, 1, 1], [], []>} : vector<4x144xbf16>, vector<144x256xbf16>, vector<4x256xf32> -> vector<4x256xf32>
    %288 = vector.broadcast %284 : vector<4x1xf32> to vector<4x256xf32>
    %289 = arith.addf %287, %288 : vector<4x256xf32>
    %c168 = arith.constant 168 : index
    %c0_222 = arith.constant 0 : index
    %290 = vector.load %arg3[%c168, %c0_222] : memref<360x240xbf16, #tpu.memory_space<vmem>>, vector<4x144xbf16>
    %c0_223 = arith.constant 0 : index
    %c0_224 = arith.constant 0 : index
    %291 = vector.load %arg6[%c0_223, %c0_224] : memref<240x256xbf16, #tpu.memory_space<vmem>>, vector<144x256xbf16>
    %cst_225 = arith.constant dense<0.000000e+00> : vector<4x256xf32>
    %292 = tpu.matmul %290, %291, %cst_225 {dimension_numbers = #tpu.dot_dimension_numbers<[1], [0], [0], [1], [0, 0, 1, 1], [], []>} : vector<4x144xbf16>, vector<144x256xbf16>, vector<4x256xf32> -> vector<4x256xf32>
    %c1_i32_226 = arith.constant 1 : i32
    %293 = tpu.dynamic_rotate %292 by %c1_i32_226 dim 1 : vector<4x256xf32>, i32 -> vector<4x256xf32>
    %294 = arith.mulf %293, %61 : vector<4x256xf32>
    %295 = arith.addf %289, %294 : vector<4x256xf32>
    %c184 = arith.constant 184 : index
    %c0_227 = arith.constant 0 : index
    %296 = vector.load %arg3[%c184, %c0_227] : memref<360x240xbf16, #tpu.memory_space<vmem>>, vector<4x144xbf16>
    %c0_228 = arith.constant 0 : index
    %c0_229 = arith.constant 0 : index
    %297 = vector.load %arg6[%c0_228, %c0_229] : memref<240x256xbf16, #tpu.memory_space<vmem>>, vector<144x256xbf16>
    %cst_230 = arith.constant dense<0.000000e+00> : vector<4x256xf32>
    %298 = tpu.matmul %296, %297, %cst_230 {dimension_numbers = #tpu.dot_dimension_numbers<[1], [0], [0], [1], [0, 0, 1, 1], [], []>} : vector<4x144xbf16>, vector<144x256xbf16>, vector<4x256xf32> -> vector<4x256xf32>
    %c255_i32_231 = arith.constant 255 : i32
    %299 = tpu.dynamic_rotate %298 by %c255_i32_231 dim 1 : vector<4x256xf32>, i32 -> vector<4x256xf32>
    %300 = arith.mulf %299, %70 : vector<4x256xf32>
    %301 = arith.addf %295, %300 : vector<4x256xf32>
    %cst_232 = arith.constant 0.000000e+00 : f32
    %302 = vector.broadcast %cst_232 : f32 to vector<4x256xf32>
    %303 = arith.cmpf ogt, %301, %302 : vector<4x256xf32>
    %cst_233 = arith.constant 2.000000e-01 : f32
    %304 = vector.broadcast %cst_233 : f32 to vector<4x256xf32>
    %305 = arith.mulf %304, %301 : vector<4x256xf32>
    %306 = arith.select %303, %301, %305 : vector<4x256xi1>, vector<4x256xf32>
    %c16_i32_234 = arith.constant 16 : i32
    %307 = tpu.dynamic_rotate %306 by %c16_i32_234 dim 1 : vector<4x256xf32>, i32 -> vector<4x256xf32>
    %308 = arith.mulf %307, %36 : vector<4x256xf32>
    %309 = arith.truncf %308 : vector<4x256xf32> to vector<4x256xbf16>
    %c144_235 = arith.constant 144 : index
    %c0_236 = arith.constant 0 : index
    %310 = vector.load %arg6[%c144_235, %c0_236] : memref<240x256xbf16, #tpu.memory_space<vmem>>, vector<4x256xbf16>
    tpu.vector_store %arg6[%c144_235, %c0_236], %309 {strides = array<i32>} : memref<240x256xbf16, #tpu.memory_space<vmem>>, vector<4x256xbf16>,
    %311 = arith.truncf %306 : vector<4x256xf32> to vector<4x256xbf16>
    %c160_237 = arith.constant 160 : index
    %c0_238 = arith.constant 0 : index
    %312 = vector.load %arg6[%c160_237, %c0_238] : memref<240x256xbf16, #tpu.memory_space<vmem>>, vector<4x256xbf16>
    tpu.vector_store %arg6[%c160_237, %c0_238], %311 {strides = array<i32>} : memref<240x256xbf16, #tpu.memory_space<vmem>>, vector<4x256xbf16>,
    %c240_i32_239 = arith.constant 240 : i32
    %313 = tpu.dynamic_rotate %306 by %c240_i32_239 dim 1 : vector<4x256xf32>, i32 -> vector<4x256xf32>
    %314 = arith.mulf %313, %45 : vector<4x256xf32>
    %315 = arith.truncf %314 : vector<4x256xf32> to vector<4x256xbf16>
    %c176_240 = arith.constant 176 : index
    %c0_241 = arith.constant 0 : index
    %316 = vector.load %arg6[%c176_240, %c0_241] : memref<240x256xbf16, #tpu.memory_space<vmem>>, vector<4x256xbf16>
    tpu.vector_store %arg6[%c176_240, %c0_241], %315 {strides = array<i32>} : memref<240x256xbf16, #tpu.memory_space<vmem>>, vector<4x256xbf16>,
    %c64_242 = arith.constant 64 : index
    %c0_243 = arith.constant 0 : index
    %317 = vector.load %arg4[%c64_242, %c0_243] : memref<120x1xf32, #tpu.memory_space<vmem>>, vector<4x1xf32>
    %c200 = arith.constant 200 : index
    %c0_244 = arith.constant 0 : index
    %318 = vector.load %arg3[%c200, %c0_244] : memref<360x240xbf16, #tpu.memory_space<vmem>>, vector<4x192xbf16>
    %c0_245 = arith.constant 0 : index
    %c0_246 = arith.constant 0 : index
    %319 = vector.load %arg6[%c0_245, %c0_246] : memref<240x256xbf16, #tpu.memory_space<vmem>>, vector<192x256xbf16>
    %cst_247 = arith.constant dense<0.000000e+00> : vector<4x256xf32>
    %320 = tpu.matmul %318, %319, %cst_247 {dimension_numbers = #tpu.dot_dimension_numbers<[1], [0], [0], [1], [0, 0, 1, 1], [], []>} : vector<4x192xbf16>, vector<192x256xbf16>, vector<4x256xf32> -> vector<4x256xf32>
    %321 = vector.broadcast %317 : vector<4x1xf32> to vector<4x256xf32>
    %322 = arith.addf %320, %321 : vector<4x256xf32>
    %c192_248 = arith.constant 192 : index
    %c0_249 = arith.constant 0 : index
    %323 = vector.load %arg3[%c192_248, %c0_249] : memref<360x240xbf16, #tpu.memory_space<vmem>>, vector<4x192xbf16>
    %c0_250 = arith.constant 0 : index
    %c0_251 = arith.constant 0 : index
    %324 = vector.load %arg6[%c0_250, %c0_251] : memref<240x256xbf16, #tpu.memory_space<vmem>>, vector<192x256xbf16>
    %cst_252 = arith.constant dense<0.000000e+00> : vector<4x256xf32>
    %325 = tpu.matmul %323, %324, %cst_252 {dimension_numbers = #tpu.dot_dimension_numbers<[1], [0], [0], [1], [0, 0, 1, 1], [], []>} : vector<4x192xbf16>, vector<192x256xbf16>, vector<4x256xf32> -> vector<4x256xf32>
    %c1_i32_253 = arith.constant 1 : i32
    %326 = tpu.dynamic_rotate %325 by %c1_i32_253 dim 1 : vector<4x256xf32>, i32 -> vector<4x256xf32>
    %327 = arith.mulf %326, %61 : vector<4x256xf32>
    %328 = arith.addf %322, %327 : vector<4x256xf32>
    %c208_254 = arith.constant 208 : index
    %c0_255 = arith.constant 0 : index
    %329 = vector.load %arg3[%c208_254, %c0_255] : memref<360x240xbf16, #tpu.memory_space<vmem>>, vector<4x192xbf16>
    %c0_256 = arith.constant 0 : index
    %c0_257 = arith.constant 0 : index
    %330 = vector.load %arg6[%c0_256, %c0_257] : memref<240x256xbf16, #tpu.memory_space<vmem>>, vector<192x256xbf16>
    %cst_258 = arith.constant dense<0.000000e+00> : vector<4x256xf32>
    %331 = tpu.matmul %329, %330, %cst_258 {dimension_numbers = #tpu.dot_dimension_numbers<[1], [0], [0], [1], [0, 0, 1, 1], [], []>} : vector<4x192xbf16>, vector<192x256xbf16>, vector<4x256xf32> -> vector<4x256xf32>
    %c255_i32_259 = arith.constant 255 : i32
    %332 = tpu.dynamic_rotate %331 by %c255_i32_259 dim 1 : vector<4x256xf32>, i32 -> vector<4x256xf32>
    %333 = arith.mulf %332, %70 : vector<4x256xf32>
    %334 = arith.addf %328, %333 : vector<4x256xf32>
    %cst_260 = arith.constant 0.000000e+00 : f32
    %335 = vector.broadcast %cst_260 : f32 to vector<4x256xf32>
    %336 = arith.cmpf ogt, %334, %335 : vector<4x256xf32>
    %cst_261 = arith.constant 2.000000e-01 : f32
    %337 = vector.broadcast %cst_261 : f32 to vector<4x256xf32>
    %338 = arith.mulf %337, %334 : vector<4x256xf32>
    %339 = arith.select %336, %334, %338 : vector<4x256xi1>, vector<4x256xf32>
    %c16_i32_262 = arith.constant 16 : i32
    %340 = tpu.dynamic_rotate %339 by %c16_i32_262 dim 1 : vector<4x256xf32>, i32 -> vector<4x256xf32>
    %341 = arith.mulf %340, %36 : vector<4x256xf32>
    %342 = arith.truncf %341 : vector<4x256xf32> to vector<4x256xbf16>
    %c192_263 = arith.constant 192 : index
    %c0_264 = arith.constant 0 : index
    %343 = vector.load %arg6[%c192_263, %c0_264] : memref<240x256xbf16, #tpu.memory_space<vmem>>, vector<4x256xbf16>
    tpu.vector_store %arg6[%c192_263, %c0_264], %342 {strides = array<i32>} : memref<240x256xbf16, #tpu.memory_space<vmem>>, vector<4x256xbf16>,
    %344 = arith.truncf %339 : vector<4x256xf32> to vector<4x256xbf16>
    %c208_265 = arith.constant 208 : index
    %c0_266 = arith.constant 0 : index
    %345 = vector.load %arg6[%c208_265, %c0_266] : memref<240x256xbf16, #tpu.memory_space<vmem>>, vector<4x256xbf16>
    tpu.vector_store %arg6[%c208_265, %c0_266], %344 {strides = array<i32>} : memref<240x256xbf16, #tpu.memory_space<vmem>>, vector<4x256xbf16>,
    %c240_i32_267 = arith.constant 240 : i32
    %346 = tpu.dynamic_rotate %339 by %c240_i32_267 dim 1 : vector<4x256xf32>, i32 -> vector<4x256xf32>
    %347 = arith.mulf %346, %45 : vector<4x256xf32>
    %348 = arith.truncf %347 : vector<4x256xf32> to vector<4x256xbf16>
    %c224_268 = arith.constant 224 : index
    %c0_269 = arith.constant 0 : index
    %349 = vector.load %arg6[%c224_268, %c0_269] : memref<240x256xbf16, #tpu.memory_space<vmem>>, vector<4x256xbf16>
    tpu.vector_store %arg6[%c224_268, %c0_269], %348 {strides = array<i32>} : memref<240x256xbf16, #tpu.memory_space<vmem>>, vector<4x256xbf16>,
    %c72_270 = arith.constant 72 : index
    %c0_271 = arith.constant 0 : index
    %350 = vector.load %arg4[%c72_270, %c0_271] : memref<120x1xf32, #tpu.memory_space<vmem>>, vector<4x1xf32>
    %c224_272 = arith.constant 224 : index
    %c0_273 = arith.constant 0 : index
    %351 = vector.load %arg3[%c224_272, %c0_273] : memref<360x240xbf16, #tpu.memory_space<vmem>>, vector<4x240xbf16>
    %c0_274 = arith.constant 0 : index
    %c0_275 = arith.constant 0 : index
    %352 = vector.load %arg6[%c0_274, %c0_275] : memref<240x256xbf16, #tpu.memory_space<vmem>>, vector<240x256xbf16>
    %cst_276 = arith.constant dense<0.000000e+00> : vector<4x256xf32>
    %353 = tpu.matmul %351, %352, %cst_276 {dimension_numbers = #tpu.dot_dimension_numbers<[1], [0], [0], [1], [0, 0, 1, 1], [], []>} : vector<4x240xbf16>, vector<240x256xbf16>, vector<4x256xf32> -> vector<4x256xf32>
    %354 = vector.broadcast %350 : vector<4x1xf32> to vector<4x256xf32>
    %355 = arith.addf %353, %354 : vector<4x256xf32>
    %c216 = arith.constant 216 : index
    %c0_277 = arith.constant 0 : index
    %356 = vector.load %arg3[%c216, %c0_277] : memref<360x240xbf16, #tpu.memory_space<vmem>>, vector<4x240xbf16>
    %c0_278 = arith.constant 0 : index
    %c0_279 = arith.constant 0 : index
    %357 = vector.load %arg6[%c0_278, %c0_279] : memref<240x256xbf16, #tpu.memory_space<vmem>>, vector<240x256xbf16>
    %cst_280 = arith.constant dense<0.000000e+00> : vector<4x256xf32>
    %358 = tpu.matmul %356, %357, %cst_280 {dimension_numbers = #tpu.dot_dimension_numbers<[1], [0], [0], [1], [0, 0, 1, 1], [], []>} : vector<4x240xbf16>, vector<240x256xbf16>, vector<4x256xf32> -> vector<4x256xf32>
    %c1_i32_281 = arith.constant 1 : i32
    %359 = tpu.dynamic_rotate %358 by %c1_i32_281 dim 1 : vector<4x256xf32>, i32 -> vector<4x256xf32>
    %360 = arith.mulf %359, %61 : vector<4x256xf32>
    %361 = arith.addf %355, %360 : vector<4x256xf32>
    %c232 = arith.constant 232 : index
    %c0_282 = arith.constant 0 : index
    %362 = vector.load %arg3[%c232, %c0_282] : memref<360x240xbf16, #tpu.memory_space<vmem>>, vector<4x240xbf16>
    %c0_283 = arith.constant 0 : index
    %c0_284 = arith.constant 0 : index
    %363 = vector.load %arg6[%c0_283, %c0_284] : memref<240x256xbf16, #tpu.memory_space<vmem>>, vector<240x256xbf16>
    %cst_285 = arith.constant dense<0.000000e+00> : vector<4x256xf32>
    %364 = tpu.matmul %362, %363, %cst_285 {dimension_numbers = #tpu.dot_dimension_numbers<[1], [0], [0], [1], [0, 0, 1, 1], [], []>} : vector<4x240xbf16>, vector<240x256xbf16>, vector<4x256xf32> -> vector<4x256xf32>
    %c255_i32_286 = arith.constant 255 : i32
    %365 = tpu.dynamic_rotate %364 by %c255_i32_286 dim 1 : vector<4x256xf32>, i32 -> vector<4x256xf32>
    %366 = arith.mulf %365, %70 : vector<4x256xf32>
    %367 = arith.addf %361, %366 : vector<4x256xf32>
    %cst_287 = arith.constant 2.000000e-01 : f32
    %368 = vector.broadcast %cst_287 : f32 to vector<4x256xf32>
    %369 = arith.mulf %367, %368 : vector<4x256xf32>
    %370 = arith.addf %369, %207 : vector<4x256xf32>
    %c16_i32_288 = arith.constant 16 : i32
    %371 = tpu.dynamic_rotate %370 by %c16_i32_288 dim 1 : vector<4x256xf32>, i32 -> vector<4x256xf32>
    %372 = arith.mulf %371, %36 : vector<4x256xf32>
    %373 = arith.truncf %372 : vector<4x256xf32> to vector<4x256xbf16>
    %c0_289 = arith.constant 0 : index
    %c0_290 = arith.constant 0 : index
    %374 = vector.load %arg6[%c0_289, %c0_290] : memref<240x256xbf16, #tpu.memory_space<vmem>>, vector<4x256xbf16>
    tpu.vector_store %arg6[%c0_289, %c0_290], %373 {strides = array<i32>} : memref<240x256xbf16, #tpu.memory_space<vmem>>, vector<4x256xbf16>,
    %375 = arith.truncf %370 : vector<4x256xf32> to vector<4x256xbf16>
    %c16_291 = arith.constant 16 : index
    %c0_292 = arith.constant 0 : index
    %376 = vector.load %arg6[%c16_291, %c0_292] : memref<240x256xbf16, #tpu.memory_space<vmem>>, vector<4x256xbf16>
    tpu.vector_store %arg6[%c16_291, %c0_292], %375 {strides = array<i32>} : memref<240x256xbf16, #tpu.memory_space<vmem>>, vector<4x256xbf16>,
    %c240_i32_293 = arith.constant 240 : i32
    %377 = tpu.dynamic_rotate %370 by %c240_i32_293 dim 1 : vector<4x256xf32>, i32 -> vector<4x256xf32>
    %378 = arith.mulf %377, %45 : vector<4x256xf32>
    %379 = arith.truncf %378 : vector<4x256xf32> to vector<4x256xbf16>
    %c32_294 = arith.constant 32 : index
    %c0_295 = arith.constant 0 : index
    %380 = vector.load %arg6[%c32_294, %c0_295] : memref<240x256xbf16, #tpu.memory_space<vmem>>, vector<4x256xbf16>
    tpu.vector_store %arg6[%c32_294, %c0_295], %379 {strides = array<i32>} : memref<240x256xbf16, #tpu.memory_space<vmem>>, vector<4x256xbf16>,
    %c80_296 = arith.constant 80 : index
    %c0_297 = arith.constant 0 : index
    %381 = vector.load %arg4[%c80_296, %c0_297] : memref<120x1xf32, #tpu.memory_space<vmem>>, vector<4x1xf32>
    %c248 = arith.constant 248 : index
    %c0_298 = arith.constant 0 : index
    %382 = vector.load %arg3[%c248, %c0_298] : memref<360x240xbf16, #tpu.memory_space<vmem>>, vector<4x48xbf16>
    %c0_299 = arith.constant 0 : index
    %c0_300 = arith.constant 0 : index
    %383 = vector.load %arg6[%c0_299, %c0_300] : memref<240x256xbf16, #tpu.memory_space<vmem>>, vector<48x256xbf16>
    %cst_301 = arith.constant dense<0.000000e+00> : vector<4x256xf32>
    %384 = tpu.matmul %382, %383, %cst_301 {dimension_numbers = #tpu.dot_dimension_numbers<[1], [0], [0], [1], [0, 0, 1, 1], [], []>} : vector<4x48xbf16>, vector<48x256xbf16>, vector<4x256xf32> -> vector<4x256xf32>
    %385 = vector.broadcast %381 : vector<4x1xf32> to vector<4x256xf32>
    %386 = arith.addf %384, %385 : vector<4x256xf32>
    %c240 = arith.constant 240 : index
    %c0_302 = arith.constant 0 : index
    %387 = vector.load %arg3[%c240, %c0_302] : memref<360x240xbf16, #tpu.memory_space<vmem>>, vector<4x48xbf16>
    %c0_303 = arith.constant 0 : index
    %c0_304 = arith.constant 0 : index
    %388 = vector.load %arg6[%c0_303, %c0_304] : memref<240x256xbf16, #tpu.memory_space<vmem>>, vector<48x256xbf16>
    %cst_305 = arith.constant dense<0.000000e+00> : vector<4x256xf32>
    %389 = tpu.matmul %387, %388, %cst_305 {dimension_numbers = #tpu.dot_dimension_numbers<[1], [0], [0], [1], [0, 0, 1, 1], [], []>} : vector<4x48xbf16>, vector<48x256xbf16>, vector<4x256xf32> -> vector<4x256xf32>
    %c1_i32_306 = arith.constant 1 : i32
    %390 = tpu.dynamic_rotate %389 by %c1_i32_306 dim 1 : vector<4x256xf32>, i32 -> vector<4x256xf32>
    %391 = arith.mulf %390, %61 : vector<4x256xf32>
    %392 = arith.addf %386, %391 : vector<4x256xf32>
    %c256 = arith.constant 256 : index
    %c0_307 = arith.constant 0 : index
    %393 = vector.load %arg3[%c256, %c0_307] : memref<360x240xbf16, #tpu.memory_space<vmem>>, vector<4x48xbf16>
    %c0_308 = arith.constant 0 : index
    %c0_309 = arith.constant 0 : index
    %394 = vector.load %arg6[%c0_308, %c0_309] : memref<240x256xbf16, #tpu.memory_space<vmem>>, vector<48x256xbf16>
    %cst_310 = arith.constant dense<0.000000e+00> : vector<4x256xf32>
    %395 = tpu.matmul %393, %394, %cst_310 {dimension_numbers = #tpu.dot_dimension_numbers<[1], [0], [0], [1], [0, 0, 1, 1], [], []>} : vector<4x48xbf16>, vector<48x256xbf16>, vector<4x256xf32> -> vector<4x256xf32>
    %c255_i32_311 = arith.constant 255 : i32
    %396 = tpu.dynamic_rotate %395 by %c255_i32_311 dim 1 : vector<4x256xf32>, i32 -> vector<4x256xf32>
    %397 = arith.mulf %396, %70 : vector<4x256xf32>
    %398 = arith.addf %392, %397 : vector<4x256xf32>
    %cst_312 = arith.constant 0.000000e+00 : f32
    %399 = vector.broadcast %cst_312 : f32 to vector<4x256xf32>
    %400 = arith.cmpf ogt, %398, %399 : vector<4x256xf32>
    %cst_313 = arith.constant 2.000000e-01 : f32
    %401 = vector.broadcast %cst_313 : f32 to vector<4x256xf32>
    %402 = arith.mulf %401, %398 : vector<4x256xf32>
    %403 = arith.select %400, %398, %402 : vector<4x256xi1>, vector<4x256xf32>
    %c16_i32_314 = arith.constant 16 : i32
    %404 = tpu.dynamic_rotate %403 by %c16_i32_314 dim 1 : vector<4x256xf32>, i32 -> vector<4x256xf32>
    %405 = arith.mulf %404, %36 : vector<4x256xf32>
    %406 = arith.truncf %405 : vector<4x256xf32> to vector<4x256xbf16>
    %c48_315 = arith.constant 48 : index
    %c0_316 = arith.constant 0 : index
    %407 = vector.load %arg6[%c48_315, %c0_316] : memref<240x256xbf16, #tpu.memory_space<vmem>>, vector<4x256xbf16>
    tpu.vector_store %arg6[%c48_315, %c0_316], %406 {strides = array<i32>} : memref<240x256xbf16, #tpu.memory_space<vmem>>, vector<4x256xbf16>,
    %408 = arith.truncf %403 : vector<4x256xf32> to vector<4x256xbf16>
    %c64_317 = arith.constant 64 : index
    %c0_318 = arith.constant 0 : index
    %409 = vector.load %arg6[%c64_317, %c0_318] : memref<240x256xbf16, #tpu.memory_space<vmem>>, vector<4x256xbf16>
    tpu.vector_store %arg6[%c64_317, %c0_318], %408 {strides = array<i32>} : memref<240x256xbf16, #tpu.memory_space<vmem>>, vector<4x256xbf16>,
    %c240_i32_319 = arith.constant 240 : i32
    %410 = tpu.dynamic_rotate %403 by %c240_i32_319 dim 1 : vector<4x256xf32>, i32 -> vector<4x256xf32>
    %411 = arith.mulf %410, %45 : vector<4x256xf32>
    %412 = arith.truncf %411 : vector<4x256xf32> to vector<4x256xbf16>
    %c80_320 = arith.constant 80 : index
    %c0_321 = arith.constant 0 : index
    %413 = vector.load %arg6[%c80_320, %c0_321] : memref<240x256xbf16, #tpu.memory_space<vmem>>, vector<4x256xbf16>
    tpu.vector_store %arg6[%c80_320, %c0_321], %412 {strides = array<i32>} : memref<240x256xbf16, #tpu.memory_space<vmem>>, vector<4x256xbf16>,
    %c88_322 = arith.constant 88 : index
    %c0_323 = arith.constant 0 : index
    %414 = vector.load %arg4[%c88_322, %c0_323] : memref<120x1xf32, #tpu.memory_space<vmem>>, vector<4x1xf32>
    %c272 = arith.constant 272 : index
    %c0_324 = arith.constant 0 : index
    %415 = vector.load %arg3[%c272, %c0_324] : memref<360x240xbf16, #tpu.memory_space<vmem>>, vector<4x96xbf16>
    %c0_325 = arith.constant 0 : index
    %c0_326 = arith.constant 0 : index
    %416 = vector.load %arg6[%c0_325, %c0_326] : memref<240x256xbf16, #tpu.memory_space<vmem>>, vector<96x256xbf16>
    %cst_327 = arith.constant dense<0.000000e+00> : vector<4x256xf32>
    %417 = tpu.matmul %415, %416, %cst_327 {dimension_numbers = #tpu.dot_dimension_numbers<[1], [0], [0], [1], [0, 0, 1, 1], [], []>} : vector<4x96xbf16>, vector<96x256xbf16>, vector<4x256xf32> -> vector<4x256xf32>
    %418 = vector.broadcast %414 : vector<4x1xf32> to vector<4x256xf32>
    %419 = arith.addf %417, %418 : vector<4x256xf32>
    %c264 = arith.constant 264 : index
    %c0_328 = arith.constant 0 : index
    %420 = vector.load %arg3[%c264, %c0_328] : memref<360x240xbf16, #tpu.memory_space<vmem>>, vector<4x96xbf16>
    %c0_329 = arith.constant 0 : index
    %c0_330 = arith.constant 0 : index
    %421 = vector.load %arg6[%c0_329, %c0_330] : memref<240x256xbf16, #tpu.memory_space<vmem>>, vector<96x256xbf16>
    %cst_331 = arith.constant dense<0.000000e+00> : vector<4x256xf32>
    %422 = tpu.matmul %420, %421, %cst_331 {dimension_numbers = #tpu.dot_dimension_numbers<[1], [0], [0], [1], [0, 0, 1, 1], [], []>} : vector<4x96xbf16>, vector<96x256xbf16>, vector<4x256xf32> -> vector<4x256xf32>
    %c1_i32_332 = arith.constant 1 : i32
    %423 = tpu.dynamic_rotate %422 by %c1_i32_332 dim 1 : vector<4x256xf32>, i32 -> vector<4x256xf32>
    %424 = arith.mulf %423, %61 : vector<4x256xf32>
    %425 = arith.addf %419, %424 : vector<4x256xf32>
    %c280 = arith.constant 280 : index
    %c0_333 = arith.constant 0 : index
    %426 = vector.load %arg3[%c280, %c0_333] : memref<360x240xbf16, #tpu.memory_space<vmem>>, vector<4x96xbf16>
    %c0_334 = arith.constant 0 : index
    %c0_335 = arith.constant 0 : index
    %427 = vector.load %arg6[%c0_334, %c0_335] : memref<240x256xbf16, #tpu.memory_space<vmem>>, vector<96x256xbf16>
    %cst_336 = arith.constant dense<0.000000e+00> : vector<4x256xf32>
    %428 = tpu.matmul %426, %427, %cst_336 {dimension_numbers = #tpu.dot_dimension_numbers<[1], [0], [0], [1], [0, 0, 1, 1], [], []>} : vector<4x96xbf16>, vector<96x256xbf16>, vector<4x256xf32> -> vector<4x256xf32>
    %c255_i32_337 = arith.constant 255 : i32
    %429 = tpu.dynamic_rotate %428 by %c255_i32_337 dim 1 : vector<4x256xf32>, i32 -> vector<4x256xf32>
    %430 = arith.mulf %429, %70 : vector<4x256xf32>
    %431 = arith.addf %425, %430 : vector<4x256xf32>
    %cst_338 = arith.constant 0.000000e+00 : f32
    %432 = vector.broadcast %cst_338 : f32 to vector<4x256xf32>
    %433 = arith.cmpf ogt, %431, %432 : vector<4x256xf32>
    %cst_339 = arith.constant 2.000000e-01 : f32
    %434 = vector.broadcast %cst_339 : f32 to vector<4x256xf32>
    %435 = arith.mulf %434, %431 : vector<4x256xf32>
    %436 = arith.select %433, %431, %435 : vector<4x256xi1>, vector<4x256xf32>
    %c16_i32_340 = arith.constant 16 : i32
    %437 = tpu.dynamic_rotate %436 by %c16_i32_340 dim 1 : vector<4x256xf32>, i32 -> vector<4x256xf32>
    %438 = arith.mulf %437, %36 : vector<4x256xf32>
    %439 = arith.truncf %438 : vector<4x256xf32> to vector<4x256xbf16>
    %c96_341 = arith.constant 96 : index
    %c0_342 = arith.constant 0 : index
    %440 = vector.load %arg6[%c96_341, %c0_342] : memref<240x256xbf16, #tpu.memory_space<vmem>>, vector<4x256xbf16>
    tpu.vector_store %arg6[%c96_341, %c0_342], %439 {strides = array<i32>} : memref<240x256xbf16, #tpu.memory_space<vmem>>, vector<4x256xbf16>,
    %441 = arith.truncf %436 : vector<4x256xf32> to vector<4x256xbf16>
    %c112_343 = arith.constant 112 : index
    %c0_344 = arith.constant 0 : index
    %442 = vector.load %arg6[%c112_343, %c0_344] : memref<240x256xbf16, #tpu.memory_space<vmem>>, vector<4x256xbf16>
    tpu.vector_store %arg6[%c112_343, %c0_344], %441 {strides = array<i32>} : memref<240x256xbf16, #tpu.memory_space<vmem>>, vector<4x256xbf16>,
    %c240_i32_345 = arith.constant 240 : i32
    %443 = tpu.dynamic_rotate %436 by %c240_i32_345 dim 1 : vector<4x256xf32>, i32 -> vector<4x256xf32>
    %444 = arith.mulf %443, %45 : vector<4x256xf32>
    %445 = arith.truncf %444 : vector<4x256xf32> to vector<4x256xbf16>
    %c128_346 = arith.constant 128 : index
    %c0_347 = arith.constant 0 : index
    %446 = vector.load %arg6[%c128_346, %c0_347] : memref<240x256xbf16, #tpu.memory_space<vmem>>, vector<4x256xbf16>
    tpu.vector_store %arg6[%c128_346, %c0_347], %445 {strides = array<i32>} : memref<240x256xbf16, #tpu.memory_space<vmem>>, vector<4x256xbf16>,
    %c96_348 = arith.constant 96 : index
    %c0_349 = arith.constant 0 : index
    %447 = vector.load %arg4[%c96_348, %c0_349] : memref<120x1xf32, #tpu.memory_space<vmem>>, vector<4x1xf32>
    %c296 = arith.constant 296 : index
    %c0_350 = arith.constant 0 : index
    %448 = vector.load %arg3[%c296, %c0_350] : memref<360x240xbf16, #tpu.memory_space<vmem>>, vector<4x144xbf16>
    %c0_351 = arith.constant 0 : index
    %c0_352 = arith.constant 0 : index
    %449 = vector.load %arg6[%c0_351, %c0_352] : memref<240x256xbf16, #tpu.memory_space<vmem>>, vector<144x256xbf16>
    %cst_353 = arith.constant dense<0.000000e+00> : vector<4x256xf32>
    %450 = tpu.matmul %448, %449, %cst_353 {dimension_numbers = #tpu.dot_dimension_numbers<[1], [0], [0], [1], [0, 0, 1, 1], [], []>} : vector<4x144xbf16>, vector<144x256xbf16>, vector<4x256xf32> -> vector<4x256xf32>
    %451 = vector.broadcast %447 : vector<4x1xf32> to vector<4x256xf32>
    %452 = arith.addf %450, %451 : vector<4x256xf32>
    %c288 = arith.constant 288 : index
    %c0_354 = arith.constant 0 : index
    %453 = vector.load %arg3[%c288, %c0_354] : memref<360x240xbf16, #tpu.memory_space<vmem>>, vector<4x144xbf16>
    %c0_355 = arith.constant 0 : index
    %c0_356 = arith.constant 0 : index
    %454 = vector.load %arg6[%c0_355, %c0_356] : memref<240x256xbf16, #tpu.memory_space<vmem>>, vector<144x256xbf16>
    %cst_357 = arith.constant dense<0.000000e+00> : vector<4x256xf32>
    %455 = tpu.matmul %453, %454, %cst_357 {dimension_numbers = #tpu.dot_dimension_numbers<[1], [0], [0], [1], [0, 0, 1, 1], [], []>} : vector<4x144xbf16>, vector<144x256xbf16>, vector<4x256xf32> -> vector<4x256xf32>
    %c1_i32_358 = arith.constant 1 : i32
    %456 = tpu.dynamic_rotate %455 by %c1_i32_358 dim 1 : vector<4x256xf32>, i32 -> vector<4x256xf32>
    %457 = arith.mulf %456, %61 : vector<4x256xf32>
    %458 = arith.addf %452, %457 : vector<4x256xf32>
    %c304 = arith.constant 304 : index
    %c0_359 = arith.constant 0 : index
    %459 = vector.load %arg3[%c304, %c0_359] : memref<360x240xbf16, #tpu.memory_space<vmem>>, vector<4x144xbf16>
    %c0_360 = arith.constant 0 : index
    %c0_361 = arith.constant 0 : index
    %460 = vector.load %arg6[%c0_360, %c0_361] : memref<240x256xbf16, #tpu.memory_space<vmem>>, vector<144x256xbf16>
    %cst_362 = arith.constant dense<0.000000e+00> : vector<4x256xf32>
    %461 = tpu.matmul %459, %460, %cst_362 {dimension_numbers = #tpu.dot_dimension_numbers<[1], [0], [0], [1], [0, 0, 1, 1], [], []>} : vector<4x144xbf16>, vector<144x256xbf16>, vector<4x256xf32> -> vector<4x256xf32>
    %c255_i32_363 = arith.constant 255 : i32
    %462 = tpu.dynamic_rotate %461 by %c255_i32_363 dim 1 : vector<4x256xf32>, i32 -> vector<4x256xf32>
    %463 = arith.mulf %462, %70 : vector<4x256xf32>
    %464 = arith.addf %458, %463 : vector<4x256xf32>
    %cst_364 = arith.constant 0.000000e+00 : f32
    %465 = vector.broadcast %cst_364 : f32 to vector<4x256xf32>
    %466 = arith.cmpf ogt, %464, %465 : vector<4x256xf32>
    %cst_365 = arith.constant 2.000000e-01 : f32
    %467 = vector.broadcast %cst_365 : f32 to vector<4x256xf32>
    %468 = arith.mulf %467, %464 : vector<4x256xf32>
    %469 = arith.select %466, %464, %468 : vector<4x256xi1>, vector<4x256xf32>
    %c16_i32_366 = arith.constant 16 : i32
    %470 = tpu.dynamic_rotate %469 by %c16_i32_366 dim 1 : vector<4x256xf32>, i32 -> vector<4x256xf32>
    %471 = arith.mulf %470, %36 : vector<4x256xf32>
    %472 = arith.truncf %471 : vector<4x256xf32> to vector<4x256xbf16>
    %c144_367 = arith.constant 144 : index
    %c0_368 = arith.constant 0 : index
    %473 = vector.load %arg6[%c144_367, %c0_368] : memref<240x256xbf16, #tpu.memory_space<vmem>>, vector<4x256xbf16>
    tpu.vector_store %arg6[%c144_367, %c0_368], %472 {strides = array<i32>} : memref<240x256xbf16, #tpu.memory_space<vmem>>, vector<4x256xbf16>,
    %474 = arith.truncf %469 : vector<4x256xf32> to vector<4x256xbf16>
    %c160_369 = arith.constant 160 : index
    %c0_370 = arith.constant 0 : index
    %475 = vector.load %arg6[%c160_369, %c0_370] : memref<240x256xbf16, #tpu.memory_space<vmem>>, vector<4x256xbf16>
    tpu.vector_store %arg6[%c160_369, %c0_370], %474 {strides = array<i32>} : memref<240x256xbf16, #tpu.memory_space<vmem>>, vector<4x256xbf16>,
    %c240_i32_371 = arith.constant 240 : i32
    %476 = tpu.dynamic_rotate %469 by %c240_i32_371 dim 1 : vector<4x256xf32>, i32 -> vector<4x256xf32>
    %477 = arith.mulf %476, %45 : vector<4x256xf32>
    %478 = arith.truncf %477 : vector<4x256xf32> to vector<4x256xbf16>
    %c176_372 = arith.constant 176 : index
    %c0_373 = arith.constant 0 : index
    %479 = vector.load %arg6[%c176_372, %c0_373] : memref<240x256xbf16, #tpu.memory_space<vmem>>, vector<4x256xbf16>
    tpu.vector_store %arg6[%c176_372, %c0_373], %478 {strides = array<i32>} : memref<240x256xbf16, #tpu.memory_space<vmem>>, vector<4x256xbf16>,
    %c104_374 = arith.constant 104 : index
    %c0_375 = arith.constant 0 : index
    %480 = vector.load %arg4[%c104_374, %c0_375] : memref<120x1xf32, #tpu.memory_space<vmem>>, vector<4x1xf32>
    %c320 = arith.constant 320 : index
    %c0_376 = arith.constant 0 : index
    %481 = vector.load %arg3[%c320, %c0_376] : memref<360x240xbf16, #tpu.memory_space<vmem>>, vector<4x192xbf16>
    %c0_377 = arith.constant 0 : index
    %c0_378 = arith.constant 0 : index
    %482 = vector.load %arg6[%c0_377, %c0_378] : memref<240x256xbf16, #tpu.memory_space<vmem>>, vector<192x256xbf16>
    %cst_379 = arith.constant dense<0.000000e+00> : vector<4x256xf32>
    %483 = tpu.matmul %481, %482, %cst_379 {dimension_numbers = #tpu.dot_dimension_numbers<[1], [0], [0], [1], [0, 0, 1, 1], [], []>} : vector<4x192xbf16>, vector<192x256xbf16>, vector<4x256xf32> -> vector<4x256xf32>
    %484 = vector.broadcast %480 : vector<4x1xf32> to vector<4x256xf32>
    %485 = arith.addf %483, %484 : vector<4x256xf32>
    %c312 = arith.constant 312 : index
    %c0_380 = arith.constant 0 : index
    %486 = vector.load %arg3[%c312, %c0_380] : memref<360x240xbf16, #tpu.memory_space<vmem>>, vector<4x192xbf16>
    %c0_381 = arith.constant 0 : index
    %c0_382 = arith.constant 0 : index
    %487 = vector.load %arg6[%c0_381, %c0_382] : memref<240x256xbf16, #tpu.memory_space<vmem>>, vector<192x256xbf16>
    %cst_383 = arith.constant dense<0.000000e+00> : vector<4x256xf32>
    %488 = tpu.matmul %486, %487, %cst_383 {dimension_numbers = #tpu.dot_dimension_numbers<[1], [0], [0], [1], [0, 0, 1, 1], [], []>} : vector<4x192xbf16>, vector<192x256xbf16>, vector<4x256xf32> -> vector<4x256xf32>
    %c1_i32_384 = arith.constant 1 : i32
    %489 = tpu.dynamic_rotate %488 by %c1_i32_384 dim 1 : vector<4x256xf32>, i32 -> vector<4x256xf32>
    %490 = arith.mulf %489, %61 : vector<4x256xf32>
    %491 = arith.addf %485, %490 : vector<4x256xf32>
    %c328 = arith.constant 328 : index
    %c0_385 = arith.constant 0 : index
    %492 = vector.load %arg3[%c328, %c0_385] : memref<360x240xbf16, #tpu.memory_space<vmem>>, vector<4x192xbf16>
    %c0_386 = arith.constant 0 : index
    %c0_387 = arith.constant 0 : index
    %493 = vector.load %arg6[%c0_386, %c0_387] : memref<240x256xbf16, #tpu.memory_space<vmem>>, vector<192x256xbf16>
    %cst_388 = arith.constant dense<0.000000e+00> : vector<4x256xf32>
    %494 = tpu.matmul %492, %493, %cst_388 {dimension_numbers = #tpu.dot_dimension_numbers<[1], [0], [0], [1], [0, 0, 1, 1], [], []>} : vector<4x192xbf16>, vector<192x256xbf16>, vector<4x256xf32> -> vector<4x256xf32>
    %c255_i32_389 = arith.constant 255 : i32
    %495 = tpu.dynamic_rotate %494 by %c255_i32_389 dim 1 : vector<4x256xf32>, i32 -> vector<4x256xf32>
    %496 = arith.mulf %495, %70 : vector<4x256xf32>
    %497 = arith.addf %491, %496 : vector<4x256xf32>
    %cst_390 = arith.constant 0.000000e+00 : f32
    %498 = vector.broadcast %cst_390 : f32 to vector<4x256xf32>
    %499 = arith.cmpf ogt, %497, %498 : vector<4x256xf32>
    %cst_391 = arith.constant 2.000000e-01 : f32
    %500 = vector.broadcast %cst_391 : f32 to vector<4x256xf32>
    %501 = arith.mulf %500, %497 : vector<4x256xf32>
    %502 = arith.select %499, %497, %501 : vector<4x256xi1>, vector<4x256xf32>
    %c16_i32_392 = arith.constant 16 : i32
    %503 = tpu.dynamic_rotate %502 by %c16_i32_392 dim 1 : vector<4x256xf32>, i32 -> vector<4x256xf32>
    %504 = arith.mulf %503, %36 : vector<4x256xf32>
    %505 = arith.truncf %504 : vector<4x256xf32> to vector<4x256xbf16>
    %c192_393 = arith.constant 192 : index
    %c0_394 = arith.constant 0 : index
    %506 = vector.load %arg6[%c192_393, %c0_394] : memref<240x256xbf16, #tpu.memory_space<vmem>>, vector<4x256xbf16>
    tpu.vector_store %arg6[%c192_393, %c0_394], %505 {strides = array<i32>} : memref<240x256xbf16, #tpu.memory_space<vmem>>, vector<4x256xbf16>,
    %507 = arith.truncf %502 : vector<4x256xf32> to vector<4x256xbf16>
    %c208_395 = arith.constant 208 : index
    %c0_396 = arith.constant 0 : index
    %508 = vector.load %arg6[%c208_395, %c0_396] : memref<240x256xbf16, #tpu.memory_space<vmem>>, vector<4x256xbf16>
    tpu.vector_store %arg6[%c208_395, %c0_396], %507 {strides = array<i32>} : memref<240x256xbf16, #tpu.memory_space<vmem>>, vector<4x256xbf16>,
    %c240_i32_397 = arith.constant 240 : i32
    %509 = tpu.dynamic_rotate %502 by %c240_i32_397 dim 1 : vector<4x256xf32>, i32 -> vector<4x256xf32>
    %510 = arith.mulf %509, %45 : vector<4x256xf32>
    %511 = arith.truncf %510 : vector<4x256xf32> to vector<4x256xbf16>
    %c224_398 = arith.constant 224 : index
    %c0_399 = arith.constant 0 : index
    %512 = vector.load %arg6[%c224_398, %c0_399] : memref<240x256xbf16, #tpu.memory_space<vmem>>, vector<4x256xbf16>
    tpu.vector_store %arg6[%c224_398, %c0_399], %511 {strides = array<i32>} : memref<240x256xbf16, #tpu.memory_space<vmem>>, vector<4x256xbf16>,
    %c112_400 = arith.constant 112 : index
    %c0_401 = arith.constant 0 : index
    %513 = vector.load %arg4[%c112_400, %c0_401] : memref<120x1xf32, #tpu.memory_space<vmem>>, vector<4x1xf32>
    %c344 = arith.constant 344 : index
    %c0_402 = arith.constant 0 : index
    %514 = vector.load %arg3[%c344, %c0_402] : memref<360x240xbf16, #tpu.memory_space<vmem>>, vector<4x240xbf16>
    %c0_403 = arith.constant 0 : index
    %c0_404 = arith.constant 0 : index
    %515 = vector.load %arg6[%c0_403, %c0_404] : memref<240x256xbf16, #tpu.memory_space<vmem>>, vector<240x256xbf16>
    %cst_405 = arith.constant dense<0.000000e+00> : vector<4x256xf32>
    %516 = tpu.matmul %514, %515, %cst_405 {dimension_numbers = #tpu.dot_dimension_numbers<[1], [0], [0], [1], [0, 0, 1, 1], [], []>} : vector<4x240xbf16>, vector<240x256xbf16>, vector<4x256xf32> -> vector<4x256xf32>
    %517 = vector.broadcast %513 : vector<4x1xf32> to vector<4x256xf32>
    %518 = arith.addf %516, %517 : vector<4x256xf32>
    %c336 = arith.constant 336 : index
    %c0_406 = arith.constant 0 : index
    %519 = vector.load %arg3[%c336, %c0_406] : memref<360x240xbf16, #tpu.memory_space<vmem>>, vector<4x240xbf16>
    %c0_407 = arith.constant 0 : index
    %c0_408 = arith.constant 0 : index
    %520 = vector.load %arg6[%c0_407, %c0_408] : memref<240x256xbf16, #tpu.memory_space<vmem>>, vector<240x256xbf16>
    %cst_409 = arith.constant dense<0.000000e+00> : vector<4x256xf32>
    %521 = tpu.matmul %519, %520, %cst_409 {dimension_numbers = #tpu.dot_dimension_numbers<[1], [0], [0], [1], [0, 0, 1, 1], [], []>} : vector<4x240xbf16>, vector<240x256xbf16>, vector<4x256xf32> -> vector<4x256xf32>
    %c1_i32_410 = arith.constant 1 : i32
    %522 = tpu.dynamic_rotate %521 by %c1_i32_410 dim 1 : vector<4x256xf32>, i32 -> vector<4x256xf32>
    %523 = arith.mulf %522, %61 : vector<4x256xf32>
    %524 = arith.addf %518, %523 : vector<4x256xf32>
    %c352 = arith.constant 352 : index
    %c0_411 = arith.constant 0 : index
    %525 = vector.load %arg3[%c352, %c0_411] : memref<360x240xbf16, #tpu.memory_space<vmem>>, vector<4x240xbf16>
    %c0_412 = arith.constant 0 : index
    %c0_413 = arith.constant 0 : index
    %526 = vector.load %arg6[%c0_412, %c0_413] : memref<240x256xbf16, #tpu.memory_space<vmem>>, vector<240x256xbf16>
    %cst_414 = arith.constant dense<0.000000e+00> : vector<4x256xf32>
    %527 = tpu.matmul %525, %526, %cst_414 {dimension_numbers = #tpu.dot_dimension_numbers<[1], [0], [0], [1], [0, 0, 1, 1], [], []>} : vector<4x240xbf16>, vector<240x256xbf16>, vector<4x256xf32> -> vector<4x256xf32>
    %c255_i32_415 = arith.constant 255 : i32
    %528 = tpu.dynamic_rotate %527 by %c255_i32_415 dim 1 : vector<4x256xf32>, i32 -> vector<4x256xf32>
    %529 = arith.mulf %528, %70 : vector<4x256xf32>
    %530 = arith.addf %524, %529 : vector<4x256xf32>
    %cst_416 = arith.constant 2.000000e-01 : f32
    %531 = vector.broadcast %cst_416 : f32 to vector<4x256xf32>
    %532 = arith.mulf %530, %531 : vector<4x256xf32>
    %533 = arith.addf %532, %370 : vector<4x256xf32>
    %cst_417 = arith.constant 2.000000e-01 : f32
    %534 = vector.broadcast %cst_417 : f32 to vector<4x256xf32>
    %535 = arith.mulf %533, %534 : vector<4x256xf32>
    %536 = arith.addf %535, %32 : vector<4x256xf32>
    %c0_418 = arith.constant 0 : index
    %c0_419 = arith.constant 0 : index
    %c0_420 = arith.constant 0 : index
    %537 = vector.load %arg5[%c0_418, %c0_419, %c0_420] : memref<1x4x256xf32, #tpu.memory_space<vmem>>, vector<1x4x256xf32>
    %538 = vector.shape_cast %537 : vector<1x4x256xf32> to vector<4x256xf32>
    %539 = vector.shape_cast %536 : vector<4x256xf32> to vector<1x4x256xf32>
    tpu.vector_store %arg5[%c0_418, %c0_419, %c0_420], %539 {strides = array<i32>} : memref<1x4x256xf32, #tpu.memory_space<vmem>>, vector<1x4x256xf32>,
    return
  }
  func.func @transform_0(%arg0: i32) -> (i32, i32, i32) {
    %c0_i32 = arith.constant 0 : i32
    %c0_i32_0 = arith.constant 0 : i32
    %c0_i32_1 = arith.constant 0 : i32
    return %arg0, %c0_i32, %c0_i32_0 : i32, i32, i32
  }
  func.func @transform_1(%arg0: i32) -> (i32, i32) {
    %c0_i32 = arith.constant 0 : i32
    %c0_i32_0 = arith.constant 0 : i32
    %c0_i32_1 = arith.constant 0 : i32
    return %c0_i32, %c0_i32_0 : i32, i32
  }
  func.func @transform_2(%arg0: i32) -> (i32, i32) {
    %c0_i32 = arith.constant 0 : i32
    %c0_i32_0 = arith.constant 0 : i32
    %c0_i32_1 = arith.constant 0 : i32
    return %c0_i32, %c0_i32_0 : i32, i32
  }
  func.func @transform_3(%arg0: i32) -> (i32, i32) {
    %c0_i32 = arith.constant 0 : i32
    %c0_i32_0 = arith.constant 0 : i32
    %c0_i32_1 = arith.constant 0 : i32
    return %c0_i32, %c0_i32_0 : i32, i32
  }
  func.func @transform_4(%arg0: i32) -> (i32, i32, i32) {
    %c0_i32 = arith.constant 0 : i32
    %c0_i32_0 = arith.constant 0 : i32
    %c0_i32_1 = arith.constant 0 : i32
    return %arg0, %c0_i32, %c0_i32_0 : i32, i32, i32
  }
}

</mosaic_0001>

<llo_original>
// kernel: tpu_custom_call.1
$region0: #{tpu_custom_call.1}
  #allocation0 [shape = 'u32[]', space=smem, size = 0x4, offset = 0x4, fixed_abs, tag = 'smem constant byte address 0x4 - core index']
  #allocation1 [shape = 'u32[144,128]{1,0:T(1,128)}', space=vmem, size = 0x12000, scoped, tag = 'internal scratch']
  #allocation2 [shape = 'bf16[240,256]{1,0:T(8,128)(2,1)}', space=vmem, size = 0x1e000, scoped, tag = 'scratch operand']
  %s0 = inlined_call_operand.vmem [shape: f32[2,4,256], index: 0, kind: input, shape index: {}]
  %s1 = inlined_call_operand.vmem [shape: f32[6,256], index: 1, kind: input, shape index: {}]
  %s2 = inlined_call_operand.hbm [shape: bf16[360,240], index: 2, kind: input, shape index: {}]
  %s3 = inlined_call_operand.vmem [shape: f32[120,1], index: 3, kind: input, shape index: {}]
  %s4 = inlined_call_operand.hbm [shape: f32[2,4,256], index: 4, kind: output, shape index: {}]
  %s5 = sld [smem:[#allocation0]]
  $region53: #{tpu_custom_call.1} parent=0
    _
  %s7 = ssub.s32 1, %s5
  %s8 = scalar_select 0, %s7, %s5
  $region1: #{tpu_custom_call.1} parent=0
    #allocation3 [shape = 'u8[184320]{0}', space=vmem, size = 0x2d000, scoped, tag = 'input window, operand 2, single buffered']
    #allocation4 [shape = 's32[2]{0}', space=sflag, size = 0x8, scoped, tag = 'scoped memory for tpu_custom_call.1']
    #allocation5 [shape = 's32[2]{0}', space=sflag, size = 0x8, scoped, tag = 'scoped memory for tpu_custom_call.1']
    #allocation6 [shape = 'u8[8192]{0}', space=vmem, size = 0x2000, scoped, tag = 'output window, operand 0']
    %9 = vsyncpa [#allocation4], 0
    %10 = vsyncpa [#allocation5], 0
    %s11 = scalar_lea.sflag [#allocation5], 1
    %12 = vsyncpa %s11, 0
    loop: start=0, step=1, limit=4
    $region2: #{tpu_custom_call.1} parent=1 // loop_pre_header
      _
    $region3: #{tpu_custom_call.1} parent=1 // loop_header
      %s14 = sphi 0, %s18
      %p15 = scmp.ge.s32.totalorder %s14, 4
      %s24 = sphi 0, %s26
      %s27 = sphi 0, %s24
      %s28 = sphi 0, %s27
      %s44 = sphi 0, %s28
      %s48 = sphi 0, %s48
      %s50 = sphi 0, %s48
      %s51 = sphi 0, %s50
      %s65 = sphi 0, %s51
      %s69 = sphi 0, %s69
      %s71 = sphi 0, %s69
      %s72 = sphi 0, %s71
      %s86 = sphi 0, %s72
      %s90 = sphi 0, %s90
      %s92 = sphi 0, %s90
      %s93 = sphi 0, %s92
      %s107 = sphi 0, %s93
      %s113 = sphi 0, %s115
      %s116 = sphi 0, %s113
      %s117 = sphi 0, %s116
      %s133 = sphi 0, %s117
    $region4: #{tpu_custom_call.1} parent=1 // loop_header_branch
      %17 = sbr.rel (%p15) target = $region8
    $region5: #{tpu_custom_call.1} parent=1 // loop_body
      %s19 = ssub.s32 %s14, 1
      %s20 = ssub.s32 %s14, 2
      %s21 = sadd.s32 %s14, 1
      %s22 = ssub.s32 %s14, %s21
      %p23 = scmp.eq.s32.totalorder %s22, 0
      %s25 = sadd.s32 %s24, 1
      %s26 = scalar_select %p23, %s24, %s25
      %p29 = pneg %p23
      %p30 = scmp.eq.s32.totalorder %s14, 1
      %p31 = por %p29, %p30
      %p32 = scmp.ne.s32.totalorder %s24, %s27
      %p33 = scmp.eq.s32.totalorder %s14, 0
      %p34 = por %p32, %p33
      %p35 = scmp.ne.s32.totalorder %s24, %s27
      %p36 = scmp.eq.s32.totalorder %s19, 1
      %p37 = por %p35, %p36
      %p38 = scmp.ne.s32.totalorder %s27, %s28
      %p39 = scmp.eq.s32.totalorder %s19, 0
      %p40 = por %p38, %p39
      %p41 = scmp.ne.s32.totalorder %s27, %s28
      %p42 = scmp.eq.s32.totalorder %s20, 1
      %p43 = por %p41, %p42
      %p45 = scmp.ne.s32.totalorder %s28, %s44
      %p46 = scmp.eq.s32.totalorder %s20, 0
      %p47 = por %p45, %p46
      %s49 = sadd.s32 %s48, 1
      %p52 = scmp.eq.s32.totalorder %s14, 1
      %p53 = scmp.ne.s32.totalorder %s48, %s50
      %p54 = scmp.eq.s32.totalorder %s14, 0
      %p55 = por %p53, %p54
      %p56 = scmp.ne.s32.totalorder %s48, %s50
      %p57 = scmp.eq.s32.totalorder %s19, 1
      %p58 = por %p56, %p57
      %p59 = scmp.ne.s32.totalorder %s50, %s51
      %p60 = scmp.eq.s32.totalorder %s19, 0
      %p61 = por %p59, %p60
      %p62 = scmp.ne.s32.totalorder %s50, %s51
      %p63 = scmp.eq.s32.totalorder %s20, 1
      %p64 = por %p62, %p63
      %p66 = scmp.ne.s32.totalorder %s51, %s65
      %p67 = scmp.eq.s32.totalorder %s20, 0
      %p68 = por %p66, %p67
      %s70 = sadd.s32 %s69, 1
      %p73 = scmp.eq.s32.totalorder %s14, 1
      %p74 = scmp.ne.s32.totalorder %s69, %s71
      %p75 = scmp.eq.s32.totalorder %s14, 0
      %p76 = por %p74, %p75
      %p77 = scmp.ne.s32.totalorder %s69, %s71
      %p78 = scmp.eq.s32.totalorder %s19, 1
      %p79 = por %p77, %p78
      %p80 = scmp.ne.s32.totalorder %s71, %s72
      %p81 = scmp.eq.s32.totalorder %s19, 0
      %p82 = por %p80, %p81
      %p83 = scmp.ne.s32.totalorder %s71, %s72
      %p84 = scmp.eq.s32.totalorder %s20, 1
      %p85 = por %p83, %p84
      %p87 = scmp.ne.s32.totalorder %s72, %s86
      %p88 = scmp.eq.s32.totalorder %s20, 0
      %p89 = por %p87, %p88
      %s91 = sadd.s32 %s90, 1
      %p94 = scmp.eq.s32.totalorder %s14, 1
      %p95 = scmp.ne.s32.totalorder %s90, %s92
      %p96 = scmp.eq.s32.totalorder %s14, 0
      %p97 = por %p95, %p96
      %p98 = scmp.ne.s32.totalorder %s90, %s92
      %p99 = scmp.eq.s32.totalorder %s19, 1
      %p100 = por %p98, %p99
      %p101 = scmp.ne.s32.totalorder %s92, %s93
      %p102 = scmp.eq.s32.totalorder %s19, 0
      %p103 = por %p101, %p102
      %p104 = scmp.ne.s32.totalorder %s92, %s93
      %p105 = scmp.eq.s32.totalorder %s20, 1
      %p106 = por %p104, %p105
      %p108 = scmp.ne.s32.totalorder %s93, %s107
      %p109 = scmp.eq.s32.totalorder %s20, 0
      %p110 = por %p108, %p109
      %s111 = ssub.s32 %s14, %s21
      %p112 = scmp.eq.s32.totalorder %s111, 0
      %s114 = sadd.s32 %s113, 1
      %s115 = scalar_select %p112, %s113, %s114
      %p118 = pneg %p112
      %p119 = scmp.eq.s32.totalorder %s14, 1
      %p120 = por %p118, %p119
      %p121 = scmp.ne.s32.totalorder %s113, %s116
      %p122 = scmp.eq.s32.totalorder %s14, 0
      %p123 = por %p121, %p122
      %p124 = scmp.ne.s32.totalorder %s113, %s116
      %p125 = scmp.eq.s32.totalorder %s19, 1
      %p126 = por %p124, %p125
      %p127 = scmp.ne.s32.totalorder %s116, %s117
      %p128 = scmp.eq.s32.totalorder %s19, 0
      %p129 = por %p127, %p128
      %p130 = scmp.ne.s32.totalorder %s116, %s117
      %p131 = scmp.eq.s32.totalorder %s20, 1
      %p132 = por %p130, %p131
      %p134 = scmp.ne.s32.totalorder %s117, %s133
      %p135 = scmp.eq.s32.totalorder %s20, 0
      %p136 = por %p134, %p135
      %p137 = scmp.le.s32.totalorder 1, %s14
      %p138 = scmp.lt.s32.totalorder %s14, 3
      %p139 = pnand %p137, %p138
      %p140 = pneg %p139
      // Predicated region
      $region9: #{tpu_custom_call.1} parent=5 // pred_check
        _
      $region10: #{tpu_custom_call.1} parent=5 // pred_check_branch
        %142 = sbr.rel (%p139) target = $region12
      $region11: #{tpu_custom_call.1} parent=5 // pred_region
        %s143 = ssub.s32 %s14, 1
        // Predicated region
        $region13: #{tpu_custom_call.1} parent=11 // pred_check
          %p144 = pneg %p61
        $region14: #{tpu_custom_call.1} parent=11 // pred_check_branch
          %146 = sbr.rel (%p144) target = $region16
        $region15: #{tpu_custom_call.1} parent=11 // pred_region
          _
        $region16: #{tpu_custom_call.1} parent=11 // pred_fallthru
          _
        // Predicated region
        $region17: #{tpu_custom_call.1} parent=11 // pred_check
          %p147 = pneg %p82
        $region18: #{tpu_custom_call.1} parent=11 // pred_check_branch
          %149 = sbr.rel (%p147) target = $region20
        $region19: #{tpu_custom_call.1} parent=11 // pred_region
          %s151 = ssub.s32 5760, 5760
          %152 = vsyncadd [#allocation4], %s151
          %s153 = sshll.u32 [#allocation3], 4
          %s154 = int_to_ptr.vmem [resolvable:$true] %s153
          %159 = dma.hbm_to_vmem [thread:$0]  %s2, 5760, %s154, [#allocation4], 128, 128, 8
        $region20: #{tpu_custom_call.1} parent=11 // pred_fallthru
          _
        // Predicated region
        $region21: #{tpu_custom_call.1} parent=11 // pred_check
          %p160 = pneg %p103
        $region22: #{tpu_custom_call.1} parent=11 // pred_check_branch
          %162 = sbr.rel (%p160) target = $region24
        $region23: #{tpu_custom_call.1} parent=11 // pred_region
          _
        $region24: #{tpu_custom_call.1} parent=11 // pred_fallthru
          _
      $region12: #{tpu_custom_call.1} parent=5 // pred_fallthru
        _
      %p163 = scmp.lt.s32.totalorder %s14, 2
      // Predicated region
      $region25: #{tpu_custom_call.1} parent=5 // pred_check
        %p164 = pneg %p163
      $region26: #{tpu_custom_call.1} parent=5 // pred_check_branch
        %166 = sbr.rel (%p164) target = $region28
      $region27: #{tpu_custom_call.1} parent=5 // pred_region
        // Predicated region
        $region29: #{tpu_custom_call.1} parent=27 // pred_check
          %p167 = pneg %p34
        $region30: #{tpu_custom_call.1} parent=27 // pred_check_branch
          %169 = sbr.rel (%p167) target = $region32
        $region31: #{tpu_custom_call.1} parent=27 // pred_region
          %p170 = scmp.lt.s32.totalorder %s14, 1
          %s171 = scalar_select %p170, %s14, 1
          %s172 = smul.addr %s171, 2
          %s173 = smul.addr %s172, 4
          %s174 = scalar_lea.vmem %s0, %s173
        $region32: #{tpu_custom_call.1} parent=27 // pred_fallthru
          _
      $region28: #{tpu_custom_call.1} parent=5 // pred_fallthru
        _
      %p175 = scmp.le.s32.totalorder 1, %s14
      %p176 = scmp.lt.s32.totalorder %s14, 3
      %p177 = pnand %p175, %p176
      %p178 = pneg %p177
      // Predicated region
      $region33: #{tpu_custom_call.1} parent=5 // pred_check
        _
      $region34: #{tpu_custom_call.1} parent=5 // pred_check_branch
        %180 = sbr.rel (%p177) target = $region36
      $region35: #{tpu_custom_call.1} parent=5 // pred_region
        %s181 = ssub.s32 %s14, 1
        // Predicated region
        $region37: #{tpu_custom_call.1} parent=35 // pred_check
          %p182 = pneg %p82
        $region38: #{tpu_custom_call.1} parent=35 // pred_check_branch
          %184 = sbr.rel (%p182) target = $region40
        $region39: #{tpu_custom_call.1} parent=35 // pred_region
          %185 = dma.done [#allocation4], 5760
        $region40: #{tpu_custom_call.1} parent=35 // pred_fallthru
          _
        %p186 = scmp.lt.s32.totalorder %s19, 1
        %s187 = scalar_select %p186, %s19, 1
        %s188 = smul.addr %s187, 2
        %s189 = smul.addr %s188, 4
        %s190 = scalar_lea.vmem %s0, %s189
        %p191 = pneg %p40
        %p192 = pneg %p37
        %p193 = pneg %p61
        %p194 = pneg %p58
        %p195 = pneg %p82
        %p196 = pneg %p79
        %p197 = pneg %p103
        %p198 = pneg %p100
        %p199 = pneg %p129
        %p200 = pneg %p126
        %s201 = sand.u32 %s116, 1
        %s202 = scalar_lea.sflag [#allocation5], %s201
        %s203 = sand.u32 %s116, 1
        %s204 = smul.addr %s203, 8
        %s205 = scalar_lea.vmem [#allocation6], %s204
        %p206 = scmp.lt.s32.totalorder %s19, 1
        %s207 = scalar_select %p206, %s19, 1
        %s208 = smul.addr %s207, 2
        %s209 = smul.addr %s208, 4
        %s210 = scalar_lea.vmem %s0, %s209
        %v212 = vld [vmem:[%s1] sm:$0x3f]
        %v213 = vld [vmem:[%s1 + $0x8] sm:$0x3f]
        %214 = vst [vmem:[#allocation2] sm:$0xcc] 0
        %215 = vst [vmem:[#allocation2 + $0x8] sm:$0xff] 0
        %216 = vst [vmem:[#allocation2 + $0x10] sm:$0xcc] 0
        %217 = vst [vmem:[#allocation2 + $0x18] sm:$0xff] 0
        %218 = vst [vmem:[#allocation2 + $0x20] sm:$0xcc] 0
        %219 = vst [vmem:[#allocation2 + $0x28] sm:$0xff] 0
        %220 = vst [vmem:[#allocation2 + $0x30] sm:$0xcc] 0
        %221 = vst [vmem:[#allocation2 + $0x38] sm:$0xff] 0
        %222 = vst [vmem:[#allocation2 + $0x40] sm:$0xcc] 0
        %223 = vst [vmem:[#allocation2 + $0x48] sm:$0xff] 0
        %224 = vst [vmem:[#allocation2 + $0x50] sm:$0xcc] 0
        %225 = vst [vmem:[#allocation2 + $0x58] sm:$0xff] 0
        %226 = vst [vmem:[#allocation2 + $0x60] sm:$0xcc] 0
        %227 = vst [vmem:[#allocation2 + $0x68] sm:$0xff] 0
        %228 = vst [vmem:[#allocation2 + $0x70] sm:$0xcc] 0
        %229 = vst [vmem:[#allocation2 + $0x78] sm:$0xff] 0
        %230 = vst [vmem:[#allocation2 + $0x80] sm:$0xcc] 0
        %231 = vst [vmem:[#allocation2 + $0x88] sm:$0xff] 0
        %232 = vst [vmem:[#allocation2 + $0x90] sm:$0xcc] 0
        %233 = vst [vmem:[#allocation2 + $0x98] sm:$0xff] 0
        %234 = vst [vmem:[#allocation2 + $0xa0] sm:$0xcc] 0
        %235 = vst [vmem:[#allocation2 + $0xa8] sm:$0xff] 0
        %236 = vst [vmem:[#allocation2 + $0xb0] sm:$0xcc] 0
        %237 = vst [vmem:[#allocation2 + $0xb8] sm:$0xff] 0
        %238 = vst [vmem:[#allocation2 + $0xc0] sm:$0xcc] 0
        %239 = vst [vmem:[#allocation2 + $0xc8] sm:$0xff] 0
        %240 = vst [vmem:[#allocation2 + $0xd0] sm:$0xcc] 0
        %241 = vst [vmem:[#allocation2 + $0xd8] sm:$0xff] 0
        %242 = vst [vmem:[#allocation2 + $0xe0] sm:$0xcc] 0
        %243 = vst [vmem:[#allocation2 + $0xe8] sm:$0xff] 0
        %v244 = vld [vmem:[%s210] sm:$0xff]
        %v246 = vcombine.high %v244, %v244
        %248 = vrot.lane.b32.xlu0 %v244, 16
        %v249 = vpop.permute.xlu0 %248
        %250 = vrot.lane.b32.xlu0 %v246, 16
        %v251 = vpop.permute.xlu0 %250
        %v252 = vlaneseq
        %v253 = vand.u32 %v252, 127
        %vm254 = vcmp.lt.s32.totalorder %v253, 16
        %v255 = vsel %vm254, %v249, %v251
        %v256 = vsel %vm254, %v251, %v249
        %v257 = vlaneseq
        %v258 = vshrl.u32 %v257, 7
        %v259 = vsub.s32 0, %v258
        %v260 = vrot.slane %v212, %v259
        %v261 = vlaneseq
        %v262 = vshrl.u32 %v261, 7
        %v263 = vsub.s32 0, %v262
        %v264 = vrot.slane %v213, %v263
        %v265 = vmul.f32 %v256, %v260
        %v266 = vmul.f32 %v255, %v264
        %v267 = vpack.c.bf16 %v265, %v265
        %v268 = vpack.c.bf16 %v266, %v266
        %v271 = vunpack.c.l.b16 %v267
        %v272 = vunpack.c.l.b16 %v268
        %v273 = vpack.c.b16 %v272, %v271
        %275 = vst [vmem:[#allocation2] sm:$0x33] %v273
        %v276 = vpack.c.bf16 %v244, %v244
        %v277 = vpack.c.bf16 %v246, %v246
        %v280 = vunpack.c.l.b16 %v276
        %v281 = vunpack.c.l.b16 %v277
        %v282 = vpack.c.b16 %v281, %v280
        %284 = vst [vmem:[#allocation2 + $0x10] sm:$0x33] %v282
        %285 = vrot.lane.b32.xlu0 %v244, 112
        %v286 = vpop.permute.xlu0 %285
        %287 = vrot.lane.b32.xlu0 %v246, 112
        %v288 = vpop.permute.xlu0 %287
        %vm289 = vcmp.lt.s32.totalorder %v253, 112
        %v290 = vsel %vm289, %v286, %v288
        %v291 = vsel %vm289, %v288, %v286
        %v292 = vlaneseq
        %v293 = vshrl.u32 %v292, 7
        %v294 = vsub.s32 2, %v293
        %v295 = vrot.slane %v212, %v294
        %v296 = vlaneseq
        %v297 = vshrl.u32 %v296, 7
        %v298 = vsub.s32 2, %v297
        %v299 = vrot.slane %v213, %v298
        %v300 = vmul.f32 %v290, %v295
        %v301 = vmul.f32 %v291, %v299
        %v302 = vpack.c.bf16 %v300, %v300
        %v303 = vpack.c.bf16 %v301, %v301
        %v306 = vunpack.c.l.b16 %v302
        %v307 = vunpack.c.l.b16 %v303
        %v308 = vpack.c.b16 %v307, %v306
        %310 = vst [vmem:[#allocation2 + $0x20] sm:$0x33] %v308
        %v311 = vld [vmem:[%s3] sm:$0xf]
        %v312 = vld [vmem:[#allocation3 + $0x8] sm:$0x3]
        %v313 = vld [vmem:[#allocation2] sm:$0xff]
        %v314 = vld [vmem:[#allocation2 + $0x8] sm:$0xff]
        %v315 = vld [vmem:[#allocation2 + $0x10] sm:$0xff]
        %v316 = vld [vmem:[#allocation2 + $0x18] sm:$0xff]
        %v317 = vld [vmem:[#allocation2 + $0x20] sm:$0xff]
        %v318 = vld [vmem:[#allocation2 + $0x28] sm:$0xff]
        %320 = vset.pattern.permute.xlu0 0
        %321 = vperm.xlu0 %320, %v311
        %v322 = vpop.permute.xlu0 %321
        %v330 = vunpack.c.l.b16 %v313
        %v331 = vunpack.c.h.b16 %v313
        %v332 = vunpack.c.l.b16 %v314
        %v333 = vunpack.c.h.b16 %v314
        %v334 = vunpack.c.l.b16 %v315
        %v335 = vunpack.c.h.b16 %v315
        %v336 = vunpack.c.l.b16 %v316
        %v337 = vunpack.c.h.b16 %v316
        %v338 = vunpack.c.l.b16 %v317
        %v339 = vunpack.c.h.b16 %v317
        %v340 = vunpack.c.l.b16 %v318
        %v341 = vunpack.c.h.b16 %v318
        %v342 = vpack.c.b16 %v332, %v330
        %v343 = vpack.c.b16 %v333, %v331
        %v344 = vpack.c.b16 %v336, %v334
        %v345 = vpack.c.b16 %v337, %v335
        %v346 = vpack.c.b16 %v340, %v338
        %v347 = vpack.c.b16 %v341, %v339
        %vm354 = vcmask 392192
        %v356 = vsel %vm354, %v312, 0
        %358 = vmatprep.subr.bf16.mxu0 0
        %359 = vmatpush1.bf16.msra.mxu0 0
        %360 = vmatprep.subr.bf16.mxu0 0
        %361 = vmatpush1.bf16.msra.mxu0 0
        %362 = vmatprep.subr.bf16.mxu0 0
        %363 = vmatpush1.bf16.msra.mxu0 0
        %364 = vmatprep.subr.bf16.mxu0 0
        %365 = vmatpush1.bf16.msra.mxu0 0
        %366 = vmatprep.subr.bf16.mxu0 0
        %367 = vmatpush1.bf16.msra.mxu0 0
        %368 = vmatprep.subr.bf16.mxu0 %v347
        %369 = vmatpush1.bf16.msra.mxu0 %v346
        %370 = vmatprep.subr.bf16.mxu0 %v345
        %371 = vmatpush1.bf16.msra.mxu0 %v344
        %372 = vmatprep.subr.bf16.mxu0 %v343
        %373 = vmatpush1.bf16.msra.mxu0 %v342
        %374 = vmatprep.subr.bf16.mxu0 0
        %375 = vmatpush2.bf16.msra.mxu0 0
        %376 = vmatprep.subr.bf16.mxu0 0
        %377 = vmatpush2.bf16.msra.mxu0 0
        %378 = vmatprep.subr.bf16.mxu0 0
        %379 = vmatpush2.bf16.msra.mxu0 0
        %380 = vmatprep.subr.bf16.mxu0 0
        %381 = vmatpush2.bf16.msra.mxu0 0
        %382 = vmatprep.subr.bf16.mxu0 0
        %383 = vmatpush2.bf16.msra.mxu0 0
        %384 = vmatprep.subr.bf16.mxu0 0
        %385 = vmatpush2.bf16.msra.mxu0 0
        %386 = vmatprep.subr.bf16.mxu0 0
        %387 = vmatpush2.bf16.msra.mxu0 0
        %388 = vmatprep.subr.bf16.mxu0 0
        %389 = vmatpush2.bf16.msra.mxu0 0
        %390 = vmatprep.mubr.bf16.mxu0 0
        %391 = vmatmul.mubr.bf16.gmra.mxu0 %v356
        %v392 = vpop.f32.mrf.mxu0
        %v393 = vadd.f32 %v322, %v392
        %v394 = vpop.f32.mrf.mxu0
        %v395 = vadd.f32 %v322, %v394
        %v396 = vpop.f32.mrf.mxu0
        %v397 = vpop.f32.mrf.mxu0
        %398 = vdwg.mxu0
        %v399 = vld [vmem:[#allocation3] sm:$0x3]
        %v401 = vsel %vm354, %v399, 0
        %403 = vmatprep.subr.bf16.mxu0 0
        %404 = vmatpush1.bf16.msra.mxu0 0
        %405 = vmatprep.subr.bf16.mxu0 0
        %406 = vmatpush1.bf16.msra.mxu0 0
        %407 = vmatprep.subr.bf16.mxu0 0
        %408 = vmatpush1.bf16.msra.mxu0 0
        %409 = vmatprep.subr.bf16.mxu0 0
        %410 = vmatpush1.bf16.msra.mxu0 0
        %411 = vmatprep.subr.bf16.mxu0 0
        %412 = vmatpush1.bf16.msra.mxu0 0
        %413 = vmatprep.subr.bf16.mxu0 %v347
        %414 = vmatpush1.bf16.msra.mxu0 %v346
        %415 = vmatprep.subr.bf16.mxu0 %v345
        %416 = vmatpush1.bf16.msra.mxu0 %v344
        %417 = vmatprep.subr.bf16.mxu0 %v343
        %418 = vmatpush1.bf16.msra.mxu0 %v342
        %419 = vmatprep.subr.bf16.mxu0 0
        %420 = vmatpush2.bf16.msra.mxu0 0
        %421 = vmatprep.subr.bf16.mxu0 0
        %422 = vmatpush2.bf16.msra.mxu0 0
        %423 = vmatprep.subr.bf16.mxu0 0
        %424 = vmatpush2.bf16.msra.mxu0 0
        %425 = vmatprep.subr.bf16.mxu0 0
        %426 = vmatpush2.bf16.msra.mxu0 0
        %427 = vmatprep.subr.bf16.mxu0 0
        %428 = vmatpush2.bf16.msra.mxu0 0
        %429 = vmatprep.subr.bf16.mxu0 0
        %430 = vmatpush2.bf16.msra.mxu0 0
        %431 = vmatprep.subr.bf16.mxu0 0
        %432 = vmatpush2.bf16.msra.mxu0 0
        %433 = vmatprep.subr.bf16.mxu0 0
        %434 = vmatpush2.bf16.msra.mxu0 0
        %435 = vmatprep.mubr.bf16.mxu0 0
        %436 = vmatmul.mubr.bf16.gmra.mxu0 %v401
        %v437 = vpop.f32.mrf.mxu0
        %v438 = vadd.f32 0.0, %v437
        %v439 = vpop.f32.mrf.mxu0
        %v440 = vadd.f32 0.0, %v439
        %v441 = vpop.f32.mrf.mxu0
        %v442 = vpop.f32.mrf.mxu0
        %443 = vdwg.mxu0
        %444 = vrot.lane.b32.xlu0 %v438, 1
        %v445 = vpop.permute.xlu0 %444
        %446 = vrot.lane.b32.xlu0 %v440, 1
        %v447 = vpop.permute.xlu0 %446
        %vm448 = vcmp.lt.s32.totalorder %v253, 1
        %v449 = vsel %vm448, %v445, %v447
        %v450 = vsel %vm448, %v447, %v445
        %v451 = vlaneseq
        %v452 = vshrl.u32 %v451, 7
        %v453 = vsub.s32 3, %v452
        %v454 = vrot.slane %v212, %v453
        %v455 = vlaneseq
        %v456 = vshrl.u32 %v455, 7
        %v457 = vsub.s32 3, %v456
        %v458 = vrot.slane %v213, %v457
        %v459 = vmul.f32 %v450, %v454
        %v460 = vmul.f32 %v449, %v458
        %v461 = vadd.f32 %v393, %v459
        %v462 = vadd.f32 %v395, %v460
        %v463 = vld [vmem:[#allocation3 + $0x10] sm:$0x3]
        %v465 = vsel %vm354, %v463, 0
        %467 = vmatprep.subr.bf16.mxu0 0
        %468 = vmatpush1.bf16.msra.mxu0 0
        %469 = vmatprep.subr.bf16.mxu0 0
        %470 = vmatpush1.bf16.msra.mxu0 0
        %471 = vmatprep.subr.bf16.mxu0 0
        %472 = vmatpush1.bf16.msra.mxu0 0
        %473 = vmatprep.subr.bf16.mxu0 0
        %474 = vmatpush1.bf16.msra.mxu0 0
        %475 = vmatprep.subr.bf16.mxu0 0
        %476 = vmatpush1.bf16.msra.mxu0 0
        %477 = vmatprep.subr.bf16.mxu0 %v347
        %478 = vmatpush1.bf16.msra.mxu0 %v346
        %479 = vmatprep.subr.bf16.mxu0 %v345
        %480 = vmatpush1.bf16.msra.mxu0 %v344
        %481 = vmatprep.subr.bf16.mxu0 %v343
        %482 = vmatpush1.bf16.msra.mxu0 %v342
        %483 = vmatprep.subr.bf16.mxu0 0
        %484 = vmatpush2.bf16.msra.mxu0 0
        %485 = vmatprep.subr.bf16.mxu0 0
        %486 = vmatpush2.bf16.msra.mxu0 0
        %487 = vmatprep.subr.bf16.mxu0 0
        %488 = vmatpush2.bf16.msra.mxu0 0
        %489 = vmatprep.subr.bf16.mxu0 0
        %490 = vmatpush2.bf16.msra.mxu0 0
        %491 = vmatprep.subr.bf16.mxu0 0
        %492 = vmatpush2.bf16.msra.mxu0 0
        %493 = vmatprep.subr.bf16.mxu0 0
        %494 = vmatpush2.bf16.msra.mxu0 0
        %495 = vmatprep.subr.bf16.mxu0 0
        %496 = vmatpush2.bf16.msra.mxu0 0
        %497 = vmatprep.subr.bf16.mxu0 0
        %498 = vmatpush2.bf16.msra.mxu0 0
        %499 = vmatprep.mubr.bf16.mxu0 0
        %500 = vmatmul.mubr.bf16.gmra.mxu0 %v465
        %v501 = vpop.f32.mrf.mxu0
        %v502 = vadd.f32 0.0, %v501
        %v503 = vpop.f32.mrf.mxu0
        %v504 = vadd.f32 0.0, %v503
        %v505 = vpop.f32.mrf.mxu0
        %v506 = vpop.f32.mrf.mxu0
        %507 = vdwg.mxu0
        %508 = vrot.lane.b32.xlu0 %v502, 127
        %v509 = vpop.permute.xlu0 %508
        %510 = vrot.lane.b32.xlu0 %v504, 127
        %v511 = vpop.permute.xlu0 %510
        %vm512 = vcmp.lt.s32.totalorder %v253, 127
        %v513 = vsel %vm512, %v509, %v511
        %v514 = vsel %vm512, %v511, %v509
        %v515 = vlaneseq
        %v516 = vshrl.u32 %v515, 7
        %v517 = vsub.s32 5, %v516
        %v518 = vrot.slane %v212, %v517
        %v519 = vlaneseq
        %v520 = vshrl.u32 %v519, 7
        %v521 = vsub.s32 5, %v520
        %v522 = vrot.slane %v213, %v521
        %v523 = vmul.f32 %v513, %v518
        %v524 = vmul.f32 %v514, %v522
        %v525 = vadd.f32 %v461, %v523
        %v526 = vadd.f32 %v462, %v524
        %vm527 = vcmp.gt.f32.partialorder %v525, 0.0
        %vm528 = vcmp.gt.f32.partialorder %v526, 0.0
        %v529 = vmul.f32 %v525, 0.2
        %v530 = vmul.f32 %v526, 0.2
        %v531 = vsel %vm527, %v525, %v529
        %v532 = vsel %vm528, %v526, %v530
        %533 = vrot.lane.b32.xlu0 %v531, 16
        %v534 = vpop.permute.xlu0 %533
        %535 = vrot.lane.b32.xlu0 %v532, 16
        %v536 = vpop.permute.xlu0 %535
        %v537 = vsel %vm254, %v534, %v536
        %v538 = vsel %vm254, %v536, %v534
        %v539 = vmul.f32 %v538, %v260
        %v540 = vmul.f32 %v537, %v264
        %v541 = vpack.c.bf16 %v539, %v539
        %v542 = vpack.c.bf16 %v540, %v540
        %v545 = vunpack.c.l.b16 %v541
        %v546 = vunpack.c.l.b16 %v542
        %v547 = vpack.c.b16 %v546, %v545
        %549 = vst [vmem:[#allocation2 + $0x30] sm:$0x33] %v547
        %v550 = vpack.c.bf16 %v531, %v531
        %v551 = vpack.c.bf16 %v532, %v532
        %v554 = vunpack.c.l.b16 %v550
        %v555 = vunpack.c.l.b16 %v551
        %v556 = vpack.c.b16 %v555, %v554
        %558 = vst [vmem:[#allocation2 + $0x40] sm:$0x33] %v556
        %559 = vrot.lane.b32.xlu0 %v531, 112
        %v560 = vpop.permute.xlu0 %559
        %561 = vrot.lane.b32.xlu0 %v532, 112
        %v562 = vpop.permute.xlu0 %561
        %v563 = vsel %vm289, %v560, %v562
        %v564 = vsel %vm289, %v562, %v560
        %v565 = vmul.f32 %v563, %v295
        %v566 = vmul.f32 %v564, %v299
        %v567 = vpack.c.bf16 %v565, %v565
        %v568 = vpack.c.bf16 %v566, %v566
        %v571 = vunpack.c.l.b16 %v567
        %v572 = vunpack.c.l.b16 %v568
        %v573 = vpack.c.b16 %v572, %v571
        %575 = vst [vmem:[#allocation2 + $0x50] sm:$0x33] %v573
        %v576 = vld [vmem:[%s3 + $0x8] sm:$0xf]
        %v577 = vld [vmem:[#allocation3 + $0x20] sm:$0x3]
        %v578 = vld [vmem:[#allocation2] sm:$0xff]
        %v579 = vld [vmem:[#allocation2 + $0x8] sm:$0xff]
        %v580 = vld [vmem:[#allocation2 + $0x10] sm:$0xff]
        %v581 = vld [vmem:[#allocation2 + $0x18] sm:$0xff]
        %v582 = vld [vmem:[#allocation2 + $0x20] sm:$0xff]
        %v583 = vld [vmem:[#allocation2 + $0x28] sm:$0xff]
        %v584 = vld [vmem:[#allocation2 + $0x30] sm:$0xff]
        %v585 = vld [vmem:[#allocation2 + $0x38] sm:$0xff]
        %v586 = vld [vmem:[#allocation2 + $0x40] sm:$0xff]
        %v587 = vld [vmem:[#allocation2 + $0x48] sm:$0xff]
        %v588 = vld [vmem:[#allocation2 + $0x50] sm:$0xff]
        %v589 = vld [vmem:[#allocation2 + $0x58] sm:$0xff]
        %591 = vset.pattern.permute.xlu0 0
        %592 = vperm.xlu0 %591, %v576
        %v593 = vpop.permute.xlu0 %592
        %v607 = vunpack.c.l.b16 %v578
        %v608 = vunpack.c.h.b16 %v578
        %v609 = vunpack.c.l.b16 %v579
        %v610 = vunpack.c.h.b16 %v579
        %v611 = vunpack.c.l.b16 %v580
        %v612 = vunpack.c.h.b16 %v580
        %v613 = vunpack.c.l.b16 %v581
        %v614 = vunpack.c.h.b16 %v581
        %v615 = vunpack.c.l.b16 %v582
        %v616 = vunpack.c.h.b16 %v582
        %v617 = vunpack.c.l.b16 %v583
        %v618 = vunpack.c.h.b16 %v583
        %v619 = vunpack.c.l.b16 %v584
        %v620 = vunpack.c.h.b16 %v584
        %v621 = vunpack.c.l.b16 %v585
        %v622 = vunpack.c.h.b16 %v585
        %v623 = vunpack.c.l.b16 %v586
        %v624 = vunpack.c.h.b16 %v586
        %v625 = vunpack.c.l.b16 %v587
        %v626 = vunpack.c.h.b16 %v587
        %v627 = vunpack.c.l.b16 %v588
        %v628 = vunpack.c.h.b16 %v588
        %v629 = vunpack.c.l.b16 %v589
        %v630 = vunpack.c.h.b16 %v589
        %v631 = vpack.c.b16 %v609, %v607
        %v632 = vpack.c.b16 %v610, %v608
        %v633 = vpack.c.b16 %v613, %v611
        %v634 = vpack.c.b16 %v614, %v612
        %v635 = vpack.c.b16 %v617, %v615
        %v636 = vpack.c.b16 %v618, %v616
        %v637 = vpack.c.b16 %v621, %v619
        %v638 = vpack.c.b16 %v622, %v620
        %v639 = vpack.c.b16 %v625, %v623
        %v640 = vpack.c.b16 %v626, %v624
        %v641 = vpack.c.b16 %v629, %v627
        %v642 = vpack.c.b16 %v630, %v628
        %vm655 = vcmask 785408
        %v657 = vsel %vm655, %v577, 0
        %659 = vmatprep.subr.bf16.mxu0 0
        %660 = vmatpush1.bf16.msra.mxu0 0
        %661 = vmatprep.subr.bf16.mxu0 0
        %662 = vmatpush1.bf16.msra.mxu0 0
        %663 = vmatprep.subr.bf16.mxu0 %v642
        %664 = vmatpush1.bf16.msra.mxu0 %v641
        %665 = vmatprep.subr.bf16.mxu0 %v640
        %666 = vmatpush1.bf16.msra.mxu0 %v639
        %667 = vmatprep.subr.bf16.mxu0 %v638
        %668 = vmatpush1.bf16.msra.mxu0 %v637
        %669 = vmatprep.subr.bf16.mxu0 %v636
        %670 = vmatpush1.bf16.msra.mxu0 %v635
        %671 = vmatprep.subr.bf16.mxu0 %v634
        %672 = vmatpush1.bf16.msra.mxu0 %v633
        %673 = vmatprep.subr.bf16.mxu0 %v632
        %674 = vmatpush1.bf16.msra.mxu0 %v631
        %675 = vmatprep.subr.bf16.mxu0 0
        %676 = vmatpush2.bf16.msra.mxu0 0
        %677 = vmatprep.subr.bf16.mxu0 0
        %678 = vmatpush2.bf16.msra.mxu0 0
        %679 = vmatprep.subr.bf16.mxu0 0
        %680 = vmatpush2.bf16.msra.mxu0 0
        %681 = vmatprep.subr.bf16.mxu0 0
        %682 = vmatpush2.bf16.msra.mxu0 0
        %683 = vmatprep.subr.bf16.mxu0 0
        %684 = vmatpush2.bf16.msra.mxu0 0
        %685 = vmatprep.subr.bf16.mxu0 0
        %686 = vmatpush2.bf16.msra.mxu0 0
        %687 = vmatprep.subr.bf16.mxu0 0
        %688 = vmatpush2.bf16.msra.mxu0 0
        %689 = vmatprep.subr.bf16.mxu0 0
        %690 = vmatpush2.bf16.msra.mxu0 0
        %691 = vmatprep.mubr.bf16.mxu0 0
        %692 = vmatmul.mubr.bf16.gmra.mxu0 %v657
        %v693 = vpop.f32.mrf.mxu0
        %v694 = vadd.f32 %v593, %v693
        %v695 = vpop.f32.mrf.mxu0
        %v696 = vadd.f32 %v593, %v695
        %v697 = vpop.f32.mrf.mxu0
        %v698 = vpop.f32.mrf.mxu0
        %699 = vdwg.mxu0
        %v700 = vld [vmem:[#allocation3 + $0x18] sm:$0x3]
        %v702 = vsel %vm655, %v700, 0
        %704 = vmatprep.subr.bf16.mxu0 0
        %705 = vmatpush1.bf16.msra.mxu0 0
        %706 = vmatprep.subr.bf16.mxu0 0
        %707 = vmatpush1.bf16.msra.mxu0 0
        %708 = vmatprep.subr.bf16.mxu0 %v642
        %709 = vmatpush1.bf16.msra.mxu0 %v641
        %710 = vmatprep.subr.bf16.mxu0 %v640
        %711 = vmatpush1.bf16.msra.mxu0 %v639
        %712 = vmatprep.subr.bf16.mxu0 %v638
        %713 = vmatpush1.bf16.msra.mxu0 %v637
        %714 = vmatprep.subr.bf16.mxu0 %v636
        %715 = vmatpush1.bf16.msra.mxu0 %v635
        %716 = vmatprep.subr.bf16.mxu0 %v634
        %717 = vmatpush1.bf16.msra.mxu0 %v633
        %718 = vmatprep.subr.bf16.mxu0 %v632
        %719 = vmatpush1.bf16.msra.mxu0 %v631
        %720 = vmatprep.subr.bf16.mxu0 0
        %721 = vmatpush2.bf16.msra.mxu0 0
        %722 = vmatprep.subr.bf16.mxu0 0
        %723 = vmatpush2.bf16.msra.mxu0 0
        %724 = vmatprep.subr.bf16.mxu0 0
        %725 = vmatpush2.bf16.msra.mxu0 0
        %726 = vmatprep.subr.bf16.mxu0 0
        %727 = vmatpush2.bf16.msra.mxu0 0
        %728 = vmatprep.subr.bf16.mxu0 0
        %729 = vmatpush2.bf16.msra.mxu0 0
        %730 = vmatprep.subr.bf16.mxu0 0
        %731 = vmatpush2.bf16.msra.mxu0 0
        %732 = vmatprep.subr.bf16.mxu0 0
        %733 = vmatpush2.bf16.msra.mxu0 0
        %734 = vmatprep.subr.bf16.mxu0 0
        %735 = vmatpush2.bf16.msra.mxu0 0
        %736 = vmatprep.mubr.bf16.mxu0 0
        %737 = vmatmul.mubr.bf16.gmra.mxu0 %v702
        %v738 = vpop.f32.mrf.mxu0
        %v739 = vadd.f32 0.0, %v738
        %v740 = vpop.f32.mrf.mxu0
        %v741 = vadd.f32 0.0, %v740
        %v742 = vpop.f32.mrf.mxu0
        %v743 = vpop.f32.mrf.mxu0
        %744 = vdwg.mxu0
        %745 = vrot.lane.b32.xlu0 %v739, 1
        %v746 = vpop.permute.xlu0 %745
        %747 = vrot.lane.b32.xlu0 %v741, 1
        %v748 = vpop.permute.xlu0 %747
        %v749 = vsel %vm448, %v746, %v748
        %v750 = vsel %vm448, %v748, %v746
        %v751 = vmul.f32 %v750, %v454
        %v752 = vmul.f32 %v749, %v458
        %v753 = vadd.f32 %v694, %v751
        %v754 = vadd.f32 %v696, %v752
        %v755 = vld [vmem:[#allocation3 + $0x28] sm:$0x3]
        %v757 = vsel %vm655, %v755, 0
        %759 = vmatprep.subr.bf16.mxu0 0
        %760 = vmatpush1.bf16.msra.mxu0 0
        %761 = vmatprep.subr.bf16.mxu0 0
        %762 = vmatpush1.bf16.msra.mxu0 0
        %763 = vmatprep.subr.bf16.mxu0 %v642
        %764 = vmatpush1.bf16.msra.mxu0 %v641
        %765 = vmatprep.subr.bf16.mxu0 %v640
        %766 = vmatpush1.bf16.msra.mxu0 %v639
        %767 = vmatprep.subr.bf16.mxu0 %v638
        %768 = vmatpush1.bf16.msra.mxu0 %v637
        %769 = vmatprep.subr.bf16.mxu0 %v636
        %770 = vmatpush1.bf16.msra.mxu0 %v635
        %771 = vmatprep.subr.bf16.mxu0 %v634
        %772 = vmatpush1.bf16.msra.mxu0 %v633
        %773 = vmatprep.subr.bf16.mxu0 %v632
        %774 = vmatpush1.bf16.msra.mxu0 %v631
        %775 = vmatprep.subr.bf16.mxu0 0
        %776 = vmatpush2.bf16.msra.mxu0 0
        %777 = vmatprep.subr.bf16.mxu0 0
        %778 = vmatpush2.bf16.msra.mxu0 0
        %779 = vmatprep.subr.bf16.mxu0 0
        %780 = vmatpush2.bf16.msra.mxu0 0
        %781 = vmatprep.subr.bf16.mxu0 0
        %782 = vmatpush2.bf16.msra.mxu0 0
        %783 = vmatprep.subr.bf16.mxu0 0
        %784 = vmatpush2.bf16.msra.mxu0 0
        %785 = vmatprep.subr.bf16.mxu0 0
        %786 = vmatpush2.bf16.msra.mxu0 0
        %787 = vmatprep.subr.bf16.mxu0 0
        %788 = vmatpush2.bf16.msra.mxu0 0
        %789 = vmatprep.subr.bf16.mxu0 0
        %790 = vmatpush2.bf16.msra.mxu0 0
        %791 = vmatprep.mubr.bf16.mxu0 0
        %792 = vmatmul.mubr.bf16.gmra.mxu0 %v757
        %v793 = vpop.f32.mrf.mxu0
        %v794 = vadd.f32 0.0, %v793
        %v795 = vpop.f32.mrf.mxu0
        %v796 = vadd.f32 0.0, %v795
        %v797 = vpop.f32.mrf.mxu0
        %v798 = vpop.f32.mrf.mxu0
        %799 = vdwg.mxu0
        %800 = vrot.lane.b32.xlu0 %v794, 127
        %v801 = vpop.permute.xlu0 %800
        %802 = vrot.lane.b32.xlu0 %v796, 127
        %v803 = vpop.permute.xlu0 %802
        %v804 = vsel %vm512, %v801, %v803
        %v805 = vsel %vm512, %v803, %v801
        %v806 = vmul.f32 %v804, %v518
        %v807 = vmul.f32 %v805, %v522
        %v808 = vadd.f32 %v753, %v806
        %v809 = vadd.f32 %v754, %v807
        %vm810 = vcmp.gt.f32.partialorder %v808, 0.0
        %vm811 = vcmp.gt.f32.partialorder %v809, 0.0
        %v812 = vmul.f32 %v808, 0.2
        %v813 = vmul.f32 %v809, 0.2
        %v814 = vsel %vm810, %v808, %v812
        %v815 = vsel %vm811, %v809, %v813
        %816 = vrot.lane.b32.xlu0 %v814, 16
        %v817 = vpop.permute.xlu0 %816
        %818 = vrot.lane.b32.xlu0 %v815, 16
        %v819 = vpop.permute.xlu0 %818
        %v820 = vsel %vm254, %v817, %v819
        %v821 = vsel %vm254, %v819, %v817
        %v822 = vmul.f32 %v821, %v260
        %v823 = vmul.f32 %v820, %v264
        %v824 = vpack.c.bf16 %v822, %v822
        %v825 = vpack.c.bf16 %v823, %v823
        %v828 = vunpack.c.l.b16 %v824
        %v829 = vunpack.c.l.b16 %v825
        %v830 = vpack.c.b16 %v829, %v828
        %832 = vst [vmem:[#allocation2 + $0x60] sm:$0x33] %v830
        %v833 = vpack.c.bf16 %v814, %v814
        %v834 = vpack.c.bf16 %v815, %v815
        %v837 = vunpack.c.l.b16 %v833
        %v838 = vunpack.c.l.b16 %v834
        %v839 = vpack.c.b16 %v838, %v837
        %841 = vst [vmem:[#allocation2 + $0x70] sm:$0x33] %v839
        %842 = vrot.lane.b32.xlu0 %v814, 112
        %v843 = vpop.permute.xlu0 %842
        %844 = vrot.lane.b32.xlu0 %v815, 112
        %v845 = vpop.permute.xlu0 %844
        %v846 = vsel %vm289, %v843, %v845
        %v847 = vsel %vm289, %v845, %v843
        %v848 = vmul.f32 %v846, %v295
        %v849 = vmul.f32 %v847, %v299
        %v850 = vpack.c.bf16 %v848, %v848
        %v851 = vpack.c.bf16 %v849, %v849
        %v854 = vunpack.c.l.b16 %v850
        %v855 = vunpack.c.l.b16 %v851
        %v856 = vpack.c.b16 %v855, %v854
        %858 = vst [vmem:[#allocation2 + $0x80] sm:$0x33] %v856
        %v859 = vld [vmem:[%s3 + $0x10] sm:$0xf]
        %v860 = vld [vmem:[#allocation3 + $0x38] sm:$0x33]
        %v861 = vld [vmem:[#allocation2] sm:$0xff]
        %v862 = vld [vmem:[#allocation2 + $0x8] sm:$0xff]
        %v863 = vld [vmem:[#allocation2 + $0x10] sm:$0xff]
        %v864 = vld [vmem:[#allocation2 + $0x18] sm:$0xff]
        %v865 = vld [vmem:[#allocation2 + $0x20] sm:$0xff]
        %v866 = vld [vmem:[#allocation2 + $0x28] sm:$0xff]
        %v867 = vld [vmem:[#allocation2 + $0x30] sm:$0xff]
        %v868 = vld [vmem:[#allocation2 + $0x38] sm:$0xff]
        %v869 = vld [vmem:[#allocation2 + $0x40] sm:$0xff]
        %v870 = vld [vmem:[#allocation2 + $0x48] sm:$0xff]
        %v871 = vld [vmem:[#allocation2 + $0x50] sm:$0xff]
        %v872 = vld [vmem:[#allocation2 + $0x58] sm:$0xff]
        %v873 = vld [vmem:[#allocation2 + $0x60] sm:$0xff]
        %v874 = vld [vmem:[#allocation2 + $0x68] sm:$0xff]
        %v875 = vld [vmem:[#allocation2 + $0x70] sm:$0xff]
        %v876 = vld [vmem:[#allocation2 + $0x78] sm:$0xff]
        %v877 = vld [vmem:[#allocation2 + $0x80] sm:$0xff]
        %v878 = vld [vmem:[#allocation2 + $0x88] sm:$0xff]
        %880 = vset.pattern.permute.xlu0 0
        %881 = vperm.xlu0 %880, %v859
        %v882 = vpop.permute.xlu0 %881
        %v885 = vunpack.c.l.b16 %v860
        %v886 = vunpack.c.h.b16 %v860
        %v887 = vpack.c.b16 %v885, %v885
        %v888 = vpack.c.b16 %v886, %v886
        %v908 = vunpack.c.l.b16 %v861
        %v909 = vunpack.c.h.b16 %v861
        %v910 = vunpack.c.l.b16 %v862
        %v911 = vunpack.c.h.b16 %v862
        %v912 = vunpack.c.l.b16 %v863
        %v913 = vunpack.c.h.b16 %v863
        %v914 = vunpack.c.l.b16 %v864
        %v915 = vunpack.c.h.b16 %v864
        %v916 = vunpack.c.l.b16 %v865
        %v917 = vunpack.c.h.b16 %v865
        %v918 = vunpack.c.l.b16 %v866
        %v919 = vunpack.c.h.b16 %v866
        %v920 = vunpack.c.l.b16 %v867
        %v921 = vunpack.c.h.b16 %v867
        %v922 = vunpack.c.l.b16 %v868
        %v923 = vunpack.c.h.b16 %v868
        %v924 = vunpack.c.l.b16 %v869
        %v925 = vunpack.c.h.b16 %v869
        %v926 = vunpack.c.l.b16 %v870
        %v927 = vunpack.c.h.b16 %v870
        %v928 = vunpack.c.l.b16 %v871
        %v929 = vunpack.c.h.b16 %v871
        %v930 = vunpack.c.l.b16 %v872
        %v931 = vunpack.c.h.b16 %v872
        %v932 = vunpack.c.l.b16 %v873
        %v933 = vunpack.c.h.b16 %v873
        %v934 = vunpack.c.l.b16 %v874
        %v935 = vunpack.c.h.b16 %v874
        %v936 = vunpack.c.l.b16 %v875
        %v937 = vunpack.c.h.b16 %v875
        %v938 = vunpack.c.l.b16 %v876
        %v939 = vunpack.c.h.b16 %v876
        %v940 = vunpack.c.l.b16 %v877
        %v941 = vunpack.c.h.b16 %v877
        %v942 = vunpack.c.l.b16 %v878
        %v943 = vunpack.c.h.b16 %v878
        %v944 = vpack.c.b16 %v910, %v908
        %v945 = vpack.c.b16 %v911, %v909
        %v946 = vpack.c.b16 %v914, %v912
        %v947 = vpack.c.b16 %v915, %v913
        %v948 = vpack.c.b16 %v918, %v916
        %v949 = vpack.c.b16 %v919, %v917
        %v950 = vpack.c.b16 %v922, %v920
        %v951 = vpack.c.b16 %v923, %v921
        %v952 = vpack.c.b16 %v926, %v924
        %v953 = vpack.c.b16 %v927, %v925
        %v954 = vpack.c.b16 %v930, %v928
        %v955 = vpack.c.b16 %v931, %v929
        %v956 = vpack.c.b16 %v934, %v932
        %v957 = vpack.c.b16 %v935, %v933
        %v958 = vpack.c.b16 %v938, %v936
        %v959 = vpack.c.b16 %v939, %v937
        %v960 = vpack.c.b16 %v942, %v940
        %v961 = vpack.c.b16 %v943, %v941
        %vm980 = vcmask 130048
        %v982 = vsel %vm980, %v888, 0
        %984 = vmatprep.subr.bf16.mxu0 %v959
        %985 = vmatpush1.bf16.msra.mxu0 %v958
        %986 = vmatprep.subr.bf16.mxu0 %v957
        %987 = vmatpush1.bf16.msra.mxu0 %v956
        %988 = vmatprep.subr.bf16.mxu0 %v955
        %989 = vmatpush1.bf16.msra.mxu0 %v954
        %990 = vmatprep.subr.bf16.mxu0 %v953
        %991 = vmatpush1.bf16.msra.mxu0 %v952
        %992 = vmatprep.subr.bf16.mxu0 %v951
        %993 = vmatpush1.bf16.msra.mxu0 %v950
        %994 = vmatprep.subr.bf16.mxu0 %v949
        %995 = vmatpush1.bf16.msra.mxu0 %v948
        %996 = vmatprep.subr.bf16.mxu0 %v947
        %997 = vmatpush1.bf16.msra.mxu0 %v946
        %998 = vmatprep.subr.bf16.mxu0 %v945
        %999 = vmatpush1.bf16.msra.mxu0 %v944
        %1000 = vmatprep.subr.bf16.mxu0 0
        %1001 = vmatpush2.bf16.msra.mxu0 0
        %1002 = vmatprep.subr.bf16.mxu0 0
        %1003 = vmatpush2.bf16.msra.mxu0 0
        %1004 = vmatprep.subr.bf16.mxu0 0
        %1005 = vmatpush2.bf16.msra.mxu0 0
        %1006 = vmatprep.subr.bf16.mxu0 0
        %1007 = vmatpush2.bf16.msra.mxu0 0
        %1008 = vmatprep.subr.bf16.mxu0 0
        %1009 = vmatpush2.bf16.msra.mxu0 0
        %1010 = vmatprep.subr.bf16.mxu0 0
        %1011 = vmatpush2.bf16.msra.mxu0 0
        %1012 = vmatprep.subr.bf16.mxu0 0
        %1013 = vmatpush2.bf16.msra.mxu0 0
        %1014 = vmatprep.subr.bf16.mxu0 %v961
        %1015 = vmatpush2.bf16.msra.mxu0 %v960
        %1016 = vmatprep.mubr.bf16.mxu0 %v982
        %1017 = vmatmul.mubr.bf16.gmra.mxu0 %v887
        %v1018 = vpop.f32.mrf.mxu0
        %v1019 = vadd.f32 %v882, %v1018
        %v1020 = vpop.f32.mrf.mxu0
        %v1021 = vadd.f32 %v882, %v1020
        %v1022 = vpop.f32.mrf.mxu0
        %v1023 = vpop.f32.mrf.mxu0
        %1024 = vdwg.mxu0
        %v1025 = vld [vmem:[#allocation3 + $0x30] sm:$0x33]
        %v1027 = vunpack.c.l.b16 %v1025
        %v1028 = vunpack.c.h.b16 %v1025
        %v1029 = vpack.c.b16 %v1027, %v1027
        %v1030 = vpack.c.b16 %v1028, %v1028
        %v1033 = vsel %vm980, %v1030, 0
        %1035 = vmatprep.subr.bf16.mxu0 %v959
        %1036 = vmatpush1.bf16.msra.mxu0 %v958
        %1037 = vmatprep.subr.bf16.mxu0 %v957
        %1038 = vmatpush1.bf16.msra.mxu0 %v956
        %1039 = vmatprep.subr.bf16.mxu0 %v955
        %1040 = vmatpush1.bf16.msra.mxu0 %v954
        %1041 = vmatprep.subr.bf16.mxu0 %v953
        %1042 = vmatpush1.bf16.msra.mxu0 %v952
        %1043 = vmatprep.subr.bf16.mxu0 %v951
        %1044 = vmatpush1.bf16.msra.mxu0 %v950
        %1045 = vmatprep.subr.bf16.mxu0 %v949
        %1046 = vmatpush1.bf16.msra.mxu0 %v948
        %1047 = vmatprep.subr.bf16.mxu0 %v947
        %1048 = vmatpush1.bf16.msra.mxu0 %v946
        %1049 = vmatprep.subr.bf16.mxu0 %v945
        %1050 = vmatpush1.bf16.msra.mxu0 %v944
        %1051 = vmatprep.subr.bf16.mxu0 0
        %1052 = vmatpush2.bf16.msra.mxu0 0
        %1053 = vmatprep.subr.bf16.mxu0 0
        %1054 = vmatpush2.bf16.msra.mxu0 0
        %1055 = vmatprep.subr.bf16.mxu0 0
        %1056 = vmatpush2.bf16.msra.mxu0 0
        %1057 = vmatprep.subr.bf16.mxu0 0
        %1058 = vmatpush2.bf16.msra.mxu0 0
        %1059 = vmatprep.subr.bf16.mxu0 0
        %1060 = vmatpush2.bf16.msra.mxu0 0
        %1061 = vmatprep.subr.bf16.mxu0 0
        %1062 = vmatpush2.bf16.msra.mxu0 0
        %1063 = vmatprep.subr.bf16.mxu0 0
        %1064 = vmatpush2.bf16.msra.mxu0 0
        %1065 = vmatprep.subr.bf16.mxu0 %v961
        %1066 = vmatpush2.bf16.msra.mxu0 %v960
        %1067 = vmatprep.mubr.bf16.mxu0 %v1033
        %1068 = vmatmul.mubr.bf16.gmra.mxu0 %v1029
        %v1069 = vpop.f32.mrf.mxu0
        %v1070 = vadd.f32 0.0, %v1069
        %v1071 = vpop.f32.mrf.mxu0
        %v1072 = vadd.f32 0.0, %v1071
        %v1073 = vpop.f32.mrf.mxu0
        %v1074 = vpop.f32.mrf.mxu0
        %1075 = vdwg.mxu0
        %1076 = vrot.lane.b32.xlu0 %v1070, 1
        %v1077 = vpop.permute.xlu0 %1076
        %1078 = vrot.lane.b32.xlu0 %v1072, 1
        %v1079 = vpop.permute.xlu0 %1078
        %v1080 = vsel %vm448, %v1077, %v1079
        %v1081 = vsel %vm448, %v1079, %v1077
        %v1082 = vmul.f32 %v1081, %v454
        %v1083 = vmul.f32 %v1080, %v458
        %v1084 = vadd.f32 %v1019, %v1082
        %v1085 = vadd.f32 %v1021, %v1083
        %v1086 = vld [vmem:[#allocation3 + $0x40] sm:$0x33]
        %v1088 = vunpack.c.l.b16 %v1086
        %v1089 = vunpack.c.h.b16 %v1086
        %v1090 = vpack.c.b16 %v1088, %v1088
        %v1091 = vpack.c.b16 %v1089, %v1089
        %v1094 = vsel %vm980, %v1091, 0
        %1096 = vmatprep.subr.bf16.mxu0 %v959
        %1097 = vmatpush1.bf16.msra.mxu0 %v958
        %1098 = vmatprep.subr.bf16.mxu0 %v957
        %1099 = vmatpush1.bf16.msra.mxu0 %v956
        %1100 = vmatprep.subr.bf16.mxu0 %v955
        %1101 = vmatpush1.bf16.msra.mxu0 %v954
        %1102 = vmatprep.subr.bf16.mxu0 %v953
        %1103 = vmatpush1.bf16.msra.mxu0 %v952
        %1104 = vmatprep.subr.bf16.mxu0 %v951
        %1105 = vmatpush1.bf16.msra.mxu0 %v950
        %1106 = vmatprep.subr.bf16.mxu0 %v949
        %1107 = vmatpush1.bf16.msra.mxu0 %v948
        %1108 = vmatprep.subr.bf16.mxu0 %v947
        %1109 = vmatpush1.bf16.msra.mxu0 %v946
        %1110 = vmatprep.subr.bf16.mxu0 %v945
        %1111 = vmatpush1.bf16.msra.mxu0 %v944
        %1112 = vmatprep.subr.bf16.mxu0 0
        %1113 = vmatpush2.bf16.msra.mxu0 0
        %1114 = vmatprep.subr.bf16.mxu0 0
        %1115 = vmatpush2.bf16.msra.mxu0 0
        %1116 = vmatprep.subr.bf16.mxu0 0
        %1117 = vmatpush2.bf16.msra.mxu0 0
        %1118 = vmatprep.subr.bf16.mxu0 0
        %1119 = vmatpush2.bf16.msra.mxu0 0
        %1120 = vmatprep.subr.bf16.mxu0 0
        %1121 = vmatpush2.bf16.msra.mxu0 0
        %1122 = vmatprep.subr.bf16.mxu0 0
        %1123 = vmatpush2.bf16.msra.mxu0 0
        %1124 = vmatprep.subr.bf16.mxu0 0
        %1125 = vmatpush2.bf16.msra.mxu0 0
        %1126 = vmatprep.subr.bf16.mxu0 %v961
        %1127 = vmatpush2.bf16.msra.mxu0 %v960
        %1128 = vmatprep.mubr.bf16.mxu0 %v1094
        %1129 = vmatmul.mubr.bf16.gmra.mxu0 %v1090
        %v1130 = vpop.f32.mrf.mxu0
        %v1131 = vadd.f32 0.0, %v1130
        %v1132 = vpop.f32.mrf.mxu0
        %v1133 = vadd.f32 0.0, %v1132
        %v1134 = vpop.f32.mrf.mxu0
        %v1135 = vpop.f32.mrf.mxu0
        %1136 = vdwg.mxu0
        %1137 = vrot.lane.b32.xlu0 %v1131, 127
        %v1138 = vpop.permute.xlu0 %1137
        %1139 = vrot.lane.b32.xlu0 %v1133, 127
        %v1140 = vpop.permute.xlu0 %1139
        %v1141 = vsel %vm512, %v1138, %v1140
        %v1142 = vsel %vm512, %v1140, %v1138
        %v1143 = vmul.f32 %v1141, %v518
        %v1144 = vmul.f32 %v1142, %v522
        %v1145 = vadd.f32 %v1084, %v1143
        %v1146 = vadd.f32 %v1085, %v1144
        %vm1147 = vcmp.gt.f32.partialorder %v1145, 0.0
        %vm1148 = vcmp.gt.f32.partialorder %v1146, 0.0
        %v1149 = vmul.f32 %v1145, 0.2
        %v1150 = vmul.f32 %v1146, 0.2
        %v1151 = vsel %vm1147, %v1145, %v1149
        %v1152 = vsel %vm1148, %v1146, %v1150
        %1153 = vrot.lane.b32.xlu0 %v1151, 16
        %v1154 = vpop.permute.xlu0 %1153
        %1155 = vrot.lane.b32.xlu0 %v1152, 16
        %v1156 = vpop.permute.xlu0 %1155
        %v1157 = vsel %vm254, %v1154, %v1156
        %v1158 = vsel %vm254, %v1156, %v1154
        %v1159 = vmul.f32 %v1158, %v260
        %v1160 = vmul.f32 %v1157, %v264
        %v1161 = vpack.c.bf16 %v1159, %v1159
        %v1162 = vpack.c.bf16 %v1160, %v1160
        %v1165 = vunpack.c.l.b16 %v1161
        %v1166 = vunpack.c.l.b16 %v1162
        %v1167 = vpack.c.b16 %v1166, %v1165
        %1169 = vst [vmem:[#allocation2 + $0x90] sm:$0x33] %v1167
        %v1170 = vpack.c.bf16 %v1151, %v1151
        %v1171 = vpack.c.bf16 %v1152, %v1152
        %v1174 = vunpack.c.l.b16 %v1170
        %v1175 = vunpack.c.l.b16 %v1171
        %v1176 = vpack.c.b16 %v1175, %v1174
        %1178 = vst [vmem:[#allocation2 + $0xa0] sm:$0x33] %v1176
        %1179 = vrot.lane.b32.xlu0 %v1151, 112
        %v1180 = vpop.permute.xlu0 %1179
        %1181 = vrot.lane.b32.xlu0 %v1152, 112
        %v1182 = vpop.permute.xlu0 %1181
        %v1183 = vsel %vm289, %v1180, %v1182
        %v1184 = vsel %vm289, %v1182, %v1180
        %v1185 = vmul.f32 %v1183, %v295
        %v1186 = vmul.f32 %v1184, %v299
        %v1187 = vpack.c.bf16 %v1185, %v1185
        %v1188 = vpack.c.bf16 %v1186, %v1186
        %v1191 = vunpack.c.l.b16 %v1187
        %v1192 = vunpack.c.l.b16 %v1188
        %v1193 = vpack.c.b16 %v1192, %v1191
        %1195 = vst [vmem:[#allocation2 + $0xb0] sm:$0x33] %v1193
        %v1196 = vld [vmem:[%s3 + $0x18] sm:$0xf]
        %v1197 = vld [vmem:[#allocation3 + $0x50] sm:$0x33]
        %v1198 = vld [vmem:[#allocation2] sm:$0xff]
        %v1199 = vld [vmem:[#allocation2 + $0x8] sm:$0xff]
        %v1200 = vld [vmem:[#allocation2 + $0x10] sm:$0xff]
        %v1201 = vld [vmem:[#allocation2 + $0x18] sm:$0xff]
        %v1202 = vld [vmem:[#allocation2 + $0x20] sm:$0xff]
        %v1203 = vld [vmem:[#allocation2 + $0x28] sm:$0xff]
        %v1204 = vld [vmem:[#allocation2 + $0x30] sm:$0xff]
        %v1205 = vld [vmem:[#allocation2 + $0x38] sm:$0xff]
        %v1206 = vld [vmem:[#allocation2 + $0x40] sm:$0xff]
        %v1207 = vld [vmem:[#allocation2 + $0x48] sm:$0xff]
        %v1208 = vld [vmem:[#allocation2 + $0x50] sm:$0xff]
        %v1209 = vld [vmem:[#allocation2 + $0x58] sm:$0xff]
        %v1210 = vld [vmem:[#allocation2 + $0x60] sm:$0xff]
        %v1211 = vld [vmem:[#allocation2 + $0x68] sm:$0xff]
        %v1212 = vld [vmem:[#allocation2 + $0x70] sm:$0xff]
        %v1213 = vld [vmem:[#allocation2 + $0x78] sm:$0xff]
        %v1214 = vld [vmem:[#allocation2 + $0x80] sm:$0xff]
        %v1215 = vld [vmem:[#allocation2 + $0x88] sm:$0xff]
        %v1216 = vld [vmem:[#allocation2 + $0x90] sm:$0xff]
        %v1217 = vld [vmem:[#allocation2 + $0x98] sm:$0xff]
        %v1218 = vld [vmem:[#allocation2 + $0xa0] sm:$0xff]
        %v1219 = vld [vmem:[#allocation2 + $0xa8] sm:$0xff]
        %v1220 = vld [vmem:[#allocation2 + $0xb0] sm:$0xff]
        %v1221 = vld [vmem:[#allocation2 + $0xb8] sm:$0xff]
        %1223 = vset.pattern.permute.xlu0 0
        %1224 = vperm.xlu0 %1223, %v1196
        %v1225 = vpop.permute.xlu0 %1224
        %v1228 = vunpack.c.l.b16 %v1197
        %v1229 = vunpack.c.h.b16 %v1197
        %v1230 = vpack.c.b16 %v1228, %v1228
        %v1231 = vpack.c.b16 %v1229, %v1229
        %v1257 = vunpack.c.l.b16 %v1198
        %v1258 = vunpack.c.h.b16 %v1198
        %v1259 = vunpack.c.l.b16 %v1199
        %v1260 = vunpack.c.h.b16 %v1199
        %v1261 = vunpack.c.l.b16 %v1200
        %v1262 = vunpack.c.h.b16 %v1200
        %v1263 = vunpack.c.l.b16 %v1201
        %v1264 = vunpack.c.h.b16 %v1201
        %v1265 = vunpack.c.l.b16 %v1202
        %v1266 = vunpack.c.h.b16 %v1202
        %v1267 = vunpack.c.l.b16 %v1203
        %v1268 = vunpack.c.h.b16 %v1203
        %v1269 = vunpack.c.l.b16 %v1204
        %v1270 = vunpack.c.h.b16 %v1204
        %v1271 = vunpack.c.l.b16 %v1205
        %v1272 = vunpack.c.h.b16 %v1205
        %v1273 = vunpack.c.l.b16 %v1206
        %v1274 = vunpack.c.h.b16 %v1206
        %v1275 = vunpack.c.l.b16 %v1207
        %v1276 = vunpack.c.h.b16 %v1207
        %v1277 = vunpack.c.l.b16 %v1208
        %v1278 = vunpack.c.h.b16 %v1208
        %v1279 = vunpack.c.l.b16 %v1209
        %v1280 = vunpack.c.h.b16 %v1209
        %v1281 = vunpack.c.l.b16 %v1210
        %v1282 = vunpack.c.h.b16 %v1210
        %v1283 = vunpack.c.l.b16 %v1211
        %v1284 = vunpack.c.h.b16 %v1211
        %v1285 = vunpack.c.l.b16 %v1212
        %v1286 = vunpack.c.h.b16 %v1212
        %v1287 = vunpack.c.l.b16 %v1213
        %v1288 = vunpack.c.h.b16 %v1213
        %v1289 = vunpack.c.l.b16 %v1214
        %v1290 = vunpack.c.h.b16 %v1214
        %v1291 = vunpack.c.l.b16 %v1215
        %v1292 = vunpack.c.h.b16 %v1215
        %v1293 = vunpack.c.l.b16 %v1216
        %v1294 = vunpack.c.h.b16 %v1216
        %v1295 = vunpack.c.l.b16 %v1217
        %v1296 = vunpack.c.h.b16 %v1217
        %v1297 = vunpack.c.l.b16 %v1218
        %v1298 = vunpack.c.h.b16 %v1218
        %v1299 = vunpack.c.l.b16 %v1219
        %v1300 = vunpack.c.h.b16 %v1219
        %v1301 = vunpack.c.l.b16 %v1220
        %v1302 = vunpack.c.h.b16 %v1220
        %v1303 = vunpack.c.l.b16 %v1221
        %v1304 = vunpack.c.h.b16 %v1221
        %v1305 = vpack.c.b16 %v1259, %v1257
        %v1306 = vpack.c.b16 %v1260, %v1258
        %v1307 = vpack.c.b16 %v1263, %v1261
        %v1308 = vpack.c.b16 %v1264, %v1262
        %v1309 = vpack.c.b16 %v1267, %v1265
        %v1310 = vpack.c.b16 %v1268, %v1266
        %v1311 = vpack.c.b16 %v1271, %v1269
        %v1312 = vpack.c.b16 %v1272, %v1270
        %v1313 = vpack.c.b16 %v1275, %v1273
        %v1314 = vpack.c.b16 %v1276, %v1274
        %v1315 = vpack.c.b16 %v1279, %v1277
        %v1316 = vpack.c.b16 %v1280, %v1278
        %v1317 = vpack.c.b16 %v1283, %v1281
        %v1318 = vpack.c.b16 %v1284, %v1282
        %v1319 = vpack.c.b16 %v1287, %v1285
        %v1320 = vpack.c.b16 %v1288, %v1286
        %v1321 = vpack.c.b16 %v1291, %v1289
        %v1322 = vpack.c.b16 %v1292, %v1290
        %v1323 = vpack.c.b16 %v1295, %v1293
        %v1324 = vpack.c.b16 %v1296, %v1294
        %v1325 = vpack.c.b16 %v1299, %v1297
        %v1326 = vpack.c.b16 %v1300, %v1298
        %v1327 = vpack.c.b16 %v1303, %v1301
        %v1328 = vpack.c.b16 %v1304, %v1302
        %vm1353 = vcmask 523264
        %v1355 = vsel %vm1353, %v1231, 0
        %1357 = vmatprep.subr.bf16.mxu0 %v1320
        %1358 = vmatpush1.bf16.msra.mxu0 %v1319
        %1359 = vmatprep.subr.bf16.mxu0 %v1318
        %1360 = vmatpush1.bf16.msra.mxu0 %v1317
        %1361 = vmatprep.subr.bf16.mxu0 %v1316
        %1362 = vmatpush1.bf16.msra.mxu0 %v1315
        %1363 = vmatprep.subr.bf16.mxu0 %v1314
        %1364 = vmatpush1.bf16.msra.mxu0 %v1313
        %1365 = vmatprep.subr.bf16.mxu0 %v1312
        %1366 = vmatpush1.bf16.msra.mxu0 %v1311
        %1367 = vmatprep.subr.bf16.mxu0 %v1310
        %1368 = vmatpush1.bf16.msra.mxu0 %v1309
        %1369 = vmatprep.subr.bf16.mxu0 %v1308
        %1370 = vmatpush1.bf16.msra.mxu0 %v1307
        %1371 = vmatprep.subr.bf16.mxu0 %v1306
        %1372 = vmatpush1.bf16.msra.mxu0 %v1305
        %1373 = vmatprep.subr.bf16.mxu0 0
        %1374 = vmatpush2.bf16.msra.mxu0 0
        %1375 = vmatprep.subr.bf16.mxu0 0
        %1376 = vmatpush2.bf16.msra.mxu0 0
        %1377 = vmatprep.subr.bf16.mxu0 0
        %1378 = vmatpush2.bf16.msra.mxu0 0
        %1379 = vmatprep.subr.bf16.mxu0 0
        %1380 = vmatpush2.bf16.msra.mxu0 0
        %1381 = vmatprep.subr.bf16.mxu0 %v1328
        %1382 = vmatpush2.bf16.msra.mxu0 %v1327
        %1383 = vmatprep.subr.bf16.mxu0 %v1326
        %1384 = vmatpush2.bf16.msra.mxu0 %v1325
        %1385 = vmatprep.subr.bf16.mxu0 %v1324
        %1386 = vmatpush2.bf16.msra.mxu0 %v1323
        %1387 = vmatprep.subr.bf16.mxu0 %v1322
        %1388 = vmatpush2.bf16.msra.mxu0 %v1321
        %1389 = vmatprep.mubr.bf16.mxu0 %v1355
        %1390 = vmatmul.mubr.bf16.gmra.mxu0 %v1230
        %v1391 = vpop.f32.mrf.mxu0
        %v1392 = vadd.f32 %v1225, %v1391
        %v1393 = vpop.f32.mrf.mxu0
        %v1394 = vadd.f32 %v1225, %v1393
        %v1395 = vpop.f32.mrf.mxu0
        %v1396 = vpop.f32.mrf.mxu0
        %1397 = vdwg.mxu0
        %v1398 = vld [vmem:[#allocation3 + $0x48] sm:$0x33]
        %v1400 = vunpack.c.l.b16 %v1398
        %v1401 = vunpack.c.h.b16 %v1398
        %v1402 = vpack.c.b16 %v1400, %v1400
        %v1403 = vpack.c.b16 %v1401, %v1401
        %v1406 = vsel %vm1353, %v1403, 0
        %1408 = vmatprep.subr.bf16.mxu0 %v1320
        %1409 = vmatpush1.bf16.msra.mxu0 %v1319
        %1410 = vmatprep.subr.bf16.mxu0 %v1318
        %1411 = vmatpush1.bf16.msra.mxu0 %v1317
        %1412 = vmatprep.subr.bf16.mxu0 %v1316
        %1413 = vmatpush1.bf16.msra.mxu0 %v1315
        %1414 = vmatprep.subr.bf16.mxu0 %v1314
        %1415 = vmatpush1.bf16.msra.mxu0 %v1313
        %1416 = vmatprep.subr.bf16.mxu0 %v1312
        %1417 = vmatpush1.bf16.msra.mxu0 %v1311
        %1418 = vmatprep.subr.bf16.mxu0 %v1310
        %1419 = vmatpush1.bf16.msra.mxu0 %v1309
        %1420 = vmatprep.subr.bf16.mxu0 %v1308
        %1421 = vmatpush1.bf16.msra.mxu0 %v1307
        %1422 = vmatprep.subr.bf16.mxu0 %v1306
        %1423 = vmatpush1.bf16.msra.mxu0 %v1305
        %1424 = vmatprep.subr.bf16.mxu0 0
        %1425 = vmatpush2.bf16.msra.mxu0 0
        %1426 = vmatprep.subr.bf16.mxu0 0
        %1427 = vmatpush2.bf16.msra.mxu0 0
        %1428 = vmatprep.subr.bf16.mxu0 0
        %1429 = vmatpush2.bf16.msra.mxu0 0
        %1430 = vmatprep.subr.bf16.mxu0 0
        %1431 = vmatpush2.bf16.msra.mxu0 0
        %1432 = vmatprep.subr.bf16.mxu0 %v1328
        %1433 = vmatpush2.bf16.msra.mxu0 %v1327
        %1434 = vmatprep.subr.bf16.mxu0 %v1326
        %1435 = vmatpush2.bf16.msra.mxu0 %v1325
        %1436 = vmatprep.subr.bf16.mxu0 %v1324
        %1437 = vmatpush2.bf16.msra.mxu0 %v1323
        %1438 = vmatprep.subr.bf16.mxu0 %v1322
        %1439 = vmatpush2.bf16.msra.mxu0 %v1321
        %1440 = vmatprep.mubr.bf16.mxu0 %v1406
        %1441 = vmatmul.mubr.bf16.gmra.mxu0 %v1402
        %v1442 = vpop.f32.mrf.mxu0
        %v1443 = vadd.f32 0.0, %v1442
        %v1444 = vpop.f32.mrf.mxu0
        %v1445 = vadd.f32 0.0, %v1444
        %v1446 = vpop.f32.mrf.mxu0
        %v1447 = vpop.f32.mrf.mxu0
        %1448 = vdwg.mxu0
        %1449 = vrot.lane.b32.xlu0 %v1443, 1
        %v1450 = vpop.permute.xlu0 %1449
        %1451 = vrot.lane.b32.xlu0 %v1445, 1
        %v1452 = vpop.permute.xlu0 %1451
        %v1453 = vsel %vm448, %v1450, %v1452
        %v1454 = vsel %vm448, %v1452, %v1450
        %v1455 = vmul.f32 %v1454, %v454
        %v1456 = vmul.f32 %v1453, %v458
        %v1457 = vadd.f32 %v1392, %v1455
        %v1458 = vadd.f32 %v1394, %v1456
        %v1459 = vld [vmem:[#allocation3 + $0x58] sm:$0x33]
        %v1461 = vunpack.c.l.b16 %v1459
        %v1462 = vunpack.c.h.b16 %v1459
        %v1463 = vpack.c.b16 %v1461, %v1461
        %v1464 = vpack.c.b16 %v1462, %v1462
        %v1467 = vsel %vm1353, %v1464, 0
        %1469 = vmatprep.subr.bf16.mxu0 %v1320
        %1470 = vmatpush1.bf16.msra.mxu0 %v1319
        %1471 = vmatprep.subr.bf16.mxu0 %v1318
        %1472 = vmatpush1.bf16.msra.mxu0 %v1317
        %1473 = vmatprep.subr.bf16.mxu0 %v1316
        %1474 = vmatpush1.bf16.msra.mxu0 %v1315
        %1475 = vmatprep.subr.bf16.mxu0 %v1314
        %1476 = vmatpush1.bf16.msra.mxu0 %v1313
        %1477 = vmatprep.subr.bf16.mxu0 %v1312
        %1478 = vmatpush1.bf16.msra.mxu0 %v1311
        %1479 = vmatprep.subr.bf16.mxu0 %v1310
        %1480 = vmatpush1.bf16.msra.mxu0 %v1309
        %1481 = vmatprep.subr.bf16.mxu0 %v1308
        %1482 = vmatpush1.bf16.msra.mxu0 %v1307
        %1483 = vmatprep.subr.bf16.mxu0 %v1306
        %1484 = vmatpush1.bf16.msra.mxu0 %v1305
        %1485 = vmatprep.subr.bf16.mxu0 0
        %1486 = vmatpush2.bf16.msra.mxu0 0
        %1487 = vmatprep.subr.bf16.mxu0 0
        %1488 = vmatpush2.bf16.msra.mxu0 0
        %1489 = vmatprep.subr.bf16.mxu0 0
        %1490 = vmatpush2.bf16.msra.mxu0 0
        %1491 = vmatprep.subr.bf16.mxu0 0
        %1492 = vmatpush2.bf16.msra.mxu0 0
        %1493 = vmatprep.subr.bf16.mxu0 %v1328
        %1494 = vmatpush2.bf16.msra.mxu0 %v1327
        %1495 = vmatprep.subr.bf16.mxu0 %v1326
        %1496 = vmatpush2.bf16.msra.mxu0 %v1325
        %1497 = vmatprep.subr.bf16.mxu0 %v1324
        %1498 = vmatpush2.bf16.msra.mxu0 %v1323
        %1499 = vmatprep.subr.bf16.mxu0 %v1322
        %1500 = vmatpush2.bf16.msra.mxu0 %v1321
        %1501 = vmatprep.mubr.bf16.mxu0 %v1467
        %1502 = vmatmul.mubr.bf16.gmra.mxu0 %v1463
        %v1503 = vpop.f32.mrf.mxu0
        %v1504 = vadd.f32 0.0, %v1503
        %v1505 = vpop.f32.mrf.mxu0
        %v1506 = vadd.f32 0.0, %v1505
        %v1507 = vpop.f32.mrf.mxu0
        %v1508 = vpop.f32.mrf.mxu0
        %1509 = vdwg.mxu0
        %1510 = vrot.lane.b32.xlu0 %v1504, 127
        %v1511 = vpop.permute.xlu0 %1510
        %1512 = vrot.lane.b32.xlu0 %v1506, 127
        %v1513 = vpop.permute.xlu0 %1512
        %v1514 = vsel %vm512, %v1511, %v1513
        %v1515 = vsel %vm512, %v1513, %v1511
        %v1516 = vmul.f32 %v1514, %v518
        %v1517 = vmul.f32 %v1515, %v522
        %v1518 = vadd.f32 %v1457, %v1516
        %v1519 = vadd.f32 %v1458, %v1517
        %vm1520 = vcmp.gt.f32.partialorder %v1518, 0.0
        %vm1521 = vcmp.gt.f32.partialorder %v1519, 0.0
        %v1522 = vmul.f32 %v1518, 0.2
        %v1523 = vmul.f32 %v1519, 0.2
        %v1524 = vsel %vm1520, %v1518, %v1522
        %v1525 = vsel %vm1521, %v1519, %v1523
        %1526 = vrot.lane.b32.xlu0 %v1524, 16
        %v1527 = vpop.permute.xlu0 %1526
        %1528 = vrot.lane.b32.xlu0 %v1525, 16
        %v1529 = vpop.permute.xlu0 %1528
        %v1530 = vsel %vm254, %v1527, %v1529
        %v1531 = vsel %vm254, %v1529, %v1527
        %v1532 = vmul.f32 %v1531, %v260
        %v1533 = vmul.f32 %v1530, %v264
        %v1534 = vpack.c.bf16 %v1532, %v1532
        %v1535 = vpack.c.bf16 %v1533, %v1533
        %v1538 = vunpack.c.l.b16 %v1534
        %v1539 = vunpack.c.l.b16 %v1535
        %v1540 = vpack.c.b16 %v1539, %v1538
        %1542 = vst [vmem:[#allocation2 + $0xc0] sm:$0x33] %v1540
        %v1543 = vpack.c.bf16 %v1524, %v1524
        %v1544 = vpack.c.bf16 %v1525, %v1525
        %v1547 = vunpack.c.l.b16 %v1543
        %v1548 = vunpack.c.l.b16 %v1544
        %v1549 = vpack.c.b16 %v1548, %v1547
        %1551 = vst [vmem:[#allocation2 + $0xd0] sm:$0x33] %v1549
        %1552 = vrot.lane.b32.xlu0 %v1524, 112
        %v1553 = vpop.permute.xlu0 %1552
        %1554 = vrot.lane.b32.xlu0 %v1525, 112
        %v1555 = vpop.permute.xlu0 %1554
        %v1556 = vsel %vm289, %v1553, %v1555
        %v1557 = vsel %vm289, %v1555, %v1553
        %v1558 = vmul.f32 %v1556, %v295
        %v1559 = vmul.f32 %v1557, %v299
        %v1560 = vpack.c.bf16 %v1558, %v1558
        %v1561 = vpack.c.bf16 %v1559, %v1559
        %v1564 = vunpack.c.l.b16 %v1560
        %v1565 = vunpack.c.l.b16 %v1561
        %v1566 = vpack.c.b16 %v1565, %v1564
        %1568 = vst [vmem:[#allocation2 + $0xe0] sm:$0x33] %v1566
        %v1569 = vld [vmem:[%s3 + $0x20] sm:$0xf]
        %v1570 = vld [vmem:[#allocation3 + $0x68] sm:$0x33]
        %v1571 = vld [vmem:[#allocation2] sm:$0xff]
        %v1572 = vld [vmem:[#allocation2 + $0x8] sm:$0xff]
        %v1573 = vld [vmem:[#allocation2 + $0x10] sm:$0xff]
        %v1574 = vld [vmem:[#allocation2 + $0x18] sm:$0xff]
        %v1575 = vld [vmem:[#allocation2 + $0x20] sm:$0xff]
        %v1576 = vld [vmem:[#allocation2 + $0x28] sm:$0xff]
        %v1577 = vld [vmem:[#allocation2 + $0x30] sm:$0xff]
        %v1578 = vld [vmem:[#allocation2 + $0x38] sm:$0xff]
        %v1579 = vld [vmem:[#allocation2 + $0x40] sm:$0xff]
        %v1580 = vld [vmem:[#allocation2 + $0x48] sm:$0xff]
        %v1581 = vld [vmem:[#allocation2 + $0x50] sm:$0xff]
        %v1582 = vld [vmem:[#allocation2 + $0x58] sm:$0xff]
        %v1583 = vld [vmem:[#allocation2 + $0x60] sm:$0xff]
        %v1584 = vld [vmem:[#allocation2 + $0x68] sm:$0xff]
        %v1585 = vld [vmem:[#allocation2 + $0x70] sm:$0xff]
        %v1586 = vld [vmem:[#allocation2 + $0x78] sm:$0xff]
        %v1587 = vld [vmem:[#allocation2 + $0x80] sm:$0xff]
        %v1588 = vld [vmem:[#allocation2 + $0x88] sm:$0xff]
        %v1589 = vld [vmem:[#allocation2 + $0x90] sm:$0xff]
        %v1590 = vld [vmem:[#allocation2 + $0x98] sm:$0xff]
        %v1591 = vld [vmem:[#allocation2 + $0xa0] sm:$0xff]
        %v1592 = vld [vmem:[#allocation2 + $0xa8] sm:$0xff]
        %v1593 = vld [vmem:[#allocation2 + $0xb0] sm:$0xff]
        %v1594 = vld [vmem:[#allocation2 + $0xb8] sm:$0xff]
        %v1595 = vld [vmem:[#allocation2 + $0xc0] sm:$0xff]
        %v1596 = vld [vmem:[#allocation2 + $0xc8] sm:$0xff]
        %v1597 = vld [vmem:[#allocation2 + $0xd0] sm:$0xff]
        %v1598 = vld [vmem:[#allocation2 + $0xd8] sm:$0xff]
        %v1599 = vld [vmem:[#allocation2 + $0xe0] sm:$0xff]
        %v1600 = vld [vmem:[#allocation2 + $0xe8] sm:$0xff]
        %1602 = vset.pattern.permute.xlu0 0
        %1603 = vperm.xlu0 %1602, %v1569
        %v1604 = vpop.permute.xlu0 %1603
        %v1607 = vunpack.c.l.b16 %v1570
        %v1608 = vunpack.c.h.b16 %v1570
        %v1609 = vpack.c.b16 %v1607, %v1607
        %v1610 = vpack.c.b16 %v1608, %v1608
        %v1642 = vunpack.c.l.b16 %v1571
        %v1643 = vunpack.c.h.b16 %v1571
        %v1644 = vunpack.c.l.b16 %v1572
        %v1645 = vunpack.c.h.b16 %v1572
        %v1646 = vunpack.c.l.b16 %v1573
        %v1647 = vunpack.c.h.b16 %v1573
        %v1648 = vunpack.c.l.b16 %v1574
        %v1649 = vunpack.c.h.b16 %v1574
        %v1650 = vunpack.c.l.b16 %v1575
        %v1651 = vunpack.c.h.b16 %v1575
        %v1652 = vunpack.c.l.b16 %v1576
        %v1653 = vunpack.c.h.b16 %v1576
        %v1654 = vunpack.c.l.b16 %v1577
        %v1655 = vunpack.c.h.b16 %v1577
        %v1656 = vunpack.c.l.b16 %v1578
        %v1657 = vunpack.c.h.b16 %v1578
        %v1658 = vunpack.c.l.b16 %v1579
        %v1659 = vunpack.c.h.b16 %v1579
        %v1660 = vunpack.c.l.b16 %v1580
        %v1661 = vunpack.c.h.b16 %v1580
        %v1662 = vunpack.c.l.b16 %v1581
        %v1663 = vunpack.c.h.b16 %v1581
        %v1664 = vunpack.c.l.b16 %v1582
        %v1665 = vunpack.c.h.b16 %v1582
        %v1666 = vunpack.c.l.b16 %v1583
        %v1667 = vunpack.c.h.b16 %v1583
        %v1668 = vunpack.c.l.b16 %v1584
        %v1669 = vunpack.c.h.b16 %v1584
        %v1670 = vunpack.c.l.b16 %v1585
        %v1671 = vunpack.c.h.b16 %v1585
        %v1672 = vunpack.c.l.b16 %v1586
        %v1673 = vunpack.c.h.b16 %v1586
        %v1674 = vunpack.c.l.b16 %v1587
        %v1675 = vunpack.c.h.b16 %v1587
        %v1676 = vunpack.c.l.b16 %v1588
        %v1677 = vunpack.c.h.b16 %v1588
        %v1678 = vunpack.c.l.b16 %v1589
        %v1679 = vunpack.c.h.b16 %v1589
        %v1680 = vunpack.c.l.b16 %v1590
        %v1681 = vunpack.c.h.b16 %v1590
        %v1682 = vunpack.c.l.b16 %v1591
        %v1683 = vunpack.c.h.b16 %v1591
        %v1684 = vunpack.c.l.b16 %v1592
        %v1685 = vunpack.c.h.b16 %v1592
        %v1686 = vunpack.c.l.b16 %v1593
        %v1687 = vunpack.c.h.b16 %v1593
        %v1688 = vunpack.c.l.b16 %v1594
        %v1689 = vunpack.c.h.b16 %v1594
        %v1690 = vunpack.c.l.b16 %v1595
        %v1691 = vunpack.c.h.b16 %v1595
        %v1692 = vunpack.c.l.b16 %v1596
        %v1693 = vunpack.c.h.b16 %v1596
        %v1694 = vunpack.c.l.b16 %v1597
        %v1695 = vunpack.c.h.b16 %v1597
        %v1696 = vunpack.c.l.b16 %v1598
        %v1697 = vunpack.c.h.b16 %v1598
        %v1698 = vunpack.c.l.b16 %v1599
        %v1699 = vunpack.c.h.b16 %v1599
        %v1700 = vunpack.c.l.b16 %v1600
        %v1701 = vunpack.c.h.b16 %v1600
        %v1702 = vpack.c.b16 %v1644, %v1642
        %v1703 = vpack.c.b16 %v1645, %v1643
        %v1704 = vpack.c.b16 %v1648, %v1646
        %v1705 = vpack.c.b16 %v1649, %v1647
        %v1706 = vpack.c.b16 %v1652, %v1650
        %v1707 = vpack.c.b16 %v1653, %v1651
        %v1708 = vpack.c.b16 %v1656, %v1654
        %v1709 = vpack.c.b16 %v1657, %v1655
        %v1710 = vpack.c.b16 %v1660, %v1658
        %v1711 = vpack.c.b16 %v1661, %v1659
        %v1712 = vpack.c.b16 %v1664, %v1662
        %v1713 = vpack.c.b16 %v1665, %v1663
        %v1714 = vpack.c.b16 %v1668, %v1666
        %v1715 = vpack.c.b16 %v1669, %v1667
        %v1716 = vpack.c.b16 %v1672, %v1670
        %v1717 = vpack.c.b16 %v1673, %v1671
        %v1718 = vpack.c.b16 %v1676, %v1674
        %v1719 = vpack.c.b16 %v1677, %v1675
        %v1720 = vpack.c.b16 %v1680, %v1678
        %v1721 = vpack.c.b16 %v1681, %v1679
        %v1722 = vpack.c.b16 %v1684, %v1682
        %v1723 = vpack.c.b16 %v1685, %v1683
        %v1724 = vpack.c.b16 %v1688, %v1686
        %v1725 = vpack.c.b16 %v1689, %v1687
        %v1726 = vpack.c.b16 %v1692, %v1690
        %v1727 = vpack.c.b16 %v1693, %v1691
        %v1728 = vpack.c.b16 %v1696, %v1694
        %v1729 = vpack.c.b16 %v1697, %v1695
        %v1730 = vpack.c.b16 %v1700, %v1698
        %v1731 = vpack.c.b16 %v1701, %v1699
        %vm1762 = vcmask 916480
        %v1764 = vsel %vm1762, %v1610, 0
        %1766 = vmatprep.subr.bf16.mxu0 %v1717
        %1767 = vmatpush1.bf16.msra.mxu0 %v1716
        %1768 = vmatprep.subr.bf16.mxu0 %v1715
        %1769 = vmatpush1.bf16.msra.mxu0 %v1714
        %1770 = vmatprep.subr.bf16.mxu0 %v1713
        %1771 = vmatpush1.bf16.msra.mxu0 %v1712
        %1772 = vmatprep.subr.bf16.mxu0 %v1711
        %1773 = vmatpush1.bf16.msra.mxu0 %v1710
        %1774 = vmatprep.subr.bf16.mxu0 %v1709
        %1775 = vmatpush1.bf16.msra.mxu0 %v1708
        %1776 = vmatprep.subr.bf16.mxu0 %v1707
        %1777 = vmatpush1.bf16.msra.mxu0 %v1706
        %1778 = vmatprep.subr.bf16.mxu0 %v1705
        %1779 = vmatpush1.bf16.msra.mxu0 %v1704
        %1780 = vmatprep.subr.bf16.mxu0 %v1703
        %1781 = vmatpush1.bf16.msra.mxu0 %v1702
        %1782 = vmatprep.subr.bf16.mxu0 0
        %1783 = vmatpush2.bf16.msra.mxu0 0
        %1784 = vmatprep.subr.bf16.mxu0 %v1731
        %1785 = vmatpush2.bf16.msra.mxu0 %v1730
        %1786 = vmatprep.subr.bf16.mxu0 %v1729
        %1787 = vmatpush2.bf16.msra.mxu0 %v1728
        %1788 = vmatprep.subr.bf16.mxu0 %v1727
        %1789 = vmatpush2.bf16.msra.mxu0 %v1726
        %1790 = vmatprep.subr.bf16.mxu0 %v1725
        %1791 = vmatpush2.bf16.msra.mxu0 %v1724
        %1792 = vmatprep.subr.bf16.mxu0 %v1723
        %1793 = vmatpush2.bf16.msra.mxu0 %v1722
        %1794 = vmatprep.subr.bf16.mxu0 %v1721
        %1795 = vmatpush2.bf16.msra.mxu0 %v1720
        %1796 = vmatprep.subr.bf16.mxu0 %v1719
        %1797 = vmatpush2.bf16.msra.mxu0 %v1718
        %1798 = vmatprep.mubr.bf16.mxu0 %v1764
        %1799 = vmatmul.mubr.bf16.gmra.mxu0 %v1609
        %v1800 = vpop.f32.mrf.mxu0
        %v1801 = vadd.f32 %v1604, %v1800
        %v1802 = vpop.f32.mrf.mxu0
        %v1803 = vadd.f32 %v1604, %v1802
        %v1804 = vpop.f32.mrf.mxu0
        %v1805 = vpop.f32.mrf.mxu0
        %1806 = vdwg.mxu0
        %v1807 = vld [vmem:[#allocation3 + $0x60] sm:$0x33]
        %v1809 = vunpack.c.l.b16 %v1807
        %v1810 = vunpack.c.h.b16 %v1807
        %v1811 = vpack.c.b16 %v1809, %v1809
        %v1812 = vpack.c.b16 %v1810, %v1810
        %v1815 = vsel %vm1762, %v1812, 0
        %1817 = vmatprep.subr.bf16.mxu0 %v1717
        %1818 = vmatpush1.bf16.msra.mxu0 %v1716
        %1819 = vmatprep.subr.bf16.mxu0 %v1715
        %1820 = vmatpush1.bf16.msra.mxu0 %v1714
        %1821 = vmatprep.subr.bf16.mxu0 %v1713
        %1822 = vmatpush1.bf16.msra.mxu0 %v1712
        %1823 = vmatprep.subr.bf16.mxu0 %v1711
        %1824 = vmatpush1.bf16.msra.mxu0 %v1710
        %1825 = vmatprep.subr.bf16.mxu0 %v1709
        %1826 = vmatpush1.bf16.msra.mxu0 %v1708
        %1827 = vmatprep.subr.bf16.mxu0 %v1707
        %1828 = vmatpush1.bf16.msra.mxu0 %v1706
        %1829 = vmatprep.subr.bf16.mxu0 %v1705
        %1830 = vmatpush1.bf16.msra.mxu0 %v1704
        %1831 = vmatprep.subr.bf16.mxu0 %v1703
        %1832 = vmatpush1.bf16.msra.mxu0 %v1702
        %1833 = vmatprep.subr.bf16.mxu0 0
        %1834 = vmatpush2.bf16.msra.mxu0 0
        %1835 = vmatprep.subr.bf16.mxu0 %v1731
        %1836 = vmatpush2.bf16.msra.mxu0 %v1730
        %1837 = vmatprep.subr.bf16.mxu0 %v1729
        %1838 = vmatpush2.bf16.msra.mxu0 %v1728
        %1839 = vmatprep.subr.bf16.mxu0 %v1727
        %1840 = vmatpush2.bf16.msra.mxu0 %v1726
        %1841 = vmatprep.subr.bf16.mxu0 %v1725
        %1842 = vmatpush2.bf16.msra.mxu0 %v1724
        %1843 = vmatprep.subr.bf16.mxu0 %v1723
        %1844 = vmatpush2.bf16.msra.mxu0 %v1722
        %1845 = vmatprep.subr.bf16.mxu0 %v1721
        %1846 = vmatpush2.bf16.msra.mxu0 %v1720
        %1847 = vmatprep.subr.bf16.mxu0 %v1719
        %1848 = vmatpush2.bf16.msra.mxu0 %v1718
        %1849 = vmatprep.mubr.bf16.mxu0 %v1815
        %1850 = vmatmul.mubr.bf16.gmra.mxu0 %v1811
        %v1851 = vpop.f32.mrf.mxu0
        %v1852 = vadd.f32 0.0, %v1851
        %v1853 = vpop.f32.mrf.mxu0
        %v1854 = vadd.f32 0.0, %v1853
        %v1855 = vpop.f32.mrf.mxu0
        %v1856 = vpop.f32.mrf.mxu0
        %1857 = vdwg.mxu0
        %1858 = vrot.lane.b32.xlu0 %v1852, 1
        %v1859 = vpop.permute.xlu0 %1858
        %1860 = vrot.lane.b32.xlu0 %v1854, 1
        %v1861 = vpop.permute.xlu0 %1860
        %v1862 = vsel %vm448, %v1859, %v1861
        %v1863 = vsel %vm448, %v1861, %v1859
        %v1864 = vmul.f32 %v1863, %v454
        %v1865 = vmul.f32 %v1862, %v458
        %v1866 = vadd.f32 %v1801, %v1864
        %v1867 = vadd.f32 %v1803, %v1865
        %v1868 = vld [vmem:[#allocation3 + $0x70] sm:$0x33]
        %v1870 = vunpack.c.l.b16 %v1868
        %v1871 = vunpack.c.h.b16 %v1868
        %v1872 = vpack.c.b16 %v1870, %v1870
        %v1873 = vpack.c.b16 %v1871, %v1871
        %v1876 = vsel %vm1762, %v1873, 0
        %1878 = vmatprep.subr.bf16.mxu0 %v1717
        %1879 = vmatpush1.bf16.msra.mxu0 %v1716
        %1880 = vmatprep.subr.bf16.mxu0 %v1715
        %1881 = vmatpush1.bf16.msra.mxu0 %v1714
        %1882 = vmatprep.subr.bf16.mxu0 %v1713
        %1883 = vmatpush1.bf16.msra.mxu0 %v1712
        %1884 = vmatprep.subr.bf16.mxu0 %v1711
        %1885 = vmatpush1.bf16.msra.mxu0 %v1710
        %1886 = vmatprep.subr.bf16.mxu0 %v1709
        %1887 = vmatpush1.bf16.msra.mxu0 %v1708
        %1888 = vmatprep.subr.bf16.mxu0 %v1707
        %1889 = vmatpush1.bf16.msra.mxu0 %v1706
        %1890 = vmatprep.subr.bf16.mxu0 %v1705
        %1891 = vmatpush1.bf16.msra.mxu0 %v1704
        %1892 = vmatprep.subr.bf16.mxu0 %v1703
        %1893 = vmatpush1.bf16.msra.mxu0 %v1702
        %1894 = vmatprep.subr.bf16.mxu0 0
        %1895 = vmatpush2.bf16.msra.mxu0 0
        %1896 = vmatprep.subr.bf16.mxu0 %v1731
        %1897 = vmatpush2.bf16.msra.mxu0 %v1730
        %1898 = vmatprep.subr.bf16.mxu0 %v1729
        %1899 = vmatpush2.bf16.msra.mxu0 %v1728
        %1900 = vmatprep.subr.bf16.mxu0 %v1727
        %1901 = vmatpush2.bf16.msra.mxu0 %v1726
        %1902 = vmatprep.subr.bf16.mxu0 %v1725
        %1903 = vmatpush2.bf16.msra.mxu0 %v1724
        %1904 = vmatprep.subr.bf16.mxu0 %v1723
        %1905 = vmatpush2.bf16.msra.mxu0 %v1722
        %1906 = vmatprep.subr.bf16.mxu0 %v1721
        %1907 = vmatpush2.bf16.msra.mxu0 %v1720
        %1908 = vmatprep.subr.bf16.mxu0 %v1719
        %1909 = vmatpush2.bf16.msra.mxu0 %v1718
        %1910 = vmatprep.mubr.bf16.mxu0 %v1876
        %1911 = vmatmul.mubr.bf16.gmra.mxu0 %v1872
        %v1912 = vpop.f32.mrf.mxu0
        %v1913 = vadd.f32 0.0, %v1912
        %v1914 = vpop.f32.mrf.mxu0
        %v1915 = vadd.f32 0.0, %v1914
        %v1916 = vpop.f32.mrf.mxu0
        %v1917 = vpop.f32.mrf.mxu0
        %1918 = vdwg.mxu0
        %1919 = vrot.lane.b32.xlu0 %v1913, 127
        %v1920 = vpop.permute.xlu0 %1919
        %1921 = vrot.lane.b32.xlu0 %v1915, 127
        %v1922 = vpop.permute.xlu0 %1921
        %v1923 = vsel %vm512, %v1920, %v1922
        %v1924 = vsel %vm512, %v1922, %v1920
        %v1925 = vmul.f32 %v1923, %v518
        %v1926 = vmul.f32 %v1924, %v522
        %v1927 = vadd.f32 %v1866, %v1925
        %v1928 = vadd.f32 %v1867, %v1926
        %v1929 = vmul.f32 %v1927, 0.2
        %v1930 = vmul.f32 %v1928, 0.2
        %v1931 = vadd.f32 %v1929, %v244
        %v1932 = vadd.f32 %v1930, %v246
        %1933 = vrot.lane.b32.xlu0 %v1931, 16
        %v1934 = vpop.permute.xlu0 %1933
        %1935 = vrot.lane.b32.xlu0 %v1932, 16
        %v1936 = vpop.permute.xlu0 %1935
        %v1937 = vsel %vm254, %v1934, %v1936
        %v1938 = vsel %vm254, %v1936, %v1934
        %v1939 = vmul.f32 %v1938, %v260
        %v1940 = vmul.f32 %v1937, %v264
        %v1941 = vpack.c.bf16 %v1939, %v1939
        %v1942 = vpack.c.bf16 %v1940, %v1940
        %v1945 = vunpack.c.l.b16 %v1941
        %v1946 = vunpack.c.l.b16 %v1942
        %v1947 = vpack.c.b16 %v1946, %v1945
        %1949 = vst [vmem:[#allocation2] sm:$0x33] %v1947
        %v1950 = vpack.c.bf16 %v1931, %v1931
        %v1951 = vpack.c.bf16 %v1932, %v1932
        %v1954 = vunpack.c.l.b16 %v1950
        %v1955 = vunpack.c.l.b16 %v1951
        %v1956 = vpack.c.b16 %v1955, %v1954
        %1958 = vst [vmem:[#allocation2 + $0x10] sm:$0x33] %v1956
        %1959 = vrot.lane.b32.xlu0 %v1931, 112
        %v1960 = vpop.permute.xlu0 %1959
        %1961 = vrot.lane.b32.xlu0 %v1932, 112
        %v1962 = vpop.permute.xlu0 %1961
        %v1963 = vsel %vm289, %v1960, %v1962
        %v1964 = vsel %vm289, %v1962, %v1960
        %v1965 = vmul.f32 %v1963, %v295
        %v1966 = vmul.f32 %v1964, %v299
        %v1967 = vpack.c.bf16 %v1965, %v1965
        %v1968 = vpack.c.bf16 %v1966, %v1966
        %v1971 = vunpack.c.l.b16 %v1967
        %v1972 = vunpack.c.l.b16 %v1968
        %v1973 = vpack.c.b16 %v1972, %v1971
        %1975 = vst [vmem:[#allocation2 + $0x20] sm:$0x33] %v1973
        %v1976 = vld [vmem:[%s3 + $0x28] sm:$0xf]
        %v1977 = vld [vmem:[#allocation3 + $0x80] sm:$0x3]
        %v1978 = vld [vmem:[#allocation2] sm:$0xff]
        %v1979 = vld [vmem:[#allocation2 + $0x8] sm:$0xff]
        %v1980 = vld [vmem:[#allocation2 + $0x10] sm:$0xff]
        %v1981 = vld [vmem:[#allocation2 + $0x18] sm:$0xff]
        %v1982 = vld [vmem:[#allocation2 + $0x20] sm:$0xff]
        %v1983 = vld [vmem:[#allocation2 + $0x28] sm:$0xff]
        %1985 = vset.pattern.permute.xlu0 0
        %1986 = vperm.xlu0 %1985, %v1976
        %v1987 = vpop.permute.xlu0 %1986
        %v1995 = vunpack.c.l.b16 %v1978
        %v1996 = vunpack.c.h.b16 %v1978
        %v1997 = vunpack.c.l.b16 %v1979
        %v1998 = vunpack.c.h.b16 %v1979
        %v1999 = vunpack.c.l.b16 %v1980
        %v2000 = vunpack.c.h.b16 %v1980
        %v2001 = vunpack.c.l.b16 %v1981
        %v2002 = vunpack.c.h.b16 %v1981
        %v2003 = vunpack.c.l.b16 %v1982
        %v2004 = vunpack.c.h.b16 %v1982
        %v2005 = vunpack.c.l.b16 %v1983
        %v2006 = vunpack.c.h.b16 %v1983
        %v2007 = vpack.c.b16 %v1997, %v1995
        %v2008 = vpack.c.b16 %v1998, %v1996
        %v2009 = vpack.c.b16 %v2001, %v1999
        %v2010 = vpack.c.b16 %v2002, %v2000
        %v2011 = vpack.c.b16 %v2005, %v2003
        %v2012 = vpack.c.b16 %v2006, %v2004
        %v2020 = vsel %vm354, %v1977, 0
        %2022 = vmatprep.subr.bf16.mxu0 0
        %2023 = vmatpush1.bf16.msra.mxu0 0
        %2024 = vmatprep.subr.bf16.mxu0 0
        %2025 = vmatpush1.bf16.msra.mxu0 0
        %2026 = vmatprep.subr.bf16.mxu0 0
        %2027 = vmatpush1.bf16.msra.mxu0 0
        %2028 = vmatprep.subr.bf16.mxu0 0
        %2029 = vmatpush1.bf16.msra.mxu0 0
        %2030 = vmatprep.subr.bf16.mxu0 0
        %2031 = vmatpush1.bf16.msra.mxu0 0
        %2032 = vmatprep.subr.bf16.mxu0 %v2012
        %2033 = vmatpush1.bf16.msra.mxu0 %v2011
        %2034 = vmatprep.subr.bf16.mxu0 %v2010
        %2035 = vmatpush1.bf16.msra.mxu0 %v2009
        %2036 = vmatprep.subr.bf16.mxu0 %v2008
        %2037 = vmatpush1.bf16.msra.mxu0 %v2007
        %2038 = vmatprep.subr.bf16.mxu0 0
        %2039 = vmatpush2.bf16.msra.mxu0 0
        %2040 = vmatprep.subr.bf16.mxu0 0
        %2041 = vmatpush2.bf16.msra.mxu0 0
        %2042 = vmatprep.subr.bf16.mxu0 0
        %2043 = vmatpush2.bf16.msra.mxu0 0
        %2044 = vmatprep.subr.bf16.mxu0 0
        %2045 = vmatpush2.bf16.msra.mxu0 0
        %2046 = vmatprep.subr.bf16.mxu0 0
        %2047 = vmatpush2.bf16.msra.mxu0 0
        %2048 = vmatprep.subr.bf16.mxu0 0
        %2049 = vmatpush2.bf16.msra.mxu0 0
        %2050 = vmatprep.subr.bf16.mxu0 0
        %2051 = vmatpush2.bf16.msra.mxu0 0
        %2052 = vmatprep.subr.bf16.mxu0 0
        %2053 = vmatpush2.bf16.msra.mxu0 0
        %2054 = vmatprep.mubr.bf16.mxu0 0
        %2055 = vmatmul.mubr.bf16.gmra.mxu0 %v2020
        %v2056 = vpop.f32.mrf.mxu0
        %v2057 = vadd.f32 %v1987, %v2056
        %v2058 = vpop.f32.mrf.mxu0
        %v2059 = vadd.f32 %v1987, %v2058
        %v2060 = vpop.f32.mrf.mxu0
        %v2061 = vpop.f32.mrf.mxu0
        %2062 = vdwg.mxu0
        %v2063 = vld [vmem:[#allocation3 + $0x78] sm:$0x3]
        %v2065 = vsel %vm354, %v2063, 0
        %2067 = vmatprep.subr.bf16.mxu0 0
        %2068 = vmatpush1.bf16.msra.mxu0 0
        %2069 = vmatprep.subr.bf16.mxu0 0
        %2070 = vmatpush1.bf16.msra.mxu0 0
        %2071 = vmatprep.subr.bf16.mxu0 0
        %2072 = vmatpush1.bf16.msra.mxu0 0
        %2073 = vmatprep.subr.bf16.mxu0 0
        %2074 = vmatpush1.bf16.msra.mxu0 0
        %2075 = vmatprep.subr.bf16.mxu0 0
        %2076 = vmatpush1.bf16.msra.mxu0 0
        %2077 = vmatprep.subr.bf16.mxu0 %v2012
        %2078 = vmatpush1.bf16.msra.mxu0 %v2011
        %2079 = vmatprep.subr.bf16.mxu0 %v2010
        %2080 = vmatpush1.bf16.msra.mxu0 %v2009
        %2081 = vmatprep.subr.bf16.mxu0 %v2008
        %2082 = vmatpush1.bf16.msra.mxu0 %v2007
        %2083 = vmatprep.subr.bf16.mxu0 0
        %2084 = vmatpush2.bf16.msra.mxu0 0
        %2085 = vmatprep.subr.bf16.mxu0 0
        %2086 = vmatpush2.bf16.msra.mxu0 0
        %2087 = vmatprep.subr.bf16.mxu0 0
        %2088 = vmatpush2.bf16.msra.mxu0 0
        %2089 = vmatprep.subr.bf16.mxu0 0
        %2090 = vmatpush2.bf16.msra.mxu0 0
        %2091 = vmatprep.subr.bf16.mxu0 0
        %2092 = vmatpush2.bf16.msra.mxu0 0
        %2093 = vmatprep.subr.bf16.mxu0 0
        %2094 = vmatpush2.bf16.msra.mxu0 0
        %2095 = vmatprep.subr.bf16.mxu0 0
        %2096 = vmatpush2.bf16.msra.mxu0 0
        %2097 = vmatprep.subr.bf16.mxu0 0
        %2098 = vmatpush2.bf16.msra.mxu0 0
        %2099 = vmatprep.mubr.bf16.mxu0 0
        %2100 = vmatmul.mubr.bf16.gmra.mxu0 %v2065
        %v2101 = vpop.f32.mrf.mxu0
        %v2102 = vadd.f32 0.0, %v2101
        %v2103 = vpop.f32.mrf.mxu0
        %v2104 = vadd.f32 0.0, %v2103
        %v2105 = vpop.f32.mrf.mxu0
        %v2106 = vpop.f32.mrf.mxu0
        %2107 = vdwg.mxu0
        %2108 = vrot.lane.b32.xlu0 %v2102, 1
        %v2109 = vpop.permute.xlu0 %2108
        %2110 = vrot.lane.b32.xlu0 %v2104, 1
        %v2111 = vpop.permute.xlu0 %2110
        %v2112 = vsel %vm448, %v2109, %v2111
        %v2113 = vsel %vm448, %v2111, %v2109
        %v2114 = vmul.f32 %v2113, %v454
        %v2115 = vmul.f32 %v2112, %v458
        %v2116 = vadd.f32 %v2057, %v2114
        %v2117 = vadd.f32 %v2059, %v2115
        %v2118 = vld [vmem:[#allocation3 + $0x88] sm:$0x3]
        %v2120 = vsel %vm354, %v2118, 0
        %2122 = vmatprep.subr.bf16.mxu0 0
        %2123 = vmatpush1.bf16.msra.mxu0 0
        %2124 = vmatprep.subr.bf16.mxu0 0
        %2125 = vmatpush1.bf16.msra.mxu0 0
        %2126 = vmatprep.subr.bf16.mxu0 0
        %2127 = vmatpush1.bf16.msra.mxu0 0
        %2128 = vmatprep.subr.bf16.mxu0 0
        %2129 = vmatpush1.bf16.msra.mxu0 0
        %2130 = vmatprep.subr.bf16.mxu0 0
        %2131 = vmatpush1.bf16.msra.mxu0 0
        %2132 = vmatprep.subr.bf16.mxu0 %v2012
        %2133 = vmatpush1.bf16.msra.mxu0 %v2011
        %2134 = vmatprep.subr.bf16.mxu0 %v2010
        %2135 = vmatpush1.bf16.msra.mxu0 %v2009
        %2136 = vmatprep.subr.bf16.mxu0 %v2008
        %2137 = vmatpush1.bf16.msra.mxu0 %v2007
        %2138 = vmatprep.subr.bf16.mxu0 0
        %2139 = vmatpush2.bf16.msra.mxu0 0
        %2140 = vmatprep.subr.bf16.mxu0 0
        %2141 = vmatpush2.bf16.msra.mxu0 0
        %2142 = vmatprep.subr.bf16.mxu0 0
        %2143 = vmatpush2.bf16.msra.mxu0 0
        %2144 = vmatprep.subr.bf16.mxu0 0
        %2145 = vmatpush2.bf16.msra.mxu0 0
        %2146 = vmatprep.subr.bf16.mxu0 0
        %2147 = vmatpush2.bf16.msra.mxu0 0
        %2148 = vmatprep.subr.bf16.mxu0 0
        %2149 = vmatpush2.bf16.msra.mxu0 0
        %2150 = vmatprep.subr.bf16.mxu0 0
        %2151 = vmatpush2.bf16.msra.mxu0 0
        %2152 = vmatprep.subr.bf16.mxu0 0
        %2153 = vmatpush2.bf16.msra.mxu0 0
        %2154 = vmatprep.mubr.bf16.mxu0 0
        %2155 = vmatmul.mubr.bf16.gmra.mxu0 %v2120
        %v2156 = vpop.f32.mrf.mxu0
        %v2157 = vadd.f32 0.0, %v2156
        %v2158 = vpop.f32.mrf.mxu0
        %v2159 = vadd.f32 0.0, %v2158
        %v2160 = vpop.f32.mrf.mxu0
        %v2161 = vpop.f32.mrf.mxu0
        %2162 = vdwg.mxu0
        %2163 = vrot.lane.b32.xlu0 %v2157, 127
        %v2164 = vpop.permute.xlu0 %2163
        %2165 = vrot.lane.b32.xlu0 %v2159, 127
        %v2166 = vpop.permute.xlu0 %2165
        %v2167 = vsel %vm512, %v2164, %v2166
        %v2168 = vsel %vm512, %v2166, %v2164
        %v2169 = vmul.f32 %v2167, %v518
        %v2170 = vmul.f32 %v2168, %v522
        %v2171 = vadd.f32 %v2116, %v2169
        %v2172 = vadd.f32 %v2117, %v2170
        %vm2173 = vcmp.gt.f32.partialorder %v2171, 0.0
        %vm2174 = vcmp.gt.f32.partialorder %v2172, 0.0
        %v2175 = vmul.f32 %v2171, 0.2
        %v2176 = vmul.f32 %v2172, 0.2
        %v2177 = vsel %vm2173, %v2171, %v2175
        %v2178 = vsel %vm2174, %v2172, %v2176
        %2179 = vrot.lane.b32.xlu0 %v2177, 16
        %v2180 = vpop.permute.xlu0 %2179
        %2181 = vrot.lane.b32.xlu0 %v2178, 16
        %v2182 = vpop.permute.xlu0 %2181
        %v2183 = vsel %vm254, %v2180, %v2182
        %v2184 = vsel %vm254, %v2182, %v2180
        %v2185 = vmul.f32 %v2184, %v260
        %v2186 = vmul.f32 %v2183, %v264
        %v2187 = vpack.c.bf16 %v2185, %v2185
        %v2188 = vpack.c.bf16 %v2186, %v2186
        %v2191 = vunpack.c.l.b16 %v2187
        %v2192 = vunpack.c.l.b16 %v2188
        %v2193 = vpack.c.b16 %v2192, %v2191
        %2195 = vst [vmem:[#allocation2 + $0x30] sm:$0x33] %v2193
        %v2196 = vpack.c.bf16 %v2177, %v2177
        %v2197 = vpack.c.bf16 %v2178, %v2178
        %v2200 = vunpack.c.l.b16 %v2196
        %v2201 = vunpack.c.l.b16 %v2197
        %v2202 = vpack.c.b16 %v2201, %v2200
        %2204 = vst [vmem:[#allocation2 + $0x40] sm:$0x33] %v2202
        %2205 = vrot.lane.b32.xlu0 %v2177, 112
        %v2206 = vpop.permute.xlu0 %2205
        %2207 = vrot.lane.b32.xlu0 %v2178, 112
        %v2208 = vpop.permute.xlu0 %2207
        %v2209 = vsel %vm289, %v2206, %v2208
        %v2210 = vsel %vm289, %v2208, %v2206
        %v2211 = vmul.f32 %v2209, %v295
        %v2212 = vmul.f32 %v2210, %v299
        %v2213 = vpack.c.bf16 %v2211, %v2211
        %v2214 = vpack.c.bf16 %v2212, %v2212
        %v2217 = vunpack.c.l.b16 %v2213
        %v2218 = vunpack.c.l.b16 %v2214
        %v2219 = vpack.c.b16 %v2218, %v2217
        %2221 = vst [vmem:[#allocation2 + $0x50] sm:$0x33] %v2219
        %v2222 = vld [vmem:[%s3 + $0x30] sm:$0xf]
        %v2223 = vld [vmem:[#allocation3 + $0x98] sm:$0x3]
        %v2224 = vld [vmem:[#allocation2] sm:$0xff]
        %v2225 = vld [vmem:[#allocation2 + $0x8] sm:$0xff]
        %v2226 = vld [vmem:[#allocation2 + $0x10] sm:$0xff]
        %v2227 = vld [vmem:[#allocation2 + $0x18] sm:$0xff]
        %v2228 = vld [vmem:[#allocation2 + $0x20] sm:$0xff]
        %v2229 = vld [vmem:[#allocation2 + $0x28] sm:$0xff]
        %v2230 = vld [vmem:[#allocation2 + $0x30] sm:$0xff]
        %v2231 = vld [vmem:[#allocation2 + $0x38] sm:$0xff]
        %v2232 = vld [vmem:[#allocation2 + $0x40] sm:$0xff]
        %v2233 = vld [vmem:[#allocation2 + $0x48] sm:$0xff]
        %v2234 = vld [vmem:[#allocation2 + $0x50] sm:$0xff]
        %v2235 = vld [vmem:[#allocation2 + $0x58] sm:$0xff]
        %2237 = vset.pattern.permute.xlu0 0
        %2238 = vperm.xlu0 %2237, %v2222
        %v2239 = vpop.permute.xlu0 %2238
        %v2253 = vunpack.c.l.b16 %v2224
        %v2254 = vunpack.c.h.b16 %v2224
        %v2255 = vunpack.c.l.b16 %v2225
        %v2256 = vunpack.c.h.b16 %v2225
        %v2257 = vunpack.c.l.b16 %v2226
        %v2258 = vunpack.c.h.b16 %v2226
        %v2259 = vunpack.c.l.b16 %v2227
        %v2260 = vunpack.c.h.b16 %v2227
        %v2261 = vunpack.c.l.b16 %v2228
        %v2262 = vunpack.c.h.b16 %v2228
        %v2263 = vunpack.c.l.b16 %v2229
        %v2264 = vunpack.c.h.b16 %v2229
        %v2265 = vunpack.c.l.b16 %v2230
        %v2266 = vunpack.c.h.b16 %v2230
        %v2267 = vunpack.c.l.b16 %v2231
        %v2268 = vunpack.c.h.b16 %v2231
        %v2269 = vunpack.c.l.b16 %v2232
        %v2270 = vunpack.c.h.b16 %v2232
        %v2271 = vunpack.c.l.b16 %v2233
        %v2272 = vunpack.c.h.b16 %v2233
        %v2273 = vunpack.c.l.b16 %v2234
        %v2274 = vunpack.c.h.b16 %v2234
        %v2275 = vunpack.c.l.b16 %v2235
        %v2276 = vunpack.c.h.b16 %v2235
        %v2277 = vpack.c.b16 %v2255, %v2253
        %v2278 = vpack.c.b16 %v2256, %v2254
        %v2279 = vpack.c.b16 %v2259, %v2257
        %v2280 = vpack.c.b16 %v2260, %v2258
        %v2281 = vpack.c.b16 %v2263, %v2261
        %v2282 = vpack.c.b16 %v2264, %v2262
        %v2283 = vpack.c.b16 %v2267, %v2265
        %v2284 = vpack.c.b16 %v2268, %v2266
        %v2285 = vpack.c.b16 %v2271, %v2269
        %v2286 = vpack.c.b16 %v2272, %v2270
        %v2287 = vpack.c.b16 %v2275, %v2273
        %v2288 = vpack.c.b16 %v2276, %v2274
        %v2302 = vsel %vm655, %v2223, 0
        %2304 = vmatprep.subr.bf16.mxu0 0
        %2305 = vmatpush1.bf16.msra.mxu0 0
        %2306 = vmatprep.subr.bf16.mxu0 0
        %2307 = vmatpush1.bf16.msra.mxu0 0
        %2308 = vmatprep.subr.bf16.mxu0 %v2288
        %2309 = vmatpush1.bf16.msra.mxu0 %v2287
        %2310 = vmatprep.subr.bf16.mxu0 %v2286
        %2311 = vmatpush1.bf16.msra.mxu0 %v2285
        %2312 = vmatprep.subr.bf16.mxu0 %v2284
        %2313 = vmatpush1.bf16.msra.mxu0 %v2283
        %2314 = vmatprep.subr.bf16.mxu0 %v2282
        %2315 = vmatpush1.bf16.msra.mxu0 %v2281
        %2316 = vmatprep.subr.bf16.mxu0 %v2280
        %2317 = vmatpush1.bf16.msra.mxu0 %v2279
        %2318 = vmatprep.subr.bf16.mxu0 %v2278
        %2319 = vmatpush1.bf16.msra.mxu0 %v2277
        %2320 = vmatprep.subr.bf16.mxu0 0
        %2321 = vmatpush2.bf16.msra.mxu0 0
        %2322 = vmatprep.subr.bf16.mxu0 0
        %2323 = vmatpush2.bf16.msra.mxu0 0
        %2324 = vmatprep.subr.bf16.mxu0 0
        %2325 = vmatpush2.bf16.msra.mxu0 0
        %2326 = vmatprep.subr.bf16.mxu0 0
        %2327 = vmatpush2.bf16.msra.mxu0 0
        %2328 = vmatprep.subr.bf16.mxu0 0
        %2329 = vmatpush2.bf16.msra.mxu0 0
        %2330 = vmatprep.subr.bf16.mxu0 0
        %2331 = vmatpush2.bf16.msra.mxu0 0
        %2332 = vmatprep.subr.bf16.mxu0 0
        %2333 = vmatpush2.bf16.msra.mxu0 0
        %2334 = vmatprep.subr.bf16.mxu0 0
        %2335 = vmatpush2.bf16.msra.mxu0 0
        %2336 = vmatprep.mubr.bf16.mxu0 0
        %2337 = vmatmul.mubr.bf16.gmra.mxu0 %v2302
        %v2338 = vpop.f32.mrf.mxu0
        %v2339 = vadd.f32 %v2239, %v2338
        %v2340 = vpop.f32.mrf.mxu0
        %v2341 = vadd.f32 %v2239, %v2340
        %v2342 = vpop.f32.mrf.mxu0
        %v2343 = vpop.f32.mrf.mxu0
        %2344 = vdwg.mxu0
        %v2345 = vld [vmem:[#allocation3 + $0x90] sm:$0x3]
        %v2347 = vsel %vm655, %v2345, 0
        %2349 = vmatprep.subr.bf16.mxu0 0
        %2350 = vmatpush1.bf16.msra.mxu0 0
        %2351 = vmatprep.subr.bf16.mxu0 0
        %2352 = vmatpush1.bf16.msra.mxu0 0
        %2353 = vmatprep.subr.bf16.mxu0 %v2288
        %2354 = vmatpush1.bf16.msra.mxu0 %v2287
        %2355 = vmatprep.subr.bf16.mxu0 %v2286
        %2356 = vmatpush1.bf16.msra.mxu0 %v2285
        %2357 = vmatprep.subr.bf16.mxu0 %v2284
        %2358 = vmatpush1.bf16.msra.mxu0 %v2283
        %2359 = vmatprep.subr.bf16.mxu0 %v2282
        %2360 = vmatpush1.bf16.msra.mxu0 %v2281
        %2361 = vmatprep.subr.bf16.mxu0 %v2280
        %2362 = vmatpush1.bf16.msra.mxu0 %v2279
        %2363 = vmatprep.subr.bf16.mxu0 %v2278
        %2364 = vmatpush1.bf16.msra.mxu0 %v2277
        %2365 = vmatprep.subr.bf16.mxu0 0
        %2366 = vmatpush2.bf16.msra.mxu0 0
        %2367 = vmatprep.subr.bf16.mxu0 0
        %2368 = vmatpush2.bf16.msra.mxu0 0
        %2369 = vmatprep.subr.bf16.mxu0 0
        %2370 = vmatpush2.bf16.msra.mxu0 0
        %2371 = vmatprep.subr.bf16.mxu0 0
        %2372 = vmatpush2.bf16.msra.mxu0 0
        %2373 = vmatprep.subr.bf16.mxu0 0
        %2374 = vmatpush2.bf16.msra.mxu0 0
        %2375 = vmatprep.subr.bf16.mxu0 0
        %2376 = vmatpush2.bf16.msra.mxu0 0
        %2377 = vmatprep.subr.bf16.mxu0 0
        %2378 = vmatpush2.bf16.msra.mxu0 0
        %2379 = vmatprep.subr.bf16.mxu0 0
        %2380 = vmatpush2.bf16.msra.mxu0 0
        %2381 = vmatprep.mubr.bf16.mxu0 0
        %2382 = vmatmul.mubr.bf16.gmra.mxu0 %v2347
        %v2383 = vpop.f32.mrf.mxu0
        %v2384 = vadd.f32 0.0, %v2383
        %v2385 = vpop.f32.mrf.mxu0
        %v2386 = vadd.f32 0.0, %v2385
        %v2387 = vpop.f32.mrf.mxu0
        %v2388 = vpop.f32.mrf.mxu0
        %2389 = vdwg.mxu0
        %2390 = vrot.lane.b32.xlu0 %v2384, 1
        %v2391 = vpop.permute.xlu0 %2390
        %2392 = vrot.lane.b32.xlu0 %v2386, 1
        %v2393 = vpop.permute.xlu0 %2392
        %v2394 = vsel %vm448, %v2391, %v2393
        %v2395 = vsel %vm448, %v2393, %v2391
        %v2396 = vmul.f32 %v2395, %v454
        %v2397 = vmul.f32 %v2394, %v458
        %v2398 = vadd.f32 %v2339, %v2396
        %v2399 = vadd.f32 %v2341, %v2397
        %v2400 = vld [vmem:[#allocation3 + $0xa0] sm:$0x3]
        %v2402 = vsel %vm655, %v2400, 0
        %2404 = vmatprep.subr.bf16.mxu0 0
        %2405 = vmatpush1.bf16.msra.mxu0 0
        %2406 = vmatprep.subr.bf16.mxu0 0
        %2407 = vmatpush1.bf16.msra.mxu0 0
        %2408 = vmatprep.subr.bf16.mxu0 %v2288
        %2409 = vmatpush1.bf16.msra.mxu0 %v2287
        %2410 = vmatprep.subr.bf16.mxu0 %v2286
        %2411 = vmatpush1.bf16.msra.mxu0 %v2285
        %2412 = vmatprep.subr.bf16.mxu0 %v2284
        %2413 = vmatpush1.bf16.msra.mxu0 %v2283
        %2414 = vmatprep.subr.bf16.mxu0 %v2282
        %2415 = vmatpush1.bf16.msra.mxu0 %v2281
        %2416 = vmatprep.subr.bf16.mxu0 %v2280
        %2417 = vmatpush1.bf16.msra.mxu0 %v2279
        %2418 = vmatprep.subr.bf16.mxu0 %v2278
        %2419 = vmatpush1.bf16.msra.mxu0 %v2277
        %2420 = vmatprep.subr.bf16.mxu0 0
        %2421 = vmatpush2.bf16.msra.mxu0 0
        %2422 = vmatprep.subr.bf16.mxu0 0
        %2423 = vmatpush2.bf16.msra.mxu0 0
        %2424 = vmatprep.subr.bf16.mxu0 0
        %2425 = vmatpush2.bf16.msra.mxu0 0
        %2426 = vmatprep.subr.bf16.mxu0 0
        %2427 = vmatpush2.bf16.msra.mxu0 0
        %2428 = vmatprep.subr.bf16.mxu0 0
        %2429 = vmatpush2.bf16.msra.mxu0 0
        %2430 = vmatprep.subr.bf16.mxu0 0
        %2431 = vmatpush2.bf16.msra.mxu0 0
        %2432 = vmatprep.subr.bf16.mxu0 0
        %2433 = vmatpush2.bf16.msra.mxu0 0
        %2434 = vmatprep.subr.bf16.mxu0 0
        %2435 = vmatpush2.bf16.msra.mxu0 0
        %2436 = vmatprep.mubr.bf16.mxu0 0
        %2437 = vmatmul.mubr.bf16.gmra.mxu0 %v2402
        %v2438 = vpop.f32.mrf.mxu0
        %v2439 = vadd.f32 0.0, %v2438
        %v2440 = vpop.f32.mrf.mxu0
        %v2441 = vadd.f32 0.0, %v2440
        %v2442 = vpop.f32.mrf.mxu0
        %v2443 = vpop.f32.mrf.mxu0
        %2444 = vdwg.mxu0
        %2445 = vrot.lane.b32.xlu0 %v2439, 127
        %v2446 = vpop.permute.xlu0 %2445
        %2447 = vrot.lane.b32.xlu0 %v2441, 127
        %v2448 = vpop.permute.xlu0 %2447
        %v2449 = vsel %vm512, %v2446, %v2448
        %v2450 = vsel %vm512, %v2448, %v2446
        %v2451 = vmul.f32 %v2449, %v518
        %v2452 = vmul.f32 %v2450, %v522
        %v2453 = vadd.f32 %v2398, %v2451
        %v2454 = vadd.f32 %v2399, %v2452
        %vm2455 = vcmp.gt.f32.partialorder %v2453, 0.0
        %vm2456 = vcmp.gt.f32.partialorder %v2454, 0.0
        %v2457 = vmul.f32 %v2453, 0.2
        %v2458 = vmul.f32 %v2454, 0.2
        %v2459 = vsel %vm2455, %v2453, %v2457
        %v2460 = vsel %vm2456, %v2454, %v2458
        %2461 = vrot.lane.b32.xlu0 %v2459, 16
        %v2462 = vpop.permute.xlu0 %2461
        %2463 = vrot.lane.b32.xlu0 %v2460, 16
        %v2464 = vpop.permute.xlu0 %2463
        %v2465 = vsel %vm254, %v2462, %v2464
        %v2466 = vsel %vm254, %v2464, %v2462
        %v2467 = vmul.f32 %v2466, %v260
        %v2468 = vmul.f32 %v2465, %v264
        %v2469 = vpack.c.bf16 %v2467, %v2467
        %v2470 = vpack.c.bf16 %v2468, %v2468
        %v2473 = vunpack.c.l.b16 %v2469
        %v2474 = vunpack.c.l.b16 %v2470
        %v2475 = vpack.c.b16 %v2474, %v2473
        %2477 = vst [vmem:[#allocation2 + $0x60] sm:$0x33] %v2475
        %v2478 = vpack.c.bf16 %v2459, %v2459
        %v2479 = vpack.c.bf16 %v2460, %v2460
        %v2482 = vunpack.c.l.b16 %v2478
        %v2483 = vunpack.c.l.b16 %v2479
        %v2484 = vpack.c.b16 %v2483, %v2482
        %2486 = vst [vmem:[#allocation2 + $0x70] sm:$0x33] %v2484
        %2487 = vrot.lane.b32.xlu0 %v2459, 112
        %v2488 = vpop.permute.xlu0 %2487
        %2489 = vrot.lane.b32.xlu0 %v2460, 112
        %v2490 = vpop.permute.xlu0 %2489
        %v2491 = vsel %vm289, %v2488, %v2490
        %v2492 = vsel %vm289, %v2490, %v2488
        %v2493 = vmul.f32 %v2491, %v295
        %v2494 = vmul.f32 %v2492, %v299
        %v2495 = vpack.c.bf16 %v2493, %v2493
        %v2496 = vpack.c.bf16 %v2494, %v2494
        %v2499 = vunpack.c.l.b16 %v2495
        %v2500 = vunpack.c.l.b16 %v2496
        %v2501 = vpack.c.b16 %v2500, %v2499
        %2503 = vst [vmem:[#allocation2 + $0x80] sm:$0x33] %v2501
        %v2504 = vld [vmem:[%s3 + $0x38] sm:$0xf]
        %v2505 = vld [vmem:[#allocation3 + $0xb0] sm:$0x33]
        %v2506 = vld [vmem:[#allocation2] sm:$0xff]
        %v2507 = vld [vmem:[#allocation2 + $0x8] sm:$0xff]
        %v2508 = vld [vmem:[#allocation2 + $0x10] sm:$0xff]
        %v2509 = vld [vmem:[#allocation2 + $0x18] sm:$0xff]
        %v2510 = vld [vmem:[#allocation2 + $0x20] sm:$0xff]
        %v2511 = vld [vmem:[#allocation2 + $0x28] sm:$0xff]
        %v2512 = vld [vmem:[#allocation2 + $0x30] sm:$0xff]
        %v2513 = vld [vmem:[#allocation2 + $0x38] sm:$0xff]
        %v2514 = vld [vmem:[#allocation2 + $0x40] sm:$0xff]
        %v2515 = vld [vmem:[#allocation2 + $0x48] sm:$0xff]
        %v2516 = vld [vmem:[#allocation2 + $0x50] sm:$0xff]
        %v2517 = vld [vmem:[#allocation2 + $0x58] sm:$0xff]
        %v2518 = vld [vmem:[#allocation2 + $0x60] sm:$0xff]
        %v2519 = vld [vmem:[#allocation2 + $0x68] sm:$0xff]
        %v2520 = vld [vmem:[#allocation2 + $0x70] sm:$0xff]
        %v2521 = vld [vmem:[#allocation2 + $0x78] sm:$0xff]
        %v2522 = vld [vmem:[#allocation2 + $0x80] sm:$0xff]
        %v2523 = vld [vmem:[#allocation2 + $0x88] sm:$0xff]
        %2525 = vset.pattern.permute.xlu0 0
        %2526 = vperm.xlu0 %2525, %v2504
        %v2527 = vpop.permute.xlu0 %2526
        %v2530 = vunpack.c.l.b16 %v2505
        %v2531 = vunpack.c.h.b16 %v2505
        %v2532 = vpack.c.b16 %v2530, %v2530
        %v2533 = vpack.c.b16 %v2531, %v2531
        %v2553 = vunpack.c.l.b16 %v2506
        %v2554 = vunpack.c.h.b16 %v2506
        %v2555 = vunpack.c.l.b16 %v2507
        %v2556 = vunpack.c.h.b16 %v2507
        %v2557 = vunpack.c.l.b16 %v2508
        %v2558 = vunpack.c.h.b16 %v2508
        %v2559 = vunpack.c.l.b16 %v2509
        %v2560 = vunpack.c.h.b16 %v2509
        %v2561 = vunpack.c.l.b16 %v2510
        %v2562 = vunpack.c.h.b16 %v2510
        %v2563 = vunpack.c.l.b16 %v2511
        %v2564 = vunpack.c.h.b16 %v2511
        %v2565 = vunpack.c.l.b16 %v2512
        %v2566 = vunpack.c.h.b16 %v2512
        %v2567 = vunpack.c.l.b16 %v2513
        %v2568 = vunpack.c.h.b16 %v2513
        %v2569 = vunpack.c.l.b16 %v2514
        %v2570 = vunpack.c.h.b16 %v2514
        %v2571 = vunpack.c.l.b16 %v2515
        %v2572 = vunpack.c.h.b16 %v2515
        %v2573 = vunpack.c.l.b16 %v2516
        %v2574 = vunpack.c.h.b16 %v2516
        %v2575 = vunpack.c.l.b16 %v2517
        %v2576 = vunpack.c.h.b16 %v2517
        %v2577 = vunpack.c.l.b16 %v2518
        %v2578 = vunpack.c.h.b16 %v2518
        %v2579 = vunpack.c.l.b16 %v2519
        %v2580 = vunpack.c.h.b16 %v2519
        %v2581 = vunpack.c.l.b16 %v2520
        %v2582 = vunpack.c.h.b16 %v2520
        %v2583 = vunpack.c.l.b16 %v2521
        %v2584 = vunpack.c.h.b16 %v2521
        %v2585 = vunpack.c.l.b16 %v2522
        %v2586 = vunpack.c.h.b16 %v2522
        %v2587 = vunpack.c.l.b16 %v2523
        %v2588 = vunpack.c.h.b16 %v2523
        %v2589 = vpack.c.b16 %v2555, %v2553
        %v2590 = vpack.c.b16 %v2556, %v2554
        %v2591 = vpack.c.b16 %v2559, %v2557
        %v2592 = vpack.c.b16 %v2560, %v2558
        %v2593 = vpack.c.b16 %v2563, %v2561
        %v2594 = vpack.c.b16 %v2564, %v2562
        %v2595 = vpack.c.b16 %v2567, %v2565
        %v2596 = vpack.c.b16 %v2568, %v2566
        %v2597 = vpack.c.b16 %v2571, %v2569
        %v2598 = vpack.c.b16 %v2572, %v2570
        %v2599 = vpack.c.b16 %v2575, %v2573
        %v2600 = vpack.c.b16 %v2576, %v2574
        %v2601 = vpack.c.b16 %v2579, %v2577
        %v2602 = vpack.c.b16 %v2580, %v2578
        %v2603 = vpack.c.b16 %v2583, %v2581
        %v2604 = vpack.c.b16 %v2584, %v2582
        %v2605 = vpack.c.b16 %v2587, %v2585
        %v2606 = vpack.c.b16 %v2588, %v2586
        %v2626 = vsel %vm980, %v2533, 0
        %2628 = vmatprep.subr.bf16.mxu0 %v2604
        %2629 = vmatpush1.bf16.msra.mxu0 %v2603
        %2630 = vmatprep.subr.bf16.mxu0 %v2602
        %2631 = vmatpush1.bf16.msra.mxu0 %v2601
        %2632 = vmatprep.subr.bf16.mxu0 %v2600
        %2633 = vmatpush1.bf16.msra.mxu0 %v2599
        %2634 = vmatprep.subr.bf16.mxu0 %v2598
        %2635 = vmatpush1.bf16.msra.mxu0 %v2597
        %2636 = vmatprep.subr.bf16.mxu0 %v2596
        %2637 = vmatpush1.bf16.msra.mxu0 %v2595
        %2638 = vmatprep.subr.bf16.mxu0 %v2594
        %2639 = vmatpush1.bf16.msra.mxu0 %v2593
        %2640 = vmatprep.subr.bf16.mxu0 %v2592
        %2641 = vmatpush1.bf16.msra.mxu0 %v2591
        %2642 = vmatprep.subr.bf16.mxu0 %v2590
        %2643 = vmatpush1.bf16.msra.mxu0 %v2589
        %2644 = vmatprep.subr.bf16.mxu0 0
        %2645 = vmatpush2.bf16.msra.mxu0 0
        %2646 = vmatprep.subr.bf16.mxu0 0
        %2647 = vmatpush2.bf16.msra.mxu0 0
        %2648 = vmatprep.subr.bf16.mxu0 0
        %2649 = vmatpush2.bf16.msra.mxu0 0
        %2650 = vmatprep.subr.bf16.mxu0 0
        %2651 = vmatpush2.bf16.msra.mxu0 0
        %2652 = vmatprep.subr.bf16.mxu0 0
        %2653 = vmatpush2.bf16.msra.mxu0 0
        %2654 = vmatprep.subr.bf16.mxu0 0
        %2655 = vmatpush2.bf16.msra.mxu0 0
        %2656 = vmatprep.subr.bf16.mxu0 0
        %2657 = vmatpush2.bf16.msra.mxu0 0
        %2658 = vmatprep.subr.bf16.mxu0 %v2606
        %2659 = vmatpush2.bf16.msra.mxu0 %v2605
        %2660 = vmatprep.mubr.bf16.mxu0 %v2626
        %2661 = vmatmul.mubr.bf16.gmra.mxu0 %v2532
        %v2662 = vpop.f32.mrf.mxu0
        %v2663 = vadd.f32 %v2527, %v2662
        %v2664 = vpop.f32.mrf.mxu0
        %v2665 = vadd.f32 %v2527, %v2664
        %v2666 = vpop.f32.mrf.mxu0
        %v2667 = vpop.f32.mrf.mxu0
        %2668 = vdwg.mxu0
        %v2669 = vld [vmem:[#allocation3 + $0xa8] sm:$0x33]
        %v2671 = vunpack.c.l.b16 %v2669
        %v2672 = vunpack.c.h.b16 %v2669
        %v2673 = vpack.c.b16 %v2671, %v2671
        %v2674 = vpack.c.b16 %v2672, %v2672
        %v2677 = vsel %vm980, %v2674, 0
        %2679 = vmatprep.subr.bf16.mxu0 %v2604
        %2680 = vmatpush1.bf16.msra.mxu0 %v2603
        %2681 = vmatprep.subr.bf16.mxu0 %v2602
        %2682 = vmatpush1.bf16.msra.mxu0 %v2601
        %2683 = vmatprep.subr.bf16.mxu0 %v2600
        %2684 = vmatpush1.bf16.msra.mxu0 %v2599
        %2685 = vmatprep.subr.bf16.mxu0 %v2598
        %2686 = vmatpush1.bf16.msra.mxu0 %v2597
        %2687 = vmatprep.subr.bf16.mxu0 %v2596
        %2688 = vmatpush1.bf16.msra.mxu0 %v2595
        %2689 = vmatprep.subr.bf16.mxu0 %v2594
        %2690 = vmatpush1.bf16.msra.mxu0 %v2593
        %2691 = vmatprep.subr.bf16.mxu0 %v2592
        %2692 = vmatpush1.bf16.msra.mxu0 %v2591
        %2693 = vmatprep.subr.bf16.mxu0 %v2590
        %2694 = vmatpush1.bf16.msra.mxu0 %v2589
        %2695 = vmatprep.subr.bf16.mxu0 0
        %2696 = vmatpush2.bf16.msra.mxu0 0
        %2697 = vmatprep.subr.bf16.mxu0 0
        %2698 = vmatpush2.bf16.msra.mxu0 0
        %2699 = vmatprep.subr.bf16.mxu0 0
        %2700 = vmatpush2.bf16.msra.mxu0 0
        %2701 = vmatprep.subr.bf16.mxu0 0
        %2702 = vmatpush2.bf16.msra.mxu0 0
        %2703 = vmatprep.subr.bf16.mxu0 0
        %2704 = vmatpush2.bf16.msra.mxu0 0
        %2705 = vmatprep.subr.bf16.mxu0 0
        %2706 = vmatpush2.bf16.msra.mxu0 0
        %2707 = vmatprep.subr.bf16.mxu0 0
        %2708 = vmatpush2.bf16.msra.mxu0 0
        %2709 = vmatprep.subr.bf16.mxu0 %v2606
        %2710 = vmatpush2.bf16.msra.mxu0 %v2605
        %2711 = vmatprep.mubr.bf16.mxu0 %v2677
        %2712 = vmatmul.mubr.bf16.gmra.mxu0 %v2673
        %v2713 = vpop.f32.mrf.mxu0
        %v2714 = vadd.f32 0.0, %v2713
        %v2715 = vpop.f32.mrf.mxu0
        %v2716 = vadd.f32 0.0, %v2715
        %v2717 = vpop.f32.mrf.mxu0
        %v2718 = vpop.f32.mrf.mxu0
        %2719 = vdwg.mxu0
        %2720 = vrot.lane.b32.xlu0 %v2714, 1
        %v2721 = vpop.permute.xlu0 %2720
        %2722 = vrot.lane.b32.xlu0 %v2716, 1
        %v2723 = vpop.permute.xlu0 %2722
        %v2724 = vsel %vm448, %v2721, %v2723
        %v2725 = vsel %vm448, %v2723, %v2721
        %v2726 = vmul.f32 %v2725, %v454
        %v2727 = vmul.f32 %v2724, %v458
        %v2728 = vadd.f32 %v2663, %v2726
        %v2729 = vadd.f32 %v2665, %v2727
        %v2730 = vld [vmem:[#allocation3 + $0xb8] sm:$0x33]
        %v2732 = vunpack.c.l.b16 %v2730
        %v2733 = vunpack.c.h.b16 %v2730
        %v2734 = vpack.c.b16 %v2732, %v2732
        %v2735 = vpack.c.b16 %v2733, %v2733
        %v2738 = vsel %vm980, %v2735, 0
        %2740 = vmatprep.subr.bf16.mxu0 %v2604
        %2741 = vmatpush1.bf16.msra.mxu0 %v2603
        %2742 = vmatprep.subr.bf16.mxu0 %v2602
        %2743 = vmatpush1.bf16.msra.mxu0 %v2601
        %2744 = vmatprep.subr.bf16.mxu0 %v2600
        %2745 = vmatpush1.bf16.msra.mxu0 %v2599
        %2746 = vmatprep.subr.bf16.mxu0 %v2598
        %2747 = vmatpush1.bf16.msra.mxu0 %v2597
        %2748 = vmatprep.subr.bf16.mxu0 %v2596
        %2749 = vmatpush1.bf16.msra.mxu0 %v2595
        %2750 = vmatprep.subr.bf16.mxu0 %v2594
        %2751 = vmatpush1.bf16.msra.mxu0 %v2593
        %2752 = vmatprep.subr.bf16.mxu0 %v2592
        %2753 = vmatpush1.bf16.msra.mxu0 %v2591
        %2754 = vmatprep.subr.bf16.mxu0 %v2590
        %2755 = vmatpush1.bf16.msra.mxu0 %v2589
        %2756 = vmatprep.subr.bf16.mxu0 0
        %2757 = vmatpush2.bf16.msra.mxu0 0
        %2758 = vmatprep.subr.bf16.mxu0 0
        %2759 = vmatpush2.bf16.msra.mxu0 0
        %2760 = vmatprep.subr.bf16.mxu0 0
        %2761 = vmatpush2.bf16.msra.mxu0 0
        %2762 = vmatprep.subr.bf16.mxu0 0
        %2763 = vmatpush2.bf16.msra.mxu0 0
        %2764 = vmatprep.subr.bf16.mxu0 0
        %2765 = vmatpush2.bf16.msra.mxu0 0
        %2766 = vmatprep.subr.bf16.mxu0 0
        %2767 = vmatpush2.bf16.msra.mxu0 0
        %2768 = vmatprep.subr.bf16.mxu0 0
        %2769 = vmatpush2.bf16.msra.mxu0 0
        %2770 = vmatprep.subr.bf16.mxu0 %v2606
        %2771 = vmatpush2.bf16.msra.mxu0 %v2605
        %2772 = vmatprep.mubr.bf16.mxu0 %v2738
        %2773 = vmatmul.mubr.bf16.gmra.mxu0 %v2734
        %v2774 = vpop.f32.mrf.mxu0
        %v2775 = vadd.f32 0.0, %v2774
        %v2776 = vpop.f32.mrf.mxu0
        %v2777 = vadd.f32 0.0, %v2776
        %v2778 = vpop.f32.mrf.mxu0
        %v2779 = vpop.f32.mrf.mxu0
        %2780 = vdwg.mxu0
        %2781 = vrot.lane.b32.xlu0 %v2775, 127
        %v2782 = vpop.permute.xlu0 %2781
        %2783 = vrot.lane.b32.xlu0 %v2777, 127
        %v2784 = vpop.permute.xlu0 %2783
        %v2785 = vsel %vm512, %v2782, %v2784
        %v2786 = vsel %vm512, %v2784, %v2782
        %v2787 = vmul.f32 %v2785, %v518
        %v2788 = vmul.f32 %v2786, %v522
        %v2789 = vadd.f32 %v2728, %v2787
        %v2790 = vadd.f32 %v2729, %v2788
        %vm2791 = vcmp.gt.f32.partialorder %v2789, 0.0
        %vm2792 = vcmp.gt.f32.partialorder %v2790, 0.0
        %v2793 = vmul.f32 %v2789, 0.2
        %v2794 = vmul.f32 %v2790, 0.2
        %v2795 = vsel %vm2791, %v2789, %v2793
        %v2796 = vsel %vm2792, %v2790, %v2794
        %2797 = vrot.lane.b32.xlu0 %v2795, 16
        %v2798 = vpop.permute.xlu0 %2797
        %2799 = vrot.lane.b32.xlu0 %v2796, 16
        %v2800 = vpop.permute.xlu0 %2799
        %v2801 = vsel %vm254, %v2798, %v2800
        %v2802 = vsel %vm254, %v2800, %v2798
        %v2803 = vmul.f32 %v2802, %v260
        %v2804 = vmul.f32 %v2801, %v264
        %v2805 = vpack.c.bf16 %v2803, %v2803
        %v2806 = vpack.c.bf16 %v2804, %v2804
        %v2809 = vunpack.c.l.b16 %v2805
        %v2810 = vunpack.c.l.b16 %v2806
        %v2811 = vpack.c.b16 %v2810, %v2809
        %2813 = vst [vmem:[#allocation2 + $0x90] sm:$0x33] %v2811
        %v2814 = vpack.c.bf16 %v2795, %v2795
        %v2815 = vpack.c.bf16 %v2796, %v2796
        %v2818 = vunpack.c.l.b16 %v2814
        %v2819 = vunpack.c.l.b16 %v2815
        %v2820 = vpack.c.b16 %v2819, %v2818
        %2822 = vst [vmem:[#allocation2 + $0xa0] sm:$0x33] %v2820
        %2823 = vrot.lane.b32.xlu0 %v2795, 112
        %v2824 = vpop.permute.xlu0 %2823
        %2825 = vrot.lane.b32.xlu0 %v2796, 112
        %v2826 = vpop.permute.xlu0 %2825
        %v2827 = vsel %vm289, %v2824, %v2826
        %v2828 = vsel %vm289, %v2826, %v2824
        %v2829 = vmul.f32 %v2827, %v295
        %v2830 = vmul.f32 %v2828, %v299
        %v2831 = vpack.c.bf16 %v2829, %v2829
        %v2832 = vpack.c.bf16 %v2830, %v2830
        %v2835 = vunpack.c.l.b16 %v2831
        %v2836 = vunpack.c.l.b16 %v2832
        %v2837 = vpack.c.b16 %v2836, %v2835
        %2839 = vst [vmem:[#allocation2 + $0xb0] sm:$0x33] %v2837
        %v2840 = vld [vmem:[%s3 + $0x40] sm:$0xf]
        %v2841 = vld [vmem:[#allocation3 + $0xc8] sm:$0x33]
        %v2842 = vld [vmem:[#allocation2] sm:$0xff]
        %v2843 = vld [vmem:[#allocation2 + $0x8] sm:$0xff]
        %v2844 = vld [vmem:[#allocation2 + $0x10] sm:$0xff]
        %v2845 = vld [vmem:[#allocation2 + $0x18] sm:$0xff]
        %v2846 = vld [vmem:[#allocation2 + $0x20] sm:$0xff]
        %v2847 = vld [vmem:[#allocation2 + $0x28] sm:$0xff]
        %v2848 = vld [vmem:[#allocation2 + $0x30] sm:$0xff]
        %v2849 = vld [vmem:[#allocation2 + $0x38] sm:$0xff]
        %v2850 = vld [vmem:[#allocation2 + $0x40] sm:$0xff]
        %v2851 = vld [vmem:[#allocation2 + $0x48] sm:$0xff]
        %v2852 = vld [vmem:[#allocation2 + $0x50] sm:$0xff]
        %v2853 = vld [vmem:[#allocation2 + $0x58] sm:$0xff]
        %v2854 = vld [vmem:[#allocation2 + $0x60] sm:$0xff]
        %v2855 = vld [vmem:[#allocation2 + $0x68] sm:$0xff]
        %v2856 = vld [vmem:[#allocation2 + $0x70] sm:$0xff]
        %v2857 = vld [vmem:[#allocation2 + $0x78] sm:$0xff]
        %v2858 = vld [vmem:[#allocation2 + $0x80] sm:$0xff]
        %v2859 = vld [vmem:[#allocation2 + $0x88] sm:$0xff]
        %v2860 = vld [vmem:[#allocation2 + $0x90] sm:$0xff]
        %v2861 = vld [vmem:[#allocation2 + $0x98] sm:$0xff]
        %v2862 = vld [vmem:[#allocation2 + $0xa0] sm:$0xff]
        %v2863 = vld [vmem:[#allocation2 + $0xa8] sm:$0xff]
        %v2864 = vld [vmem:[#allocation2 + $0xb0] sm:$0xff]
        %v2865 = vld [vmem:[#allocation2 + $0xb8] sm:$0xff]
        %2867 = vset.pattern.permute.xlu0 0
        %2868 = vperm.xlu0 %2867, %v2840
        %v2869 = vpop.permute.xlu0 %2868
        %v2872 = vunpack.c.l.b16 %v2841
        %v2873 = vunpack.c.h.b16 %v2841
        %v2874 = vpack.c.b16 %v2872, %v2872
        %v2875 = vpack.c.b16 %v2873, %v2873
        %v2901 = vunpack.c.l.b16 %v2842
        %v2902 = vunpack.c.h.b16 %v2842
        %v2903 = vunpack.c.l.b16 %v2843
        %v2904 = vunpack.c.h.b16 %v2843
        %v2905 = vunpack.c.l.b16 %v2844
        %v2906 = vunpack.c.h.b16 %v2844
        %v2907 = vunpack.c.l.b16 %v2845
        %v2908 = vunpack.c.h.b16 %v2845
        %v2909 = vunpack.c.l.b16 %v2846
        %v2910 = vunpack.c.h.b16 %v2846
        %v2911 = vunpack.c.l.b16 %v2847
        %v2912 = vunpack.c.h.b16 %v2847
        %v2913 = vunpack.c.l.b16 %v2848
        %v2914 = vunpack.c.h.b16 %v2848
        %v2915 = vunpack.c.l.b16 %v2849
        %v2916 = vunpack.c.h.b16 %v2849
        %v2917 = vunpack.c.l.b16 %v2850
        %v2918 = vunpack.c.h.b16 %v2850
        %v2919 = vunpack.c.l.b16 %v2851
        %v2920 = vunpack.c.h.b16 %v2851
        %v2921 = vunpack.c.l.b16 %v2852
        %v2922 = vunpack.c.h.b16 %v2852
        %v2923 = vunpack.c.l.b16 %v2853
        %v2924 = vunpack.c.h.b16 %v2853
        %v2925 = vunpack.c.l.b16 %v2854
        %v2926 = vunpack.c.h.b16 %v2854
        %v2927 = vunpack.c.l.b16 %v2855
        %v2928 = vunpack.c.h.b16 %v2855
        %v2929 = vunpack.c.l.b16 %v2856
        %v2930 = vunpack.c.h.b16 %v2856
        %v2931 = vunpack.c.l.b16 %v2857
        %v2932 = vunpack.c.h.b16 %v2857
        %v2933 = vunpack.c.l.b16 %v2858
        %v2934 = vunpack.c.h.b16 %v2858
        %v2935 = vunpack.c.l.b16 %v2859
        %v2936 = vunpack.c.h.b16 %v2859
        %v2937 = vunpack.c.l.b16 %v2860
        %v2938 = vunpack.c.h.b16 %v2860
        %v2939 = vunpack.c.l.b16 %v2861
        %v2940 = vunpack.c.h.b16 %v2861
        %v2941 = vunpack.c.l.b16 %v2862
        %v2942 = vunpack.c.h.b16 %v2862
        %v2943 = vunpack.c.l.b16 %v2863
        %v2944 = vunpack.c.h.b16 %v2863
        %v2945 = vunpack.c.l.b16 %v2864
        %v2946 = vunpack.c.h.b16 %v2864
        %v2947 = vunpack.c.l.b16 %v2865
        %v2948 = vunpack.c.h.b16 %v2865
        %v2949 = vpack.c.b16 %v2903, %v2901
        %v2950 = vpack.c.b16 %v2904, %v2902
        %v2951 = vpack.c.b16 %v2907, %v2905
        %v2952 = vpack.c.b16 %v2908, %v2906
        %v2953 = vpack.c.b16 %v2911, %v2909
        %v2954 = vpack.c.b16 %v2912, %v2910
        %v2955 = vpack.c.b16 %v2915, %v2913
        %v2956 = vpack.c.b16 %v2916, %v2914
        %v2957 = vpack.c.b16 %v2919, %v2917
        %v2958 = vpack.c.b16 %v2920, %v2918
        %v2959 = vpack.c.b16 %v2923, %v2921
        %v2960 = vpack.c.b16 %v2924, %v2922
        %v2961 = vpack.c.b16 %v2927, %v2925
        %v2962 = vpack.c.b16 %v2928, %v2926
        %v2963 = vpack.c.b16 %v2931, %v2929
        %v2964 = vpack.c.b16 %v2932, %v2930
        %v2965 = vpack.c.b16 %v2935, %v2933
        %v2966 = vpack.c.b16 %v2936, %v2934
        %v2967 = vpack.c.b16 %v2939, %v2937
        %v2968 = vpack.c.b16 %v2940, %v2938
        %v2969 = vpack.c.b16 %v2943, %v2941
        %v2970 = vpack.c.b16 %v2944, %v2942
        %v2971 = vpack.c.b16 %v2947, %v2945
        %v2972 = vpack.c.b16 %v2948, %v2946
        %v2998 = vsel %vm1353, %v2875, 0
        %3000 = vmatprep.subr.bf16.mxu0 %v2964
        %3001 = vmatpush1.bf16.msra.mxu0 %v2963
        %3002 = vmatprep.subr.bf16.mxu0 %v2962
        %3003 = vmatpush1.bf16.msra.mxu0 %v2961
        %3004 = vmatprep.subr.bf16.mxu0 %v2960
        %3005 = vmatpush1.bf16.msra.mxu0 %v2959
        %3006 = vmatprep.subr.bf16.mxu0 %v2958
        %3007 = vmatpush1.bf16.msra.mxu0 %v2957
        %3008 = vmatprep.subr.bf16.mxu0 %v2956
        %3009 = vmatpush1.bf16.msra.mxu0 %v2955
        %3010 = vmatprep.subr.bf16.mxu0 %v2954
        %3011 = vmatpush1.bf16.msra.mxu0 %v2953
        %3012 = vmatprep.subr.bf16.mxu0 %v2952
        %3013 = vmatpush1.bf16.msra.mxu0 %v2951
        %3014 = vmatprep.subr.bf16.mxu0 %v2950
        %3015 = vmatpush1.bf16.msra.mxu0 %v2949
        %3016 = vmatprep.subr.bf16.mxu0 0
        %3017 = vmatpush2.bf16.msra.mxu0 0
        %3018 = vmatprep.subr.bf16.mxu0 0
        %3019 = vmatpush2.bf16.msra.mxu0 0
        %3020 = vmatprep.subr.bf16.mxu0 0
        %3021 = vmatpush2.bf16.msra.mxu0 0
        %3022 = vmatprep.subr.bf16.mxu0 0
        %3023 = vmatpush2.bf16.msra.mxu0 0
        %3024 = vmatprep.subr.bf16.mxu0 %v2972
        %3025 = vmatpush2.bf16.msra.mxu0 %v2971
        %3026 = vmatprep.subr.bf16.mxu0 %v2970
        %3027 = vmatpush2.bf16.msra.mxu0 %v2969
        %3028 = vmatprep.subr.bf16.mxu0 %v2968
        %3029 = vmatpush2.bf16.msra.mxu0 %v2967
        %3030 = vmatprep.subr.bf16.mxu0 %v2966
        %3031 = vmatpush2.bf16.msra.mxu0 %v2965
        %3032 = vmatprep.mubr.bf16.mxu0 %v2998
        %3033 = vmatmul.mubr.bf16.gmra.mxu0 %v2874
        %v3034 = vpop.f32.mrf.mxu0
        %v3035 = vadd.f32 %v2869, %v3034
        %v3036 = vpop.f32.mrf.mxu0
        %v3037 = vadd.f32 %v2869, %v3036
        %v3038 = vpop.f32.mrf.mxu0
        %v3039 = vpop.f32.mrf.mxu0
        %3040 = vdwg.mxu0
        %v3041 = vld [vmem:[#allocation3 + $0xc0] sm:$0x33]
        %v3043 = vunpack.c.l.b16 %v3041
        %v3044 = vunpack.c.h.b16 %v3041
        %v3045 = vpack.c.b16 %v3043, %v3043
        %v3046 = vpack.c.b16 %v3044, %v3044
        %v3049 = vsel %vm1353, %v3046, 0
        %3051 = vmatprep.subr.bf16.mxu0 %v2964
        %3052 = vmatpush1.bf16.msra.mxu0 %v2963
        %3053 = vmatprep.subr.bf16.mxu0 %v2962
        %3054 = vmatpush1.bf16.msra.mxu0 %v2961
        %3055 = vmatprep.subr.bf16.mxu0 %v2960
        %3056 = vmatpush1.bf16.msra.mxu0 %v2959
        %3057 = vmatprep.subr.bf16.mxu0 %v2958
        %3058 = vmatpush1.bf16.msra.mxu0 %v2957
        %3059 = vmatprep.subr.bf16.mxu0 %v2956
        %3060 = vmatpush1.bf16.msra.mxu0 %v2955
        %3061 = vmatprep.subr.bf16.mxu0 %v2954
        %3062 = vmatpush1.bf16.msra.mxu0 %v2953
        %3063 = vmatprep.subr.bf16.mxu0 %v2952
        %3064 = vmatpush1.bf16.msra.mxu0 %v2951
        %3065 = vmatprep.subr.bf16.mxu0 %v2950
        %3066 = vmatpush1.bf16.msra.mxu0 %v2949
        %3067 = vmatprep.subr.bf16.mxu0 0
        %3068 = vmatpush2.bf16.msra.mxu0 0
        %3069 = vmatprep.subr.bf16.mxu0 0
        %3070 = vmatpush2.bf16.msra.mxu0 0
        %3071 = vmatprep.subr.bf16.mxu0 0
        %3072 = vmatpush2.bf16.msra.mxu0 0
        %3073 = vmatprep.subr.bf16.mxu0 0
        %3074 = vmatpush2.bf16.msra.mxu0 0
        %3075 = vmatprep.subr.bf16.mxu0 %v2972
        %3076 = vmatpush2.bf16.msra.mxu0 %v2971
        %3077 = vmatprep.subr.bf16.mxu0 %v2970
        %3078 = vmatpush2.bf16.msra.mxu0 %v2969
        %3079 = vmatprep.subr.bf16.mxu0 %v2968
        %3080 = vmatpush2.bf16.msra.mxu0 %v2967
        %3081 = vmatprep.subr.bf16.mxu0 %v2966
        %3082 = vmatpush2.bf16.msra.mxu0 %v2965
        %3083 = vmatprep.mubr.bf16.mxu0 %v3049
        %3084 = vmatmul.mubr.bf16.gmra.mxu0 %v3045
        %v3085 = vpop.f32.mrf.mxu0
        %v3086 = vadd.f32 0.0, %v3085
        %v3087 = vpop.f32.mrf.mxu0
        %v3088 = vadd.f32 0.0, %v3087
        %v3089 = vpop.f32.mrf.mxu0
        %v3090 = vpop.f32.mrf.mxu0
        %3091 = vdwg.mxu0
        %3092 = vrot.lane.b32.xlu0 %v3086, 1
        %v3093 = vpop.permute.xlu0 %3092
        %3094 = vrot.lane.b32.xlu0 %v3088, 1
        %v3095 = vpop.permute.xlu0 %3094
        %v3096 = vsel %vm448, %v3093, %v3095
        %v3097 = vsel %vm448, %v3095, %v3093
        %v3098 = vmul.f32 %v3097, %v454
        %v3099 = vmul.f32 %v3096, %v458
        %v3100 = vadd.f32 %v3035, %v3098
        %v3101 = vadd.f32 %v3037, %v3099
        %v3102 = vld [vmem:[#allocation3 + $0xd0] sm:$0x33]
        %v3104 = vunpack.c.l.b16 %v3102
        %v3105 = vunpack.c.h.b16 %v3102
        %v3106 = vpack.c.b16 %v3104, %v3104
        %v3107 = vpack.c.b16 %v3105, %v3105
        %v3110 = vsel %vm1353, %v3107, 0
        %3112 = vmatprep.subr.bf16.mxu0 %v2964
        %3113 = vmatpush1.bf16.msra.mxu0 %v2963
        %3114 = vmatprep.subr.bf16.mxu0 %v2962
        %3115 = vmatpush1.bf16.msra.mxu0 %v2961
        %3116 = vmatprep.subr.bf16.mxu0 %v2960
        %3117 = vmatpush1.bf16.msra.mxu0 %v2959
        %3118 = vmatprep.subr.bf16.mxu0 %v2958
        %3119 = vmatpush1.bf16.msra.mxu0 %v2957
        %3120 = vmatprep.subr.bf16.mxu0 %v2956
        %3121 = vmatpush1.bf16.msra.mxu0 %v2955
        %3122 = vmatprep.subr.bf16.mxu0 %v2954
        %3123 = vmatpush1.bf16.msra.mxu0 %v2953
        %3124 = vmatprep.subr.bf16.mxu0 %v2952
        %3125 = vmatpush1.bf16.msra.mxu0 %v2951
        %3126 = vmatprep.subr.bf16.mxu0 %v2950
        %3127 = vmatpush1.bf16.msra.mxu0 %v2949
        %3128 = vmatprep.subr.bf16.mxu0 0
        %3129 = vmatpush2.bf16.msra.mxu0 0
        %3130 = vmatprep.subr.bf16.mxu0 0
        %3131 = vmatpush2.bf16.msra.mxu0 0
        %3132 = vmatprep.subr.bf16.mxu0 0
        %3133 = vmatpush2.bf16.msra.mxu0 0
        %3134 = vmatprep.subr.bf16.mxu0 0
        %3135 = vmatpush2.bf16.msra.mxu0 0
        %3136 = vmatprep.subr.bf16.mxu0 %v2972
        %3137 = vmatpush2.bf16.msra.mxu0 %v2971
        %3138 = vmatprep.subr.bf16.mxu0 %v2970
        %3139 = vmatpush2.bf16.msra.mxu0 %v2969
        %3140 = vmatprep.subr.bf16.mxu0 %v2968
        %3141 = vmatpush2.bf16.msra.mxu0 %v2967
        %3142 = vmatprep.subr.bf16.mxu0 %v2966
        %3143 = vmatpush2.bf16.msra.mxu0 %v2965
        %3144 = vmatprep.mubr.bf16.mxu0 %v3110
        %3145 = vmatmul.mubr.bf16.gmra.mxu0 %v3106
        %v3146 = vpop.f32.mrf.mxu0
        %v3147 = vadd.f32 0.0, %v3146
        %v3148 = vpop.f32.mrf.mxu0
        %v3149 = vadd.f32 0.0, %v3148
        %v3150 = vpop.f32.mrf.mxu0
        %v3151 = vpop.f32.mrf.mxu0
        %3152 = vdwg.mxu0
        %3153 = vrot.lane.b32.xlu0 %v3147, 127
        %v3154 = vpop.permute.xlu0 %3153
        %3155 = vrot.lane.b32.xlu0 %v3149, 127
        %v3156 = vpop.permute.xlu0 %3155
        %v3157 = vsel %vm512, %v3154, %v3156
        %v3158 = vsel %vm512, %v3156, %v3154
        %v3159 = vmul.f32 %v3157, %v518
        %v3160 = vmul.f32 %v3158, %v522
        %v3161 = vadd.f32 %v3100, %v3159
        %v3162 = vadd.f32 %v3101, %v3160
        %vm3163 = vcmp.gt.f32.partialorder %v3161, 0.0
        %vm3164 = vcmp.gt.f32.partialorder %v3162, 0.0
        %v3165 = vmul.f32 %v3161, 0.2
        %v3166 = vmul.f32 %v3162, 0.2
        %v3167 = vsel %vm3163, %v3161, %v3165
        %v3168 = vsel %vm3164, %v3162, %v3166
        %3169 = vrot.lane.b32.xlu0 %v3167, 16
        %v3170 = vpop.permute.xlu0 %3169
        %3171 = vrot.lane.b32.xlu0 %v3168, 16
        %v3172 = vpop.permute.xlu0 %3171
        %v3173 = vsel %vm254, %v3170, %v3172
        %v3174 = vsel %vm254, %v3172, %v3170
        %v3175 = vmul.f32 %v3174, %v260
        %v3176 = vmul.f32 %v3173, %v264
        %v3177 = vpack.c.bf16 %v3175, %v3175
        %v3178 = vpack.c.bf16 %v3176, %v3176
        %v3181 = vunpack.c.l.b16 %v3177
        %v3182 = vunpack.c.l.b16 %v3178
        %v3183 = vpack.c.b16 %v3182, %v3181
        %3185 = vst [vmem:[#allocation2 + $0xc0] sm:$0x33] %v3183
        %v3186 = vpack.c.bf16 %v3167, %v3167
        %v3187 = vpack.c.bf16 %v3168, %v3168
        %v3190 = vunpack.c.l.b16 %v3186
        %v3191 = vunpack.c.l.b16 %v3187
        %v3192 = vpack.c.b16 %v3191, %v3190
        %3194 = vst [vmem:[#allocation2 + $0xd0] sm:$0x33] %v3192
        %3195 = vrot.lane.b32.xlu0 %v3167, 112
        %v3196 = vpop.permute.xlu0 %3195
        %3197 = vrot.lane.b32.xlu0 %v3168, 112
        %v3198 = vpop.permute.xlu0 %3197
        %v3199 = vsel %vm289, %v3196, %v3198
        %v3200 = vsel %vm289, %v3198, %v3196
        %v3201 = vmul.f32 %v3199, %v295
        %v3202 = vmul.f32 %v3200, %v299
        %v3203 = vpack.c.bf16 %v3201, %v3201
        %v3204 = vpack.c.bf16 %v3202, %v3202
        %v3207 = vunpack.c.l.b16 %v3203
        %v3208 = vunpack.c.l.b16 %v3204
        %v3209 = vpack.c.b16 %v3208, %v3207
        %3211 = vst [vmem:[#allocation2 + $0xe0] sm:$0x33] %v3209
        %v3212 = vld [vmem:[%s3 + $0x48] sm:$0xf]
        %v3213 = vld [vmem:[#allocation3 + $0xe0] sm:$0x33]
        %v3214 = vld [vmem:[#allocation2] sm:$0xff]
        %v3215 = vld [vmem:[#allocation2 + $0x8] sm:$0xff]
        %v3216 = vld [vmem:[#allocation2 + $0x10] sm:$0xff]
        %v3217 = vld [vmem:[#allocation2 + $0x18] sm:$0xff]
        %v3218 = vld [vmem:[#allocation2 + $0x20] sm:$0xff]
        %v3219 = vld [vmem:[#allocation2 + $0x28] sm:$0xff]
        %v3220 = vld [vmem:[#allocation2 + $0x30] sm:$0xff]
        %v3221 = vld [vmem:[#allocation2 + $0x38] sm:$0xff]
        %v3222 = vld [vmem:[#allocation2 + $0x40] sm:$0xff]
        %v3223 = vld [vmem:[#allocation2 + $0x48] sm:$0xff]
        %v3224 = vld [vmem:[#allocation2 + $0x50] sm:$0xff]
        %v3225 = vld [vmem:[#allocation2 + $0x58] sm:$0xff]
        %v3226 = vld [vmem:[#allocation2 + $0x60] sm:$0xff]
        %v3227 = vld [vmem:[#allocation2 + $0x68] sm:$0xff]
        %v3228 = vld [vmem:[#allocation2 + $0x70] sm:$0xff]
        %v3229 = vld [vmem:[#allocation2 + $0x78] sm:$0xff]
        %v3230 = vld [vmem:[#allocation2 + $0x80] sm:$0xff]
        %v3231 = vld [vmem:[#allocation2 + $0x88] sm:$0xff]
        %v3232 = vld [vmem:[#allocation2 + $0x90] sm:$0xff]
        %v3233 = vld [vmem:[#allocation2 + $0x98] sm:$0xff]
        %v3234 = vld [vmem:[#allocation2 + $0xa0] sm:$0xff]
        %v3235 = vld [vmem:[#allocation2 + $0xa8] sm:$0xff]
        %v3236 = vld [vmem:[#allocation2 + $0xb0] sm:$0xff]
        %v3237 = vld [vmem:[#allocation2 + $0xb8] sm:$0xff]
        %v3238 = vld [vmem:[#allocation2 + $0xc0] sm:$0xff]
        %v3239 = vld [vmem:[#allocation2 + $0xc8] sm:$0xff]
        %v3240 = vld [vmem:[#allocation2 + $0xd0] sm:$0xff]
        %v3241 = vld [vmem:[#allocation2 + $0xd8] sm:$0xff]
        %v3242 = vld [vmem:[#allocation2 + $0xe0] sm:$0xff]
        %v3243 = vld [vmem:[#allocation2 + $0xe8] sm:$0xff]
        %3245 = vset.pattern.permute.xlu0 0
        %3246 = vperm.xlu0 %3245, %v3212
        %v3247 = vpop.permute.xlu0 %3246
        %v3250 = vunpack.c.l.b16 %v3213
        %v3251 = vunpack.c.h.b16 %v3213
        %v3252 = vpack.c.b16 %v3250, %v3250
        %v3253 = vpack.c.b16 %v3251, %v3251
        %v3285 = vunpack.c.l.b16 %v3214
        %v3286 = vunpack.c.h.b16 %v3214
        %v3287 = vunpack.c.l.b16 %v3215
        %v3288 = vunpack.c.h.b16 %v3215
        %v3289 = vunpack.c.l.b16 %v3216
        %v3290 = vunpack.c.h.b16 %v3216
        %v3291 = vunpack.c.l.b16 %v3217
        %v3292 = vunpack.c.h.b16 %v3217
        %v3293 = vunpack.c.l.b16 %v3218
        %v3294 = vunpack.c.h.b16 %v3218
        %v3295 = vunpack.c.l.b16 %v3219
        %v3296 = vunpack.c.h.b16 %v3219
        %v3297 = vunpack.c.l.b16 %v3220
        %v3298 = vunpack.c.h.b16 %v3220
        %v3299 = vunpack.c.l.b16 %v3221
        %v3300 = vunpack.c.h.b16 %v3221
        %v3301 = vunpack.c.l.b16 %v3222
        %v3302 = vunpack.c.h.b16 %v3222
        %v3303 = vunpack.c.l.b16 %v3223
        %v3304 = vunpack.c.h.b16 %v3223
        %v3305 = vunpack.c.l.b16 %v3224
        %v3306 = vunpack.c.h.b16 %v3224
        %v3307 = vunpack.c.l.b16 %v3225
        %v3308 = vunpack.c.h.b16 %v3225
        %v3309 = vunpack.c.l.b16 %v3226
        %v3310 = vunpack.c.h.b16 %v3226
        %v3311 = vunpack.c.l.b16 %v3227
        %v3312 = vunpack.c.h.b16 %v3227
        %v3313 = vunpack.c.l.b16 %v3228
        %v3314 = vunpack.c.h.b16 %v3228
        %v3315 = vunpack.c.l.b16 %v3229
        %v3316 = vunpack.c.h.b16 %v3229
        %v3317 = vunpack.c.l.b16 %v3230
        %v3318 = vunpack.c.h.b16 %v3230
        %v3319 = vunpack.c.l.b16 %v3231
        %v3320 = vunpack.c.h.b16 %v3231
        %v3321 = vunpack.c.l.b16 %v3232
        %v3322 = vunpack.c.h.b16 %v3232
        %v3323 = vunpack.c.l.b16 %v3233
        %v3324 = vunpack.c.h.b16 %v3233
        %v3325 = vunpack.c.l.b16 %v3234
        %v3326 = vunpack.c.h.b16 %v3234
        %v3327 = vunpack.c.l.b16 %v3235
        %v3328 = vunpack.c.h.b16 %v3235
        %v3329 = vunpack.c.l.b16 %v3236
        %v3330 = vunpack.c.h.b16 %v3236
        %v3331 = vunpack.c.l.b16 %v3237
        %v3332 = vunpack.c.h.b16 %v3237
        %v3333 = vunpack.c.l.b16 %v3238
        %v3334 = vunpack.c.h.b16 %v3238
        %v3335 = vunpack.c.l.b16 %v3239
        %v3336 = vunpack.c.h.b16 %v3239
        %v3337 = vunpack.c.l.b16 %v3240
        %v3338 = vunpack.c.h.b16 %v3240
        %v3339 = vunpack.c.l.b16 %v3241
        %v3340 = vunpack.c.h.b16 %v3241
        %v3341 = vunpack.c.l.b16 %v3242
        %v3342 = vunpack.c.h.b16 %v3242
        %v3343 = vunpack.c.l.b16 %v3243
        %v3344 = vunpack.c.h.b16 %v3243
        %v3345 = vpack.c.b16 %v3287, %v3285
        %v3346 = vpack.c.b16 %v3288, %v3286
        %v3347 = vpack.c.b16 %v3291, %v3289
        %v3348 = vpack.c.b16 %v3292, %v3290
        %v3349 = vpack.c.b16 %v3295, %v3293
        %v3350 = vpack.c.b16 %v3296, %v3294
        %v3351 = vpack.c.b16 %v3299, %v3297
        %v3352 = vpack.c.b16 %v3300, %v3298
        %v3353 = vpack.c.b16 %v3303, %v3301
        %v3354 = vpack.c.b16 %v3304, %v3302
        %v3355 = vpack.c.b16 %v3307, %v3305
        %v3356 = vpack.c.b16 %v3308, %v3306
        %v3357 = vpack.c.b16 %v3311, %v3309
        %v3358 = vpack.c.b16 %v3312, %v3310
        %v3359 = vpack.c.b16 %v3315, %v3313
        %v3360 = vpack.c.b16 %v3316, %v3314
        %v3361 = vpack.c.b16 %v3319, %v3317
        %v3362 = vpack.c.b16 %v3320, %v3318
        %v3363 = vpack.c.b16 %v3323, %v3321
        %v3364 = vpack.c.b16 %v3324, %v3322
        %v3365 = vpack.c.b16 %v3327, %v3325
        %v3366 = vpack.c.b16 %v3328, %v3326
        %v3367 = vpack.c.b16 %v3331, %v3329
        %v3368 = vpack.c.b16 %v3332, %v3330
        %v3369 = vpack.c.b16 %v3335, %v3333
        %v3370 = vpack.c.b16 %v3336, %v3334
        %v3371 = vpack.c.b16 %v3339, %v3337
        %v3372 = vpack.c.b16 %v3340, %v3338
        %v3373 = vpack.c.b16 %v3343, %v3341
        %v3374 = vpack.c.b16 %v3344, %v3342
        %v3406 = vsel %vm1762, %v3253, 0
        %3408 = vmatprep.subr.bf16.mxu0 %v3360
        %3409 = vmatpush1.bf16.msra.mxu0 %v3359
        %3410 = vmatprep.subr.bf16.mxu0 %v3358
        %3411 = vmatpush1.bf16.msra.mxu0 %v3357
        %3412 = vmatprep.subr.bf16.mxu0 %v3356
        %3413 = vmatpush1.bf16.msra.mxu0 %v3355
        %3414 = vmatprep.subr.bf16.mxu0 %v3354
        %3415 = vmatpush1.bf16.msra.mxu0 %v3353
        %3416 = vmatprep.subr.bf16.mxu0 %v3352
        %3417 = vmatpush1.bf16.msra.mxu0 %v3351
        %3418 = vmatprep.subr.bf16.mxu0 %v3350
        %3419 = vmatpush1.bf16.msra.mxu0 %v3349
        %3420 = vmatprep.subr.bf16.mxu0 %v3348
        %3421 = vmatpush1.bf16.msra.mxu0 %v3347
        %3422 = vmatprep.subr.bf16.mxu0 %v3346
        %3423 = vmatpush1.bf16.msra.mxu0 %v3345
        %3424 = vmatprep.subr.bf16.mxu0 0
        %3425 = vmatpush2.bf16.msra.mxu0 0
        %3426 = vmatprep.subr.bf16.mxu0 %v3374
        %3427 = vmatpush2.bf16.msra.mxu0 %v3373
        %3428 = vmatprep.subr.bf16.mxu0 %v3372
        %3429 = vmatpush2.bf16.msra.mxu0 %v3371
        %3430 = vmatprep.subr.bf16.mxu0 %v3370
        %3431 = vmatpush2.bf16.msra.mxu0 %v3369
        %3432 = vmatprep.subr.bf16.mxu0 %v3368
        %3433 = vmatpush2.bf16.msra.mxu0 %v3367
        %3434 = vmatprep.subr.bf16.mxu0 %v3366
        %3435 = vmatpush2.bf16.msra.mxu0 %v3365
        %3436 = vmatprep.subr.bf16.mxu0 %v3364
        %3437 = vmatpush2.bf16.msra.mxu0 %v3363
        %3438 = vmatprep.subr.bf16.mxu0 %v3362
        %3439 = vmatpush2.bf16.msra.mxu0 %v3361
        %3440 = vmatprep.mubr.bf16.mxu0 %v3406
        %3441 = vmatmul.mubr.bf16.gmra.mxu0 %v3252
        %v3442 = vpop.f32.mrf.mxu0
        %v3443 = vadd.f32 %v3247, %v3442
        %v3444 = vpop.f32.mrf.mxu0
        %v3445 = vadd.f32 %v3247, %v3444
        %v3446 = vpop.f32.mrf.mxu0
        %v3447 = vpop.f32.mrf.mxu0
        %3448 = vdwg.mxu0
        %v3449 = vld [vmem:[#allocation3 + $0xd8] sm:$0x33]
        %v3451 = vunpack.c.l.b16 %v3449
        %v3452 = vunpack.c.h.b16 %v3449
        %v3453 = vpack.c.b16 %v3451, %v3451
        %v3454 = vpack.c.b16 %v3452, %v3452
        %v3457 = vsel %vm1762, %v3454, 0
        %3459 = vmatprep.subr.bf16.mxu0 %v3360
        %3460 = vmatpush1.bf16.msra.mxu0 %v3359
        %3461 = vmatprep.subr.bf16.mxu0 %v3358
        %3462 = vmatpush1.bf16.msra.mxu0 %v3357
        %3463 = vmatprep.subr.bf16.mxu0 %v3356
        %3464 = vmatpush1.bf16.msra.mxu0 %v3355
        %3465 = vmatprep.subr.bf16.mxu0 %v3354
        %3466 = vmatpush1.bf16.msra.mxu0 %v3353
        %3467 = vmatprep.subr.bf16.mxu0 %v3352
        %3468 = vmatpush1.bf16.msra.mxu0 %v3351
        %3469 = vmatprep.subr.bf16.mxu0 %v3350
        %3470 = vmatpush1.bf16.msra.mxu0 %v3349
        %3471 = vmatprep.subr.bf16.mxu0 %v3348
        %3472 = vmatpush1.bf16.msra.mxu0 %v3347
        %3473 = vmatprep.subr.bf16.mxu0 %v3346
        %3474 = vmatpush1.bf16.msra.mxu0 %v3345
        %3475 = vmatprep.subr.bf16.mxu0 0
        %3476 = vmatpush2.bf16.msra.mxu0 0
        %3477 = vmatprep.subr.bf16.mxu0 %v3374
        %3478 = vmatpush2.bf16.msra.mxu0 %v3373
        %3479 = vmatprep.subr.bf16.mxu0 %v3372
        %3480 = vmatpush2.bf16.msra.mxu0 %v3371
        %3481 = vmatprep.subr.bf16.mxu0 %v3370
        %3482 = vmatpush2.bf16.msra.mxu0 %v3369
        %3483 = vmatprep.subr.bf16.mxu0 %v3368
        %3484 = vmatpush2.bf16.msra.mxu0 %v3367
        %3485 = vmatprep.subr.bf16.mxu0 %v3366
        %3486 = vmatpush2.bf16.msra.mxu0 %v3365
        %3487 = vmatprep.subr.bf16.mxu0 %v3364
        %3488 = vmatpush2.bf16.msra.mxu0 %v3363
        %3489 = vmatprep.subr.bf16.mxu0 %v3362
        %3490 = vmatpush2.bf16.msra.mxu0 %v3361
        %3491 = vmatprep.mubr.bf16.mxu0 %v3457
        %3492 = vmatmul.mubr.bf16.gmra.mxu0 %v3453
        %v3493 = vpop.f32.mrf.mxu0
        %v3494 = vadd.f32 0.0, %v3493
        %v3495 = vpop.f32.mrf.mxu0
        %v3496 = vadd.f32 0.0, %v3495
        %v3497 = vpop.f32.mrf.mxu0
        %v3498 = vpop.f32.mrf.mxu0
        %3499 = vdwg.mxu0
        %3500 = vrot.lane.b32.xlu0 %v3494, 1
        %v3501 = vpop.permute.xlu0 %3500
        %3502 = vrot.lane.b32.xlu0 %v3496, 1
        %v3503 = vpop.permute.xlu0 %3502
        %v3504 = vsel %vm448, %v3501, %v3503
        %v3505 = vsel %vm448, %v3503, %v3501
        %v3506 = vmul.f32 %v3505, %v454
        %v3507 = vmul.f32 %v3504, %v458
        %v3508 = vadd.f32 %v3443, %v3506
        %v3509 = vadd.f32 %v3445, %v3507
        %v3510 = vld [vmem:[#allocation3 + $0xe8] sm:$0x33]
        %v3512 = vunpack.c.l.b16 %v3510
        %v3513 = vunpack.c.h.b16 %v3510
        %v3514 = vpack.c.b16 %v3512, %v3512
        %v3515 = vpack.c.b16 %v3513, %v3513
        %v3518 = vsel %vm1762, %v3515, 0
        %3520 = vmatprep.subr.bf16.mxu0 %v3360
        %3521 = vmatpush1.bf16.msra.mxu0 %v3359
        %3522 = vmatprep.subr.bf16.mxu0 %v3358
        %3523 = vmatpush1.bf16.msra.mxu0 %v3357
        %3524 = vmatprep.subr.bf16.mxu0 %v3356
        %3525 = vmatpush1.bf16.msra.mxu0 %v3355
        %3526 = vmatprep.subr.bf16.mxu0 %v3354
        %3527 = vmatpush1.bf16.msra.mxu0 %v3353
        %3528 = vmatprep.subr.bf16.mxu0 %v3352
        %3529 = vmatpush1.bf16.msra.mxu0 %v3351
        %3530 = vmatprep.subr.bf16.mxu0 %v3350
        %3531 = vmatpush1.bf16.msra.mxu0 %v3349
        %3532 = vmatprep.subr.bf16.mxu0 %v3348
        %3533 = vmatpush1.bf16.msra.mxu0 %v3347
        %3534 = vmatprep.subr.bf16.mxu0 %v3346
        %3535 = vmatpush1.bf16.msra.mxu0 %v3345
        %3536 = vmatprep.subr.bf16.mxu0 0
        %3537 = vmatpush2.bf16.msra.mxu0 0
        %3538 = vmatprep.subr.bf16.mxu0 %v3374
        %3539 = vmatpush2.bf16.msra.mxu0 %v3373
        %3540 = vmatprep.subr.bf16.mxu0 %v3372
        %3541 = vmatpush2.bf16.msra.mxu0 %v3371
        %3542 = vmatprep.subr.bf16.mxu0 %v3370
        %3543 = vmatpush2.bf16.msra.mxu0 %v3369
        %3544 = vmatprep.subr.bf16.mxu0 %v3368
        %3545 = vmatpush2.bf16.msra.mxu0 %v3367
        %3546 = vmatprep.subr.bf16.mxu0 %v3366
        %3547 = vmatpush2.bf16.msra.mxu0 %v3365
        %3548 = vmatprep.subr.bf16.mxu0 %v3364
        %3549 = vmatpush2.bf16.msra.mxu0 %v3363
        %3550 = vmatprep.subr.bf16.mxu0 %v3362
        %3551 = vmatpush2.bf16.msra.mxu0 %v3361
        %3552 = vmatprep.mubr.bf16.mxu0 %v3518
        %3553 = vmatmul.mubr.bf16.gmra.mxu0 %v3514
        %v3554 = vpop.f32.mrf.mxu0
        %v3555 = vadd.f32 0.0, %v3554
        %v3556 = vpop.f32.mrf.mxu0
        %v3557 = vadd.f32 0.0, %v3556
        %v3558 = vpop.f32.mrf.mxu0
        %v3559 = vpop.f32.mrf.mxu0
        %3560 = vdwg.mxu0
        %3561 = vrot.lane.b32.xlu0 %v3555, 127
        %v3562 = vpop.permute.xlu0 %3561
        %3563 = vrot.lane.b32.xlu0 %v3557, 127
        %v3564 = vpop.permute.xlu0 %3563
        %v3565 = vsel %vm512, %v3562, %v3564
        %v3566 = vsel %vm512, %v3564, %v3562
        %v3567 = vmul.f32 %v3565, %v518
        %v3568 = vmul.f32 %v3566, %v522
        %v3569 = vadd.f32 %v3508, %v3567
        %v3570 = vadd.f32 %v3509, %v3568
        %v3571 = vmul.f32 %v3569, 0.2
        %v3572 = vmul.f32 %v3570, 0.2
        %v3573 = vadd.f32 %v3571, %v1931
        %v3574 = vadd.f32 %v3572, %v1932
        %3575 = vrot.lane.b32.xlu0 %v3573, 16
        %v3576 = vpop.permute.xlu0 %3575
        %3577 = vrot.lane.b32.xlu0 %v3574, 16
        %v3578 = vpop.permute.xlu0 %3577
        %v3579 = vsel %vm254, %v3576, %v3578
        %v3580 = vsel %vm254, %v3578, %v3576
        %v3581 = vmul.f32 %v3580, %v260
        %v3582 = vmul.f32 %v3579, %v264
        %v3583 = vpack.c.bf16 %v3581, %v3581
        %v3584 = vpack.c.bf16 %v3582, %v3582
        %v3587 = vunpack.c.l.b16 %v3583
        %v3588 = vunpack.c.l.b16 %v3584
        %v3589 = vpack.c.b16 %v3588, %v3587
        %3591 = vst [vmem:[#allocation2] sm:$0x33] %v3589
        %v3592 = vpack.c.bf16 %v3573, %v3573
        %v3593 = vpack.c.bf16 %v3574, %v3574
        %v3596 = vunpack.c.l.b16 %v3592
        %v3597 = vunpack.c.l.b16 %v3593
        %v3598 = vpack.c.b16 %v3597, %v3596
        %3600 = vst [vmem:[#allocation2 + $0x10] sm:$0x33] %v3598
        %3601 = vrot.lane.b32.xlu0 %v3573, 112
        %v3602 = vpop.permute.xlu0 %3601
        %3603 = vrot.lane.b32.xlu0 %v3574, 112
        %v3604 = vpop.permute.xlu0 %3603
        %v3605 = vsel %vm289, %v3602, %v3604
        %v3606 = vsel %vm289, %v3604, %v3602
        %v3607 = vmul.f32 %v3605, %v295
        %v3608 = vmul.f32 %v3606, %v299
        %v3609 = vpack.c.bf16 %v3607, %v3607
        %v3610 = vpack.c.bf16 %v3608, %v3608
        %v3613 = vunpack.c.l.b16 %v3609
        %v3614 = vunpack.c.l.b16 %v3610
        %v3615 = vpack.c.b16 %v3614, %v3613
        %3617 = vst [vmem:[#allocation2 + $0x20] sm:$0x33] %v3615
        %v3618 = vld [vmem:[%s3 + $0x50] sm:$0xf]
        %v3619 = vld [vmem:[#allocation3 + $0xf8] sm:$0x3]
        %v3620 = vld [vmem:[#allocation2] sm:$0xff]
        %v3621 = vld [vmem:[#allocation2 + $0x8] sm:$0xff]
        %v3622 = vld [vmem:[#allocation2 + $0x10] sm:$0xff]
        %v3623 = vld [vmem:[#allocation2 + $0x18] sm:$0xff]
        %v3624 = vld [vmem:[#allocation2 + $0x20] sm:$0xff]
        %v3625 = vld [vmem:[#allocation2 + $0x28] sm:$0xff]
        %3627 = vset.pattern.permute.xlu0 0
        %3628 = vperm.xlu0 %3627, %v3618
        %v3629 = vpop.permute.xlu0 %3628
        %v3637 = vunpack.c.l.b16 %v3620
        %v3638 = vunpack.c.h.b16 %v3620
        %v3639 = vunpack.c.l.b16 %v3621
        %v3640 = vunpack.c.h.b16 %v3621
        %v3641 = vunpack.c.l.b16 %v3622
        %v3642 = vunpack.c.h.b16 %v3622
        %v3643 = vunpack.c.l.b16 %v3623
        %v3644 = vunpack.c.h.b16 %v3623
        %v3645 = vunpack.c.l.b16 %v3624
        %v3646 = vunpack.c.h.b16 %v3624
        %v3647 = vunpack.c.l.b16 %v3625
        %v3648 = vunpack.c.h.b16 %v3625
        %v3649 = vpack.c.b16 %v3639, %v3637
        %v3650 = vpack.c.b16 %v3640, %v3638
        %v3651 = vpack.c.b16 %v3643, %v3641
        %v3652 = vpack.c.b16 %v3644, %v3642
        %v3653 = vpack.c.b16 %v3647, %v3645
        %v3654 = vpack.c.b16 %v3648, %v3646
        %v3662 = vsel %vm354, %v3619, 0
        %3664 = vmatprep.subr.bf16.mxu0 0
        %3665 = vmatpush1.bf16.msra.mxu0 0
        %3666 = vmatprep.subr.bf16.mxu0 0
        %3667 = vmatpush1.bf16.msra.mxu0 0
        %3668 = vmatprep.subr.bf16.mxu0 0
        %3669 = vmatpush1.bf16.msra.mxu0 0
        %3670 = vmatprep.subr.bf16.mxu0 0
        %3671 = vmatpush1.bf16.msra.mxu0 0
        %3672 = vmatprep.subr.bf16.mxu0 0
        %3673 = vmatpush1.bf16.msra.mxu0 0
        %3674 = vmatprep.subr.bf16.mxu0 %v3654
        %3675 = vmatpush1.bf16.msra.mxu0 %v3653
        %3676 = vmatprep.subr.bf16.mxu0 %v3652
        %3677 = vmatpush1.bf16.msra.mxu0 %v3651
        %3678 = vmatprep.subr.bf16.mxu0 %v3650
        %3679 = vmatpush1.bf16.msra.mxu0 %v3649
        %3680 = vmatprep.subr.bf16.mxu0 0
        %3681 = vmatpush2.bf16.msra.mxu0 0
        %3682 = vmatprep.subr.bf16.mxu0 0
        %3683 = vmatpush2.bf16.msra.mxu0 0
        %3684 = vmatprep.subr.bf16.mxu0 0
        %3685 = vmatpush2.bf16.msra.mxu0 0
        %3686 = vmatprep.subr.bf16.mxu0 0
        %3687 = vmatpush2.bf16.msra.mxu0 0
        %3688 = vmatprep.subr.bf16.mxu0 0
        %3689 = vmatpush2.bf16.msra.mxu0 0
        %3690 = vmatprep.subr.bf16.mxu0 0
        %3691 = vmatpush2.bf16.msra.mxu0 0
        %3692 = vmatprep.subr.bf16.mxu0 0
        %3693 = vmatpush2.bf16.msra.mxu0 0
        %3694 = vmatprep.subr.bf16.mxu0 0
        %3695 = vmatpush2.bf16.msra.mxu0 0
        %3696 = vmatprep.mubr.bf16.mxu0 0
        %3697 = vmatmul.mubr.bf16.gmra.mxu0 %v3662
        %v3698 = vpop.f32.mrf.mxu0
        %v3699 = vadd.f32 %v3629, %v3698
        %v3700 = vpop.f32.mrf.mxu0
        %v3701 = vadd.f32 %v3629, %v3700
        %v3702 = vpop.f32.mrf.mxu0
        %v3703 = vpop.f32.mrf.mxu0
        %3704 = vdwg.mxu0
        %v3705 = vld [vmem:[#allocation3 + $0xf0] sm:$0x3]
        %v3707 = vsel %vm354, %v3705, 0
        %3709 = vmatprep.subr.bf16.mxu0 0
        %3710 = vmatpush1.bf16.msra.mxu0 0
        %3711 = vmatprep.subr.bf16.mxu0 0
        %3712 = vmatpush1.bf16.msra.mxu0 0
        %3713 = vmatprep.subr.bf16.mxu0 0
        %3714 = vmatpush1.bf16.msra.mxu0 0
        %3715 = vmatprep.subr.bf16.mxu0 0
        %3716 = vmatpush1.bf16.msra.mxu0 0
        %3717 = vmatprep.subr.bf16.mxu0 0
        %3718 = vmatpush1.bf16.msra.mxu0 0
        %3719 = vmatprep.subr.bf16.mxu0 %v3654
        %3720 = vmatpush1.bf16.msra.mxu0 %v3653
        %3721 = vmatprep.subr.bf16.mxu0 %v3652
        %3722 = vmatpush1.bf16.msra.mxu0 %v3651
        %3723 = vmatprep.subr.bf16.mxu0 %v3650
        %3724 = vmatpush1.bf16.msra.mxu0 %v3649
        %3725 = vmatprep.subr.bf16.mxu0 0
        %3726 = vmatpush2.bf16.msra.mxu0 0
        %3727 = vmatprep.subr.bf16.mxu0 0
        %3728 = vmatpush2.bf16.msra.mxu0 0
        %3729 = vmatprep.subr.bf16.mxu0 0
        %3730 = vmatpush2.bf16.msra.mxu0 0
        %3731 = vmatprep.subr.bf16.mxu0 0
        %3732 = vmatpush2.bf16.msra.mxu0 0
        %3733 = vmatprep.subr.bf16.mxu0 0
        %3734 = vmatpush2.bf16.msra.mxu0 0
        %3735 = vmatprep.subr.bf16.mxu0 0
        %3736 = vmatpush2.bf16.msra.mxu0 0
        %3737 = vmatprep.subr.bf16.mxu0 0
        %3738 = vmatpush2.bf16.msra.mxu0 0
        %3739 = vmatprep.subr.bf16.mxu0 0
        %3740 = vmatpush2.bf16.msra.mxu0 0
        %3741 = vmatprep.mubr.bf16.mxu0 0
        %3742 = vmatmul.mubr.bf16.gmra.mxu0 %v3707
        %v3743 = vpop.f32.mrf.mxu0
        %v3744 = vadd.f32 0.0, %v3743
        %v3745 = vpop.f32.mrf.mxu0
        %v3746 = vadd.f32 0.0, %v3745
        %v3747 = vpop.f32.mrf.mxu0
        %v3748 = vpop.f32.mrf.mxu0
        %3749 = vdwg.mxu0
        %3750 = vrot.lane.b32.xlu0 %v3744, 1
        %v3751 = vpop.permute.xlu0 %3750
        %3752 = vrot.lane.b32.xlu0 %v3746, 1
        %v3753 = vpop.permute.xlu0 %3752
        %v3754 = vsel %vm448, %v3751, %v3753
        %v3755 = vsel %vm448, %v3753, %v3751
        %v3756 = vmul.f32 %v3755, %v454
        %v3757 = vmul.f32 %v3754, %v458
        %v3758 = vadd.f32 %v3699, %v3756
        %v3759 = vadd.f32 %v3701, %v3757
        %v3760 = vld [vmem:[#allocation3 + $0x100] sm:$0x3]
        %v3762 = vsel %vm354, %v3760, 0
        %3764 = vmatprep.subr.bf16.mxu0 0
        %3765 = vmatpush1.bf16.msra.mxu0 0
        %3766 = vmatprep.subr.bf16.mxu0 0
        %3767 = vmatpush1.bf16.msra.mxu0 0
        %3768 = vmatprep.subr.bf16.mxu0 0
        %3769 = vmatpush1.bf16.msra.mxu0 0
        %3770 = vmatprep.subr.bf16.mxu0 0
        %3771 = vmatpush1.bf16.msra.mxu0 0
        %3772 = vmatprep.subr.bf16.mxu0 0
        %3773 = vmatpush1.bf16.msra.mxu0 0
        %3774 = vmatprep.subr.bf16.mxu0 %v3654
        %3775 = vmatpush1.bf16.msra.mxu0 %v3653
        %3776 = vmatprep.subr.bf16.mxu0 %v3652
        %3777 = vmatpush1.bf16.msra.mxu0 %v3651
        %3778 = vmatprep.subr.bf16.mxu0 %v3650
        %3779 = vmatpush1.bf16.msra.mxu0 %v3649
        %3780 = vmatprep.subr.bf16.mxu0 0
        %3781 = vmatpush2.bf16.msra.mxu0 0
        %3782 = vmatprep.subr.bf16.mxu0 0
        %3783 = vmatpush2.bf16.msra.mxu0 0
        %3784 = vmatprep.subr.bf16.mxu0 0
        %3785 = vmatpush2.bf16.msra.mxu0 0
        %3786 = vmatprep.subr.bf16.mxu0 0
        %3787 = vmatpush2.bf16.msra.mxu0 0
        %3788 = vmatprep.subr.bf16.mxu0 0
        %3789 = vmatpush2.bf16.msra.mxu0 0
        %3790 = vmatprep.subr.bf16.mxu0 0
        %3791 = vmatpush2.bf16.msra.mxu0 0
        %3792 = vmatprep.subr.bf16.mxu0 0
        %3793 = vmatpush2.bf16.msra.mxu0 0
        %3794 = vmatprep.subr.bf16.mxu0 0
        %3795 = vmatpush2.bf16.msra.mxu0 0
        %3796 = vmatprep.mubr.bf16.mxu0 0
        %3797 = vmatmul.mubr.bf16.gmra.mxu0 %v3762
        %v3798 = vpop.f32.mrf.mxu0
        %v3799 = vadd.f32 0.0, %v3798
        %v3800 = vpop.f32.mrf.mxu0
        %v3801 = vadd.f32 0.0, %v3800
        %v3802 = vpop.f32.mrf.mxu0
        %v3803 = vpop.f32.mrf.mxu0
        %3804 = vdwg.mxu0
        %3805 = vrot.lane.b32.xlu0 %v3799, 127
        %v3806 = vpop.permute.xlu0 %3805
        %3807 = vrot.lane.b32.xlu0 %v3801, 127
        %v3808 = vpop.permute.xlu0 %3807
        %v3809 = vsel %vm512, %v3806, %v3808
        %v3810 = vsel %vm512, %v3808, %v3806
        %v3811 = vmul.f32 %v3809, %v518
        %v3812 = vmul.f32 %v3810, %v522
        %v3813 = vadd.f32 %v3758, %v3811
        %v3814 = vadd.f32 %v3759, %v3812
        %vm3815 = vcmp.gt.f32.partialorder %v3813, 0.0
        %vm3816 = vcmp.gt.f32.partialorder %v3814, 0.0
        %v3817 = vmul.f32 %v3813, 0.2
        %v3818 = vmul.f32 %v3814, 0.2
        %v3819 = vsel %vm3815, %v3813, %v3817
        %v3820 = vsel %vm3816, %v3814, %v3818
        %3821 = vrot.lane.b32.xlu0 %v3819, 16
        %v3822 = vpop.permute.xlu0 %3821
        %3823 = vrot.lane.b32.xlu0 %v3820, 16
        %v3824 = vpop.permute.xlu0 %3823
        %v3825 = vsel %vm254, %v3822, %v3824
        %v3826 = vsel %vm254, %v3824, %v3822
        %v3827 = vmul.f32 %v3826, %v260
        %v3828 = vmul.f32 %v3825, %v264
        %v3829 = vpack.c.bf16 %v3827, %v3827
        %v3830 = vpack.c.bf16 %v3828, %v3828
        %v3833 = vunpack.c.l.b16 %v3829
        %v3834 = vunpack.c.l.b16 %v3830
        %v3835 = vpack.c.b16 %v3834, %v3833
        %3837 = vst [vmem:[#allocation2 + $0x30] sm:$0x33] %v3835
        %v3838 = vpack.c.bf16 %v3819, %v3819
        %v3839 = vpack.c.bf16 %v3820, %v3820
        %v3842 = vunpack.c.l.b16 %v3838
        %v3843 = vunpack.c.l.b16 %v3839
        %v3844 = vpack.c.b16 %v3843, %v3842
        %3846 = vst [vmem:[#allocation2 + $0x40] sm:$0x33] %v3844
        %3847 = vrot.lane.b32.xlu0 %v3819, 112
        %v3848 = vpop.permute.xlu0 %3847
        %3849 = vrot.lane.b32.xlu0 %v3820, 112
        %v3850 = vpop.permute.xlu0 %3849
        %v3851 = vsel %vm289, %v3848, %v3850
        %v3852 = vsel %vm289, %v3850, %v3848
        %v3853 = vmul.f32 %v3851, %v295
        %v3854 = vmul.f32 %v3852, %v299
        %v3855 = vpack.c.bf16 %v3853, %v3853
        %v3856 = vpack.c.bf16 %v3854, %v3854
        %v3859 = vunpack.c.l.b16 %v3855
        %v3860 = vunpack.c.l.b16 %v3856
        %v3861 = vpack.c.b16 %v3860, %v3859
        %3863 = vst [vmem:[#allocation2 + $0x50] sm:$0x33] %v3861
        %v3864 = vld [vmem:[%s3 + $0x58] sm:$0xf]
        %v3865 = vld [vmem:[#allocation3 + $0x110] sm:$0x3]
        %v3866 = vld [vmem:[#allocation2] sm:$0xff]
        %v3867 = vld [vmem:[#allocation2 + $0x8] sm:$0xff]
        %v3868 = vld [vmem:[#allocation2 + $0x10] sm:$0xff]
        %v3869 = vld [vmem:[#allocation2 + $0x18] sm:$0xff]
        %v3870 = vld [vmem:[#allocation2 + $0x20] sm:$0xff]
        %v3871 = vld [vmem:[#allocation2 + $0x28] sm:$0xff]
        %v3872 = vld [vmem:[#allocation2 + $0x30] sm:$0xff]
        %v3873 = vld [vmem:[#allocation2 + $0x38] sm:$0xff]
        %v3874 = vld [vmem:[#allocation2 + $0x40] sm:$0xff]
        %v3875 = vld [vmem:[#allocation2 + $0x48] sm:$0xff]
        %v3876 = vld [vmem:[#allocation2 + $0x50] sm:$0xff]
        %v3877 = vld [vmem:[#allocation2 + $0x58] sm:$0xff]
        %3879 = vset.pattern.permute.xlu0 0
        %3880 = vperm.xlu0 %3879, %v3864
        %v3881 = vpop.permute.xlu0 %3880
        %v3895 = vunpack.c.l.b16 %v3866
        %v3896 = vunpack.c.h.b16 %v3866
        %v3897 = vunpack.c.l.b16 %v3867
        %v3898 = vunpack.c.h.b16 %v3867
        %v3899 = vunpack.c.l.b16 %v3868
        %v3900 = vunpack.c.h.b16 %v3868
        %v3901 = vunpack.c.l.b16 %v3869
        %v3902 = vunpack.c.h.b16 %v3869
        %v3903 = vunpack.c.l.b16 %v3870
        %v3904 = vunpack.c.h.b16 %v3870
        %v3905 = vunpack.c.l.b16 %v3871
        %v3906 = vunpack.c.h.b16 %v3871
        %v3907 = vunpack.c.l.b16 %v3872
        %v3908 = vunpack.c.h.b16 %v3872
        %v3909 = vunpack.c.l.b16 %v3873
        %v3910 = vunpack.c.h.b16 %v3873
        %v3911 = vunpack.c.l.b16 %v3874
        %v3912 = vunpack.c.h.b16 %v3874
        %v3913 = vunpack.c.l.b16 %v3875
        %v3914 = vunpack.c.h.b16 %v3875
        %v3915 = vunpack.c.l.b16 %v3876
        %v3916 = vunpack.c.h.b16 %v3876
        %v3917 = vunpack.c.l.b16 %v3877
        %v3918 = vunpack.c.h.b16 %v3877
        %v3919 = vpack.c.b16 %v3897, %v3895
        %v3920 = vpack.c.b16 %v3898, %v3896
        %v3921 = vpack.c.b16 %v3901, %v3899
        %v3922 = vpack.c.b16 %v3902, %v3900
        %v3923 = vpack.c.b16 %v3905, %v3903
        %v3924 = vpack.c.b16 %v3906, %v3904
        %v3925 = vpack.c.b16 %v3909, %v3907
        %v3926 = vpack.c.b16 %v3910, %v3908
        %v3927 = vpack.c.b16 %v3913, %v3911
        %v3928 = vpack.c.b16 %v3914, %v3912
        %v3929 = vpack.c.b16 %v3917, %v3915
        %v3930 = vpack.c.b16 %v3918, %v3916
        %v3944 = vsel %vm655, %v3865, 0
        %3946 = vmatprep.subr.bf16.mxu0 0
        %3947 = vmatpush1.bf16.msra.mxu0 0
        %3948 = vmatprep.subr.bf16.mxu0 0
        %3949 = vmatpush1.bf16.msra.mxu0 0
        %3950 = vmatprep.subr.bf16.mxu0 %v3930
        %3951 = vmatpush1.bf16.msra.mxu0 %v3929
        %3952 = vmatprep.subr.bf16.mxu0 %v3928
        %3953 = vmatpush1.bf16.msra.mxu0 %v3927
        %3954 = vmatprep.subr.bf16.mxu0 %v3926
        %3955 = vmatpush1.bf16.msra.mxu0 %v3925
        %3956 = vmatprep.subr.bf16.mxu0 %v3924
        %3957 = vmatpush1.bf16.msra.mxu0 %v3923
        %3958 = vmatprep.subr.bf16.mxu0 %v3922
        %3959 = vmatpush1.bf16.msra.mxu0 %v3921
        %3960 = vmatprep.subr.bf16.mxu0 %v3920
        %3961 = vmatpush1.bf16.msra.mxu0 %v3919
        %3962 = vmatprep.subr.bf16.mxu0 0
        %3963 = vmatpush2.bf16.msra.mxu0 0
        %3964 = vmatprep.subr.bf16.mxu0 0
        %3965 = vmatpush2.bf16.msra.mxu0 0
        %3966 = vmatprep.subr.bf16.mxu0 0
        %3967 = vmatpush2.bf16.msra.mxu0 0
        %3968 = vmatprep.subr.bf16.mxu0 0
        %3969 = vmatpush2.bf16.msra.mxu0 0
        %3970 = vmatprep.subr.bf16.mxu0 0
        %3971 = vmatpush2.bf16.msra.mxu0 0
        %3972 = vmatprep.subr.bf16.mxu0 0
        %3973 = vmatpush2.bf16.msra.mxu0 0
        %3974 = vmatprep.subr.bf16.mxu0 0
        %3975 = vmatpush2.bf16.msra.mxu0 0
        %3976 = vmatprep.subr.bf16.mxu0 0
        %3977 = vmatpush2.bf16.msra.mxu0 0
        %3978 = vmatprep.mubr.bf16.mxu0 0
        %3979 = vmatmul.mubr.bf16.gmra.mxu0 %v3944
        %v3980 = vpop.f32.mrf.mxu0
        %v3981 = vadd.f32 %v3881, %v3980
        %v3982 = vpop.f32.mrf.mxu0
        %v3983 = vadd.f32 %v3881, %v3982
        %v3984 = vpop.f32.mrf.mxu0
        %v3985 = vpop.f32.mrf.mxu0
        %3986 = vdwg.mxu0
        %v3987 = vld [vmem:[#allocation3 + $0x108] sm:$0x3]
        %v3989 = vsel %vm655, %v3987, 0
        %3991 = vmatprep.subr.bf16.mxu0 0
        %3992 = vmatpush1.bf16.msra.mxu0 0
        %3993 = vmatprep.subr.bf16.mxu0 0
        %3994 = vmatpush1.bf16.msra.mxu0 0
        %3995 = vmatprep.subr.bf16.mxu0 %v3930
        %3996 = vmatpush1.bf16.msra.mxu0 %v3929
        %3997 = vmatprep.subr.bf16.mxu0 %v3928
        %3998 = vmatpush1.bf16.msra.mxu0 %v3927
        %3999 = vmatprep.subr.bf16.mxu0 %v3926
        %4000 = vmatpush1.bf16.msra.mxu0 %v3925
        %4001 = vmatprep.subr.bf16.mxu0 %v3924
        %4002 = vmatpush1.bf16.msra.mxu0 %v3923
        %4003 = vmatprep.subr.bf16.mxu0 %v3922
        %4004 = vmatpush1.bf16.msra.mxu0 %v3921
        %4005 = vmatprep.subr.bf16.mxu0 %v3920
        %4006 = vmatpush1.bf16.msra.mxu0 %v3919
        %4007 = vmatprep.subr.bf16.mxu0 0
        %4008 = vmatpush2.bf16.msra.mxu0 0
        %4009 = vmatprep.subr.bf16.mxu0 0
        %4010 = vmatpush2.bf16.msra.mxu0 0
        %4011 = vmatprep.subr.bf16.mxu0 0
        %4012 = vmatpush2.bf16.msra.mxu0 0
        %4013 = vmatprep.subr.bf16.mxu0 0
        %4014 = vmatpush2.bf16.msra.mxu0 0
        %4015 = vmatprep.subr.bf16.mxu0 0
        %4016 = vmatpush2.bf16.msra.mxu0 0
        %4017 = vmatprep.subr.bf16.mxu0 0
        %4018 = vmatpush2.bf16.msra.mxu0 0
        %4019 = vmatprep.subr.bf16.mxu0 0
        %4020 = vmatpush2.bf16.msra.mxu0 0
        %4021 = vmatprep.subr.bf16.mxu0 0
        %4022 = vmatpush2.bf16.msra.mxu0 0
        %4023 = vmatprep.mubr.bf16.mxu0 0
        %4024 = vmatmul.mubr.bf16.gmra.mxu0 %v3989
        %v4025 = vpop.f32.mrf.mxu0
        %v4026 = vadd.f32 0.0, %v4025
        %v4027 = vpop.f32.mrf.mxu0
        %v4028 = vadd.f32 0.0, %v4027
        %v4029 = vpop.f32.mrf.mxu0
        %v4030 = vpop.f32.mrf.mxu0
        %4031 = vdwg.mxu0
        %4032 = vrot.lane.b32.xlu0 %v4026, 1
        %v4033 = vpop.permute.xlu0 %4032
        %4034 = vrot.lane.b32.xlu0 %v4028, 1
        %v4035 = vpop.permute.xlu0 %4034
        %v4036 = vsel %vm448, %v4033, %v4035
        %v4037 = vsel %vm448, %v4035, %v4033
        %v4038 = vmul.f32 %v4037, %v454
        %v4039 = vmul.f32 %v4036, %v458
        %v4040 = vadd.f32 %v3981, %v4038
        %v4041 = vadd.f32 %v3983, %v4039
        %v4042 = vld [vmem:[#allocation3 + $0x118] sm:$0x3]
        %v4044 = vsel %vm655, %v4042, 0
        %4046 = vmatprep.subr.bf16.mxu0 0
        %4047 = vmatpush1.bf16.msra.mxu0 0
        %4048 = vmatprep.subr.bf16.mxu0 0
        %4049 = vmatpush1.bf16.msra.mxu0 0
        %4050 = vmatprep.subr.bf16.mxu0 %v3930
        %4051 = vmatpush1.bf16.msra.mxu0 %v3929
        %4052 = vmatprep.subr.bf16.mxu0 %v3928
        %4053 = vmatpush1.bf16.msra.mxu0 %v3927
        %4054 = vmatprep.subr.bf16.mxu0 %v3926
        %4055 = vmatpush1.bf16.msra.mxu0 %v3925
        %4056 = vmatprep.subr.bf16.mxu0 %v3924
        %4057 = vmatpush1.bf16.msra.mxu0 %v3923
        %4058 = vmatprep.subr.bf16.mxu0 %v3922
        %4059 = vmatpush1.bf16.msra.mxu0 %v3921
        %4060 = vmatprep.subr.bf16.mxu0 %v3920
        %4061 = vmatpush1.bf16.msra.mxu0 %v3919
        %4062 = vmatprep.subr.bf16.mxu0 0
        %4063 = vmatpush2.bf16.msra.mxu0 0
        %4064 = vmatprep.subr.bf16.mxu0 0
        %4065 = vmatpush2.bf16.msra.mxu0 0
        %4066 = vmatprep.subr.bf16.mxu0 0
        %4067 = vmatpush2.bf16.msra.mxu0 0
        %4068 = vmatprep.subr.bf16.mxu0 0
        %4069 = vmatpush2.bf16.msra.mxu0 0
        %4070 = vmatprep.subr.bf16.mxu0 0
        %4071 = vmatpush2.bf16.msra.mxu0 0
        %4072 = vmatprep.subr.bf16.mxu0 0
        %4073 = vmatpush2.bf16.msra.mxu0 0
        %4074 = vmatprep.subr.bf16.mxu0 0
        %4075 = vmatpush2.bf16.msra.mxu0 0
        %4076 = vmatprep.subr.bf16.mxu0 0
        %4077 = vmatpush2.bf16.msra.mxu0 0
        %4078 = vmatprep.mubr.bf16.mxu0 0
        %4079 = vmatmul.mubr.bf16.gmra.mxu0 %v4044
        %v4080 = vpop.f32.mrf.mxu0
        %v4081 = vadd.f32 0.0, %v4080
        %v4082 = vpop.f32.mrf.mxu0
        %v4083 = vadd.f32 0.0, %v4082
        %v4084 = vpop.f32.mrf.mxu0
        %v4085 = vpop.f32.mrf.mxu0
        %4086 = vdwg.mxu0
        %4087 = vrot.lane.b32.xlu0 %v4081, 127
        %v4088 = vpop.permute.xlu0 %4087
        %4089 = vrot.lane.b32.xlu0 %v4083, 127
        %v4090 = vpop.permute.xlu0 %4089
        %v4091 = vsel %vm512, %v4088, %v4090
        %v4092 = vsel %vm512, %v4090, %v4088
        %v4093 = vmul.f32 %v4091, %v518
        %v4094 = vmul.f32 %v4092, %v522
        %v4095 = vadd.f32 %v4040, %v4093
        %v4096 = vadd.f32 %v4041, %v4094
        %vm4097 = vcmp.gt.f32.partialorder %v4095, 0.0
        %vm4098 = vcmp.gt.f32.partialorder %v4096, 0.0
        %v4099 = vmul.f32 %v4095, 0.2
        %v4100 = vmul.f32 %v4096, 0.2
        %v4101 = vsel %vm4097, %v4095, %v4099
        %v4102 = vsel %vm4098, %v4096, %v4100
        %4103 = vrot.lane.b32.xlu0 %v4101, 16
        %v4104 = vpop.permute.xlu0 %4103
        %4105 = vrot.lane.b32.xlu0 %v4102, 16
        %v4106 = vpop.permute.xlu0 %4105
        %v4107 = vsel %vm254, %v4104, %v4106
        %v4108 = vsel %vm254, %v4106, %v4104
        %v4109 = vmul.f32 %v4108, %v260
        %v4110 = vmul.f32 %v4107, %v264
        %v4111 = vpack.c.bf16 %v4109, %v4109
        %v4112 = vpack.c.bf16 %v4110, %v4110
        %v4115 = vunpack.c.l.b16 %v4111
        %v4116 = vunpack.c.l.b16 %v4112
        %v4117 = vpack.c.b16 %v4116, %v4115
        %4119 = vst [vmem:[#allocation2 + $0x60] sm:$0x33] %v4117
        %v4120 = vpack.c.bf16 %v4101, %v4101
        %v4121 = vpack.c.bf16 %v4102, %v4102
        %v4124 = vunpack.c.l.b16 %v4120
        %v4125 = vunpack.c.l.b16 %v4121
        %v4126 = vpack.c.b16 %v4125, %v4124
        %4128 = vst [vmem:[#allocation2 + $0x70] sm:$0x33] %v4126
        %4129 = vrot.lane.b32.xlu0 %v4101, 112
        %v4130 = vpop.permute.xlu0 %4129
        %4131 = vrot.lane.b32.xlu0 %v4102, 112
        %v4132 = vpop.permute.xlu0 %4131
        %v4133 = vsel %vm289, %v4130, %v4132
        %v4134 = vsel %vm289, %v4132, %v4130
        %v4135 = vmul.f32 %v4133, %v295
        %v4136 = vmul.f32 %v4134, %v299
        %v4137 = vpack.c.bf16 %v4135, %v4135
        %v4138 = vpack.c.bf16 %v4136, %v4136
        %v4141 = vunpack.c.l.b16 %v4137
        %v4142 = vunpack.c.l.b16 %v4138
        %v4143 = vpack.c.b16 %v4142, %v4141
        %4145 = vst [vmem:[#allocation2 + $0x80] sm:$0x33] %v4143
        %v4146 = vld [vmem:[%s3 + $0x60] sm:$0xf]
        %v4147 = vld [vmem:[#allocation3 + $0x128] sm:$0x33]
        %v4148 = vld [vmem:[#allocation2] sm:$0xff]
        %v4149 = vld [vmem:[#allocation2 + $0x8] sm:$0xff]
        %v4150 = vld [vmem:[#allocation2 + $0x10] sm:$0xff]
        %v4151 = vld [vmem:[#allocation2 + $0x18] sm:$0xff]
        %v4152 = vld [vmem:[#allocation2 + $0x20] sm:$0xff]
        %v4153 = vld [vmem:[#allocation2 + $0x28] sm:$0xff]
        %v4154 = vld [vmem:[#allocation2 + $0x30] sm:$0xff]
        %v4155 = vld [vmem:[#allocation2 + $0x38] sm:$0xff]
        %v4156 = vld [vmem:[#allocation2 + $0x40] sm:$0xff]
        %v4157 = vld [vmem:[#allocation2 + $0x48] sm:$0xff]
        %v4158 = vld [vmem:[#allocation2 + $0x50] sm:$0xff]
        %v4159 = vld [vmem:[#allocation2 + $0x58] sm:$0xff]
        %v4160 = vld [vmem:[#allocation2 + $0x60] sm:$0xff]
        %v4161 = vld [vmem:[#allocation2 + $0x68] sm:$0xff]
        %v4162 = vld [vmem:[#allocation2 + $0x70] sm:$0xff]
        %v4163 = vld [vmem:[#allocation2 + $0x78] sm:$0xff]
        %v4164 = vld [vmem:[#allocation2 + $0x80] sm:$0xff]
        %v4165 = vld [vmem:[#allocation2 + $0x88] sm:$0xff]
        %4167 = vset.pattern.permute.xlu0 0
        %4168 = vperm.xlu0 %4167, %v4146
        %v4169 = vpop.permute.xlu0 %4168
        %v4172 = vunpack.c.l.b16 %v4147
        %v4173 = vunpack.c.h.b16 %v4147
        %v4174 = vpack.c.b16 %v4172, %v4172
        %v4175 = vpack.c.b16 %v4173, %v4173
        %v4195 = vunpack.c.l.b16 %v4148
        %v4196 = vunpack.c.h.b16 %v4148
        %v4197 = vunpack.c.l.b16 %v4149
        %v4198 = vunpack.c.h.b16 %v4149
        %v4199 = vunpack.c.l.b16 %v4150
        %v4200 = vunpack.c.h.b16 %v4150
        %v4201 = vunpack.c.l.b16 %v4151
        %v4202 = vunpack.c.h.b16 %v4151
        %v4203 = vunpack.c.l.b16 %v4152
        %v4204 = vunpack.c.h.b16 %v4152
        %v4205 = vunpack.c.l.b16 %v4153
        %v4206 = vunpack.c.h.b16 %v4153
        %v4207 = vunpack.c.l.b16 %v4154
        %v4208 = vunpack.c.h.b16 %v4154
        %v4209 = vunpack.c.l.b16 %v4155
        %v4210 = vunpack.c.h.b16 %v4155
        %v4211 = vunpack.c.l.b16 %v4156
        %v4212 = vunpack.c.h.b16 %v4156
        %v4213 = vunpack.c.l.b16 %v4157
        %v4214 = vunpack.c.h.b16 %v4157
        %v4215 = vunpack.c.l.b16 %v4158
        %v4216 = vunpack.c.h.b16 %v4158
        %v4217 = vunpack.c.l.b16 %v4159
        %v4218 = vunpack.c.h.b16 %v4159
        %v4219 = vunpack.c.l.b16 %v4160
        %v4220 = vunpack.c.h.b16 %v4160
        %v4221 = vunpack.c.l.b16 %v4161
        %v4222 = vunpack.c.h.b16 %v4161
        %v4223 = vunpack.c.l.b16 %v4162
        %v4224 = vunpack.c.h.b16 %v4162
        %v4225 = vunpack.c.l.b16 %v4163
        %v4226 = vunpack.c.h.b16 %v4163
        %v4227 = vunpack.c.l.b16 %v4164
        %v4228 = vunpack.c.h.b16 %v4164
        %v4229 = vunpack.c.l.b16 %v4165
        %v4230 = vunpack.c.h.b16 %v4165
        %v4231 = vpack.c.b16 %v4197, %v4195
        %v4232 = vpack.c.b16 %v4198, %v4196
        %v4233 = vpack.c.b16 %v4201, %v4199
        %v4234 = vpack.c.b16 %v4202, %v4200
        %v4235 = vpack.c.b16 %v4205, %v4203
        %v4236 = vpack.c.b16 %v4206, %v4204
        %v4237 = vpack.c.b16 %v4209, %v4207
        %v4238 = vpack.c.b16 %v4210, %v4208
        %v4239 = vpack.c.b16 %v4213, %v4211
        %v4240 = vpack.c.b16 %v4214, %v4212
        %v4241 = vpack.c.b16 %v4217, %v4215
        %v4242 = vpack.c.b16 %v4218, %v4216
        %v4243 = vpack.c.b16 %v4221, %v4219
        %v4244 = vpack.c.b16 %v4222, %v4220
        %v4245 = vpack.c.b16 %v4225, %v4223
        %v4246 = vpack.c.b16 %v4226, %v4224
        %v4247 = vpack.c.b16 %v4229, %v4227
        %v4248 = vpack.c.b16 %v4230, %v4228
        %v4268 = vsel %vm980, %v4175, 0
        %4270 = vmatprep.subr.bf16.mxu0 %v4246
        %4271 = vmatpush1.bf16.msra.mxu0 %v4245
        %4272 = vmatprep.subr.bf16.mxu0 %v4244
        %4273 = vmatpush1.bf16.msra.mxu0 %v4243
        %4274 = vmatprep.subr.bf16.mxu0 %v4242
        %4275 = vmatpush1.bf16.msra.mxu0 %v4241
        %4276 = vmatprep.subr.bf16.mxu0 %v4240
        %4277 = vmatpush1.bf16.msra.mxu0 %v4239
        %4278 = vmatprep.subr.bf16.mxu0 %v4238
        %4279 = vmatpush1.bf16.msra.mxu0 %v4237
        %4280 = vmatprep.subr.bf16.mxu0 %v4236
        %4281 = vmatpush1.bf16.msra.mxu0 %v4235
        %4282 = vmatprep.subr.bf16.mxu0 %v4234
        %4283 = vmatpush1.bf16.msra.mxu0 %v4233
        %4284 = vmatprep.subr.bf16.mxu0 %v4232
        %4285 = vmatpush1.bf16.msra.mxu0 %v4231
        %4286 = vmatprep.subr.bf16.mxu0 0
        %4287 = vmatpush2.bf16.msra.mxu0 0
        %4288 = vmatprep.subr.bf16.mxu0 0
        %4289 = vmatpush2.bf16.msra.mxu0 0
        %4290 = vmatprep.subr.bf16.mxu0 0
        %4291 = vmatpush2.bf16.msra.mxu0 0
        %4292 = vmatprep.subr.bf16.mxu0 0
        %4293 = vmatpush2.bf16.msra.mxu0 0
        %4294 = vmatprep.subr.bf16.mxu0 0
        %4295 = vmatpush2.bf16.msra.mxu0 0
        %4296 = vmatprep.subr.bf16.mxu0 0
        %4297 = vmatpush2.bf16.msra.mxu0 0
        %4298 = vmatprep.subr.bf16.mxu0 0
        %4299 = vmatpush2.bf16.msra.mxu0 0
        %4300 = vmatprep.subr.bf16.mxu0 %v4248
        %4301 = vmatpush2.bf16.msra.mxu0 %v4247
        %4302 = vmatprep.mubr.bf16.mxu0 %v4268
        %4303 = vmatmul.mubr.bf16.gmra.mxu0 %v4174
        %v4304 = vpop.f32.mrf.mxu0
        %v4305 = vadd.f32 %v4169, %v4304
        %v4306 = vpop.f32.mrf.mxu0
        %v4307 = vadd.f32 %v4169, %v4306
        %v4308 = vpop.f32.mrf.mxu0
        %v4309 = vpop.f32.mrf.mxu0
        %4310 = vdwg.mxu0
        %v4311 = vld [vmem:[#allocation3 + $0x120] sm:$0x33]
        %v4313 = vunpack.c.l.b16 %v4311
        %v4314 = vunpack.c.h.b16 %v4311
        %v4315 = vpack.c.b16 %v4313, %v4313
        %v4316 = vpack.c.b16 %v4314, %v4314
        %v4319 = vsel %vm980, %v4316, 0
        %4321 = vmatprep.subr.bf16.mxu0 %v4246
        %4322 = vmatpush1.bf16.msra.mxu0 %v4245
        %4323 = vmatprep.subr.bf16.mxu0 %v4244
        %4324 = vmatpush1.bf16.msra.mxu0 %v4243
        %4325 = vmatprep.subr.bf16.mxu0 %v4242
        %4326 = vmatpush1.bf16.msra.mxu0 %v4241
        %4327 = vmatprep.subr.bf16.mxu0 %v4240
        %4328 = vmatpush1.bf16.msra.mxu0 %v4239
        %4329 = vmatprep.subr.bf16.mxu0 %v4238
        %4330 = vmatpush1.bf16.msra.mxu0 %v4237
        %4331 = vmatprep.subr.bf16.mxu0 %v4236
        %4332 = vmatpush1.bf16.msra.mxu0 %v4235
        %4333 = vmatprep.subr.bf16.mxu0 %v4234
        %4334 = vmatpush1.bf16.msra.mxu0 %v4233
        %4335 = vmatprep.subr.bf16.mxu0 %v4232
        %4336 = vmatpush1.bf16.msra.mxu0 %v4231
        %4337 = vmatprep.subr.bf16.mxu0 0
        %4338 = vmatpush2.bf16.msra.mxu0 0
        %4339 = vmatprep.subr.bf16.mxu0 0
        %4340 = vmatpush2.bf16.msra.mxu0 0
        %4341 = vmatprep.subr.bf16.mxu0 0
        %4342 = vmatpush2.bf16.msra.mxu0 0
        %4343 = vmatprep.subr.bf16.mxu0 0
        %4344 = vmatpush2.bf16.msra.mxu0 0
        %4345 = vmatprep.subr.bf16.mxu0 0
        %4346 = vmatpush2.bf16.msra.mxu0 0
        %4347 = vmatprep.subr.bf16.mxu0 0
        %4348 = vmatpush2.bf16.msra.mxu0 0
        %4349 = vmatprep.subr.bf16.mxu0 0
        %4350 = vmatpush2.bf16.msra.mxu0 0
        %4351 = vmatprep.subr.bf16.mxu0 %v4248
        %4352 = vmatpush2.bf16.msra.mxu0 %v4247
        %4353 = vmatprep.mubr.bf16.mxu0 %v4319
        %4354 = vmatmul.mubr.bf16.gmra.mxu0 %v4315
        %v4355 = vpop.f32.mrf.mxu0
        %v4356 = vadd.f32 0.0, %v4355
        %v4357 = vpop.f32.mrf.mxu0
        %v4358 = vadd.f32 0.0, %v4357
        %v4359 = vpop.f32.mrf.mxu0
        %v4360 = vpop.f32.mrf.mxu0
        %4361 = vdwg.mxu0
        %4362 = vrot.lane.b32.xlu0 %v4356, 1
        %v4363 = vpop.permute.xlu0 %4362
        %4364 = vrot.lane.b32.xlu0 %v4358, 1
        %v4365 = vpop.permute.xlu0 %4364
        %v4366 = vsel %vm448, %v4363, %v4365
        %v4367 = vsel %vm448, %v4365, %v4363
        %v4368 = vmul.f32 %v4367, %v454
        %v4369 = vmul.f32 %v4366, %v458
        %v4370 = vadd.f32 %v4305, %v4368
        %v4371 = vadd.f32 %v4307, %v4369
        %v4372 = vld [vmem:[#allocation3 + $0x130] sm:$0x33]
        %v4374 = vunpack.c.l.b16 %v4372
        %v4375 = vunpack.c.h.b16 %v4372
        %v4376 = vpack.c.b16 %v4374, %v4374
        %v4377 = vpack.c.b16 %v4375, %v4375
        %v4380 = vsel %vm980, %v4377, 0
        %4382 = vmatprep.subr.bf16.mxu0 %v4246
        %4383 = vmatpush1.bf16.msra.mxu0 %v4245
        %4384 = vmatprep.subr.bf16.mxu0 %v4244
        %4385 = vmatpush1.bf16.msra.mxu0 %v4243
        %4386 = vmatprep.subr.bf16.mxu0 %v4242
        %4387 = vmatpush1.bf16.msra.mxu0 %v4241
        %4388 = vmatprep.subr.bf16.mxu0 %v4240
        %4389 = vmatpush1.bf16.msra.mxu0 %v4239
        %4390 = vmatprep.subr.bf16.mxu0 %v4238
        %4391 = vmatpush1.bf16.msra.mxu0 %v4237
        %4392 = vmatprep.subr.bf16.mxu0 %v4236
        %4393 = vmatpush1.bf16.msra.mxu0 %v4235
        %4394 = vmatprep.subr.bf16.mxu0 %v4234
        %4395 = vmatpush1.bf16.msra.mxu0 %v4233
        %4396 = vmatprep.subr.bf16.mxu0 %v4232
        %4397 = vmatpush1.bf16.msra.mxu0 %v4231
        %4398 = vmatprep.subr.bf16.mxu0 0
        %4399 = vmatpush2.bf16.msra.mxu0 0
        %4400 = vmatprep.subr.bf16.mxu0 0
        %4401 = vmatpush2.bf16.msra.mxu0 0
        %4402 = vmatprep.subr.bf16.mxu0 0
        %4403 = vmatpush2.bf16.msra.mxu0 0
        %4404 = vmatprep.subr.bf16.mxu0 0
        %4405 = vmatpush2.bf16.msra.mxu0 0
        %4406 = vmatprep.subr.bf16.mxu0 0
        %4407 = vmatpush2.bf16.msra.mxu0 0
        %4408 = vmatprep.subr.bf16.mxu0 0
        %4409 = vmatpush2.bf16.msra.mxu0 0
        %4410 = vmatprep.subr.bf16.mxu0 0
        %4411 = vmatpush2.bf16.msra.mxu0 0
        %4412 = vmatprep.subr.bf16.mxu0 %v4248
        %4413 = vmatpush2.bf16.msra.mxu0 %v4247
        %4414 = vmatprep.mubr.bf16.mxu0 %v4380
        %4415 = vmatmul.mubr.bf16.gmra.mxu0 %v4376
        %v4416 = vpop.f32.mrf.mxu0
        %v4417 = vadd.f32 0.0, %v4416
        %v4418 = vpop.f32.mrf.mxu0
        %v4419 = vadd.f32 0.0, %v4418
        %v4420 = vpop.f32.mrf.mxu0
        %v4421 = vpop.f32.mrf.mxu0
        %4422 = vdwg.mxu0
        %4423 = vrot.lane.b32.xlu0 %v4417, 127
        %v4424 = vpop.permute.xlu0 %4423
        %4425 = vrot.lane.b32.xlu0 %v4419, 127
        %v4426 = vpop.permute.xlu0 %4425
        %v4427 = vsel %vm512, %v4424, %v4426
        %v4428 = vsel %vm512, %v4426, %v4424
        %v4429 = vmul.f32 %v4427, %v518
        %v4430 = vmul.f32 %v4428, %v522
        %v4431 = vadd.f32 %v4370, %v4429
        %v4432 = vadd.f32 %v4371, %v4430
        %vm4433 = vcmp.gt.f32.partialorder %v4431, 0.0
        %vm4434 = vcmp.gt.f32.partialorder %v4432, 0.0
        %v4435 = vmul.f32 %v4431, 0.2
        %v4436 = vmul.f32 %v4432, 0.2
        %v4437 = vsel %vm4433, %v4431, %v4435
        %v4438 = vsel %vm4434, %v4432, %v4436
        %4439 = vrot.lane.b32.xlu0 %v4437, 16
        %v4440 = vpop.permute.xlu0 %4439
        %4441 = vrot.lane.b32.xlu0 %v4438, 16
        %v4442 = vpop.permute.xlu0 %4441
        %v4443 = vsel %vm254, %v4440, %v4442
        %v4444 = vsel %vm254, %v4442, %v4440
        %v4445 = vmul.f32 %v4444, %v260
        %v4446 = vmul.f32 %v4443, %v264
        %v4447 = vpack.c.bf16 %v4445, %v4445
        %v4448 = vpack.c.bf16 %v4446, %v4446
        %v4451 = vunpack.c.l.b16 %v4447
        %v4452 = vunpack.c.l.b16 %v4448
        %v4453 = vpack.c.b16 %v4452, %v4451
        %4455 = vst [vmem:[#allocation2 + $0x90] sm:$0x33] %v4453
        %v4456 = vpack.c.bf16 %v4437, %v4437
        %v4457 = vpack.c.bf16 %v4438, %v4438
        %v4460 = vunpack.c.l.b16 %v4456
        %v4461 = vunpack.c.l.b16 %v4457
        %v4462 = vpack.c.b16 %v4461, %v4460
        %4464 = vst [vmem:[#allocation2 + $0xa0] sm:$0x33] %v4462
        %4465 = vrot.lane.b32.xlu0 %v4437, 112
        %v4466 = vpop.permute.xlu0 %4465
        %4467 = vrot.lane.b32.xlu0 %v4438, 112
        %v4468 = vpop.permute.xlu0 %4467
        %v4469 = vsel %vm289, %v4466, %v4468
        %v4470 = vsel %vm289, %v4468, %v4466
        %v4471 = vmul.f32 %v4469, %v295
        %v4472 = vmul.f32 %v4470, %v299
        %v4473 = vpack.c.bf16 %v4471, %v4471
        %v4474 = vpack.c.bf16 %v4472, %v4472
        %v4477 = vunpack.c.l.b16 %v4473
        %v4478 = vunpack.c.l.b16 %v4474
        %v4479 = vpack.c.b16 %v4478, %v4477
        %4481 = vst [vmem:[#allocation2 + $0xb0] sm:$0x33] %v4479
        %v4482 = vld [vmem:[%s3 + $0x68] sm:$0xf]
        %v4483 = vld [vmem:[#allocation3 + $0x140] sm:$0x33]
        %v4484 = vld [vmem:[#allocation2] sm:$0xff]
        %v4485 = vld [vmem:[#allocation2 + $0x8] sm:$0xff]
        %v4486 = vld [vmem:[#allocation2 + $0x10] sm:$0xff]
        %v4487 = vld [vmem:[#allocation2 + $0x18] sm:$0xff]
        %v4488 = vld [vmem:[#allocation2 + $0x20] sm:$0xff]
        %v4489 = vld [vmem:[#allocation2 + $0x28] sm:$0xff]
        %v4490 = vld [vmem:[#allocation2 + $0x30] sm:$0xff]
        %v4491 = vld [vmem:[#allocation2 + $0x38] sm:$0xff]
        %v4492 = vld [vmem:[#allocation2 + $0x40] sm:$0xff]
        %v4493 = vld [vmem:[#allocation2 + $0x48] sm:$0xff]
        %v4494 = vld [vmem:[#allocation2 + $0x50] sm:$0xff]
        %v4495 = vld [vmem:[#allocation2 + $0x58] sm:$0xff]
        %v4496 = vld [vmem:[#allocation2 + $0x60] sm:$0xff]
        %v4497 = vld [vmem:[#allocation2 + $0x68] sm:$0xff]
        %v4498 = vld [vmem:[#allocation2 + $0x70] sm:$0xff]
        %v4499 = vld [vmem:[#allocation2 + $0x78] sm:$0xff]
        %v4500 = vld [vmem:[#allocation2 + $0x80] sm:$0xff]
        %v4501 = vld [vmem:[#allocation2 + $0x88] sm:$0xff]
        %v4502 = vld [vmem:[#allocation2 + $0x90] sm:$0xff]
        %v4503 = vld [vmem:[#allocation2 + $0x98] sm:$0xff]
        %v4504 = vld [vmem:[#allocation2 + $0xa0] sm:$0xff]
        %v4505 = vld [vmem:[#allocation2 + $0xa8] sm:$0xff]
        %v4506 = vld [vmem:[#allocation2 + $0xb0] sm:$0xff]
        %v4507 = vld [vmem:[#allocation2 + $0xb8] sm:$0xff]
        %4509 = vset.pattern.permute.xlu0 0
        %4510 = vperm.xlu0 %4509, %v4482
        %v4511 = vpop.permute.xlu0 %4510
        %v4514 = vunpack.c.l.b16 %v4483
        %v4515 = vunpack.c.h.b16 %v4483
        %v4516 = vpack.c.b16 %v4514, %v4514
        %v4517 = vpack.c.b16 %v4515, %v4515
        %v4543 = vunpack.c.l.b16 %v4484
        %v4544 = vunpack.c.h.b16 %v4484
        %v4545 = vunpack.c.l.b16 %v4485
        %v4546 = vunpack.c.h.b16 %v4485
        %v4547 = vunpack.c.l.b16 %v4486
        %v4548 = vunpack.c.h.b16 %v4486
        %v4549 = vunpack.c.l.b16 %v4487
        %v4550 = vunpack.c.h.b16 %v4487
        %v4551 = vunpack.c.l.b16 %v4488
        %v4552 = vunpack.c.h.b16 %v4488
        %v4553 = vunpack.c.l.b16 %v4489
        %v4554 = vunpack.c.h.b16 %v4489
        %v4555 = vunpack.c.l.b16 %v4490
        %v4556 = vunpack.c.h.b16 %v4490
        %v4557 = vunpack.c.l.b16 %v4491
        %v4558 = vunpack.c.h.b16 %v4491
        %v4559 = vunpack.c.l.b16 %v4492
        %v4560 = vunpack.c.h.b16 %v4492
        %v4561 = vunpack.c.l.b16 %v4493
        %v4562 = vunpack.c.h.b16 %v4493
        %v4563 = vunpack.c.l.b16 %v4494
        %v4564 = vunpack.c.h.b16 %v4494
        %v4565 = vunpack.c.l.b16 %v4495
        %v4566 = vunpack.c.h.b16 %v4495
        %v4567 = vunpack.c.l.b16 %v4496
        %v4568 = vunpack.c.h.b16 %v4496
        %v4569 = vunpack.c.l.b16 %v4497
        %v4570 = vunpack.c.h.b16 %v4497
        %v4571 = vunpack.c.l.b16 %v4498
        %v4572 = vunpack.c.h.b16 %v4498
        %v4573 = vunpack.c.l.b16 %v4499
        %v4574 = vunpack.c.h.b16 %v4499
        %v4575 = vunpack.c.l.b16 %v4500
        %v4576 = vunpack.c.h.b16 %v4500
        %v4577 = vunpack.c.l.b16 %v4501
        %v4578 = vunpack.c.h.b16 %v4501
        %v4579 = vunpack.c.l.b16 %v4502
        %v4580 = vunpack.c.h.b16 %v4502
        %v4581 = vunpack.c.l.b16 %v4503
        %v4582 = vunpack.c.h.b16 %v4503
        %v4583 = vunpack.c.l.b16 %v4504
        %v4584 = vunpack.c.h.b16 %v4504
        %v4585 = vunpack.c.l.b16 %v4505
        %v4586 = vunpack.c.h.b16 %v4505
        %v4587 = vunpack.c.l.b16 %v4506
        %v4588 = vunpack.c.h.b16 %v4506
        %v4589 = vunpack.c.l.b16 %v4507
        %v4590 = vunpack.c.h.b16 %v4507
        %v4591 = vpack.c.b16 %v4545, %v4543
        %v4592 = vpack.c.b16 %v4546, %v4544
        %v4593 = vpack.c.b16 %v4549, %v4547
        %v4594 = vpack.c.b16 %v4550, %v4548
        %v4595 = vpack.c.b16 %v4553, %v4551
        %v4596 = vpack.c.b16 %v4554, %v4552
        %v4597 = vpack.c.b16 %v4557, %v4555
        %v4598 = vpack.c.b16 %v4558, %v4556
        %v4599 = vpack.c.b16 %v4561, %v4559
        %v4600 = vpack.c.b16 %v4562, %v4560
        %v4601 = vpack.c.b16 %v4565, %v4563
        %v4602 = vpack.c.b16 %v4566, %v4564
        %v4603 = vpack.c.b16 %v4569, %v4567
        %v4604 = vpack.c.b16 %v4570, %v4568
        %v4605 = vpack.c.b16 %v4573, %v4571
        %v4606 = vpack.c.b16 %v4574, %v4572
        %v4607 = vpack.c.b16 %v4577, %v4575
        %v4608 = vpack.c.b16 %v4578, %v4576
        %v4609 = vpack.c.b16 %v4581, %v4579
        %v4610 = vpack.c.b16 %v4582, %v4580
        %v4611 = vpack.c.b16 %v4585, %v4583
        %v4612 = vpack.c.b16 %v4586, %v4584
        %v4613 = vpack.c.b16 %v4589, %v4587
        %v4614 = vpack.c.b16 %v4590, %v4588
        %v4640 = vsel %vm1353, %v4517, 0
        %4642 = vmatprep.subr.bf16.mxu0 %v4606
        %4643 = vmatpush1.bf16.msra.mxu0 %v4605
        %4644 = vmatprep.subr.bf16.mxu0 %v4604
        %4645 = vmatpush1.bf16.msra.mxu0 %v4603
        %4646 = vmatprep.subr.bf16.mxu0 %v4602
        %4647 = vmatpush1.bf16.msra.mxu0 %v4601
        %4648 = vmatprep.subr.bf16.mxu0 %v4600
        %4649 = vmatpush1.bf16.msra.mxu0 %v4599
        %4650 = vmatprep.subr.bf16.mxu0 %v4598
        %4651 = vmatpush1.bf16.msra.mxu0 %v4597
        %4652 = vmatprep.subr.bf16.mxu0 %v4596
        %4653 = vmatpush1.bf16.msra.mxu0 %v4595
        %4654 = vmatprep.subr.bf16.mxu0 %v4594
        %4655 = vmatpush1.bf16.msra.mxu0 %v4593
        %4656 = vmatprep.subr.bf16.mxu0 %v4592
        %4657 = vmatpush1.bf16.msra.mxu0 %v4591
        %4658 = vmatprep.subr.bf16.mxu0 0
        %4659 = vmatpush2.bf16.msra.mxu0 0
        %4660 = vmatprep.subr.bf16.mxu0 0
        %4661 = vmatpush2.bf16.msra.mxu0 0
        %4662 = vmatprep.subr.bf16.mxu0 0
        %4663 = vmatpush2.bf16.msra.mxu0 0
        %4664 = vmatprep.subr.bf16.mxu0 0
        %4665 = vmatpush2.bf16.msra.mxu0 0
        %4666 = vmatprep.subr.bf16.mxu0 %v4614
        %4667 = vmatpush2.bf16.msra.mxu0 %v4613
        %4668 = vmatprep.subr.bf16.mxu0 %v4612
        %4669 = vmatpush2.bf16.msra.mxu0 %v4611
        %4670 = vmatprep.subr.bf16.mxu0 %v4610
        %4671 = vmatpush2.bf16.msra.mxu0 %v4609
        %4672 = vmatprep.subr.bf16.mxu0 %v4608
        %4673 = vmatpush2.bf16.msra.mxu0 %v4607
        %4674 = vmatprep.mubr.bf16.mxu0 %v4640
        %4675 = vmatmul.mubr.bf16.gmra.mxu0 %v4516
        %v4676 = vpop.f32.mrf.mxu0
        %v4677 = vadd.f32 %v4511, %v4676
        %v4678 = vpop.f32.mrf.mxu0
        %v4679 = vadd.f32 %v4511, %v4678
        %v4680 = vpop.f32.mrf.mxu0
        %v4681 = vpop.f32.mrf.mxu0
        %4682 = vdwg.mxu0
        %v4683 = vld [vmem:[#allocation3 + $0x138] sm:$0x33]
        %v4685 = vunpack.c.l.b16 %v4683
        %v4686 = vunpack.c.h.b16 %v4683
        %v4687 = vpack.c.b16 %v4685, %v4685
        %v4688 = vpack.c.b16 %v4686, %v4686
        %v4691 = vsel %vm1353, %v4688, 0
        %4693 = vmatprep.subr.bf16.mxu0 %v4606
        %4694 = vmatpush1.bf16.msra.mxu0 %v4605
        %4695 = vmatprep.subr.bf16.mxu0 %v4604
        %4696 = vmatpush1.bf16.msra.mxu0 %v4603
        %4697 = vmatprep.subr.bf16.mxu0 %v4602
        %4698 = vmatpush1.bf16.msra.mxu0 %v4601
        %4699 = vmatprep.subr.bf16.mxu0 %v4600
        %4700 = vmatpush1.bf16.msra.mxu0 %v4599
        %4701 = vmatprep.subr.bf16.mxu0 %v4598
        %4702 = vmatpush1.bf16.msra.mxu0 %v4597
        %4703 = vmatprep.subr.bf16.mxu0 %v4596
        %4704 = vmatpush1.bf16.msra.mxu0 %v4595
        %4705 = vmatprep.subr.bf16.mxu0 %v4594
        %4706 = vmatpush1.bf16.msra.mxu0 %v4593
        %4707 = vmatprep.subr.bf16.mxu0 %v4592
        %4708 = vmatpush1.bf16.msra.mxu0 %v4591
        %4709 = vmatprep.subr.bf16.mxu0 0
        %4710 = vmatpush2.bf16.msra.mxu0 0
        %4711 = vmatprep.subr.bf16.mxu0 0
        %4712 = vmatpush2.bf16.msra.mxu0 0
        %4713 = vmatprep.subr.bf16.mxu0 0
        %4714 = vmatpush2.bf16.msra.mxu0 0
        %4715 = vmatprep.subr.bf16.mxu0 0
        %4716 = vmatpush2.bf16.msra.mxu0 0
        %4717 = vmatprep.subr.bf16.mxu0 %v4614
        %4718 = vmatpush2.bf16.msra.mxu0 %v4613
        %4719 = vmatprep.subr.bf16.mxu0 %v4612
        %4720 = vmatpush2.bf16.msra.mxu0 %v4611
        %4721 = vmatprep.subr.bf16.mxu0 %v4610
        %4722 = vmatpush2.bf16.msra.mxu0 %v4609
        %4723 = vmatprep.subr.bf16.mxu0 %v4608
        %4724 = vmatpush2.bf16.msra.mxu0 %v4607
        %4725 = vmatprep.mubr.bf16.mxu0 %v4691
        %4726 = vmatmul.mubr.bf16.gmra.mxu0 %v4687
        %v4727 = vpop.f32.mrf.mxu0
        %v4728 = vadd.f32 0.0, %v4727
        %v4729 = vpop.f32.mrf.mxu0
        %v4730 = vadd.f32 0.0, %v4729
        %v4731 = vpop.f32.mrf.mxu0
        %v4732 = vpop.f32.mrf.mxu0
        %4733 = vdwg.mxu0
        %4734 = vrot.lane.b32.xlu0 %v4728, 1
        %v4735 = vpop.permute.xlu0 %4734
        %4736 = vrot.lane.b32.xlu0 %v4730, 1
        %v4737 = vpop.permute.xlu0 %4736
        %v4738 = vsel %vm448, %v4735, %v4737
        %v4739 = vsel %vm448, %v4737, %v4735
        %v4740 = vmul.f32 %v4739, %v454
        %v4741 = vmul.f32 %v4738, %v458
        %v4742 = vadd.f32 %v4677, %v4740
        %v4743 = vadd.f32 %v4679, %v4741
        %v4744 = vld [vmem:[#allocation3 + $0x148] sm:$0x33]
        %v4746 = vunpack.c.l.b16 %v4744
        %v4747 = vunpack.c.h.b16 %v4744
        %v4748 = vpack.c.b16 %v4746, %v4746
        %v4749 = vpack.c.b16 %v4747, %v4747
        %v4752 = vsel %vm1353, %v4749, 0
        %4754 = vmatprep.subr.bf16.mxu0 %v4606
        %4755 = vmatpush1.bf16.msra.mxu0 %v4605
        %4756 = vmatprep.subr.bf16.mxu0 %v4604
        %4757 = vmatpush1.bf16.msra.mxu0 %v4603
        %4758 = vmatprep.subr.bf16.mxu0 %v4602
        %4759 = vmatpush1.bf16.msra.mxu0 %v4601
        %4760 = vmatprep.subr.bf16.mxu0 %v4600
        %4761 = vmatpush1.bf16.msra.mxu0 %v4599
        %4762 = vmatprep.subr.bf16.mxu0 %v4598
        %4763 = vmatpush1.bf16.msra.mxu0 %v4597
        %4764 = vmatprep.subr.bf16.mxu0 %v4596
        %4765 = vmatpush1.bf16.msra.mxu0 %v4595
        %4766 = vmatprep.subr.bf16.mxu0 %v4594
        %4767 = vmatpush1.bf16.msra.mxu0 %v4593
        %4768 = vmatprep.subr.bf16.mxu0 %v4592
        %4769 = vmatpush1.bf16.msra.mxu0 %v4591
        %4770 = vmatprep.subr.bf16.mxu0 0
        %4771 = vmatpush2.bf16.msra.mxu0 0
        %4772 = vmatprep.subr.bf16.mxu0 0
        %4773 = vmatpush2.bf16.msra.mxu0 0
        %4774 = vmatprep.subr.bf16.mxu0 0
        %4775 = vmatpush2.bf16.msra.mxu0 0
        %4776 = vmatprep.subr.bf16.mxu0 0
        %4777 = vmatpush2.bf16.msra.mxu0 0
        %4778 = vmatprep.subr.bf16.mxu0 %v4614
        %4779 = vmatpush2.bf16.msra.mxu0 %v4613
        %4780 = vmatprep.subr.bf16.mxu0 %v4612
        %4781 = vmatpush2.bf16.msra.mxu0 %v4611
        %4782 = vmatprep.subr.bf16.mxu0 %v4610
        %4783 = vmatpush2.bf16.msra.mxu0 %v4609
        %4784 = vmatprep.subr.bf16.mxu0 %v4608
        %4785 = vmatpush2.bf16.msra.mxu0 %v4607
        %4786 = vmatprep.mubr.bf16.mxu0 %v4752
        %4787 = vmatmul.mubr.bf16.gmra.mxu0 %v4748
        %v4788 = vpop.f32.mrf.mxu0
        %v4789 = vadd.f32 0.0, %v4788
        %v4790 = vpop.f32.mrf.mxu0
        %v4791 = vadd.f32 0.0, %v4790
        %v4792 = vpop.f32.mrf.mxu0
        %v4793 = vpop.f32.mrf.mxu0
        %4794 = vdwg.mxu0
        %4795 = vrot.lane.b32.xlu0 %v4789, 127
        %v4796 = vpop.permute.xlu0 %4795
        %4797 = vrot.lane.b32.xlu0 %v4791, 127
        %v4798 = vpop.permute.xlu0 %4797
        %v4799 = vsel %vm512, %v4796, %v4798
        %v4800 = vsel %vm512, %v4798, %v4796
        %v4801 = vmul.f32 %v4799, %v518
        %v4802 = vmul.f32 %v4800, %v522
        %v4803 = vadd.f32 %v4742, %v4801
        %v4804 = vadd.f32 %v4743, %v4802
        %vm4805 = vcmp.gt.f32.partialorder %v4803, 0.0
        %vm4806 = vcmp.gt.f32.partialorder %v4804, 0.0
        %v4807 = vmul.f32 %v4803, 0.2
        %v4808 = vmul.f32 %v4804, 0.2
        %v4809 = vsel %vm4805, %v4803, %v4807
        %v4810 = vsel %vm4806, %v4804, %v4808
        %4811 = vrot.lane.b32.xlu0 %v4809, 16
        %v4812 = vpop.permute.xlu0 %4811
        %4813 = vrot.lane.b32.xlu0 %v4810, 16
        %v4814 = vpop.permute.xlu0 %4813
        %v4815 = vsel %vm254, %v4812, %v4814
        %v4816 = vsel %vm254, %v4814, %v4812
        %v4817 = vmul.f32 %v4816, %v260
        %v4818 = vmul.f32 %v4815, %v264
        %v4819 = vpack.c.bf16 %v4817, %v4817
        %v4820 = vpack.c.bf16 %v4818, %v4818
        %v4823 = vunpack.c.l.b16 %v4819
        %v4824 = vunpack.c.l.b16 %v4820
        %v4825 = vpack.c.b16 %v4824, %v4823
        %4827 = vst [vmem:[#allocation2 + $0xc0] sm:$0x33] %v4825
        %v4828 = vpack.c.bf16 %v4809, %v4809
        %v4829 = vpack.c.bf16 %v4810, %v4810
        %v4832 = vunpack.c.l.b16 %v4828
        %v4833 = vunpack.c.l.b16 %v4829
        %v4834 = vpack.c.b16 %v4833, %v4832
        %4836 = vst [vmem:[#allocation2 + $0xd0] sm:$0x33] %v4834
        %4837 = vrot.lane.b32.xlu0 %v4809, 112
        %v4838 = vpop.permute.xlu0 %4837
        %4839 = vrot.lane.b32.xlu0 %v4810, 112
        %v4840 = vpop.permute.xlu0 %4839
        %v4841 = vsel %vm289, %v4838, %v4840
        %v4842 = vsel %vm289, %v4840, %v4838
        %v4843 = vmul.f32 %v4841, %v295
        %v4844 = vmul.f32 %v4842, %v299
        %v4845 = vpack.c.bf16 %v4843, %v4843
        %v4846 = vpack.c.bf16 %v4844, %v4844
        %v4849 = vunpack.c.l.b16 %v4845
        %v4850 = vunpack.c.l.b16 %v4846
        %v4851 = vpack.c.b16 %v4850, %v4849
        %4853 = vst [vmem:[#allocation2 + $0xe0] sm:$0x33] %v4851
        %v4854 = vld [vmem:[%s3 + $0x70] sm:$0xf]
        %v4855 = vld [vmem:[#allocation3 + $0x158] sm:$0x33]
        %v4856 = vld [vmem:[#allocation2] sm:$0xff]
        %v4857 = vld [vmem:[#allocation2 + $0x8] sm:$0xff]
        %v4858 = vld [vmem:[#allocation2 + $0x10] sm:$0xff]
        %v4859 = vld [vmem:[#allocation2 + $0x18] sm:$0xff]
        %v4860 = vld [vmem:[#allocation2 + $0x20] sm:$0xff]
        %v4861 = vld [vmem:[#allocation2 + $0x28] sm:$0xff]
        %v4862 = vld [vmem:[#allocation2 + $0x30] sm:$0xff]
        %v4863 = vld [vmem:[#allocation2 + $0x38] sm:$0xff]
        %v4864 = vld [vmem:[#allocation2 + $0x40] sm:$0xff]
        %v4865 = vld [vmem:[#allocation2 + $0x48] sm:$0xff]
        %v4866 = vld [vmem:[#allocation2 + $0x50] sm:$0xff]
        %v4867 = vld [vmem:[#allocation2 + $0x58] sm:$0xff]
        %v4868 = vld [vmem:[#allocation2 + $0x60] sm:$0xff]
        %v4869 = vld [vmem:[#allocation2 + $0x68] sm:$0xff]
        %v4870 = vld [vmem:[#allocation2 + $0x70] sm:$0xff]
        %v4871 = vld [vmem:[#allocation2 + $0x78] sm:$0xff]
        %v4872 = vld [vmem:[#allocation2 + $0x80] sm:$0xff]
        %v4873 = vld [vmem:[#allocation2 + $0x88] sm:$0xff]
        %v4874 = vld [vmem:[#allocation2 + $0x90] sm:$0xff]
        %v4875 = vld [vmem:[#allocation2 + $0x98] sm:$0xff]
        %v4876 = vld [vmem:[#allocation2 + $0xa0] sm:$0xff]
        %v4877 = vld [vmem:[#allocation2 + $0xa8] sm:$0xff]
        %v4878 = vld [vmem:[#allocation2 + $0xb0] sm:$0xff]
        %v4879 = vld [vmem:[#allocation2 + $0xb8] sm:$0xff]
        %v4880 = vld [vmem:[#allocation2 + $0xc0] sm:$0xff]
        %v4881 = vld [vmem:[#allocation2 + $0xc8] sm:$0xff]
        %v4882 = vld [vmem:[#allocation2 + $0xd0] sm:$0xff]
        %v4883 = vld [vmem:[#allocation2 + $0xd8] sm:$0xff]
        %v4884 = vld [vmem:[#allocation2 + $0xe0] sm:$0xff]
        %v4885 = vld [vmem:[#allocation2 + $0xe8] sm:$0xff]
        %4887 = vset.pattern.permute.xlu0 0
        %4888 = vperm.xlu0 %4887, %v4854
        %v4889 = vpop.permute.xlu0 %4888
        %v4892 = vunpack.c.l.b16 %v4855
        %v4893 = vunpack.c.h.b16 %v4855
        %v4894 = vpack.c.b16 %v4892, %v4892
        %v4895 = vpack.c.b16 %v4893, %v4893
        %v4927 = vunpack.c.l.b16 %v4856
        %v4928 = vunpack.c.h.b16 %v4856
        %v4929 = vunpack.c.l.b16 %v4857
        %v4930 = vunpack.c.h.b16 %v4857
        %v4931 = vunpack.c.l.b16 %v4858
        %v4932 = vunpack.c.h.b16 %v4858
        %v4933 = vunpack.c.l.b16 %v4859
        %v4934 = vunpack.c.h.b16 %v4859
        %v4935 = vunpack.c.l.b16 %v4860
        %v4936 = vunpack.c.h.b16 %v4860
        %v4937 = vunpack.c.l.b16 %v4861
        %v4938 = vunpack.c.h.b16 %v4861
        %v4939 = vunpack.c.l.b16 %v4862
        %v4940 = vunpack.c.h.b16 %v4862
        %v4941 = vunpack.c.l.b16 %v4863
        %v4942 = vunpack.c.h.b16 %v4863
        %v4943 = vunpack.c.l.b16 %v4864
        %v4944 = vunpack.c.h.b16 %v4864
        %v4945 = vunpack.c.l.b16 %v4865
        %v4946 = vunpack.c.h.b16 %v4865
        %v4947 = vunpack.c.l.b16 %v4866
        %v4948 = vunpack.c.h.b16 %v4866
        %v4949 = vunpack.c.l.b16 %v4867
        %v4950 = vunpack.c.h.b16 %v4867
        %v4951 = vunpack.c.l.b16 %v4868
        %v4952 = vunpack.c.h.b16 %v4868
        %v4953 = vunpack.c.l.b16 %v4869
        %v4954 = vunpack.c.h.b16 %v4869
        %v4955 = vunpack.c.l.b16 %v4870
        %v4956 = vunpack.c.h.b16 %v4870
        %v4957 = vunpack.c.l.b16 %v4871
        %v4958 = vunpack.c.h.b16 %v4871
        %v4959 = vunpack.c.l.b16 %v4872
        %v4960 = vunpack.c.h.b16 %v4872
        %v4961 = vunpack.c.l.b16 %v4873
        %v4962 = vunpack.c.h.b16 %v4873
        %v4963 = vunpack.c.l.b16 %v4874
        %v4964 = vunpack.c.h.b16 %v4874
        %v4965 = vunpack.c.l.b16 %v4875
        %v4966 = vunpack.c.h.b16 %v4875
        %v4967 = vunpack.c.l.b16 %v4876
        %v4968 = vunpack.c.h.b16 %v4876
        %v4969 = vunpack.c.l.b16 %v4877
        %v4970 = vunpack.c.h.b16 %v4877
        %v4971 = vunpack.c.l.b16 %v4878
        %v4972 = vunpack.c.h.b16 %v4878
        %v4973 = vunpack.c.l.b16 %v4879
        %v4974 = vunpack.c.h.b16 %v4879
        %v4975 = vunpack.c.l.b16 %v4880
        %v4976 = vunpack.c.h.b16 %v4880
        %v4977 = vunpack.c.l.b16 %v4881
        %v4978 = vunpack.c.h.b16 %v4881
        %v4979 = vunpack.c.l.b16 %v4882
        %v4980 = vunpack.c.h.b16 %v4882
        %v4981 = vunpack.c.l.b16 %v4883
        %v4982 = vunpack.c.h.b16 %v4883
        %v4983 = vunpack.c.l.b16 %v4884
        %v4984 = vunpack.c.h.b16 %v4884
        %v4985 = vunpack.c.l.b16 %v4885
        %v4986 = vunpack.c.h.b16 %v4885
        %v4987 = vpack.c.b16 %v4929, %v4927
        %v4988 = vpack.c.b16 %v4930, %v4928
        %v4989 = vpack.c.b16 %v4933, %v4931
        %v4990 = vpack.c.b16 %v4934, %v4932
        %v4991 = vpack.c.b16 %v4937, %v4935
        %v4992 = vpack.c.b16 %v4938, %v4936
        %v4993 = vpack.c.b16 %v4941, %v4939
        %v4994 = vpack.c.b16 %v4942, %v4940
        %v4995 = vpack.c.b16 %v4945, %v4943
        %v4996 = vpack.c.b16 %v4946, %v4944
        %v4997 = vpack.c.b16 %v4949, %v4947
        %v4998 = vpack.c.b16 %v4950, %v4948
        %v4999 = vpack.c.b16 %v4953, %v4951
        %v5000 = vpack.c.b16 %v4954, %v4952
        %v5001 = vpack.c.b16 %v4957, %v4955
        %v5002 = vpack.c.b16 %v4958, %v4956
        %v5003 = vpack.c.b16 %v4961, %v4959
        %v5004 = vpack.c.b16 %v4962, %v4960
        %v5005 = vpack.c.b16 %v4965, %v4963
        %v5006 = vpack.c.b16 %v4966, %v4964
        %v5007 = vpack.c.b16 %v4969, %v4967
        %v5008 = vpack.c.b16 %v4970, %v4968
        %v5009 = vpack.c.b16 %v4973, %v4971
        %v5010 = vpack.c.b16 %v4974, %v4972
        %v5011 = vpack.c.b16 %v4977, %v4975
        %v5012 = vpack.c.b16 %v4978, %v4976
        %v5013 = vpack.c.b16 %v4981, %v4979
        %v5014 = vpack.c.b16 %v4982, %v4980
        %v5015 = vpack.c.b16 %v4985, %v4983
        %v5016 = vpack.c.b16 %v4986, %v4984
        %v5048 = vsel %vm1762, %v4895, 0
        %5050 = vmatprep.subr.bf16.mxu0 %v5002
        %5051 = vmatpush1.bf16.msra.mxu0 %v5001
        %5052 = vmatprep.subr.bf16.mxu0 %v5000
        %5053 = vmatpush1.bf16.msra.mxu0 %v4999
        %5054 = vmatprep.subr.bf16.mxu0 %v4998
        %5055 = vmatpush1.bf16.msra.mxu0 %v4997
        %5056 = vmatprep.subr.bf16.mxu0 %v4996
        %5057 = vmatpush1.bf16.msra.mxu0 %v4995
        %5058 = vmatprep.subr.bf16.mxu0 %v4994
        %5059 = vmatpush1.bf16.msra.mxu0 %v4993
        %5060 = vmatprep.subr.bf16.mxu0 %v4992
        %5061 = vmatpush1.bf16.msra.mxu0 %v4991
        %5062 = vmatprep.subr.bf16.mxu0 %v4990
        %5063 = vmatpush1.bf16.msra.mxu0 %v4989
        %5064 = vmatprep.subr.bf16.mxu0 %v4988
        %5065 = vmatpush1.bf16.msra.mxu0 %v4987
        %5066 = vmatprep.subr.bf16.mxu0 0
        %5067 = vmatpush2.bf16.msra.mxu0 0
        %5068 = vmatprep.subr.bf16.mxu0 %v5016
        %5069 = vmatpush2.bf16.msra.mxu0 %v5015
        %5070 = vmatprep.subr.bf16.mxu0 %v5014
        %5071 = vmatpush2.bf16.msra.mxu0 %v5013
        %5072 = vmatprep.subr.bf16.mxu0 %v5012
        %5073 = vmatpush2.bf16.msra.mxu0 %v5011
        %5074 = vmatprep.subr.bf16.mxu0 %v5010
        %5075 = vmatpush2.bf16.msra.mxu0 %v5009
        %5076 = vmatprep.subr.bf16.mxu0 %v5008
        %5077 = vmatpush2.bf16.msra.mxu0 %v5007
        %5078 = vmatprep.subr.bf16.mxu0 %v5006
        %5079 = vmatpush2.bf16.msra.mxu0 %v5005
        %5080 = vmatprep.subr.bf16.mxu0 %v5004
        %5081 = vmatpush2.bf16.msra.mxu0 %v5003
        %5082 = vmatprep.mubr.bf16.mxu0 %v5048
        %5083 = vmatmul.mubr.bf16.gmra.mxu0 %v4894
        %v5084 = vpop.f32.mrf.mxu0
        %v5085 = vadd.f32 %v4889, %v5084
        %v5086 = vpop.f32.mrf.mxu0
        %v5087 = vadd.f32 %v4889, %v5086
        %v5088 = vpop.f32.mrf.mxu0
        %v5089 = vpop.f32.mrf.mxu0
        %5090 = vdwg.mxu0
        %v5091 = vld [vmem:[#allocation3 + $0x150] sm:$0x33]
        %v5093 = vunpack.c.l.b16 %v5091
        %v5094 = vunpack.c.h.b16 %v5091
        %v5095 = vpack.c.b16 %v5093, %v5093
        %v5096 = vpack.c.b16 %v5094, %v5094
        %v5099 = vsel %vm1762, %v5096, 0
        %5101 = vmatprep.subr.bf16.mxu0 %v5002
        %5102 = vmatpush1.bf16.msra.mxu0 %v5001
        %5103 = vmatprep.subr.bf16.mxu0 %v5000
        %5104 = vmatpush1.bf16.msra.mxu0 %v4999
        %5105 = vmatprep.subr.bf16.mxu0 %v4998
        %5106 = vmatpush1.bf16.msra.mxu0 %v4997
        %5107 = vmatprep.subr.bf16.mxu0 %v4996
        %5108 = vmatpush1.bf16.msra.mxu0 %v4995
        %5109 = vmatprep.subr.bf16.mxu0 %v4994
        %5110 = vmatpush1.bf16.msra.mxu0 %v4993
        %5111 = vmatprep.subr.bf16.mxu0 %v4992
        %5112 = vmatpush1.bf16.msra.mxu0 %v4991
        %5113 = vmatprep.subr.bf16.mxu0 %v4990
        %5114 = vmatpush1.bf16.msra.mxu0 %v4989
        %5115 = vmatprep.subr.bf16.mxu0 %v4988
        %5116 = vmatpush1.bf16.msra.mxu0 %v4987
        %5117 = vmatprep.subr.bf16.mxu0 0
        %5118 = vmatpush2.bf16.msra.mxu0 0
        %5119 = vmatprep.subr.bf16.mxu0 %v5016
        %5120 = vmatpush2.bf16.msra.mxu0 %v5015
        %5121 = vmatprep.subr.bf16.mxu0 %v5014
        %5122 = vmatpush2.bf16.msra.mxu0 %v5013
        %5123 = vmatprep.subr.bf16.mxu0 %v5012
        %5124 = vmatpush2.bf16.msra.mxu0 %v5011
        %5125 = vmatprep.subr.bf16.mxu0 %v5010
        %5126 = vmatpush2.bf16.msra.mxu0 %v5009
        %5127 = vmatprep.subr.bf16.mxu0 %v5008
        %5128 = vmatpush2.bf16.msra.mxu0 %v5007
        %5129 = vmatprep.subr.bf16.mxu0 %v5006
        %5130 = vmatpush2.bf16.msra.mxu0 %v5005
        %5131 = vmatprep.subr.bf16.mxu0 %v5004
        %5132 = vmatpush2.bf16.msra.mxu0 %v5003
        %5133 = vmatprep.mubr.bf16.mxu0 %v5099
        %5134 = vmatmul.mubr.bf16.gmra.mxu0 %v5095
        %v5135 = vpop.f32.mrf.mxu0
        %v5136 = vadd.f32 0.0, %v5135
        %v5137 = vpop.f32.mrf.mxu0
        %v5138 = vadd.f32 0.0, %v5137
        %v5139 = vpop.f32.mrf.mxu0
        %v5140 = vpop.f32.mrf.mxu0
        %5141 = vdwg.mxu0
        %5142 = vrot.lane.b32.xlu0 %v5136, 1
        %v5143 = vpop.permute.xlu0 %5142
        %5144 = vrot.lane.b32.xlu0 %v5138, 1
        %v5145 = vpop.permute.xlu0 %5144
        %v5146 = vsel %vm448, %v5143, %v5145
        %v5147 = vsel %vm448, %v5145, %v5143
        %v5148 = vmul.f32 %v5147, %v454
        %v5149 = vmul.f32 %v5146, %v458
        %v5150 = vadd.f32 %v5085, %v5148
        %v5151 = vadd.f32 %v5087, %v5149
        %v5152 = vld [vmem:[#allocation3 + $0x160] sm:$0x33]
        %v5154 = vunpack.c.l.b16 %v5152
        %v5155 = vunpack.c.h.b16 %v5152
        %v5156 = vpack.c.b16 %v5154, %v5154
        %v5157 = vpack.c.b16 %v5155, %v5155
        %v5160 = vsel %vm1762, %v5157, 0
        %5162 = vmatprep.subr.bf16.mxu0 %v5002
        %5163 = vmatpush1.bf16.msra.mxu0 %v5001
        %5164 = vmatprep.subr.bf16.mxu0 %v5000
        %5165 = vmatpush1.bf16.msra.mxu0 %v4999
        %5166 = vmatprep.subr.bf16.mxu0 %v4998
        %5167 = vmatpush1.bf16.msra.mxu0 %v4997
        %5168 = vmatprep.subr.bf16.mxu0 %v4996
        %5169 = vmatpush1.bf16.msra.mxu0 %v4995
        %5170 = vmatprep.subr.bf16.mxu0 %v4994
        %5171 = vmatpush1.bf16.msra.mxu0 %v4993
        %5172 = vmatprep.subr.bf16.mxu0 %v4992
        %5173 = vmatpush1.bf16.msra.mxu0 %v4991
        %5174 = vmatprep.subr.bf16.mxu0 %v4990
        %5175 = vmatpush1.bf16.msra.mxu0 %v4989
        %5176 = vmatprep.subr.bf16.mxu0 %v4988
        %5177 = vmatpush1.bf16.msra.mxu0 %v4987
        %5178 = vmatprep.subr.bf16.mxu0 0
        %5179 = vmatpush2.bf16.msra.mxu0 0
        %5180 = vmatprep.subr.bf16.mxu0 %v5016
        %5181 = vmatpush2.bf16.msra.mxu0 %v5015
        %5182 = vmatprep.subr.bf16.mxu0 %v5014
        %5183 = vmatpush2.bf16.msra.mxu0 %v5013
        %5184 = vmatprep.subr.bf16.mxu0 %v5012
        %5185 = vmatpush2.bf16.msra.mxu0 %v5011
        %5186 = vmatprep.subr.bf16.mxu0 %v5010
        %5187 = vmatpush2.bf16.msra.mxu0 %v5009
        %5188 = vmatprep.subr.bf16.mxu0 %v5008
        %5189 = vmatpush2.bf16.msra.mxu0 %v5007
        %5190 = vmatprep.subr.bf16.mxu0 %v5006
        %5191 = vmatpush2.bf16.msra.mxu0 %v5005
        %5192 = vmatprep.subr.bf16.mxu0 %v5004
        %5193 = vmatpush2.bf16.msra.mxu0 %v5003
        %5194 = vmatprep.mubr.bf16.mxu0 %v5160
        %5195 = vmatmul.mubr.bf16.gmra.mxu0 %v5156
        %v5196 = vpop.f32.mrf.mxu0
        %v5197 = vadd.f32 0.0, %v5196
        %v5198 = vpop.f32.mrf.mxu0
        %v5199 = vadd.f32 0.0, %v5198
        %v5200 = vpop.f32.mrf.mxu0
        %v5201 = vpop.f32.mrf.mxu0
        %5202 = vdwg.mxu0
        %5203 = vrot.lane.b32.xlu0 %v5197, 127
        %v5204 = vpop.permute.xlu0 %5203
        %5205 = vrot.lane.b32.xlu0 %v5199, 127
        %v5206 = vpop.permute.xlu0 %5205
        %v5207 = vsel %vm512, %v5204, %v5206
        %v5208 = vsel %vm512, %v5206, %v5204
        %v5209 = vmul.f32 %v5207, %v518
        %v5210 = vmul.f32 %v5208, %v522
        %v5211 = vadd.f32 %v5150, %v5209
        %v5212 = vadd.f32 %v5151, %v5210
        %v5213 = vmul.f32 %v5211, 0.2
        %v5214 = vmul.f32 %v5212, 0.2
        %v5215 = vadd.f32 %v5213, %v3573
        %v5216 = vadd.f32 %v5214, %v3574
        %v5217 = vmul.f32 %v5215, 0.2
        %v5218 = vmul.f32 %v5216, 0.2
        %v5219 = vadd.f32 %v5217, %v244
        %v5220 = vadd.f32 %v5218, %v246
        %v5223 = vcombine.low %v5219, %v5220
        %5225 = vst [vmem:[%s205] sm:$0xff] %v5223
        %s5226 = sand.u32 %s116, 1
        %s5227 = scalar_lea.sflag [#allocation5], %s5226
        %s5228 = sand.u32 %s116, 1
        %s5229 = smul.addr %s5228, 8
        %s5230 = scalar_lea.vmem [#allocation6], %s5229
        // Predicated region
        $region41: #{tpu_custom_call.1} parent=35 // pred_check
          %p5231 = pneg %p126
        $region42: #{tpu_custom_call.1} parent=35 // pred_check_branch
          %5233 = sbr.rel (%p5231) target = $region44
        $region43: #{tpu_custom_call.1} parent=35 // pred_region
          %s5235 = ssub.s32 128, 128
          %5236 = vsyncadd %s5227, %s5235
          %s5237 = smul.addr %s19, 2
          %s5238 = smul.addr %s5237, 64
          %s5239 = scalar_lea.hbm %s4, %s5238
          %s5241 = sshll.u32 %s5230, 4
          %s5242 = int_to_ptr.vmem [resolvable:$true] %s5241
          %5244 = dma.vmem_to_hbm [thread:$0]  %s5242, 128, %s5239, %s5227
        $region44: #{tpu_custom_call.1} parent=35 // pred_fallthru
          _
      $region36: #{tpu_custom_call.1} parent=5 // pred_fallthru
        _
      %p5245 = scmp.le.s32.totalorder 2, %s14
      // Predicated region
      $region45: #{tpu_custom_call.1} parent=5 // pred_check
        %p5246 = pneg %p5245
      $region46: #{tpu_custom_call.1} parent=5 // pred_check_branch
        %5248 = sbr.rel (%p5246) target = $region48
      $region47: #{tpu_custom_call.1} parent=5 // pred_region
        %s5249 = ssub.s32 %s14, 2
        // Predicated region
        $region49: #{tpu_custom_call.1} parent=47 // pred_check
          %p5250 = pneg %p132
        $region50: #{tpu_custom_call.1} parent=47 // pred_check_branch
          %5252 = sbr.rel (%p5250) target = $region52
        $region51: #{tpu_custom_call.1} parent=47 // pred_region
          %s5253 = sand.u32 %s117, 1
          %s5254 = scalar_lea.sflag [#allocation5], %s5253
          %s5255 = sand.u32 %s117, 1
          %s5256 = smul.addr %s5255, 8
          %s5257 = scalar_lea.vmem [#allocation6], %s5256
          %5258 = dma.done %s5254, 128
        $region52: #{tpu_custom_call.1} parent=47 // pred_fallthru
          _
      $region48: #{tpu_custom_call.1} parent=5 // pred_fallthru
        _
    $region6: #{tpu_custom_call.1} parent=1 // loop_footer
      %s18 = sadd.s32 1, %s14
    $region7: #{tpu_custom_call.1} parent=1 // loop_footer_branch
      %13 = sbr.rel target = $region3
    $region8: #{tpu_custom_call.1} parent=1 // loop_exit
      _
    %5259 = vsyncpa [#allocation4], 1
    %s5260 = scalar_lea.sflag [#allocation4], 1
    %5261 = vsyncpa %s5260, 1
    %5262 = vsyncpa [#allocation5], 1
    %s5263 = scalar_lea.sflag [#allocation5], 1
    %5264 = vsyncpa %s5263, 1

</llo_original>
